<compile_context>
chip_gen: v7x
topology: tpu7x:2x2x1
jax: 0.10.0
libtpu: 0.0.40
codegen_flags: <defaults>
</compile_context>

<pallas_src>
import jax
import jax.numpy as jnp
import numpy as np
from jax.experimental import pallas as pl
from jax.experimental.pallas import tpu as pltpu

EPS = 1e-5
MAIN_PLANES = 64
RED_PLANES = 32
STRIDES = (2, 1, 2, 1, 2, 1)


# ------------------------------------------------------------------ folding helpers

def _fold_bn(bn):
    """(4, C) [gamma, beta, mean, var] -> inference-mode per-channel (scale, shift)."""
    gamma, beta, mean, var = bn[0], bn[1], bn[2], bn[3]
    scale = gamma * jax.lax.rsqrt(var + EPS)
    shift = beta - mean * scale
    return scale, shift


def _band1d(w_kio, l_in, l_out, stride, pad):
    """(K, Cin, Cout) conv1d weights -> (L_in*Cin, L_out*Cout) banded matmul weights.

    M[l*Cin+ci, q*Cout+co] = w[k, ci, co] where l == stride*q + k - pad (else 0), so
    (B, L_in*Cin) @ M equals Conv1d(stride, pad) directly in the lane-dense layout:
    padding, stride and the kernel taps are all baked into the band structure.
    """
    k, cin, cout = w_kio.shape
    l = np.arange(l_in)[:, None, None]
    q = np.arange(l_out)[None, :, None]
    kk = np.arange(k)[None, None, :]
    band = jnp.asarray((l == stride * q + kk - pad).astype(np.float32))  # (L_in, L_out, K)
    m = jnp.einsum("lqk,kio->liqo", band, w_kio)     # (L_in, Cin, L_out, Cout)
    return m.reshape(l_in * cin, l_out * cout)


def _build_folded(params, seq_len, matmul_dtype):
    """Fold every BN, turn every conv/linear into one banded matmul weight, pack all
    per-lane vectors into one array, group the weights by shape.  Returns
    (group_arrays, vec_pack, plan) where plan is purely static Python metadata."""
    L = seq_len
    mats = []   # (name, 2D array) in creation order
    vecs = []   # (name, 1D f32 array)

    def add_mat(name, arr):
        mats.append((name, arr.astype(matmul_dtype)))

    def add_vec(name, arr):
        vecs.append((name, jnp.asarray(arr, jnp.float32).reshape(-1)))

    # reduction Linear(E -> 32): per-position linear == 1x1 "conv" (block-diag band).
    red_w = params["red_w"]                                   # torch layout (out, in)
    add_mat("red", _band1d(jnp.transpose(red_w)[None], L, L, 1, 0))
    add_vec("red_b", jnp.tile(params["red_b"], L))

    # Conv1d stem (32 -> 64, k=3, p=1, s=1, bias=True).
    stem_w = jnp.transpose(params["stem_w"], (2, 1, 0))       # (K, Cin, Cout)
    add_mat("stem", _band1d(stem_w, L, L, 1, 1))
    add_vec("stem_b", jnp.tile(params["stem_b"], L))

    plan_blocks = []
    l_in = L
    for b, blk in enumerate(params["blocks"]):
        stride = blk["stride"]
        l_out = (l_in - 1) // stride + 1
        s1, b1 = _fold_bn(blk["bn1"])
        s2, b2 = _fold_bn(blk["bn2"])
        w1 = jnp.transpose(blk["w1"], (2, 1, 0))               # (3, C, C)
        w2 = jnp.transpose(blk["w2"], (2, 1, 0))
        add_vec(f"blk{b}_s1", jnp.tile(s1, l_in))
        add_vec(f"blk{b}_b1", jnp.tile(b1, l_in))
        add_mat(f"blk{b}_m1", _band1d(w1 * s2[None, None, :], l_in, l_out, stride, 1))
        add_vec(f"blk{b}_b2", jnp.tile(b2, l_out))
        add_mat(f"blk{b}_m2", _band1d(w2, l_out, l_out, 1, 1))
        has_down = "wd" in blk
        if has_down:
            sd, bd = _fold_bn(blk["bnd"])
            wd = jnp.transpose(blk["wd"], (2, 1, 0))           # (1, C, C)
            add_mat(f"blk{b}_md", _band1d(wd * sd[None, None, :], l_in, l_out, stride, 0))
            add_vec(f"blk{b}_bd", jnp.tile(bd, l_out))
        plan_blocks.append(dict(l_in=l_in, l_out=l_out, has_down=has_down))
        l_in = l_out

    # mean over the final length folded into the predictor Linear(64 -> 1):
    #   out = mean_l(h) @ Wp + bp  ==  sum over lanes of h * tile(Wp / L_f)  +  bp
    add_vec("pred_w", jnp.tile(params["pred_w"][0] / l_in, l_in))
    add_vec("pred_b", params["pred_b"])

    # Pack all per-lane vectors into one (n_vec, VLEN) f32 array (fewer operands).
    vlen = max(int(v.shape[0]) for _, v in vecs)
    vec_rows, vec_index = [], {}
    for name, v in vecs:
        vec_index[name] = (len(vec_rows), int(v.shape[0]))
        vec_rows.append(jnp.pad(v, (0, vlen - v.shape[0])))
    vec_pack = jnp.stack(vec_rows, axis=0)

    # Group the banded weights by shape -> a handful of stacked operand arrays.
    group_shapes, group_members, mat_index = [], {}, {}
    for name, m in mats:
        shp = tuple(m.shape)
        if shp not in group_members:
            group_members[shp] = []
            group_shapes.append(shp)
        mat_index[name] = (group_shapes.index(shp), len(group_members[shp]))
        group_members[shp].append(m)
    group_arrays = [jnp.stack(group_members[s], axis=0) for s in group_shapes]

    plan = dict(blocks=plan_blocks, mat_index=mat_index, vec_index=vec_index)
    return group_arrays, vec_pack, plan


# ------------------------------------------------------------------ the fused kernel

def _make_kernel(plan):
    mat_index = plan["mat_index"]
    vec_index = plan["vec_index"]
    blocks = plan["blocks"]

    def kernel(x_ref, vec_ref, *rest):
        out_ref = rest[-1]
        g_refs = rest[:-1]
        mm_dtype = g_refs[0].dtype

        def mat(name):
            g, i = mat_index[name]
            return g_refs[g][i]                         # (R, C) banded weights

        def vec(name):
            row, n = vec_index[name]
            return vec_ref[row:row + 1, :n]             # (1, n) f32

        def mm(act_f32, name):
            # One MXU matmul per conv/linear: taps, padding and stride are all baked
            # into the banded weight matrix.  f32 accumulation.
            return jnp.dot(act_f32.astype(mm_dtype), mat(name),
                           preferred_element_type=jnp.float32)

        x = x_ref[...].astype(jnp.float32)              # (B, L*E), batch stacked on M

        h = mm(x, "red") + vec("red_b")                 # reduction Linear  (B, L*32)
        h = mm(h, "stem") + vec("stem_b")               # Conv1d stem       (B, L*64)

        for b, blk in enumerate(blocks):
            t = jnp.maximum(h * vec(f"blk{b}_s1") + vec(f"blk{b}_b1"), 0.0)   # bn1+relu
            u = mm(t, f"blk{b}_m1") + vec(f"blk{b}_b2")                       # conv1(+bn2)
            v = jnp.maximum(u, 0.0)                                           # relu2
            w = mm(v, f"blk{b}_m2")                                           # conv2
            if blk["has_down"]:
                idn = mm(h, f"blk{b}_md") + vec(f"blk{b}_bd")                 # 1x1 (+bnd)
            else:
                idn = h
            h = w + idn

        # mean pooling is folded into the predictor weights; Linear(64->1) as a
        # per-lane multiply + cross-lane reduce (XLU), avoiding an N=1 matmul.
        out = jnp.sum(h * vec("pred_w"), axis=-1, keepdims=True) + vec("pred_b")
        out_ref[...] = out.astype(out_ref.dtype)

    return kernel


def rnafm_resnet_qt_forward(x, params, matmul_dtype=jnp.bfloat16):
    """x: (B, L, E) float32 -> (B, 1).  Entire forward in one pallas_call / one step."""
    B, L, E = x.shape
    group_arrays, vec_pack, plan = _build_folded(params, L, matmul_dtype)
    kernel = _make_kernel(plan)

    x_flat = x.reshape(B, L * E).astype(jnp.float32)    # lane-dense (l, c) -> l*C + c
    operands = [x_flat, vec_pack] + group_arrays

    # VMEM budget from actual operand sizes (allow double-buffering + headroom).
    operand_bytes = sum(int(a.size) * a.dtype.itemsize for a in operands) + B * 4
    vmem_limit = int(2 * operand_bytes) + (16 << 20)

    def full(a):
        nd = a.ndim
        return pl.BlockSpec(tuple(a.shape), lambda i, _nd=nd: (0,) * _nd)

    out = pl.pallas_call(
        kernel,
        out_shape=jax.ShapeDtypeStruct((B, 1), jnp.float32),
        grid_spec=pltpu.PrefetchScalarGridSpec(
            num_scalar_prefetch=0,
            grid=(1,),                                  # whole batch in one grid step
            in_specs=[pl.BlockSpec((B, L * E), lambda i: (0, 0)),
                      full(vec_pack)] + [full(g) for g in group_arrays],
            out_specs=pl.BlockSpec((B, 1), lambda i: (0, 0)),
        ),
        compiler_params=pltpu.CompilerParams(
            # Single step -> nothing to shard; for big batches, tile the batch
            # (multiple-of-8 rows) and mark this axis pltpu.CORE_PARALLEL on v7x.
            dimension_semantics=("arbitrary",),
            vmem_limit_bytes=vmem_limit,
        ),
    )(*operands)
    return out


# ------------------------------------------------------------------ pure-JAX reference

def _bn_ref(x_bcl, bn):
    gamma, beta, mean, var = bn[0], bn[1], bn[2], bn[3]
    inv = jax.lax.rsqrt(var + EPS)
    return (gamma[None, :, None] * (x_bcl - mean[None, :, None]) * inv[None, :, None]
            + beta[None, :, None])


def _conv1d_ref(x_bcl, w_oik, bias, stride, pad):
    k = w_oik.shape[-1]
    l_in = x_bcl.shape[-1]
    l_out = (l_in + 2 * pad - k) // stride + 1
    xp = jnp.pad(x_bcl, ((0, 0), (0, 0), (pad, pad)))
    out = jnp.zeros((x_bcl.shape[0], w_oik.shape[0], l_out), jnp.float32)
    for kk in range(k):
        xs = jax.lax.slice_in_dim(xp, kk, kk + (l_out - 1) * stride + 1, stride, axis=2)
        out = out + jnp.einsum("bcl,oc->bol", xs, w_oik[:, :, kk],
                               precision=jax.lax.Precision.HIGHEST)
    if bias is not None:
        out = out + bias[None, :, None]
    return out


def rnafm_resnet_qt_reference(x, params):
    h = jnp.einsum("ble,oe->blo", x, params["red_w"],
                   precision=jax.lax.Precision.HIGHEST) + params["red_b"]
    h = jnp.transpose(h, (0, 2, 1))                            # (B, 32, L)
    h = _conv1d_ref(h, params["stem_w"], params["stem_b"], 1, 1)
    for blk in params["blocks"]:
        stride = blk["stride"]
        t = jnp.maximum(_bn_ref(h, blk["bn1"]), 0.0)
        t = _conv1d_ref(t, blk["w1"], None, stride, 1)
        t = jnp.maximum(_bn_ref(t, blk["bn2"]), 0.0)
        t = _conv1d_ref(t, blk["w2"], None, 1, 1)
        if "wd" in blk:
            idn = _bn_ref(_conv1d_ref(h, blk["wd"], None, stride, 0), blk["bnd"])
        else:
            idn = h
        h = t + idn
    feat = jnp.mean(h, axis=2)                                 # (B, 64)
    return jnp.einsum("bc,oc->bo", feat, params["pred_w"],
                      precision=jax.lax.Precision.HIGHEST) + params["pred_b"]


# ------------------------------------------------------------------ demo / checks

if __name__ == "__main__":
    B, L, E = 2, 16, 160

    key = jax.random.PRNGKey(0)
    keys = jax.random.split(key, 40)
    ki = iter(keys)

    def normal(k, shape, scale=0.1):
        return scale * jax.random.normal(k, shape, jnp.float32)

    def make_bn(k, c):
        kg, kb, km, kv = jax.random.split(k, 4)
        gamma = 1.0 + 0.1 * jax.random.normal(kg, (c,), jnp.float32)
        beta = 0.1 * jax.random.normal(kb, (c,), jnp.float32)
        mean = 0.1 * jax.random.normal(km, (c,), jnp.float32)
        var = 0.5 + jnp.abs(jax.random.normal(kv, (c,), jnp.float32))
        return jnp.stack([gamma, beta, mean, var], axis=0)      # (4, c)

    x = jax.random.normal(next(ki), (B, L, E), jnp.float32)

    params = dict(
        red_w=normal(next(ki), (RED_PLANES, E)),                 # torch Linear (out, in)
        red_b=normal(next(ki), (RED_PLANES,)),
        stem_w=normal(next(ki), (MAIN_PLANES, RED_PLANES, 3)),   # torch Conv1d (out,in,k)
        stem_b=normal(next(ki), (MAIN_PLANES,)),
        pred_w=normal(next(ki), (1, MAIN_PLANES)),
        pred_b=normal(next(ki), (1,)),
        blocks=[],
    )
    for stride in STRIDES:
        blk = dict(
            stride=stride,
            bn1=make_bn(next(ki), MAIN_PLANES),
            w1=normal(next(ki), (MAIN_PLANES, MAIN_PLANES, 3)),
            bn2=make_bn(next(ki), MAIN_PLANES),
            w2=normal(next(ki), (MAIN_PLANES, MAIN_PLANES, 3)),
        )
        if stride > 1:                                           # downsample branch
            blk["wd"] = normal(next(ki), (MAIN_PLANES, MAIN_PLANES, 1))
            blk["bnd"] = make_bn(next(ki), MAIN_PLANES)
        params["blocks"].append(blk)

    ref = np.asarray(rnafm_resnet_qt_reference(x, params))

    # Structural check: f32 matmul path must match the f32 reference tightly.
    out_f32 = np.asarray(jax.block_until_ready(
        rnafm_resnet_qt_forward(x, params, matmul_dtype=jnp.float32)))
    np.testing.assert_allclose(out_f32, ref, rtol=5e-3, atol=5e-3)

    # Production path: bf16 MXU operands with f32 accumulation (loose sanity check;
    # the tight correctness proof is the f32 path above).
    out_bf16 = np.asarray(jax.block_until_ready(
        rnafm_resnet_qt_forward(x, params, matmul_dtype=jnp.bfloat16)))
    np.testing.assert_allclose(out_bf16, ref, rtol=0.1, atol=0.05)

    print("KERNEL_OK")
</pallas_src>

<mosaic_0001>
module attributes {stable_mosaic.version = 11 : i64} {
  func.func @kernel(%arg0: i32, %arg1: memref<2x2560xf32, #tpu.memory_space<vmem>>, %arg2: memref<25x1024xf32, #tpu.memory_space<vmem>>, %arg3: memref<1x2560x512xf32, #tpu.memory_space<vmem>>, %arg4: memref<1x512x1024xf32, #tpu.memory_space<vmem>>, %arg5: memref<2x1024x512xf32, #tpu.memory_space<vmem>>, %arg6: memref<3x512x512xf32, #tpu.memory_space<vmem>>, %arg7: memref<2x512x256xf32, #tpu.memory_space<vmem>>, %arg8: memref<3x256x256xf32, #tpu.memory_space<vmem>>, %arg9: memref<2x256x128xf32, #tpu.memory_space<vmem>>, %arg10: memref<3x128x128xf32, #tpu.memory_space<vmem>>, %arg11: memref<2x1xf32, #tpu.memory_space<vmem>>) attributes {dimension_semantics = [#tpu.dimension_semantics<arbitrary>], iteration_bounds = array<i64: 1>, scalar_prefetch = 0 : i64, scratch_operands = 0 : i64, tpu.core_type = #tpu.core_type<tc>, window_params = [{pipeline_mode = #tpu.pipeline_mode<synchronous>, transform_indices = @transform_0, window_bounds = array<i64: 2, 2560>}, {pipeline_mode = #tpu.pipeline_mode<synchronous>, transform_indices = @transform_1, window_bounds = array<i64: 25, 1024>}, {pipeline_mode = #tpu.pipeline_mode<synchronous>, transform_indices = @transform_2, window_bounds = array<i64: 1, 2560, 512>}, {pipeline_mode = #tpu.pipeline_mode<synchronous>, transform_indices = @transform_3, window_bounds = array<i64: 1, 512, 1024>}, {pipeline_mode = #tpu.pipeline_mode<synchronous>, transform_indices = @transform_4, window_bounds = array<i64: 2, 1024, 512>}, {pipeline_mode = #tpu.pipeline_mode<synchronous>, transform_indices = @transform_5, window_bounds = array<i64: 3, 512, 512>}, {pipeline_mode = #tpu.pipeline_mode<synchronous>, transform_indices = @transform_6, window_bounds = array<i64: 2, 512, 256>}, {pipeline_mode = #tpu.pipeline_mode<synchronous>, transform_indices = @transform_7, window_bounds = array<i64: 3, 256, 256>}, {pipeline_mode = #tpu.pipeline_mode<synchronous>, transform_indices = @transform_8, window_bounds = array<i64: 2, 256, 128>}, {pipeline_mode = #tpu.pipeline_mode<synchronous>, transform_indices = @transform_9, window_bounds = array<i64: 3, 128, 128>}, {pipeline_mode = #tpu.pipeline_mode<synchronous>, transform_indices = @transform_10, window_bounds = array<i64: 2, 1>}]} {
    %c0 = arith.constant 0 : index
    %c0_0 = arith.constant 0 : index
    %0 = vector.load %arg1[%c0, %c0_0] : memref<2x2560xf32, #tpu.memory_space<vmem>>, vector<2x2560xf32>
    %c0_1 = arith.constant 0 : index
    %c0_2 = arith.constant 0 : index
    %c0_3 = arith.constant 0 : index
    %1 = vector.load %arg3[%c0_1, %c0_2, %c0_3] : memref<1x2560x512xf32, #tpu.memory_space<vmem>>, vector<1x2560x512xf32>
    %2 = vector.shape_cast %1 : vector<1x2560x512xf32> to vector<2560x512xf32>
    %cst = arith.constant dense<0.000000e+00> : vector<2x512xf32>
    %3 = tpu.matmul %0, %2, %cst {dimension_numbers = #tpu.dot_dimension_numbers<[1], [0], [0], [1], [0, 0, 1, 1], [], []>} : vector<2x2560xf32>, vector<2560x512xf32>, vector<2x512xf32> -> vector<2x512xf32>
    %c0_4 = arith.constant 0 : index
    %c0_5 = arith.constant 0 : index
    %4 = vector.load %arg2[%c0_4, %c0_5] : memref<25x1024xf32, #tpu.memory_space<vmem>>, vector<1x512xf32>
    %5 = vector.broadcast %4 : vector<1x512xf32> to vector<2x512xf32>
    %6 = arith.addf %3, %5 : vector<2x512xf32>
    %c0_6 = arith.constant 0 : index
    %c0_7 = arith.constant 0 : index
    %c0_8 = arith.constant 0 : index
    %7 = vector.load %arg4[%c0_6, %c0_7, %c0_8] : memref<1x512x1024xf32, #tpu.memory_space<vmem>>, vector<1x512x1024xf32>
    %8 = vector.shape_cast %7 : vector<1x512x1024xf32> to vector<512x1024xf32>
    %cst_9 = arith.constant dense<0.000000e+00> : vector<2x1024xf32>
    %9 = tpu.matmul %6, %8, %cst_9 {dimension_numbers = #tpu.dot_dimension_numbers<[1], [0], [0], [1], [0, 0, 1, 1], [], []>} : vector<2x512xf32>, vector<512x1024xf32>, vector<2x1024xf32> -> vector<2x1024xf32>
    %c1 = arith.constant 1 : index
    %c0_10 = arith.constant 0 : index
    %10 = vector.load %arg2[%c1, %c0_10] : memref<25x1024xf32, #tpu.memory_space<vmem>>, vector<1x1024xf32>
    %11 = vector.broadcast %10 : vector<1x1024xf32> to vector<2x1024xf32>
    %12 = arith.addf %9, %11 : vector<2x1024xf32>
    %c2 = arith.constant 2 : index
    %c0_11 = arith.constant 0 : index
    %13 = vector.load %arg2[%c2, %c0_11] : memref<25x1024xf32, #tpu.memory_space<vmem>>, vector<1x1024xf32>
    %14 = vector.broadcast %13 : vector<1x1024xf32> to vector<2x1024xf32>
    %15 = arith.mulf %12, %14 : vector<2x1024xf32>
    %c3 = arith.constant 3 : index
    %c0_12 = arith.constant 0 : index
    %16 = vector.load %arg2[%c3, %c0_12] : memref<25x1024xf32, #tpu.memory_space<vmem>>, vector<1x1024xf32>
    %17 = vector.broadcast %16 : vector<1x1024xf32> to vector<2x1024xf32>
    %18 = arith.addf %15, %17 : vector<2x1024xf32>
    %cst_13 = arith.constant 0.000000e+00 : f32
    %19 = vector.broadcast %cst_13 : f32 to vector<2x1024xf32>
    %20 = arith.maximumf %18, %19 : vector<2x1024xf32>
    %c0_14 = arith.constant 0 : index
    %c0_15 = arith.constant 0 : index
    %c0_16 = arith.constant 0 : index
    %21 = vector.load %arg5[%c0_14, %c0_15, %c0_16] : memref<2x1024x512xf32, #tpu.memory_space<vmem>>, vector<1x1024x512xf32>
    %22 = vector.shape_cast %21 : vector<1x1024x512xf32> to vector<1024x512xf32>
    %cst_17 = arith.constant dense<0.000000e+00> : vector<2x512xf32>
    %23 = tpu.matmul %20, %22, %cst_17 {dimension_numbers = #tpu.dot_dimension_numbers<[1], [0], [0], [1], [0, 0, 1, 1], [], []>} : vector<2x1024xf32>, vector<1024x512xf32>, vector<2x512xf32> -> vector<2x512xf32>
    %c4 = arith.constant 4 : index
    %c0_18 = arith.constant 0 : index
    %24 = vector.load %arg2[%c4, %c0_18] : memref<25x1024xf32, #tpu.memory_space<vmem>>, vector<1x512xf32>
    %25 = vector.broadcast %24 : vector<1x512xf32> to vector<2x512xf32>
    %26 = arith.addf %23, %25 : vector<2x512xf32>
    %cst_19 = arith.constant 0.000000e+00 : f32
    %27 = vector.broadcast %cst_19 : f32 to vector<2x512xf32>
    %28 = arith.maximumf %26, %27 : vector<2x512xf32>
    %c0_20 = arith.constant 0 : index
    %c0_21 = arith.constant 0 : index
    %c0_22 = arith.constant 0 : index
    %29 = vector.load %arg6[%c0_20, %c0_21, %c0_22] : memref<3x512x512xf32, #tpu.memory_space<vmem>>, vector<1x512x512xf32>
    %30 = vector.shape_cast %29 : vector<1x512x512xf32> to vector<512x512xf32>
    %cst_23 = arith.constant dense<0.000000e+00> : vector<2x512xf32>
    %31 = tpu.matmul %28, %30, %cst_23 {dimension_numbers = #tpu.dot_dimension_numbers<[1], [0], [0], [1], [0, 0, 1, 1], [], []>} : vector<2x512xf32>, vector<512x512xf32>, vector<2x512xf32> -> vector<2x512xf32>
    %c1_24 = arith.constant 1 : index
    %c0_25 = arith.constant 0 : index
    %c0_26 = arith.constant 0 : index
    %32 = vector.load %arg5[%c1_24, %c0_25, %c0_26] : memref<2x1024x512xf32, #tpu.memory_space<vmem>>, vector<1x1024x512xf32>
    %33 = vector.shape_cast %32 : vector<1x1024x512xf32> to vector<1024x512xf32>
    %cst_27 = arith.constant dense<0.000000e+00> : vector<2x512xf32>
    %34 = tpu.matmul %12, %33, %cst_27 {dimension_numbers = #tpu.dot_dimension_numbers<[1], [0], [0], [1], [0, 0, 1, 1], [], []>} : vector<2x1024xf32>, vector<1024x512xf32>, vector<2x512xf32> -> vector<2x512xf32>
    %c5 = arith.constant 5 : index
    %c0_28 = arith.constant 0 : index
    %35 = vector.load %arg2[%c5, %c0_28] : memref<25x1024xf32, #tpu.memory_space<vmem>>, vector<1x512xf32>
    %36 = vector.broadcast %35 : vector<1x512xf32> to vector<2x512xf32>
    %37 = arith.addf %34, %36 : vector<2x512xf32>
    %38 = arith.addf %31, %37 : vector<2x512xf32>
    %c6 = arith.constant 6 : index
    %c0_29 = arith.constant 0 : index
    %39 = vector.load %arg2[%c6, %c0_29] : memref<25x1024xf32, #tpu.memory_space<vmem>>, vector<1x512xf32>
    %40 = vector.broadcast %39 : vector<1x512xf32> to vector<2x512xf32>
    %41 = arith.mulf %38, %40 : vector<2x512xf32>
    %c7 = arith.constant 7 : index
    %c0_30 = arith.constant 0 : index
    %42 = vector.load %arg2[%c7, %c0_30] : memref<25x1024xf32, #tpu.memory_space<vmem>>, vector<1x512xf32>
    %43 = vector.broadcast %42 : vector<1x512xf32> to vector<2x512xf32>
    %44 = arith.addf %41, %43 : vector<2x512xf32>
    %cst_31 = arith.constant 0.000000e+00 : f32
    %45 = vector.broadcast %cst_31 : f32 to vector<2x512xf32>
    %46 = arith.maximumf %44, %45 : vector<2x512xf32>
    %c1_32 = arith.constant 1 : index
    %c0_33 = arith.constant 0 : index
    %c0_34 = arith.constant 0 : index
    %47 = vector.load %arg6[%c1_32, %c0_33, %c0_34] : memref<3x512x512xf32, #tpu.memory_space<vmem>>, vector<1x512x512xf32>
    %48 = vector.shape_cast %47 : vector<1x512x512xf32> to vector<512x512xf32>
    %cst_35 = arith.constant dense<0.000000e+00> : vector<2x512xf32>
    %49 = tpu.matmul %46, %48, %cst_35 {dimension_numbers = #tpu.dot_dimension_numbers<[1], [0], [0], [1], [0, 0, 1, 1], [], []>} : vector<2x512xf32>, vector<512x512xf32>, vector<2x512xf32> -> vector<2x512xf32>
    %c8 = arith.constant 8 : index
    %c0_36 = arith.constant 0 : index
    %50 = vector.load %arg2[%c8, %c0_36] : memref<25x1024xf32, #tpu.memory_space<vmem>>, vector<1x512xf32>
    %51 = vector.broadcast %50 : vector<1x512xf32> to vector<2x512xf32>
    %52 = arith.addf %49, %51 : vector<2x512xf32>
    %cst_37 = arith.constant 0.000000e+00 : f32
    %53 = vector.broadcast %cst_37 : f32 to vector<2x512xf32>
    %54 = arith.maximumf %52, %53 : vector<2x512xf32>
    %c2_38 = arith.constant 2 : index
    %c0_39 = arith.constant 0 : index
    %c0_40 = arith.constant 0 : index
    %55 = vector.load %arg6[%c2_38, %c0_39, %c0_40] : memref<3x512x512xf32, #tpu.memory_space<vmem>>, vector<1x512x512xf32>
    %56 = vector.shape_cast %55 : vector<1x512x512xf32> to vector<512x512xf32>
    %cst_41 = arith.constant dense<0.000000e+00> : vector<2x512xf32>
    %57 = tpu.matmul %54, %56, %cst_41 {dimension_numbers = #tpu.dot_dimension_numbers<[1], [0], [0], [1], [0, 0, 1, 1], [], []>} : vector<2x512xf32>, vector<512x512xf32>, vector<2x512xf32> -> vector<2x512xf32>
    %58 = arith.addf %57, %38 : vector<2x512xf32>
    %c9 = arith.constant 9 : index
    %c0_42 = arith.constant 0 : index
    %59 = vector.load %arg2[%c9, %c0_42] : memref<25x1024xf32, #tpu.memory_space<vmem>>, vector<1x512xf32>
    %60 = vector.broadcast %59 : vector<1x512xf32> to vector<2x512xf32>
    %61 = arith.mulf %58, %60 : vector<2x512xf32>
    %c10 = arith.constant 10 : index
    %c0_43 = arith.constant 0 : index
    %62 = vector.load %arg2[%c10, %c0_43] : memref<25x1024xf32, #tpu.memory_space<vmem>>, vector<1x512xf32>
    %63 = vector.broadcast %62 : vector<1x512xf32> to vector<2x512xf32>
    %64 = arith.addf %61, %63 : vector<2x512xf32>
    %cst_44 = arith.constant 0.000000e+00 : f32
    %65 = vector.broadcast %cst_44 : f32 to vector<2x512xf32>
    %66 = arith.maximumf %64, %65 : vector<2x512xf32>
    %c0_45 = arith.constant 0 : index
    %c0_46 = arith.constant 0 : index
    %c0_47 = arith.constant 0 : index
    %67 = vector.load %arg7[%c0_45, %c0_46, %c0_47] : memref<2x512x256xf32, #tpu.memory_space<vmem>>, vector<1x512x256xf32>
    %68 = vector.shape_cast %67 : vector<1x512x256xf32> to vector<512x256xf32>
    %cst_48 = arith.constant dense<0.000000e+00> : vector<2x256xf32>
    %69 = tpu.matmul %66, %68, %cst_48 {dimension_numbers = #tpu.dot_dimension_numbers<[1], [0], [0], [1], [0, 0, 1, 1], [], []>} : vector<2x512xf32>, vector<512x256xf32>, vector<2x256xf32> -> vector<2x256xf32>
    %c11 = arith.constant 11 : index
    %c0_49 = arith.constant 0 : index
    %70 = vector.load %arg2[%c11, %c0_49] : memref<25x1024xf32, #tpu.memory_space<vmem>>, vector<1x256xf32>
    %71 = vector.broadcast %70 : vector<1x256xf32> to vector<2x256xf32>
    %72 = arith.addf %69, %71 : vector<2x256xf32>
    %cst_50 = arith.constant 0.000000e+00 : f32
    %73 = vector.broadcast %cst_50 : f32 to vector<2x256xf32>
    %74 = arith.maximumf %72, %73 : vector<2x256xf32>
    %c0_51 = arith.constant 0 : index
    %c0_52 = arith.constant 0 : index
    %c0_53 = arith.constant 0 : index
    %75 = vector.load %arg8[%c0_51, %c0_52, %c0_53] : memref<3x256x256xf32, #tpu.memory_space<vmem>>, vector<1x256x256xf32>
    %76 = vector.shape_cast %75 : vector<1x256x256xf32> to vector<256x256xf32>
    %cst_54 = arith.constant dense<0.000000e+00> : vector<2x256xf32>
    %77 = tpu.matmul %74, %76, %cst_54 {dimension_numbers = #tpu.dot_dimension_numbers<[1], [0], [0], [1], [0, 0, 1, 1], [], []>} : vector<2x256xf32>, vector<256x256xf32>, vector<2x256xf32> -> vector<2x256xf32>
    %c1_55 = arith.constant 1 : index
    %c0_56 = arith.constant 0 : index
    %c0_57 = arith.constant 0 : index
    %78 = vector.load %arg7[%c1_55, %c0_56, %c0_57] : memref<2x512x256xf32, #tpu.memory_space<vmem>>, vector<1x512x256xf32>
    %79 = vector.shape_cast %78 : vector<1x512x256xf32> to vector<512x256xf32>
    %cst_58 = arith.constant dense<0.000000e+00> : vector<2x256xf32>
    %80 = tpu.matmul %58, %79, %cst_58 {dimension_numbers = #tpu.dot_dimension_numbers<[1], [0], [0], [1], [0, 0, 1, 1], [], []>} : vector<2x512xf32>, vector<512x256xf32>, vector<2x256xf32> -> vector<2x256xf32>
    %c12 = arith.constant 12 : index
    %c0_59 = arith.constant 0 : index
    %81 = vector.load %arg2[%c12, %c0_59] : memref<25x1024xf32, #tpu.memory_space<vmem>>, vector<1x256xf32>
    %82 = vector.broadcast %81 : vector<1x256xf32> to vector<2x256xf32>
    %83 = arith.addf %80, %82 : vector<2x256xf32>
    %84 = arith.addf %77, %83 : vector<2x256xf32>
    %c13 = arith.constant 13 : index
    %c0_60 = arith.constant 0 : index
    %85 = vector.load %arg2[%c13, %c0_60] : memref<25x1024xf32, #tpu.memory_space<vmem>>, vector<1x256xf32>
    %86 = vector.broadcast %85 : vector<1x256xf32> to vector<2x256xf32>
    %87 = arith.mulf %84, %86 : vector<2x256xf32>
    %c14 = arith.constant 14 : index
    %c0_61 = arith.constant 0 : index
    %88 = vector.load %arg2[%c14, %c0_61] : memref<25x1024xf32, #tpu.memory_space<vmem>>, vector<1x256xf32>
    %89 = vector.broadcast %88 : vector<1x256xf32> to vector<2x256xf32>
    %90 = arith.addf %87, %89 : vector<2x256xf32>
    %cst_62 = arith.constant 0.000000e+00 : f32
    %91 = vector.broadcast %cst_62 : f32 to vector<2x256xf32>
    %92 = arith.maximumf %90, %91 : vector<2x256xf32>
    %c1_63 = arith.constant 1 : index
    %c0_64 = arith.constant 0 : index
    %c0_65 = arith.constant 0 : index
    %93 = vector.load %arg8[%c1_63, %c0_64, %c0_65] : memref<3x256x256xf32, #tpu.memory_space<vmem>>, vector<1x256x256xf32>
    %94 = vector.shape_cast %93 : vector<1x256x256xf32> to vector<256x256xf32>
    %cst_66 = arith.constant dense<0.000000e+00> : vector<2x256xf32>
    %95 = tpu.matmul %92, %94, %cst_66 {dimension_numbers = #tpu.dot_dimension_numbers<[1], [0], [0], [1], [0, 0, 1, 1], [], []>} : vector<2x256xf32>, vector<256x256xf32>, vector<2x256xf32> -> vector<2x256xf32>
    %c15 = arith.constant 15 : index
    %c0_67 = arith.constant 0 : index
    %96 = vector.load %arg2[%c15, %c0_67] : memref<25x1024xf32, #tpu.memory_space<vmem>>, vector<1x256xf32>
    %97 = vector.broadcast %96 : vector<1x256xf32> to vector<2x256xf32>
    %98 = arith.addf %95, %97 : vector<2x256xf32>
    %cst_68 = arith.constant 0.000000e+00 : f32
    %99 = vector.broadcast %cst_68 : f32 to vector<2x256xf32>
    %100 = arith.maximumf %98, %99 : vector<2x256xf32>
    %c2_69 = arith.constant 2 : index
    %c0_70 = arith.constant 0 : index
    %c0_71 = arith.constant 0 : index
    %101 = vector.load %arg8[%c2_69, %c0_70, %c0_71] : memref<3x256x256xf32, #tpu.memory_space<vmem>>, vector<1x256x256xf32>
    %102 = vector.shape_cast %101 : vector<1x256x256xf32> to vector<256x256xf32>
    %cst_72 = arith.constant dense<0.000000e+00> : vector<2x256xf32>
    %103 = tpu.matmul %100, %102, %cst_72 {dimension_numbers = #tpu.dot_dimension_numbers<[1], [0], [0], [1], [0, 0, 1, 1], [], []>} : vector<2x256xf32>, vector<256x256xf32>, vector<2x256xf32> -> vector<2x256xf32>
    %104 = arith.addf %103, %84 : vector<2x256xf32>
    %c16 = arith.constant 16 : index
    %c0_73 = arith.constant 0 : index
    %105 = vector.load %arg2[%c16, %c0_73] : memref<25x1024xf32, #tpu.memory_space<vmem>>, vector<1x256xf32>
    %106 = vector.broadcast %105 : vector<1x256xf32> to vector<2x256xf32>
    %107 = arith.mulf %104, %106 : vector<2x256xf32>
    %c17 = arith.constant 17 : index
    %c0_74 = arith.constant 0 : index
    %108 = vector.load %arg2[%c17, %c0_74] : memref<25x1024xf32, #tpu.memory_space<vmem>>, vector<1x256xf32>
    %109 = vector.broadcast %108 : vector<1x256xf32> to vector<2x256xf32>
    %110 = arith.addf %107, %109 : vector<2x256xf32>
    %cst_75 = arith.constant 0.000000e+00 : f32
    %111 = vector.broadcast %cst_75 : f32 to vector<2x256xf32>
    %112 = arith.maximumf %110, %111 : vector<2x256xf32>
    %c0_76 = arith.constant 0 : index
    %c0_77 = arith.constant 0 : index
    %c0_78 = arith.constant 0 : index
    %113 = vector.load %arg9[%c0_76, %c0_77, %c0_78] : memref<2x256x128xf32, #tpu.memory_space<vmem>>, vector<1x256x128xf32>
    %114 = vector.shape_cast %113 : vector<1x256x128xf32> to vector<256x128xf32>
    %cst_79 = arith.constant dense<0.000000e+00> : vector<2x128xf32>
    %115 = tpu.matmul %112, %114, %cst_79 {dimension_numbers = #tpu.dot_dimension_numbers<[1], [0], [0], [1], [0, 0, 1, 1], [], []>} : vector<2x256xf32>, vector<256x128xf32>, vector<2x128xf32> -> vector<2x128xf32>
    %c18 = arith.constant 18 : index
    %c0_80 = arith.constant 0 : index
    %116 = vector.load %arg2[%c18, %c0_80] : memref<25x1024xf32, #tpu.memory_space<vmem>>, vector<1x128xf32>
    %117 = vector.broadcast %116 : vector<1x128xf32> to vector<2x128xf32>
    %118 = arith.addf %115, %117 : vector<2x128xf32>
    %cst_81 = arith.constant 0.000000e+00 : f32
    %119 = vector.broadcast %cst_81 : f32 to vector<2x128xf32>
    %120 = arith.maximumf %118, %119 : vector<2x128xf32>
    %c0_82 = arith.constant 0 : index
    %c0_83 = arith.constant 0 : index
    %c0_84 = arith.constant 0 : index
    %121 = vector.load %arg10[%c0_82, %c0_83, %c0_84] : memref<3x128x128xf32, #tpu.memory_space<vmem>>, vector<1x128x128xf32>
    %122 = vector.shape_cast %121 : vector<1x128x128xf32> to vector<128x128xf32>
    %cst_85 = arith.constant dense<0.000000e+00> : vector<2x128xf32>
    %123 = tpu.matmul %120, %122, %cst_85 {dimension_numbers = #tpu.dot_dimension_numbers<[1], [0], [0], [1], [0, 0, 1, 1], [], []>} : vector<2x128xf32>, vector<128x128xf32>, vector<2x128xf32> -> vector<2x128xf32>
    %c1_86 = arith.constant 1 : index
    %c0_87 = arith.constant 0 : index
    %c0_88 = arith.constant 0 : index
    %124 = vector.load %arg9[%c1_86, %c0_87, %c0_88] : memref<2x256x128xf32, #tpu.memory_space<vmem>>, vector<1x256x128xf32>
    %125 = vector.shape_cast %124 : vector<1x256x128xf32> to vector<256x128xf32>
    %cst_89 = arith.constant dense<0.000000e+00> : vector<2x128xf32>
    %126 = tpu.matmul %104, %125, %cst_89 {dimension_numbers = #tpu.dot_dimension_numbers<[1], [0], [0], [1], [0, 0, 1, 1], [], []>} : vector<2x256xf32>, vector<256x128xf32>, vector<2x128xf32> -> vector<2x128xf32>
    %c19 = arith.constant 19 : index
    %c0_90 = arith.constant 0 : index
    %127 = vector.load %arg2[%c19, %c0_90] : memref<25x1024xf32, #tpu.memory_space<vmem>>, vector<1x128xf32>
    %128 = vector.broadcast %127 : vector<1x128xf32> to vector<2x128xf32>
    %129 = arith.addf %126, %128 : vector<2x128xf32>
    %130 = arith.addf %123, %129 : vector<2x128xf32>
    %c20 = arith.constant 20 : index
    %c0_91 = arith.constant 0 : index
    %131 = vector.load %arg2[%c20, %c0_91] : memref<25x1024xf32, #tpu.memory_space<vmem>>, vector<1x128xf32>
    %132 = vector.broadcast %131 : vector<1x128xf32> to vector<2x128xf32>
    %133 = arith.mulf %130, %132 : vector<2x128xf32>
    %c21 = arith.constant 21 : index
    %c0_92 = arith.constant 0 : index
    %134 = vector.load %arg2[%c21, %c0_92] : memref<25x1024xf32, #tpu.memory_space<vmem>>, vector<1x128xf32>
    %135 = vector.broadcast %134 : vector<1x128xf32> to vector<2x128xf32>
    %136 = arith.addf %133, %135 : vector<2x128xf32>
    %cst_93 = arith.constant 0.000000e+00 : f32
    %137 = vector.broadcast %cst_93 : f32 to vector<2x128xf32>
    %138 = arith.maximumf %136, %137 : vector<2x128xf32>
    %c1_94 = arith.constant 1 : index
    %c0_95 = arith.constant 0 : index
    %c0_96 = arith.constant 0 : index
    %139 = vector.load %arg10[%c1_94, %c0_95, %c0_96] : memref<3x128x128xf32, #tpu.memory_space<vmem>>, vector<1x128x128xf32>
    %140 = vector.shape_cast %139 : vector<1x128x128xf32> to vector<128x128xf32>
    %cst_97 = arith.constant dense<0.000000e+00> : vector<2x128xf32>
    %141 = tpu.matmul %138, %140, %cst_97 {dimension_numbers = #tpu.dot_dimension_numbers<[1], [0], [0], [1], [0, 0, 1, 1], [], []>} : vector<2x128xf32>, vector<128x128xf32>, vector<2x128xf32> -> vector<2x128xf32>
    %c22 = arith.constant 22 : index
    %c0_98 = arith.constant 0 : index
    %142 = vector.load %arg2[%c22, %c0_98] : memref<25x1024xf32, #tpu.memory_space<vmem>>, vector<1x128xf32>
    %143 = vector.broadcast %142 : vector<1x128xf32> to vector<2x128xf32>
    %144 = arith.addf %141, %143 : vector<2x128xf32>
    %cst_99 = arith.constant 0.000000e+00 : f32
    %145 = vector.broadcast %cst_99 : f32 to vector<2x128xf32>
    %146 = arith.maximumf %144, %145 : vector<2x128xf32>
    %c2_100 = arith.constant 2 : index
    %c0_101 = arith.constant 0 : index
    %c0_102 = arith.constant 0 : index
    %147 = vector.load %arg10[%c2_100, %c0_101, %c0_102] : memref<3x128x128xf32, #tpu.memory_space<vmem>>, vector<1x128x128xf32>
    %148 = vector.shape_cast %147 : vector<1x128x128xf32> to vector<128x128xf32>
    %cst_103 = arith.constant dense<0.000000e+00> : vector<2x128xf32>
    %149 = tpu.matmul %146, %148, %cst_103 {dimension_numbers = #tpu.dot_dimension_numbers<[1], [0], [0], [1], [0, 0, 1, 1], [], []>} : vector<2x128xf32>, vector<128x128xf32>, vector<2x128xf32> -> vector<2x128xf32>
    %150 = arith.addf %149, %130 : vector<2x128xf32>
    %c23 = arith.constant 23 : index
    %c0_104 = arith.constant 0 : index
    %151 = vector.load %arg2[%c23, %c0_104] : memref<25x1024xf32, #tpu.memory_space<vmem>>, vector<1x128xf32>
    %152 = vector.broadcast %151 : vector<1x128xf32> to vector<2x128xf32>
    %153 = arith.mulf %150, %152 : vector<2x128xf32>
    %cst_105 = arith.constant dense<0.000000e+00> : vector<2xf32>
    %154 = vector.multi_reduction <add>, %153, %cst_105 [1] : vector<2x128xf32> to vector<2xf32>
    %155 = vector.shape_cast %154 : vector<2xf32> to vector<2x1xf32>
    %c24 = arith.constant 24 : index
    %c0_106 = arith.constant 0 : index
    %156 = vector.load %arg2[%c24, %c0_106] : memref<25x1024xf32, #tpu.memory_space<vmem>>, vector<1x1xf32>
    %157 = vector.broadcast %156 : vector<1x1xf32> to vector<2x1xf32>
    %158 = arith.addf %155, %157 : vector<2x1xf32>
    %c0_107 = arith.constant 0 : index
    %c0_108 = arith.constant 0 : index
    %159 = vector.load %arg11[%c0_107, %c0_108] : memref<2x1xf32, #tpu.memory_space<vmem>>, vector<2x1xf32>
    tpu.vector_store %arg11[%c0_107, %c0_108], %158 {strides = array<i32>} : memref<2x1xf32, #tpu.memory_space<vmem>>, vector<2x1xf32>,
    return
  }
  func.func @transform_0(%arg0: i32) -> (i32, i32) {
    %c0_i32 = arith.constant 0 : i32
    %c0_i32_0 = arith.constant 0 : i32
    %c0_i32_1 = arith.constant 0 : i32
    return %c0_i32, %c0_i32_0 : i32, i32
  }
  func.func @transform_1(%arg0: i32) -> (i32, i32) {
    %c0_i32 = arith.constant 0 : i32
    %c0_i32_0 = arith.constant 0 : i32
    %c0_i32_1 = arith.constant 0 : i32
    return %c0_i32, %c0_i32_0 : i32, i32
  }
  func.func @transform_2(%arg0: i32) -> (i32, i32, i32) {
    %c0_i32 = arith.constant 0 : i32
    %c0_i32_0 = arith.constant 0 : i32
    %c0_i32_1 = arith.constant 0 : i32
    %c0_i32_2 = arith.constant 0 : i32
    return %c0_i32, %c0_i32_0, %c0_i32_1 : i32, i32, i32
  }
  func.func @transform_3(%arg0: i32) -> (i32, i32, i32) {
    %c0_i32 = arith.constant 0 : i32
    %c0_i32_0 = arith.constant 0 : i32
    %c0_i32_1 = arith.constant 0 : i32
    %c0_i32_2 = arith.constant 0 : i32
    return %c0_i32, %c0_i32_0, %c0_i32_1 : i32, i32, i32
  }
  func.func @transform_4(%arg0: i32) -> (i32, i32, i32) {
    %c0_i32 = arith.constant 0 : i32
    %c0_i32_0 = arith.constant 0 : i32
    %c0_i32_1 = arith.constant 0 : i32
    %c0_i32_2 = arith.constant 0 : i32
    return %c0_i32, %c0_i32_0, %c0_i32_1 : i32, i32, i32
  }
  func.func @transform_5(%arg0: i32) -> (i32, i32, i32) {
    %c0_i32 = arith.constant 0 : i32
    %c0_i32_0 = arith.constant 0 : i32
    %c0_i32_1 = arith.constant 0 : i32
    %c0_i32_2 = arith.constant 0 : i32
    return %c0_i32, %c0_i32_0, %c0_i32_1 : i32, i32, i32
  }
  func.func @transform_6(%arg0: i32) -> (i32, i32, i32) {
    %c0_i32 = arith.constant 0 : i32
    %c0_i32_0 = arith.constant 0 : i32
    %c0_i32_1 = arith.constant 0 : i32
    %c0_i32_2 = arith.constant 0 : i32
    return %c0_i32, %c0_i32_0, %c0_i32_1 : i32, i32, i32
  }
  func.func @transform_7(%arg0: i32) -> (i32, i32, i32) {
    %c0_i32 = arith.constant 0 : i32
    %c0_i32_0 = arith.constant 0 : i32
    %c0_i32_1 = arith.constant 0 : i32
    %c0_i32_2 = arith.constant 0 : i32
    return %c0_i32, %c0_i32_0, %c0_i32_1 : i32, i32, i32
  }
  func.func @transform_8(%arg0: i32) -> (i32, i32, i32) {
    %c0_i32 = arith.constant 0 : i32
    %c0_i32_0 = arith.constant 0 : i32
    %c0_i32_1 = arith.constant 0 : i32
    %c0_i32_2 = arith.constant 0 : i32
    return %c0_i32, %c0_i32_0, %c0_i32_1 : i32, i32, i32
  }
  func.func @transform_9(%arg0: i32) -> (i32, i32, i32) {
    %c0_i32 = arith.constant 0 : i32
    %c0_i32_0 = arith.constant 0 : i32
    %c0_i32_1 = arith.constant 0 : i32
    %c0_i32_2 = arith.constant 0 : i32
    return %c0_i32, %c0_i32_0, %c0_i32_1 : i32, i32, i32
  }
  func.func @transform_10(%arg0: i32) -> (i32, i32) {
    %c0_i32 = arith.constant 0 : i32
    %c0_i32_0 = arith.constant 0 : i32
    %c0_i32_1 = arith.constant 0 : i32
    return %c0_i32, %c0_i32_0 : i32, i32
  }
}

</mosaic_0001>

<llo_original>
// kernel: tpu_custom_call.1
$region0: #{tpu_custom_call.1}
  #allocation0 [shape = 'u32[]', space=smem, size = 0x4, offset = 0x4, fixed_abs, tag = 'smem constant byte address 0x4 - core index']
  #allocation1 [shape = 'u32[144,128]{1,0:T(1,128)}', space=vmem, size = 0x12000, scoped, tag = 'internal scratch']
  %s0 = inlined_call_operand.hbm [shape: f32[2,2560], index: 0, kind: input, shape index: {}]
  %s1 = inlined_call_operand.hbm [shape: f32[25,1024], index: 1, kind: input, shape index: {}]
  %s2 = inlined_call_operand.hbm [shape: f32[1,2560,512], index: 2, kind: input, shape index: {}]
  %s3 = inlined_call_operand.hbm [shape: f32[1,512,1024], index: 3, kind: input, shape index: {}]
  %s4 = inlined_call_operand.hbm [shape: f32[2,1024,512], index: 4, kind: input, shape index: {}]
  %s5 = inlined_call_operand.hbm [shape: f32[3,512,512], index: 5, kind: input, shape index: {}]
  %s6 = inlined_call_operand.hbm [shape: f32[2,512,256], index: 6, kind: input, shape index: {}]
  %s7 = inlined_call_operand.hbm [shape: f32[3,256,256], index: 7, kind: input, shape index: {}]
  %s8 = inlined_call_operand.hbm [shape: f32[2,256,128], index: 8, kind: input, shape index: {}]
  %s9 = inlined_call_operand.hbm [shape: f32[3,128,128], index: 9, kind: input, shape index: {}]
  %s10 = inlined_call_operand.vmem [shape: f32[2,1], index: 10, kind: output, shape index: {}]
  %s11 = sld [smem:[#allocation0]]
  $region90: #{tpu_custom_call.1} parent=0
    _
  %s13 = ssub.s32 1, %s11
  %s14 = scalar_select 0, %s13, %s11
  $region1: #{tpu_custom_call.1} parent=0
    #allocation2 [shape = 'u8[20480]{0}', space=vmem, size = 0x5000, scoped, tag = 'input window, operand 0, single buffered']
    #allocation3 [shape = 's32[1]{0}', space=sflag, size = 0x4, scoped, tag = 'scoped memory for tpu_custom_call.1']
    #allocation4 [shape = 'u8[131072]{0}', space=vmem, size = 0x20000, scoped, tag = 'input window, operand 1, single buffered']
    #allocation5 [shape = 's32[1]{0}', space=sflag, size = 0x4, scoped, tag = 'scoped memory for tpu_custom_call.1']
    #allocation6 [shape = 'u8[5242880]{0}', space=vmem, size = 0x500000, scoped, tag = 'input window, operand 2, single buffered']
    #allocation7 [shape = 'u8[2097152]{0}', space=vmem, size = 0x200000, scoped, tag = 'input window, operand 3, single buffered']
    #allocation8 [shape = 's32[1]{0}', space=sflag, size = 0x4, scoped, tag = 'scoped memory for tpu_custom_call.1']
    #allocation9 [shape = 'u8[4194304]{0}', space=vmem, size = 0x400000, scoped, tag = 'input window, operand 4, single buffered']
    #allocation10 [shape = 'u8[3145728]{0}', space=vmem, size = 0x300000, scoped, tag = 'input window, operand 5, single buffered']
    #allocation11 [shape = 's32[1]{0}', space=sflag, size = 0x4, scoped, tag = 'scoped memory for tpu_custom_call.1']
    #allocation12 [shape = 'u8[1048576]{0}', space=vmem, size = 0x100000, scoped, tag = 'input window, operand 6, single buffered']
    #allocation13 [shape = 'u8[786432]{0}', space=vmem, size = 0xc0000, scoped, tag = 'input window, operand 7, single buffered']
    #allocation14 [shape = 's32[1]{0}', space=sflag, size = 0x4, scoped, tag = 'scoped memory for tpu_custom_call.1']
    #allocation15 [shape = 'u8[262144]{0}', space=vmem, size = 0x40000, scoped, tag = 'input window, operand 8, single buffered']
    #allocation16 [shape = 'u8[196608]{0}', space=vmem, size = 0x30000, scoped, tag = 'input window, operand 9, single buffered']
    #allocation17 [shape = 's32[1]{0}', space=sflag, size = 0x4, scoped, tag = 'scoped memory for tpu_custom_call.1']
    %15 = vsyncpa [#allocation3], 0
    %16 = vsyncpa [#allocation5], 0
    %17 = vsyncpa [#allocation8], 0
    %18 = vsyncpa [#allocation11], 0
    %19 = vsyncpa [#allocation14], 0
    %20 = vsyncpa [#allocation17], 0
    // Predicated region
    $region2: #{tpu_custom_call.1} parent=1 // pred_check
      _
    $region3: #{tpu_custom_call.1} parent=1 // pred_check_branch
      %22 = sbr.rel (0) target = $region5
    $region4: #{tpu_custom_call.1} parent=1 // pred_region
      %s24 = ssub.s32 640, 640
      %25 = vsyncadd [#allocation3], %s24
      %s27 = sshll.u32 [#allocation2], 4
      %s28 = int_to_ptr.vmem [resolvable:$true] %s27
      %30 = dma.hbm_to_vmem [thread:$0]  %s0, 640, %s28, [#allocation3]
    $region5: #{tpu_custom_call.1} parent=1 // pred_fallthru
      _
    // Predicated region
    $region6: #{tpu_custom_call.1} parent=1 // pred_check
      _
    $region7: #{tpu_custom_call.1} parent=1 // pred_check_branch
      %32 = sbr.rel (0) target = $region9
    $region8: #{tpu_custom_call.1} parent=1 // pred_region
      %s34 = ssub.s32 4096, 4096
      %35 = vsyncadd [#allocation5], %s34
      %s36 = sshll.u32 [#allocation4], 4
      %s37 = int_to_ptr.vmem [resolvable:$true] %s36
      %42 = dma.hbm_to_vmem [thread:$0]  %s1, 4096, %s37, [#allocation5], 1024, 1024, 64
    $region9: #{tpu_custom_call.1} parent=1 // pred_fallthru
      _
    // Predicated region
    $region10: #{tpu_custom_call.1} parent=1 // pred_check
      _
    $region11: #{tpu_custom_call.1} parent=1 // pred_check_branch
      %44 = sbr.rel (0) target = $region13
    $region12: #{tpu_custom_call.1} parent=1 // pred_region
      %s46 = ssub.s32 163840, 163840
      %47 = vsyncadd [#allocation5], %s46
      %s48 = sshll.u32 [#allocation6], 4
      %s49 = int_to_ptr.vmem [resolvable:$true] %s48
      %54 = dma.hbm_to_vmem [thread:$0]  %s2, 163840, %s49, [#allocation5], 512, 512, 32
    $region13: #{tpu_custom_call.1} parent=1 // pred_fallthru
      _
    // Predicated region
    $region14: #{tpu_custom_call.1} parent=1 // pred_check
      _
    $region15: #{tpu_custom_call.1} parent=1 // pred_check_branch
      %56 = sbr.rel (0) target = $region17
    $region16: #{tpu_custom_call.1} parent=1 // pred_region
      %s58 = ssub.s32 65536, 65536
      %59 = vsyncadd [#allocation8], %s58
      %s60 = sshll.u32 [#allocation7], 4
      %s61 = int_to_ptr.vmem [resolvable:$true] %s60
      %66 = dma.hbm_to_vmem [thread:$0]  %s3, 65536, %s61, [#allocation8], 1024, 1024, 64
    $region17: #{tpu_custom_call.1} parent=1 // pred_fallthru
      _
    // Predicated region
    $region18: #{tpu_custom_call.1} parent=1 // pred_check
      _
    $region19: #{tpu_custom_call.1} parent=1 // pred_check_branch
      %68 = sbr.rel (0) target = $region21
    $region20: #{tpu_custom_call.1} parent=1 // pred_region
      %s70 = ssub.s32 131072, 131072
      %71 = vsyncadd [#allocation8], %s70
      %s72 = sshll.u32 [#allocation9], 4
      %s73 = int_to_ptr.vmem [resolvable:$true] %s72
      %78 = dma.hbm_to_vmem [thread:$0]  %s4, 131072, %s73, [#allocation8], 512, 512, 32
    $region21: #{tpu_custom_call.1} parent=1 // pred_fallthru
      _
    // Predicated region
    $region22: #{tpu_custom_call.1} parent=1 // pred_check
      _
    $region23: #{tpu_custom_call.1} parent=1 // pred_check_branch
      %80 = sbr.rel (0) target = $region25
    $region24: #{tpu_custom_call.1} parent=1 // pred_region
      %s82 = ssub.s32 98304, 98304
      %83 = vsyncadd [#allocation11], %s82
      %s84 = sshll.u32 [#allocation10], 4
      %s85 = int_to_ptr.vmem [resolvable:$true] %s84
      %90 = dma.hbm_to_vmem [thread:$0]  %s5, 98304, %s85, [#allocation11], 512, 512, 32
    $region25: #{tpu_custom_call.1} parent=1 // pred_fallthru
      _
    // Predicated region
    $region26: #{tpu_custom_call.1} parent=1 // pred_check
      _
    $region27: #{tpu_custom_call.1} parent=1 // pred_check_branch
      %92 = sbr.rel (0) target = $region29
    $region28: #{tpu_custom_call.1} parent=1 // pred_region
      %s94 = ssub.s32 32768, 32768
      %95 = vsyncadd [#allocation11], %s94
      %s96 = sshll.u32 [#allocation12], 4
      %s97 = int_to_ptr.vmem [resolvable:$true] %s96
      %102 = dma.hbm_to_vmem [thread:$0]  %s6, 32768, %s97, [#allocation11], 256, 256, 16
    $region29: #{tpu_custom_call.1} parent=1 // pred_fallthru
      _
    // Predicated region
    $region30: #{tpu_custom_call.1} parent=1 // pred_check
      _
    $region31: #{tpu_custom_call.1} parent=1 // pred_check_branch
      %104 = sbr.rel (0) target = $region33
    $region32: #{tpu_custom_call.1} parent=1 // pred_region
      %s106 = ssub.s32 24576, 24576
      %107 = vsyncadd [#allocation14], %s106
      %s108 = sshll.u32 [#allocation13], 4
      %s109 = int_to_ptr.vmem [resolvable:$true] %s108
      %114 = dma.hbm_to_vmem [thread:$0]  %s7, 24576, %s109, [#allocation14], 256, 256, 16
    $region33: #{tpu_custom_call.1} parent=1 // pred_fallthru
      _
    // Predicated region
    $region34: #{tpu_custom_call.1} parent=1 // pred_check
      _
    $region35: #{tpu_custom_call.1} parent=1 // pred_check_branch
      %116 = sbr.rel (0) target = $region37
    $region36: #{tpu_custom_call.1} parent=1 // pred_region
      %s118 = ssub.s32 8192, 8192
      %119 = vsyncadd [#allocation14], %s118
      %s120 = sshll.u32 [#allocation15], 4
      %s121 = int_to_ptr.vmem [resolvable:$true] %s120
      %126 = dma.hbm_to_vmem [thread:$0]  %s8, 8192, %s121, [#allocation14], 128, 128, 8
    $region37: #{tpu_custom_call.1} parent=1 // pred_fallthru
      _
    // Predicated region
    $region38: #{tpu_custom_call.1} parent=1 // pred_check
      _
    $region39: #{tpu_custom_call.1} parent=1 // pred_check_branch
      %128 = sbr.rel (0) target = $region41
    $region40: #{tpu_custom_call.1} parent=1 // pred_region
      %s130 = ssub.s32 6144, 6144
      %131 = vsyncadd [#allocation17], %s130
      %s132 = sshll.u32 [#allocation16], 4
      %s133 = int_to_ptr.vmem [resolvable:$true] %s132
      %138 = dma.hbm_to_vmem [thread:$0]  %s9, 6144, %s133, [#allocation17], 128, 128, 8
    $region41: #{tpu_custom_call.1} parent=1 // pred_fallthru
      _
    // Predicated region
    $region42: #{tpu_custom_call.1} parent=1 // pred_check
      _
    $region43: #{tpu_custom_call.1} parent=1 // pred_check_branch
      %140 = sbr.rel (0) target = $region45
    $region44: #{tpu_custom_call.1} parent=1 // pred_region
      %141 = dma.done [#allocation3], 640
    $region45: #{tpu_custom_call.1} parent=1 // pred_fallthru
      _
    // Predicated region
    $region46: #{tpu_custom_call.1} parent=1 // pred_check
      _
    $region47: #{tpu_custom_call.1} parent=1 // pred_check_branch
      %143 = sbr.rel (0) target = $region49
    $region48: #{tpu_custom_call.1} parent=1 // pred_region
      %144 = dma.done [#allocation5], 4096
    $region49: #{tpu_custom_call.1} parent=1 // pred_fallthru
      _
    // Predicated region
    $region50: #{tpu_custom_call.1} parent=1 // pred_check
      _
    $region51: #{tpu_custom_call.1} parent=1 // pred_check_branch
      %146 = sbr.rel (0) target = $region53
    $region52: #{tpu_custom_call.1} parent=1 // pred_region
      %147 = dma.done [#allocation5], 163840
    $region53: #{tpu_custom_call.1} parent=1 // pred_fallthru
      _
    // Predicated region
    $region54: #{tpu_custom_call.1} parent=1 // pred_check
      _
    $region55: #{tpu_custom_call.1} parent=1 // pred_check_branch
      %149 = sbr.rel (0) target = $region57
    $region56: #{tpu_custom_call.1} parent=1 // pred_region
      %150 = dma.done [#allocation8], 65536
    $region57: #{tpu_custom_call.1} parent=1 // pred_fallthru
      _
    // Predicated region
    $region58: #{tpu_custom_call.1} parent=1 // pred_check
      _
    $region59: #{tpu_custom_call.1} parent=1 // pred_check_branch
      %152 = sbr.rel (0) target = $region61
    $region60: #{tpu_custom_call.1} parent=1 // pred_region
      %153 = dma.done [#allocation8], 131072
    $region61: #{tpu_custom_call.1} parent=1 // pred_fallthru
      _
    // Predicated region
    $region62: #{tpu_custom_call.1} parent=1 // pred_check
      _
    $region63: #{tpu_custom_call.1} parent=1 // pred_check_branch
      %155 = sbr.rel (0) target = $region65
    $region64: #{tpu_custom_call.1} parent=1 // pred_region
      %156 = dma.done [#allocation11], 98304
    $region65: #{tpu_custom_call.1} parent=1 // pred_fallthru
      _
    // Predicated region
    $region66: #{tpu_custom_call.1} parent=1 // pred_check
      _
    $region67: #{tpu_custom_call.1} parent=1 // pred_check_branch
      %158 = sbr.rel (0) target = $region69
    $region68: #{tpu_custom_call.1} parent=1 // pred_region
      %159 = dma.done [#allocation11], 32768
    $region69: #{tpu_custom_call.1} parent=1 // pred_fallthru
      _
    // Predicated region
    $region70: #{tpu_custom_call.1} parent=1 // pred_check
      _
    $region71: #{tpu_custom_call.1} parent=1 // pred_check_branch
      %161 = sbr.rel (0) target = $region73
    $region72: #{tpu_custom_call.1} parent=1 // pred_region
      %162 = dma.done [#allocation14], 24576
    $region73: #{tpu_custom_call.1} parent=1 // pred_fallthru
      _
    // Predicated region
    $region74: #{tpu_custom_call.1} parent=1 // pred_check
      _
    $region75: #{tpu_custom_call.1} parent=1 // pred_check_branch
      %164 = sbr.rel (0) target = $region77
    $region76: #{tpu_custom_call.1} parent=1 // pred_region
      %165 = dma.done [#allocation14], 8192
    $region77: #{tpu_custom_call.1} parent=1 // pred_fallthru
      _
    // Predicated region
    $region78: #{tpu_custom_call.1} parent=1 // pred_check
      _
    $region79: #{tpu_custom_call.1} parent=1 // pred_check_branch
      %167 = sbr.rel (0) target = $region81
    $region80: #{tpu_custom_call.1} parent=1 // pred_region
      %168 = dma.done [#allocation17], 6144
    $region81: #{tpu_custom_call.1} parent=1 // pred_fallthru
      _
    %v169 = vld [vmem:[#allocation2] sm:$0xff]
    %v170 = vld [vmem:[#allocation2 + $0x8] sm:$0xff]
    %v171 = vld [vmem:[#allocation2 + $0x10] sm:$0xff]
    %v172 = vld [vmem:[#allocation2 + $0x18] sm:$0xff]
    %v173 = vld [vmem:[#allocation2 + $0x20] sm:$0xff]
    %v174 = vld [vmem:[#allocation6] sm:$0xff]
    %v175 = vld [vmem:[#allocation6 + $0x8] sm:$0xff]
    %v176 = vld [vmem:[#allocation6 + $0x10] sm:$0xff]
    %v177 = vld [vmem:[#allocation6 + $0x18] sm:$0xff]
    %v178 = vld [vmem:[#allocation6 + $0x20] sm:$0xff]
    %v179 = vld [vmem:[#allocation6 + $0x28] sm:$0xff]
    %v180 = vld [vmem:[#allocation6 + $0x30] sm:$0xff]
    %v181 = vld [vmem:[#allocation6 + $0x38] sm:$0xff]
    %v182 = vld [vmem:[#allocation6 + $0x40] sm:$0xff]
    %v183 = vld [vmem:[#allocation6 + $0x48] sm:$0xff]
    %v184 = vld [vmem:[#allocation6 + $0x50] sm:$0xff]
    %v185 = vld [vmem:[#allocation6 + $0x58] sm:$0xff]
    %v186 = vld [vmem:[#allocation6 + $0x60] sm:$0xff]
    %v187 = vld [vmem:[#allocation6 + $0x68] sm:$0xff]
    %v188 = vld [vmem:[#allocation6 + $0x70] sm:$0xff]
    %v189 = vld [vmem:[#allocation6 + $0x78] sm:$0xff]
    %v190 = vld [vmem:[#allocation6 + $0x80] sm:$0xff]
    %v191 = vld [vmem:[#allocation6 + $0x88] sm:$0xff]
    %v192 = vld [vmem:[#allocation6 + $0x90] sm:$0xff]
    %v193 = vld [vmem:[#allocation6 + $0x98] sm:$0xff]
    %v194 = vld [vmem:[#allocation6 + $0xa0] sm:$0xff]
    %v195 = vld [vmem:[#allocation6 + $0xa8] sm:$0xff]
    %v196 = vld [vmem:[#allocation6 + $0xb0] sm:$0xff]
    %v197 = vld [vmem:[#allocation6 + $0xb8] sm:$0xff]
    %v198 = vld [vmem:[#allocation6 + $0xc0] sm:$0xff]
    %v199 = vld [vmem:[#allocation6 + $0xc8] sm:$0xff]
    %v200 = vld [vmem:[#allocation6 + $0xd0] sm:$0xff]
    %v201 = vld [vmem:[#allocation6 + $0xd8] sm:$0xff]
    %v202 = vld [vmem:[#allocation6 + $0xe0] sm:$0xff]
    %v203 = vld [vmem:[#allocation6 + $0xe8] sm:$0xff]
    %v204 = vld [vmem:[#allocation6 + $0xf0] sm:$0xff]
    %v205 = vld [vmem:[#allocation6 + $0xf8] sm:$0xff]
    %v206 = vld [vmem:[#allocation6 + $0x100] sm:$0xff]
    %v207 = vld [vmem:[#allocation6 + $0x108] sm:$0xff]
    %v208 = vld [vmem:[#allocation6 + $0x110] sm:$0xff]
    %v209 = vld [vmem:[#allocation6 + $0x118] sm:$0xff]
    %v210 = vld [vmem:[#allocation6 + $0x120] sm:$0xff]
    %v211 = vld [vmem:[#allocation6 + $0x128] sm:$0xff]
    %v212 = vld [vmem:[#allocation6 + $0x130] sm:$0xff]
    %v213 = vld [vmem:[#allocation6 + $0x138] sm:$0xff]
    %v214 = vld [vmem:[#allocation6 + $0x140] sm:$0xff]
    %v215 = vld [vmem:[#allocation6 + $0x148] sm:$0xff]
    %v216 = vld [vmem:[#allocation6 + $0x150] sm:$0xff]
    %v217 = vld [vmem:[#allocation6 + $0x158] sm:$0xff]
    %v218 = vld [vmem:[#allocation6 + $0x160] sm:$0xff]
    %v219 = vld [vmem:[#allocation6 + $0x168] sm:$0xff]
    %v220 = vld [vmem:[#allocation6 + $0x170] sm:$0xff]
    %v221 = vld [vmem:[#allocation6 + $0x178] sm:$0xff]
    %v222 = vld [vmem:[#allocation6 + $0x180] sm:$0xff]
    %v223 = vld [vmem:[#allocation6 + $0x188] sm:$0xff]
    %v224 = vld [vmem:[#allocation6 + $0x190] sm:$0xff]
    %v225 = vld [vmem:[#allocation6 + $0x198] sm:$0xff]
    %v226 = vld [vmem:[#allocation6 + $0x1a0] sm:$0xff]
    %v227 = vld [vmem:[#allocation6 + $0x1a8] sm:$0xff]
    %v228 = vld [vmem:[#allocation6 + $0x1b0] sm:$0xff]
    %v229 = vld [vmem:[#allocation6 + $0x1b8] sm:$0xff]
    %v230 = vld [vmem:[#allocation6 + $0x1c0] sm:$0xff]
    %v231 = vld [vmem:[#allocation6 + $0x1c8] sm:$0xff]
    %v232 = vld [vmem:[#allocation6 + $0x1d0] sm:$0xff]
    %v233 = vld [vmem:[#allocation6 + $0x1d8] sm:$0xff]
    %v234 = vld [vmem:[#allocation6 + $0x1e0] sm:$0xff]
    %v235 = vld [vmem:[#allocation6 + $0x1e8] sm:$0xff]
    %v236 = vld [vmem:[#allocation6 + $0x1f0] sm:$0xff]
    %v237 = vld [vmem:[#allocation6 + $0x1f8] sm:$0xff]
    %v238 = vld [vmem:[#allocation6 + $0x200] sm:$0xff]
    %v239 = vld [vmem:[#allocation6 + $0x208] sm:$0xff]
    %v240 = vld [vmem:[#allocation6 + $0x210] sm:$0xff]
    %v241 = vld [vmem:[#allocation6 + $0x218] sm:$0xff]
    %v242 = vld [vmem:[#allocation6 + $0x220] sm:$0xff]
    %v243 = vld [vmem:[#allocation6 + $0x228] sm:$0xff]
    %v244 = vld [vmem:[#allocation6 + $0x230] sm:$0xff]
    %v245 = vld [vmem:[#allocation6 + $0x238] sm:$0xff]
    %v246 = vld [vmem:[#allocation6 + $0x240] sm:$0xff]
    %v247 = vld [vmem:[#allocation6 + $0x248] sm:$0xff]
    %v248 = vld [vmem:[#allocation6 + $0x250] sm:$0xff]
    %v249 = vld [vmem:[#allocation6 + $0x258] sm:$0xff]
    %v250 = vld [vmem:[#allocation6 + $0x260] sm:$0xff]
    %v251 = vld [vmem:[#allocation6 + $0x268] sm:$0xff]
    %v252 = vld [vmem:[#allocation6 + $0x270] sm:$0xff]
    %v253 = vld [vmem:[#allocation6 + $0x278] sm:$0xff]
    %v254 = vld [vmem:[#allocation6 + $0x280] sm:$0xff]
    %v255 = vld [vmem:[#allocation6 + $0x288] sm:$0xff]
    %v256 = vld [vmem:[#allocation6 + $0x290] sm:$0xff]
    %v257 = vld [vmem:[#allocation6 + $0x298] sm:$0xff]
    %v258 = vld [vmem:[#allocation6 + $0x2a0] sm:$0xff]
    %v259 = vld [vmem:[#allocation6 + $0x2a8] sm:$0xff]
    %v260 = vld [vmem:[#allocation6 + $0x2b0] sm:$0xff]
    %v261 = vld [vmem:[#allocation6 + $0x2b8] sm:$0xff]
    %v262 = vld [vmem:[#allocation6 + $0x2c0] sm:$0xff]
    %v263 = vld [vmem:[#allocation6 + $0x2c8] sm:$0xff]
    %v264 = vld [vmem:[#allocation6 + $0x2d0] sm:$0xff]
    %v265 = vld [vmem:[#allocation6 + $0x2d8] sm:$0xff]
    %v266 = vld [vmem:[#allocation6 + $0x2e0] sm:$0xff]
    %v267 = vld [vmem:[#allocation6 + $0x2e8] sm:$0xff]
    %v268 = vld [vmem:[#allocation6 + $0x2f0] sm:$0xff]
    %v269 = vld [vmem:[#allocation6 + $0x2f8] sm:$0xff]
    %v270 = vld [vmem:[#allocation6 + $0x300] sm:$0xff]
    %v271 = vld [vmem:[#allocation6 + $0x308] sm:$0xff]
    %v272 = vld [vmem:[#allocation6 + $0x310] sm:$0xff]
    %v273 = vld [vmem:[#allocation6 + $0x318] sm:$0xff]
    %v274 = vld [vmem:[#allocation6 + $0x320] sm:$0xff]
    %v275 = vld [vmem:[#allocation6 + $0x328] sm:$0xff]
    %v276 = vld [vmem:[#allocation6 + $0x330] sm:$0xff]
    %v277 = vld [vmem:[#allocation6 + $0x338] sm:$0xff]
    %v278 = vld [vmem:[#allocation6 + $0x340] sm:$0xff]
    %v279 = vld [vmem:[#allocation6 + $0x348] sm:$0xff]
    %v280 = vld [vmem:[#allocation6 + $0x350] sm:$0xff]
    %v281 = vld [vmem:[#allocation6 + $0x358] sm:$0xff]
    %v282 = vld [vmem:[#allocation6 + $0x360] sm:$0xff]
    %v283 = vld [vmem:[#allocation6 + $0x368] sm:$0xff]
    %v284 = vld [vmem:[#allocation6 + $0x370] sm:$0xff]
    %v285 = vld [vmem:[#allocation6 + $0x378] sm:$0xff]
    %v286 = vld [vmem:[#allocation6 + $0x380] sm:$0xff]
    %v287 = vld [vmem:[#allocation6 + $0x388] sm:$0xff]
    %v288 = vld [vmem:[#allocation6 + $0x390] sm:$0xff]
    %v289 = vld [vmem:[#allocation6 + $0x398] sm:$0xff]
    %v290 = vld [vmem:[#allocation6 + $0x3a0] sm:$0xff]
    %v291 = vld [vmem:[#allocation6 + $0x3a8] sm:$0xff]
    %v292 = vld [vmem:[#allocation6 + $0x3b0] sm:$0xff]
    %v293 = vld [vmem:[#allocation6 + $0x3b8] sm:$0xff]
    %v294 = vld [vmem:[#allocation6 + $0x3c0] sm:$0xff]
    %v295 = vld [vmem:[#allocation6 + $0x3c8] sm:$0xff]
    %v296 = vld [vmem:[#allocation6 + $0x3d0] sm:$0xff]
    %v297 = vld [vmem:[#allocation6 + $0x3d8] sm:$0xff]
    %v298 = vld [vmem:[#allocation6 + $0x3e0] sm:$0xff]
    %v299 = vld [vmem:[#allocation6 + $0x3e8] sm:$0xff]
    %v300 = vld [vmem:[#allocation6 + $0x3f0] sm:$0xff]
    %v301 = vld [vmem:[#allocation6 + $0x3f8] sm:$0xff]
    %v302 = vld [vmem:[#allocation6 + $0x400] sm:$0xff]
    %v303 = vld [vmem:[#allocation6 + $0x408] sm:$0xff]
    %v304 = vld [vmem:[#allocation6 + $0x410] sm:$0xff]
    %v305 = vld [vmem:[#allocation6 + $0x418] sm:$0xff]
    %v306 = vld [vmem:[#allocation6 + $0x420] sm:$0xff]
    %v307 = vld [vmem:[#allocation6 + $0x428] sm:$0xff]
    %v308 = vld [vmem:[#allocation6 + $0x430] sm:$0xff]
    %v309 = vld [vmem:[#allocation6 + $0x438] sm:$0xff]
    %v310 = vld [vmem:[#allocation6 + $0x440] sm:$0xff]
    %v311 = vld [vmem:[#allocation6 + $0x448] sm:$0xff]
    %v312 = vld [vmem:[#allocation6 + $0x450] sm:$0xff]
    %v313 = vld [vmem:[#allocation6 + $0x458] sm:$0xff]
    %v314 = vld [vmem:[#allocation6 + $0x460] sm:$0xff]
    %v315 = vld [vmem:[#allocation6 + $0x468] sm:$0xff]
    %v316 = vld [vmem:[#allocation6 + $0x470] sm:$0xff]
    %v317 = vld [vmem:[#allocation6 + $0x478] sm:$0xff]
    %v318 = vld [vmem:[#allocation6 + $0x480] sm:$0xff]
    %v319 = vld [vmem:[#allocation6 + $0x488] sm:$0xff]
    %v320 = vld [vmem:[#allocation6 + $0x490] sm:$0xff]
    %v321 = vld [vmem:[#allocation6 + $0x498] sm:$0xff]
    %v322 = vld [vmem:[#allocation6 + $0x4a0] sm:$0xff]
    %v323 = vld [vmem:[#allocation6 + $0x4a8] sm:$0xff]
    %v324 = vld [vmem:[#allocation6 + $0x4b0] sm:$0xff]
    %v325 = vld [vmem:[#allocation6 + $0x4b8] sm:$0xff]
    %v326 = vld [vmem:[#allocation6 + $0x4c0] sm:$0xff]
    %v327 = vld [vmem:[#allocation6 + $0x4c8] sm:$0xff]
    %v328 = vld [vmem:[#allocation6 + $0x4d0] sm:$0xff]
    %v329 = vld [vmem:[#allocation6 + $0x4d8] sm:$0xff]
    %v330 = vld [vmem:[#allocation6 + $0x4e0] sm:$0xff]
    %v331 = vld [vmem:[#allocation6 + $0x4e8] sm:$0xff]
    %v332 = vld [vmem:[#allocation6 + $0x4f0] sm:$0xff]
    %v333 = vld [vmem:[#allocation6 + $0x4f8] sm:$0xff]
    %v334 = vld [vmem:[#allocation6 + $0x500] sm:$0xff]
    %v335 = vld [vmem:[#allocation6 + $0x508] sm:$0xff]
    %v336 = vld [vmem:[#allocation6 + $0x510] sm:$0xff]
    %v337 = vld [vmem:[#allocation6 + $0x518] sm:$0xff]
    %v338 = vld [vmem:[#allocation6 + $0x520] sm:$0xff]
    %v339 = vld [vmem:[#allocation6 + $0x528] sm:$0xff]
    %v340 = vld [vmem:[#allocation6 + $0x530] sm:$0xff]
    %v341 = vld [vmem:[#allocation6 + $0x538] sm:$0xff]
    %v342 = vld [vmem:[#allocation6 + $0x540] sm:$0xff]
    %v343 = vld [vmem:[#allocation6 + $0x548] sm:$0xff]
    %v344 = vld [vmem:[#allocation6 + $0x550] sm:$0xff]
    %v345 = vld [vmem:[#allocation6 + $0x558] sm:$0xff]
    %v346 = vld [vmem:[#allocation6 + $0x560] sm:$0xff]
    %v347 = vld [vmem:[#allocation6 + $0x568] sm:$0xff]
    %v348 = vld [vmem:[#allocation6 + $0x570] sm:$0xff]
    %v349 = vld [vmem:[#allocation6 + $0x578] sm:$0xff]
    %v350 = vld [vmem:[#allocation6 + $0x580] sm:$0xff]
    %v351 = vld [vmem:[#allocation6 + $0x588] sm:$0xff]
    %v352 = vld [vmem:[#allocation6 + $0x590] sm:$0xff]
    %v353 = vld [vmem:[#allocation6 + $0x598] sm:$0xff]
    %v354 = vld [vmem:[#allocation6 + $0x5a0] sm:$0xff]
    %v355 = vld [vmem:[#allocation6 + $0x5a8] sm:$0xff]
    %v356 = vld [vmem:[#allocation6 + $0x5b0] sm:$0xff]
    %v357 = vld [vmem:[#allocation6 + $0x5b8] sm:$0xff]
    %v358 = vld [vmem:[#allocation6 + $0x5c0] sm:$0xff]
    %v359 = vld [vmem:[#allocation6 + $0x5c8] sm:$0xff]
    %v360 = vld [vmem:[#allocation6 + $0x5d0] sm:$0xff]
    %v361 = vld [vmem:[#allocation6 + $0x5d8] sm:$0xff]
    %v362 = vld [vmem:[#allocation6 + $0x5e0] sm:$0xff]
    %v363 = vld [vmem:[#allocation6 + $0x5e8] sm:$0xff]
    %v364 = vld [vmem:[#allocation6 + $0x5f0] sm:$0xff]
    %v365 = vld [vmem:[#allocation6 + $0x5f8] sm:$0xff]
    %v366 = vld [vmem:[#allocation6 + $0x600] sm:$0xff]
    %v367 = vld [vmem:[#allocation6 + $0x608] sm:$0xff]
    %v368 = vld [vmem:[#allocation6 + $0x610] sm:$0xff]
    %v369 = vld [vmem:[#allocation6 + $0x618] sm:$0xff]
    %v370 = vld [vmem:[#allocation6 + $0x620] sm:$0xff]
    %v371 = vld [vmem:[#allocation6 + $0x628] sm:$0xff]
    %v372 = vld [vmem:[#allocation6 + $0x630] sm:$0xff]
    %v373 = vld [vmem:[#allocation6 + $0x638] sm:$0xff]
    %v374 = vld [vmem:[#allocation6 + $0x640] sm:$0xff]
    %v375 = vld [vmem:[#allocation6 + $0x648] sm:$0xff]
    %v376 = vld [vmem:[#allocation6 + $0x650] sm:$0xff]
    %v377 = vld [vmem:[#allocation6 + $0x658] sm:$0xff]
    %v378 = vld [vmem:[#allocation6 + $0x660] sm:$0xff]
    %v379 = vld [vmem:[#allocation6 + $0x668] sm:$0xff]
    %v380 = vld [vmem:[#allocation6 + $0x670] sm:$0xff]
    %v381 = vld [vmem:[#allocation6 + $0x678] sm:$0xff]
    %v382 = vld [vmem:[#allocation6 + $0x680] sm:$0xff]
    %v383 = vld [vmem:[#allocation6 + $0x688] sm:$0xff]
    %v384 = vld [vmem:[#allocation6 + $0x690] sm:$0xff]
    %v385 = vld [vmem:[#allocation6 + $0x698] sm:$0xff]
    %v386 = vld [vmem:[#allocation6 + $0x6a0] sm:$0xff]
    %v387 = vld [vmem:[#allocation6 + $0x6a8] sm:$0xff]
    %v388 = vld [vmem:[#allocation6 + $0x6b0] sm:$0xff]
    %v389 = vld [vmem:[#allocation6 + $0x6b8] sm:$0xff]
    %v390 = vld [vmem:[#allocation6 + $0x6c0] sm:$0xff]
    %v391 = vld [vmem:[#allocation6 + $0x6c8] sm:$0xff]
    %v392 = vld [vmem:[#allocation6 + $0x6d0] sm:$0xff]
    %v393 = vld [vmem:[#allocation6 + $0x6d8] sm:$0xff]
    %v394 = vld [vmem:[#allocation6 + $0x6e0] sm:$0xff]
    %v395 = vld [vmem:[#allocation6 + $0x6e8] sm:$0xff]
    %v396 = vld [vmem:[#allocation6 + $0x6f0] sm:$0xff]
    %v397 = vld [vmem:[#allocation6 + $0x6f8] sm:$0xff]
    %v398 = vld [vmem:[#allocation6 + $0x700] sm:$0xff]
    %v399 = vld [vmem:[#allocation6 + $0x708] sm:$0xff]
    %v400 = vld [vmem:[#allocation6 + $0x710] sm:$0xff]
    %v401 = vld [vmem:[#allocation6 + $0x718] sm:$0xff]
    %v402 = vld [vmem:[#allocation6 + $0x720] sm:$0xff]
    %v403 = vld [vmem:[#allocation6 + $0x728] sm:$0xff]
    %v404 = vld [vmem:[#allocation6 + $0x730] sm:$0xff]
    %v405 = vld [vmem:[#allocation6 + $0x738] sm:$0xff]
    %v406 = vld [vmem:[#allocation6 + $0x740] sm:$0xff]
    %v407 = vld [vmem:[#allocation6 + $0x748] sm:$0xff]
    %v408 = vld [vmem:[#allocation6 + $0x750] sm:$0xff]
    %v409 = vld [vmem:[#allocation6 + $0x758] sm:$0xff]
    %v410 = vld [vmem:[#allocation6 + $0x760] sm:$0xff]
    %v411 = vld [vmem:[#allocation6 + $0x768] sm:$0xff]
    %v412 = vld [vmem:[#allocation6 + $0x770] sm:$0xff]
    %v413 = vld [vmem:[#allocation6 + $0x778] sm:$0xff]
    %v414 = vld [vmem:[#allocation6 + $0x780] sm:$0xff]
    %v415 = vld [vmem:[#allocation6 + $0x788] sm:$0xff]
    %v416 = vld [vmem:[#allocation6 + $0x790] sm:$0xff]
    %v417 = vld [vmem:[#allocation6 + $0x798] sm:$0xff]
    %v418 = vld [vmem:[#allocation6 + $0x7a0] sm:$0xff]
    %v419 = vld [vmem:[#allocation6 + $0x7a8] sm:$0xff]
    %v420 = vld [vmem:[#allocation6 + $0x7b0] sm:$0xff]
    %v421 = vld [vmem:[#allocation6 + $0x7b8] sm:$0xff]
    %v422 = vld [vmem:[#allocation6 + $0x7c0] sm:$0xff]
    %v423 = vld [vmem:[#allocation6 + $0x7c8] sm:$0xff]
    %v424 = vld [vmem:[#allocation6 + $0x7d0] sm:$0xff]
    %v425 = vld [vmem:[#allocation6 + $0x7d8] sm:$0xff]
    %v426 = vld [vmem:[#allocation6 + $0x7e0] sm:$0xff]
    %v427 = vld [vmem:[#allocation6 + $0x7e8] sm:$0xff]
    %v428 = vld [vmem:[#allocation6 + $0x7f0] sm:$0xff]
    %v429 = vld [vmem:[#allocation6 + $0x7f8] sm:$0xff]
    %v430 = vld [vmem:[#allocation6 + $0x800] sm:$0xff]
    %v431 = vld [vmem:[#allocation6 + $0x808] sm:$0xff]
    %v432 = vld [vmem:[#allocation6 + $0x810] sm:$0xff]
    %v433 = vld [vmem:[#allocation6 + $0x818] sm:$0xff]
    %v434 = vld [vmem:[#allocation6 + $0x820] sm:$0xff]
    %v435 = vld [vmem:[#allocation6 + $0x828] sm:$0xff]
    %v436 = vld [vmem:[#allocation6 + $0x830] sm:$0xff]
    %v437 = vld [vmem:[#allocation6 + $0x838] sm:$0xff]
    %v438 = vld [vmem:[#allocation6 + $0x840] sm:$0xff]
    %v439 = vld [vmem:[#allocation6 + $0x848] sm:$0xff]
    %v440 = vld [vmem:[#allocation6 + $0x850] sm:$0xff]
    %v441 = vld [vmem:[#allocation6 + $0x858] sm:$0xff]
    %v442 = vld [vmem:[#allocation6 + $0x860] sm:$0xff]
    %v443 = vld [vmem:[#allocation6 + $0x868] sm:$0xff]
    %v444 = vld [vmem:[#allocation6 + $0x870] sm:$0xff]
    %v445 = vld [vmem:[#allocation6 + $0x878] sm:$0xff]
    %v446 = vld [vmem:[#allocation6 + $0x880] sm:$0xff]
    %v447 = vld [vmem:[#allocation6 + $0x888] sm:$0xff]
    %v448 = vld [vmem:[#allocation6 + $0x890] sm:$0xff]
    %v449 = vld [vmem:[#allocation6 + $0x898] sm:$0xff]
    %v450 = vld [vmem:[#allocation6 + $0x8a0] sm:$0xff]
    %v451 = vld [vmem:[#allocation6 + $0x8a8] sm:$0xff]
    %v452 = vld [vmem:[#allocation6 + $0x8b0] sm:$0xff]
    %v453 = vld [vmem:[#allocation6 + $0x8b8] sm:$0xff]
    %v454 = vld [vmem:[#allocation6 + $0x8c0] sm:$0xff]
    %v455 = vld [vmem:[#allocation6 + $0x8c8] sm:$0xff]
    %v456 = vld [vmem:[#allocation6 + $0x8d0] sm:$0xff]
    %v457 = vld [vmem:[#allocation6 + $0x8d8] sm:$0xff]
    %v458 = vld [vmem:[#allocation6 + $0x8e0] sm:$0xff]
    %v459 = vld [vmem:[#allocation6 + $0x8e8] sm:$0xff]
    %v460 = vld [vmem:[#allocation6 + $0x8f0] sm:$0xff]
    %v461 = vld [vmem:[#allocation6 + $0x8f8] sm:$0xff]
    %v462 = vld [vmem:[#allocation6 + $0x900] sm:$0xff]
    %v463 = vld [vmem:[#allocation6 + $0x908] sm:$0xff]
    %v464 = vld [vmem:[#allocation6 + $0x910] sm:$0xff]
    %v465 = vld [vmem:[#allocation6 + $0x918] sm:$0xff]
    %v466 = vld [vmem:[#allocation6 + $0x920] sm:$0xff]
    %v467 = vld [vmem:[#allocation6 + $0x928] sm:$0xff]
    %v468 = vld [vmem:[#allocation6 + $0x930] sm:$0xff]
    %v469 = vld [vmem:[#allocation6 + $0x938] sm:$0xff]
    %v470 = vld [vmem:[#allocation6 + $0x940] sm:$0xff]
    %v471 = vld [vmem:[#allocation6 + $0x948] sm:$0xff]
    %v472 = vld [vmem:[#allocation6 + $0x950] sm:$0xff]
    %v473 = vld [vmem:[#allocation6 + $0x958] sm:$0xff]
    %v474 = vld [vmem:[#allocation6 + $0x960] sm:$0xff]
    %v475 = vld [vmem:[#allocation6 + $0x968] sm:$0xff]
    %v476 = vld [vmem:[#allocation6 + $0x970] sm:$0xff]
    %v477 = vld [vmem:[#allocation6 + $0x978] sm:$0xff]
    %v478 = vld [vmem:[#allocation6 + $0x980] sm:$0xff]
    %v479 = vld [vmem:[#allocation6 + $0x988] sm:$0xff]
    %v480 = vld [vmem:[#allocation6 + $0x990] sm:$0xff]
    %v481 = vld [vmem:[#allocation6 + $0x998] sm:$0xff]
    %v482 = vld [vmem:[#allocation6 + $0x9a0] sm:$0xff]
    %v483 = vld [vmem:[#allocation6 + $0x9a8] sm:$0xff]
    %v484 = vld [vmem:[#allocation6 + $0x9b0] sm:$0xff]
    %v485 = vld [vmem:[#allocation6 + $0x9b8] sm:$0xff]
    %v486 = vld [vmem:[#allocation6 + $0x9c0] sm:$0xff]
    %v487 = vld [vmem:[#allocation6 + $0x9c8] sm:$0xff]
    %v488 = vld [vmem:[#allocation6 + $0x9d0] sm:$0xff]
    %v489 = vld [vmem:[#allocation6 + $0x9d8] sm:$0xff]
    %v490 = vld [vmem:[#allocation6 + $0x9e0] sm:$0xff]
    %v491 = vld [vmem:[#allocation6 + $0x9e8] sm:$0xff]
    %v492 = vld [vmem:[#allocation6 + $0x9f0] sm:$0xff]
    %v493 = vld [vmem:[#allocation6 + $0x9f8] sm:$0xff]
    %v494 = vld [vmem:[#allocation6 + $0xa00] sm:$0xff]
    %v495 = vld [vmem:[#allocation6 + $0xa08] sm:$0xff]
    %v496 = vld [vmem:[#allocation6 + $0xa10] sm:$0xff]
    %v497 = vld [vmem:[#allocation6 + $0xa18] sm:$0xff]
    %v498 = vld [vmem:[#allocation6 + $0xa20] sm:$0xff]
    %v499 = vld [vmem:[#allocation6 + $0xa28] sm:$0xff]
    %v500 = vld [vmem:[#allocation6 + $0xa30] sm:$0xff]
    %v501 = vld [vmem:[#allocation6 + $0xa38] sm:$0xff]
    %v502 = vld [vmem:[#allocation6 + $0xa40] sm:$0xff]
    %v503 = vld [vmem:[#allocation6 + $0xa48] sm:$0xff]
    %v504 = vld [vmem:[#allocation6 + $0xa50] sm:$0xff]
    %v505 = vld [vmem:[#allocation6 + $0xa58] sm:$0xff]
    %v506 = vld [vmem:[#allocation6 + $0xa60] sm:$0xff]
    %v507 = vld [vmem:[#allocation6 + $0xa68] sm:$0xff]
    %v508 = vld [vmem:[#allocation6 + $0xa70] sm:$0xff]
    %v509 = vld [vmem:[#allocation6 + $0xa78] sm:$0xff]
    %v510 = vld [vmem:[#allocation6 + $0xa80] sm:$0xff]
    %v511 = vld [vmem:[#allocation6 + $0xa88] sm:$0xff]
    %v512 = vld [vmem:[#allocation6 + $0xa90] sm:$0xff]
    %v513 = vld [vmem:[#allocation6 + $0xa98] sm:$0xff]
    %v514 = vld [vmem:[#allocation6 + $0xaa0] sm:$0xff]
    %v515 = vld [vmem:[#allocation6 + $0xaa8] sm:$0xff]
    %v516 = vld [vmem:[#allocation6 + $0xab0] sm:$0xff]
    %v517 = vld [vmem:[#allocation6 + $0xab8] sm:$0xff]
    %v518 = vld [vmem:[#allocation6 + $0xac0] sm:$0xff]
    %v519 = vld [vmem:[#allocation6 + $0xac8] sm:$0xff]
    %v520 = vld [vmem:[#allocation6 + $0xad0] sm:$0xff]
    %v521 = vld [vmem:[#allocation6 + $0xad8] sm:$0xff]
    %v522 = vld [vmem:[#allocation6 + $0xae0] sm:$0xff]
    %v523 = vld [vmem:[#allocation6 + $0xae8] sm:$0xff]
    %v524 = vld [vmem:[#allocation6 + $0xaf0] sm:$0xff]
    %v525 = vld [vmem:[#allocation6 + $0xaf8] sm:$0xff]
    %v526 = vld [vmem:[#allocation6 + $0xb00] sm:$0xff]
    %v527 = vld [vmem:[#allocation6 + $0xb08] sm:$0xff]
    %v528 = vld [vmem:[#allocation6 + $0xb10] sm:$0xff]
    %v529 = vld [vmem:[#allocation6 + $0xb18] sm:$0xff]
    %v530 = vld [vmem:[#allocation6 + $0xb20] sm:$0xff]
    %v531 = vld [vmem:[#allocation6 + $0xb28] sm:$0xff]
    %v532 = vld [vmem:[#allocation6 + $0xb30] sm:$0xff]
    %v533 = vld [vmem:[#allocation6 + $0xb38] sm:$0xff]
    %v534 = vld [vmem:[#allocation6 + $0xb40] sm:$0xff]
    %v535 = vld [vmem:[#allocation6 + $0xb48] sm:$0xff]
    %v536 = vld [vmem:[#allocation6 + $0xb50] sm:$0xff]
    %v537 = vld [vmem:[#allocation6 + $0xb58] sm:$0xff]
    %v538 = vld [vmem:[#allocation6 + $0xb60] sm:$0xff]
    %v539 = vld [vmem:[#allocation6 + $0xb68] sm:$0xff]
    %v540 = vld [vmem:[#allocation6 + $0xb70] sm:$0xff]
    %v541 = vld [vmem:[#allocation6 + $0xb78] sm:$0xff]
    %v542 = vld [vmem:[#allocation6 + $0xb80] sm:$0xff]
    %v543 = vld [vmem:[#allocation6 + $0xb88] sm:$0xff]
    %v544 = vld [vmem:[#allocation6 + $0xb90] sm:$0xff]
    %v545 = vld [vmem:[#allocation6 + $0xb98] sm:$0xff]
    %v546 = vld [vmem:[#allocation6 + $0xba0] sm:$0xff]
    %v547 = vld [vmem:[#allocation6 + $0xba8] sm:$0xff]
    %v548 = vld [vmem:[#allocation6 + $0xbb0] sm:$0xff]
    %v549 = vld [vmem:[#allocation6 + $0xbb8] sm:$0xff]
    %v550 = vld [vmem:[#allocation6 + $0xbc0] sm:$0xff]
    %v551 = vld [vmem:[#allocation6 + $0xbc8] sm:$0xff]
    %v552 = vld [vmem:[#allocation6 + $0xbd0] sm:$0xff]
    %v553 = vld [vmem:[#allocation6 + $0xbd8] sm:$0xff]
    %v554 = vld [vmem:[#allocation6 + $0xbe0] sm:$0xff]
    %v555 = vld [vmem:[#allocation6 + $0xbe8] sm:$0xff]
    %v556 = vld [vmem:[#allocation6 + $0xbf0] sm:$0xff]
    %v557 = vld [vmem:[#allocation6 + $0xbf8] sm:$0xff]
    %v558 = vld [vmem:[#allocation6 + $0xc00] sm:$0xff]
    %v559 = vld [vmem:[#allocation6 + $0xc08] sm:$0xff]
    %v560 = vld [vmem:[#allocation6 + $0xc10] sm:$0xff]
    %v561 = vld [vmem:[#allocation6 + $0xc18] sm:$0xff]
    %v562 = vld [vmem:[#allocation6 + $0xc20] sm:$0xff]
    %v563 = vld [vmem:[#allocation6 + $0xc28] sm:$0xff]
    %v564 = vld [vmem:[#allocation6 + $0xc30] sm:$0xff]
    %v565 = vld [vmem:[#allocation6 + $0xc38] sm:$0xff]
    %v566 = vld [vmem:[#allocation6 + $0xc40] sm:$0xff]
    %v567 = vld [vmem:[#allocation6 + $0xc48] sm:$0xff]
    %v568 = vld [vmem:[#allocation6 + $0xc50] sm:$0xff]
    %v569 = vld [vmem:[#allocation6 + $0xc58] sm:$0xff]
    %v570 = vld [vmem:[#allocation6 + $0xc60] sm:$0xff]
    %v571 = vld [vmem:[#allocation6 + $0xc68] sm:$0xff]
    %v572 = vld [vmem:[#allocation6 + $0xc70] sm:$0xff]
    %v573 = vld [vmem:[#allocation6 + $0xc78] sm:$0xff]
    %v574 = vld [vmem:[#allocation6 + $0xc80] sm:$0xff]
    %v575 = vld [vmem:[#allocation6 + $0xc88] sm:$0xff]
    %v576 = vld [vmem:[#allocation6 + $0xc90] sm:$0xff]
    %v577 = vld [vmem:[#allocation6 + $0xc98] sm:$0xff]
    %v578 = vld [vmem:[#allocation6 + $0xca0] sm:$0xff]
    %v579 = vld [vmem:[#allocation6 + $0xca8] sm:$0xff]
    %v580 = vld [vmem:[#allocation6 + $0xcb0] sm:$0xff]
    %v581 = vld [vmem:[#allocation6 + $0xcb8] sm:$0xff]
    %v582 = vld [vmem:[#allocation6 + $0xcc0] sm:$0xff]
    %v583 = vld [vmem:[#allocation6 + $0xcc8] sm:$0xff]
    %v584 = vld [vmem:[#allocation6 + $0xcd0] sm:$0xff]
    %v585 = vld [vmem:[#allocation6 + $0xcd8] sm:$0xff]
    %v586 = vld [vmem:[#allocation6 + $0xce0] sm:$0xff]
    %v587 = vld [vmem:[#allocation6 + $0xce8] sm:$0xff]
    %v588 = vld [vmem:[#allocation6 + $0xcf0] sm:$0xff]
    %v589 = vld [vmem:[#allocation6 + $0xcf8] sm:$0xff]
    %v590 = vld [vmem:[#allocation6 + $0xd00] sm:$0xff]
    %v591 = vld [vmem:[#allocation6 + $0xd08] sm:$0xff]
    %v592 = vld [vmem:[#allocation6 + $0xd10] sm:$0xff]
    %v593 = vld [vmem:[#allocation6 + $0xd18] sm:$0xff]
    %v594 = vld [vmem:[#allocation6 + $0xd20] sm:$0xff]
    %v595 = vld [vmem:[#allocation6 + $0xd28] sm:$0xff]
    %v596 = vld [vmem:[#allocation6 + $0xd30] sm:$0xff]
    %v597 = vld [vmem:[#allocation6 + $0xd38] sm:$0xff]
    %v598 = vld [vmem:[#allocation6 + $0xd40] sm:$0xff]
    %v599 = vld [vmem:[#allocation6 + $0xd48] sm:$0xff]
    %v600 = vld [vmem:[#allocation6 + $0xd50] sm:$0xff]
    %v601 = vld [vmem:[#allocation6 + $0xd58] sm:$0xff]
    %v602 = vld [vmem:[#allocation6 + $0xd60] sm:$0xff]
    %v603 = vld [vmem:[#allocation6 + $0xd68] sm:$0xff]
    %v604 = vld [vmem:[#allocation6 + $0xd70] sm:$0xff]
    %v605 = vld [vmem:[#allocation6 + $0xd78] sm:$0xff]
    %v606 = vld [vmem:[#allocation6 + $0xd80] sm:$0xff]
    %v607 = vld [vmem:[#allocation6 + $0xd88] sm:$0xff]
    %v608 = vld [vmem:[#allocation6 + $0xd90] sm:$0xff]
    %v609 = vld [vmem:[#allocation6 + $0xd98] sm:$0xff]
    %v610 = vld [vmem:[#allocation6 + $0xda0] sm:$0xff]
    %v611 = vld [vmem:[#allocation6 + $0xda8] sm:$0xff]
    %v612 = vld [vmem:[#allocation6 + $0xdb0] sm:$0xff]
    %v613 = vld [vmem:[#allocation6 + $0xdb8] sm:$0xff]
    %v614 = vld [vmem:[#allocation6 + $0xdc0] sm:$0xff]
    %v615 = vld [vmem:[#allocation6 + $0xdc8] sm:$0xff]
    %v616 = vld [vmem:[#allocation6 + $0xdd0] sm:$0xff]
    %v617 = vld [vmem:[#allocation6 + $0xdd8] sm:$0xff]
    %v618 = vld [vmem:[#allocation6 + $0xde0] sm:$0xff]
    %v619 = vld [vmem:[#allocation6 + $0xde8] sm:$0xff]
    %v620 = vld [vmem:[#allocation6 + $0xdf0] sm:$0xff]
    %v621 = vld [vmem:[#allocation6 + $0xdf8] sm:$0xff]
    %v622 = vld [vmem:[#allocation6 + $0xe00] sm:$0xff]
    %v623 = vld [vmem:[#allocation6 + $0xe08] sm:$0xff]
    %v624 = vld [vmem:[#allocation6 + $0xe10] sm:$0xff]
    %v625 = vld [vmem:[#allocation6 + $0xe18] sm:$0xff]
    %v626 = vld [vmem:[#allocation6 + $0xe20] sm:$0xff]
    %v627 = vld [vmem:[#allocation6 + $0xe28] sm:$0xff]
    %v628 = vld [vmem:[#allocation6 + $0xe30] sm:$0xff]
    %v629 = vld [vmem:[#allocation6 + $0xe38] sm:$0xff]
    %v630 = vld [vmem:[#allocation6 + $0xe40] sm:$0xff]
    %v631 = vld [vmem:[#allocation6 + $0xe48] sm:$0xff]
    %v632 = vld [vmem:[#allocation6 + $0xe50] sm:$0xff]
    %v633 = vld [vmem:[#allocation6 + $0xe58] sm:$0xff]
    %v634 = vld [vmem:[#allocation6 + $0xe60] sm:$0xff]
    %v635 = vld [vmem:[#allocation6 + $0xe68] sm:$0xff]
    %v636 = vld [vmem:[#allocation6 + $0xe70] sm:$0xff]
    %v637 = vld [vmem:[#allocation6 + $0xe78] sm:$0xff]
    %v638 = vld [vmem:[#allocation6 + $0xe80] sm:$0xff]
    %v639 = vld [vmem:[#allocation6 + $0xe88] sm:$0xff]
    %v640 = vld [vmem:[#allocation6 + $0xe90] sm:$0xff]
    %v641 = vld [vmem:[#allocation6 + $0xe98] sm:$0xff]
    %v642 = vld [vmem:[#allocation6 + $0xea0] sm:$0xff]
    %v643 = vld [vmem:[#allocation6 + $0xea8] sm:$0xff]
    %v644 = vld [vmem:[#allocation6 + $0xeb0] sm:$0xff]
    %v645 = vld [vmem:[#allocation6 + $0xeb8] sm:$0xff]
    %v646 = vld [vmem:[#allocation6 + $0xec0] sm:$0xff]
    %v647 = vld [vmem:[#allocation6 + $0xec8] sm:$0xff]
    %v648 = vld [vmem:[#allocation6 + $0xed0] sm:$0xff]
    %v649 = vld [vmem:[#allocation6 + $0xed8] sm:$0xff]
    %v650 = vld [vmem:[#allocation6 + $0xee0] sm:$0xff]
    %v651 = vld [vmem:[#allocation6 + $0xee8] sm:$0xff]
    %v652 = vld [vmem:[#allocation6 + $0xef0] sm:$0xff]
    %v653 = vld [vmem:[#allocation6 + $0xef8] sm:$0xff]
    %v654 = vld [vmem:[#allocation6 + $0xf00] sm:$0xff]
    %v655 = vld [vmem:[#allocation6 + $0xf08] sm:$0xff]
    %v656 = vld [vmem:[#allocation6 + $0xf10] sm:$0xff]
    %v657 = vld [vmem:[#allocation6 + $0xf18] sm:$0xff]
    %v658 = vld [vmem:[#allocation6 + $0xf20] sm:$0xff]
    %v659 = vld [vmem:[#allocation6 + $0xf28] sm:$0xff]
    %v660 = vld [vmem:[#allocation6 + $0xf30] sm:$0xff]
    %v661 = vld [vmem:[#allocation6 + $0xf38] sm:$0xff]
    %v662 = vld [vmem:[#allocation6 + $0xf40] sm:$0xff]
    %v663 = vld [vmem:[#allocation6 + $0xf48] sm:$0xff]
    %v664 = vld [vmem:[#allocation6 + $0xf50] sm:$0xff]
    %v665 = vld [vmem:[#allocation6 + $0xf58] sm:$0xff]
    %v666 = vld [vmem:[#allocation6 + $0xf60] sm:$0xff]
    %v667 = vld [vmem:[#allocation6 + $0xf68] sm:$0xff]
    %v668 = vld [vmem:[#allocation6 + $0xf70] sm:$0xff]
    %v669 = vld [vmem:[#allocation6 + $0xf78] sm:$0xff]
    %v670 = vld [vmem:[#allocation6 + $0xf80] sm:$0xff]
    %v671 = vld [vmem:[#allocation6 + $0xf88] sm:$0xff]
    %v672 = vld [vmem:[#allocation6 + $0xf90] sm:$0xff]
    %v673 = vld [vmem:[#allocation6 + $0xf98] sm:$0xff]
    %v674 = vld [vmem:[#allocation6 + $0xfa0] sm:$0xff]
    %v675 = vld [vmem:[#allocation6 + $0xfa8] sm:$0xff]
    %v676 = vld [vmem:[#allocation6 + $0xfb0] sm:$0xff]
    %v677 = vld [vmem:[#allocation6 + $0xfb8] sm:$0xff]
    %v678 = vld [vmem:[#allocation6 + $0xfc0] sm:$0xff]
    %v679 = vld [vmem:[#allocation6 + $0xfc8] sm:$0xff]
    %v680 = vld [vmem:[#allocation6 + $0xfd0] sm:$0xff]
    %v681 = vld [vmem:[#allocation6 + $0xfd8] sm:$0xff]
    %v682 = vld [vmem:[#allocation6 + $0xfe0] sm:$0xff]
    %v683 = vld [vmem:[#allocation6 + $0xfe8] sm:$0xff]
    %v684 = vld [vmem:[#allocation6 + $0xff0] sm:$0xff]
    %v685 = vld [vmem:[#allocation6 + $0xff8] sm:$0xff]
    %v686 = vld [vmem:[#allocation6 + $0x1000] sm:$0xff]
    %v687 = vld [vmem:[#allocation6 + $0x1008] sm:$0xff]
    %v688 = vld [vmem:[#allocation6 + $0x1010] sm:$0xff]
    %v689 = vld [vmem:[#allocation6 + $0x1018] sm:$0xff]
    %v690 = vld [vmem:[#allocation6 + $0x1020] sm:$0xff]
    %v691 = vld [vmem:[#allocation6 + $0x1028] sm:$0xff]
    %v692 = vld [vmem:[#allocation6 + $0x1030] sm:$0xff]
    %v693 = vld [vmem:[#allocation6 + $0x1038] sm:$0xff]
    %v694 = vld [vmem:[#allocation6 + $0x1040] sm:$0xff]
    %v695 = vld [vmem:[#allocation6 + $0x1048] sm:$0xff]
    %v696 = vld [vmem:[#allocation6 + $0x1050] sm:$0xff]
    %v697 = vld [vmem:[#allocation6 + $0x1058] sm:$0xff]
    %v698 = vld [vmem:[#allocation6 + $0x1060] sm:$0xff]
    %v699 = vld [vmem:[#allocation6 + $0x1068] sm:$0xff]
    %v700 = vld [vmem:[#allocation6 + $0x1070] sm:$0xff]
    %v701 = vld [vmem:[#allocation6 + $0x1078] sm:$0xff]
    %v702 = vld [vmem:[#allocation6 + $0x1080] sm:$0xff]
    %v703 = vld [vmem:[#allocation6 + $0x1088] sm:$0xff]
    %v704 = vld [vmem:[#allocation6 + $0x1090] sm:$0xff]
    %v705 = vld [vmem:[#allocation6 + $0x1098] sm:$0xff]
    %v706 = vld [vmem:[#allocation6 + $0x10a0] sm:$0xff]
    %v707 = vld [vmem:[#allocation6 + $0x10a8] sm:$0xff]
    %v708 = vld [vmem:[#allocation6 + $0x10b0] sm:$0xff]
    %v709 = vld [vmem:[#allocation6 + $0x10b8] sm:$0xff]
    %v710 = vld [vmem:[#allocation6 + $0x10c0] sm:$0xff]
    %v711 = vld [vmem:[#allocation6 + $0x10c8] sm:$0xff]
    %v712 = vld [vmem:[#allocation6 + $0x10d0] sm:$0xff]
    %v713 = vld [vmem:[#allocation6 + $0x10d8] sm:$0xff]
    %v714 = vld [vmem:[#allocation6 + $0x10e0] sm:$0xff]
    %v715 = vld [vmem:[#allocation6 + $0x10e8] sm:$0xff]
    %v716 = vld [vmem:[#allocation6 + $0x10f0] sm:$0xff]
    %v717 = vld [vmem:[#allocation6 + $0x10f8] sm:$0xff]
    %v718 = vld [vmem:[#allocation6 + $0x1100] sm:$0xff]
    %v719 = vld [vmem:[#allocation6 + $0x1108] sm:$0xff]
    %v720 = vld [vmem:[#allocation6 + $0x1110] sm:$0xff]
    %v721 = vld [vmem:[#allocation6 + $0x1118] sm:$0xff]
    %v722 = vld [vmem:[#allocation6 + $0x1120] sm:$0xff]
    %v723 = vld [vmem:[#allocation6 + $0x1128] sm:$0xff]
    %v724 = vld [vmem:[#allocation6 + $0x1130] sm:$0xff]
    %v725 = vld [vmem:[#allocation6 + $0x1138] sm:$0xff]
    %v726 = vld [vmem:[#allocation6 + $0x1140] sm:$0xff]
    %v727 = vld [vmem:[#allocation6 + $0x1148] sm:$0xff]
    %v728 = vld [vmem:[#allocation6 + $0x1150] sm:$0xff]
    %v729 = vld [vmem:[#allocation6 + $0x1158] sm:$0xff]
    %v730 = vld [vmem:[#allocation6 + $0x1160] sm:$0xff]
    %v731 = vld [vmem:[#allocation6 + $0x1168] sm:$0xff]
    %v732 = vld [vmem:[#allocation6 + $0x1170] sm:$0xff]
    %v733 = vld [vmem:[#allocation6 + $0x1178] sm:$0xff]
    %v734 = vld [vmem:[#allocation6 + $0x1180] sm:$0xff]
    %v735 = vld [vmem:[#allocation6 + $0x1188] sm:$0xff]
    %v736 = vld [vmem:[#allocation6 + $0x1190] sm:$0xff]
    %v737 = vld [vmem:[#allocation6 + $0x1198] sm:$0xff]
    %v738 = vld [vmem:[#allocation6 + $0x11a0] sm:$0xff]
    %v739 = vld [vmem:[#allocation6 + $0x11a8] sm:$0xff]
    %v740 = vld [vmem:[#allocation6 + $0x11b0] sm:$0xff]
    %v741 = vld [vmem:[#allocation6 + $0x11b8] sm:$0xff]
    %v742 = vld [vmem:[#allocation6 + $0x11c0] sm:$0xff]
    %v743 = vld [vmem:[#allocation6 + $0x11c8] sm:$0xff]
    %v744 = vld [vmem:[#allocation6 + $0x11d0] sm:$0xff]
    %v745 = vld [vmem:[#allocation6 + $0x11d8] sm:$0xff]
    %v746 = vld [vmem:[#allocation6 + $0x11e0] sm:$0xff]
    %v747 = vld [vmem:[#allocation6 + $0x11e8] sm:$0xff]
    %v748 = vld [vmem:[#allocation6 + $0x11f0] sm:$0xff]
    %v749 = vld [vmem:[#allocation6 + $0x11f8] sm:$0xff]
    %v750 = vld [vmem:[#allocation6 + $0x1200] sm:$0xff]
    %v751 = vld [vmem:[#allocation6 + $0x1208] sm:$0xff]
    %v752 = vld [vmem:[#allocation6 + $0x1210] sm:$0xff]
    %v753 = vld [vmem:[#allocation6 + $0x1218] sm:$0xff]
    %v754 = vld [vmem:[#allocation6 + $0x1220] sm:$0xff]
    %v755 = vld [vmem:[#allocation6 + $0x1228] sm:$0xff]
    %v756 = vld [vmem:[#allocation6 + $0x1230] sm:$0xff]
    %v757 = vld [vmem:[#allocation6 + $0x1238] sm:$0xff]
    %v758 = vld [vmem:[#allocation6 + $0x1240] sm:$0xff]
    %v759 = vld [vmem:[#allocation6 + $0x1248] sm:$0xff]
    %v760 = vld [vmem:[#allocation6 + $0x1250] sm:$0xff]
    %v761 = vld [vmem:[#allocation6 + $0x1258] sm:$0xff]
    %v762 = vld [vmem:[#allocation6 + $0x1260] sm:$0xff]
    %v763 = vld [vmem:[#allocation6 + $0x1268] sm:$0xff]
    %v764 = vld [vmem:[#allocation6 + $0x1270] sm:$0xff]
    %v765 = vld [vmem:[#allocation6 + $0x1278] sm:$0xff]
    %v766 = vld [vmem:[#allocation6 + $0x1280] sm:$0xff]
    %v767 = vld [vmem:[#allocation6 + $0x1288] sm:$0xff]
    %v768 = vld [vmem:[#allocation6 + $0x1290] sm:$0xff]
    %v769 = vld [vmem:[#allocation6 + $0x1298] sm:$0xff]
    %v770 = vld [vmem:[#allocation6 + $0x12a0] sm:$0xff]
    %v771 = vld [vmem:[#allocation6 + $0x12a8] sm:$0xff]
    %v772 = vld [vmem:[#allocation6 + $0x12b0] sm:$0xff]
    %v773 = vld [vmem:[#allocation6 + $0x12b8] sm:$0xff]
    %v774 = vld [vmem:[#allocation6 + $0x12c0] sm:$0xff]
    %v775 = vld [vmem:[#allocation6 + $0x12c8] sm:$0xff]
    %v776 = vld [vmem:[#allocation6 + $0x12d0] sm:$0xff]
    %v777 = vld [vmem:[#allocation6 + $0x12d8] sm:$0xff]
    %v778 = vld [vmem:[#allocation6 + $0x12e0] sm:$0xff]
    %v779 = vld [vmem:[#allocation6 + $0x12e8] sm:$0xff]
    %v780 = vld [vmem:[#allocation6 + $0x12f0] sm:$0xff]
    %v781 = vld [vmem:[#allocation6 + $0x12f8] sm:$0xff]
    %v782 = vld [vmem:[#allocation6 + $0x1300] sm:$0xff]
    %v783 = vld [vmem:[#allocation6 + $0x1308] sm:$0xff]
    %v784 = vld [vmem:[#allocation6 + $0x1310] sm:$0xff]
    %v785 = vld [vmem:[#allocation6 + $0x1318] sm:$0xff]
    %v786 = vld [vmem:[#allocation6 + $0x1320] sm:$0xff]
    %v787 = vld [vmem:[#allocation6 + $0x1328] sm:$0xff]
    %v788 = vld [vmem:[#allocation6 + $0x1330] sm:$0xff]
    %v789 = vld [vmem:[#allocation6 + $0x1338] sm:$0xff]
    %v790 = vld [vmem:[#allocation6 + $0x1340] sm:$0xff]
    %v791 = vld [vmem:[#allocation6 + $0x1348] sm:$0xff]
    %v792 = vld [vmem:[#allocation6 + $0x1350] sm:$0xff]
    %v793 = vld [vmem:[#allocation6 + $0x1358] sm:$0xff]
    %v794 = vld [vmem:[#allocation6 + $0x1360] sm:$0xff]
    %v795 = vld [vmem:[#allocation6 + $0x1368] sm:$0xff]
    %v796 = vld [vmem:[#allocation6 + $0x1370] sm:$0xff]
    %v797 = vld [vmem:[#allocation6 + $0x1378] sm:$0xff]
    %v798 = vld [vmem:[#allocation6 + $0x1380] sm:$0xff]
    %v799 = vld [vmem:[#allocation6 + $0x1388] sm:$0xff]
    %v800 = vld [vmem:[#allocation6 + $0x1390] sm:$0xff]
    %v801 = vld [vmem:[#allocation6 + $0x1398] sm:$0xff]
    %v802 = vld [vmem:[#allocation6 + $0x13a0] sm:$0xff]
    %v803 = vld [vmem:[#allocation6 + $0x13a8] sm:$0xff]
    %v804 = vld [vmem:[#allocation6 + $0x13b0] sm:$0xff]
    %v805 = vld [vmem:[#allocation6 + $0x13b8] sm:$0xff]
    %v806 = vld [vmem:[#allocation6 + $0x13c0] sm:$0xff]
    %v807 = vld [vmem:[#allocation6 + $0x13c8] sm:$0xff]
    %v808 = vld [vmem:[#allocation6 + $0x13d0] sm:$0xff]
    %v809 = vld [vmem:[#allocation6 + $0x13d8] sm:$0xff]
    %v810 = vld [vmem:[#allocation6 + $0x13e0] sm:$0xff]
    %v811 = vld [vmem:[#allocation6 + $0x13e8] sm:$0xff]
    %v812 = vld [vmem:[#allocation6 + $0x13f0] sm:$0xff]
    %v813 = vld [vmem:[#allocation6 + $0x13f8] sm:$0xff]
    %v814 = vld [vmem:[#allocation6 + $0x1400] sm:$0xff]
    %v815 = vld [vmem:[#allocation6 + $0x1408] sm:$0xff]
    %v816 = vld [vmem:[#allocation6 + $0x1410] sm:$0xff]
    %v817 = vld [vmem:[#allocation6 + $0x1418] sm:$0xff]
    %v818 = vld [vmem:[#allocation6 + $0x1420] sm:$0xff]
    %v819 = vld [vmem:[#allocation6 + $0x1428] sm:$0xff]
    %v820 = vld [vmem:[#allocation6 + $0x1430] sm:$0xff]
    %v821 = vld [vmem:[#allocation6 + $0x1438] sm:$0xff]
    %v822 = vld [vmem:[#allocation6 + $0x1440] sm:$0xff]
    %v823 = vld [vmem:[#allocation6 + $0x1448] sm:$0xff]
    %v824 = vld [vmem:[#allocation6 + $0x1450] sm:$0xff]
    %v825 = vld [vmem:[#allocation6 + $0x1458] sm:$0xff]
    %v826 = vld [vmem:[#allocation6 + $0x1460] sm:$0xff]
    %v827 = vld [vmem:[#allocation6 + $0x1468] sm:$0xff]
    %v828 = vld [vmem:[#allocation6 + $0x1470] sm:$0xff]
    %v829 = vld [vmem:[#allocation6 + $0x1478] sm:$0xff]
    %v830 = vld [vmem:[#allocation6 + $0x1480] sm:$0xff]
    %v831 = vld [vmem:[#allocation6 + $0x1488] sm:$0xff]
    %v832 = vld [vmem:[#allocation6 + $0x1490] sm:$0xff]
    %v833 = vld [vmem:[#allocation6 + $0x1498] sm:$0xff]
    %v834 = vld [vmem:[#allocation6 + $0x14a0] sm:$0xff]
    %v835 = vld [vmem:[#allocation6 + $0x14a8] sm:$0xff]
    %v836 = vld [vmem:[#allocation6 + $0x14b0] sm:$0xff]
    %v837 = vld [vmem:[#allocation6 + $0x14b8] sm:$0xff]
    %v838 = vld [vmem:[#allocation6 + $0x14c0] sm:$0xff]
    %v839 = vld [vmem:[#allocation6 + $0x14c8] sm:$0xff]
    %v840 = vld [vmem:[#allocation6 + $0x14d0] sm:$0xff]
    %v841 = vld [vmem:[#allocation6 + $0x14d8] sm:$0xff]
    %v842 = vld [vmem:[#allocation6 + $0x14e0] sm:$0xff]
    %v843 = vld [vmem:[#allocation6 + $0x14e8] sm:$0xff]
    %v844 = vld [vmem:[#allocation6 + $0x14f0] sm:$0xff]
    %v845 = vld [vmem:[#allocation6 + $0x14f8] sm:$0xff]
    %v846 = vld [vmem:[#allocation6 + $0x1500] sm:$0xff]
    %v847 = vld [vmem:[#allocation6 + $0x1508] sm:$0xff]
    %v848 = vld [vmem:[#allocation6 + $0x1510] sm:$0xff]
    %v849 = vld [vmem:[#allocation6 + $0x1518] sm:$0xff]
    %v850 = vld [vmem:[#allocation6 + $0x1520] sm:$0xff]
    %v851 = vld [vmem:[#allocation6 + $0x1528] sm:$0xff]
    %v852 = vld [vmem:[#allocation6 + $0x1530] sm:$0xff]
    %v853 = vld [vmem:[#allocation6 + $0x1538] sm:$0xff]
    %v854 = vld [vmem:[#allocation6 + $0x1540] sm:$0xff]
    %v855 = vld [vmem:[#allocation6 + $0x1548] sm:$0xff]
    %v856 = vld [vmem:[#allocation6 + $0x1550] sm:$0xff]
    %v857 = vld [vmem:[#allocation6 + $0x1558] sm:$0xff]
    %v858 = vld [vmem:[#allocation6 + $0x1560] sm:$0xff]
    %v859 = vld [vmem:[#allocation6 + $0x1568] sm:$0xff]
    %v860 = vld [vmem:[#allocation6 + $0x1570] sm:$0xff]
    %v861 = vld [vmem:[#allocation6 + $0x1578] sm:$0xff]
    %v862 = vld [vmem:[#allocation6 + $0x1580] sm:$0xff]
    %v863 = vld [vmem:[#allocation6 + $0x1588] sm:$0xff]
    %v864 = vld [vmem:[#allocation6 + $0x1590] sm:$0xff]
    %v865 = vld [vmem:[#allocation6 + $0x1598] sm:$0xff]
    %v866 = vld [vmem:[#allocation6 + $0x15a0] sm:$0xff]
    %v867 = vld [vmem:[#allocation6 + $0x15a8] sm:$0xff]
    %v868 = vld [vmem:[#allocation6 + $0x15b0] sm:$0xff]
    %v869 = vld [vmem:[#allocation6 + $0x15b8] sm:$0xff]
    %v870 = vld [vmem:[#allocation6 + $0x15c0] sm:$0xff]
    %v871 = vld [vmem:[#allocation6 + $0x15c8] sm:$0xff]
    %v872 = vld [vmem:[#allocation6 + $0x15d0] sm:$0xff]
    %v873 = vld [vmem:[#allocation6 + $0x15d8] sm:$0xff]
    %v874 = vld [vmem:[#allocation6 + $0x15e0] sm:$0xff]
    %v875 = vld [vmem:[#allocation6 + $0x15e8] sm:$0xff]
    %v876 = vld [vmem:[#allocation6 + $0x15f0] sm:$0xff]
    %v877 = vld [vmem:[#allocation6 + $0x15f8] sm:$0xff]
    %v878 = vld [vmem:[#allocation6 + $0x1600] sm:$0xff]
    %v879 = vld [vmem:[#allocation6 + $0x1608] sm:$0xff]
    %v880 = vld [vmem:[#allocation6 + $0x1610] sm:$0xff]
    %v881 = vld [vmem:[#allocation6 + $0x1618] sm:$0xff]
    %v882 = vld [vmem:[#allocation6 + $0x1620] sm:$0xff]
    %v883 = vld [vmem:[#allocation6 + $0x1628] sm:$0xff]
    %v884 = vld [vmem:[#allocation6 + $0x1630] sm:$0xff]
    %v885 = vld [vmem:[#allocation6 + $0x1638] sm:$0xff]
    %v886 = vld [vmem:[#allocation6 + $0x1640] sm:$0xff]
    %v887 = vld [vmem:[#allocation6 + $0x1648] sm:$0xff]
    %v888 = vld [vmem:[#allocation6 + $0x1650] sm:$0xff]
    %v889 = vld [vmem:[#allocation6 + $0x1658] sm:$0xff]
    %v890 = vld [vmem:[#allocation6 + $0x1660] sm:$0xff]
    %v891 = vld [vmem:[#allocation6 + $0x1668] sm:$0xff]
    %v892 = vld [vmem:[#allocation6 + $0x1670] sm:$0xff]
    %v893 = vld [vmem:[#allocation6 + $0x1678] sm:$0xff]
    %v894 = vld [vmem:[#allocation6 + $0x1680] sm:$0xff]
    %v895 = vld [vmem:[#allocation6 + $0x1688] sm:$0xff]
    %v896 = vld [vmem:[#allocation6 + $0x1690] sm:$0xff]
    %v897 = vld [vmem:[#allocation6 + $0x1698] sm:$0xff]
    %v898 = vld [vmem:[#allocation6 + $0x16a0] sm:$0xff]
    %v899 = vld [vmem:[#allocation6 + $0x16a8] sm:$0xff]
    %v900 = vld [vmem:[#allocation6 + $0x16b0] sm:$0xff]
    %v901 = vld [vmem:[#allocation6 + $0x16b8] sm:$0xff]
    %v902 = vld [vmem:[#allocation6 + $0x16c0] sm:$0xff]
    %v903 = vld [vmem:[#allocation6 + $0x16c8] sm:$0xff]
    %v904 = vld [vmem:[#allocation6 + $0x16d0] sm:$0xff]
    %v905 = vld [vmem:[#allocation6 + $0x16d8] sm:$0xff]
    %v906 = vld [vmem:[#allocation6 + $0x16e0] sm:$0xff]
    %v907 = vld [vmem:[#allocation6 + $0x16e8] sm:$0xff]
    %v908 = vld [vmem:[#allocation6 + $0x16f0] sm:$0xff]
    %v909 = vld [vmem:[#allocation6 + $0x16f8] sm:$0xff]
    %v910 = vld [vmem:[#allocation6 + $0x1700] sm:$0xff]
    %v911 = vld [vmem:[#allocation6 + $0x1708] sm:$0xff]
    %v912 = vld [vmem:[#allocation6 + $0x1710] sm:$0xff]
    %v913 = vld [vmem:[#allocation6 + $0x1718] sm:$0xff]
    %v914 = vld [vmem:[#allocation6 + $0x1720] sm:$0xff]
    %v915 = vld [vmem:[#allocation6 + $0x1728] sm:$0xff]
    %v916 = vld [vmem:[#allocation6 + $0x1730] sm:$0xff]
    %v917 = vld [vmem:[#allocation6 + $0x1738] sm:$0xff]
    %v918 = vld [vmem:[#allocation6 + $0x1740] sm:$0xff]
    %v919 = vld [vmem:[#allocation6 + $0x1748] sm:$0xff]
    %v920 = vld [vmem:[#allocation6 + $0x1750] sm:$0xff]
    %v921 = vld [vmem:[#allocation6 + $0x1758] sm:$0xff]
    %v922 = vld [vmem:[#allocation6 + $0x1760] sm:$0xff]
    %v923 = vld [vmem:[#allocation6 + $0x1768] sm:$0xff]
    %v924 = vld [vmem:[#allocation6 + $0x1770] sm:$0xff]
    %v925 = vld [vmem:[#allocation6 + $0x1778] sm:$0xff]
    %v926 = vld [vmem:[#allocation6 + $0x1780] sm:$0xff]
    %v927 = vld [vmem:[#allocation6 + $0x1788] sm:$0xff]
    %v928 = vld [vmem:[#allocation6 + $0x1790] sm:$0xff]
    %v929 = vld [vmem:[#allocation6 + $0x1798] sm:$0xff]
    %v930 = vld [vmem:[#allocation6 + $0x17a0] sm:$0xff]
    %v931 = vld [vmem:[#allocation6 + $0x17a8] sm:$0xff]
    %v932 = vld [vmem:[#allocation6 + $0x17b0] sm:$0xff]
    %v933 = vld [vmem:[#allocation6 + $0x17b8] sm:$0xff]
    %v934 = vld [vmem:[#allocation6 + $0x17c0] sm:$0xff]
    %v935 = vld [vmem:[#allocation6 + $0x17c8] sm:$0xff]
    %v936 = vld [vmem:[#allocation6 + $0x17d0] sm:$0xff]
    %v937 = vld [vmem:[#allocation6 + $0x17d8] sm:$0xff]
    %v938 = vld [vmem:[#allocation6 + $0x17e0] sm:$0xff]
    %v939 = vld [vmem:[#allocation6 + $0x17e8] sm:$0xff]
    %v940 = vld [vmem:[#allocation6 + $0x17f0] sm:$0xff]
    %v941 = vld [vmem:[#allocation6 + $0x17f8] sm:$0xff]
    %v942 = vld [vmem:[#allocation6 + $0x1800] sm:$0xff]
    %v943 = vld [vmem:[#allocation6 + $0x1808] sm:$0xff]
    %v944 = vld [vmem:[#allocation6 + $0x1810] sm:$0xff]
    %v945 = vld [vmem:[#allocation6 + $0x1818] sm:$0xff]
    %v946 = vld [vmem:[#allocation6 + $0x1820] sm:$0xff]
    %v947 = vld [vmem:[#allocation6 + $0x1828] sm:$0xff]
    %v948 = vld [vmem:[#allocation6 + $0x1830] sm:$0xff]
    %v949 = vld [vmem:[#allocation6 + $0x1838] sm:$0xff]
    %v950 = vld [vmem:[#allocation6 + $0x1840] sm:$0xff]
    %v951 = vld [vmem:[#allocation6 + $0x1848] sm:$0xff]
    %v952 = vld [vmem:[#allocation6 + $0x1850] sm:$0xff]
    %v953 = vld [vmem:[#allocation6 + $0x1858] sm:$0xff]
    %v954 = vld [vmem:[#allocation6 + $0x1860] sm:$0xff]
    %v955 = vld [vmem:[#allocation6 + $0x1868] sm:$0xff]
    %v956 = vld [vmem:[#allocation6 + $0x1870] sm:$0xff]
    %v957 = vld [vmem:[#allocation6 + $0x1878] sm:$0xff]
    %v958 = vld [vmem:[#allocation6 + $0x1880] sm:$0xff]
    %v959 = vld [vmem:[#allocation6 + $0x1888] sm:$0xff]
    %v960 = vld [vmem:[#allocation6 + $0x1890] sm:$0xff]
    %v961 = vld [vmem:[#allocation6 + $0x1898] sm:$0xff]
    %v962 = vld [vmem:[#allocation6 + $0x18a0] sm:$0xff]
    %v963 = vld [vmem:[#allocation6 + $0x18a8] sm:$0xff]
    %v964 = vld [vmem:[#allocation6 + $0x18b0] sm:$0xff]
    %v965 = vld [vmem:[#allocation6 + $0x18b8] sm:$0xff]
    %v966 = vld [vmem:[#allocation6 + $0x18c0] sm:$0xff]
    %v967 = vld [vmem:[#allocation6 + $0x18c8] sm:$0xff]
    %v968 = vld [vmem:[#allocation6 + $0x18d0] sm:$0xff]
    %v969 = vld [vmem:[#allocation6 + $0x18d8] sm:$0xff]
    %v970 = vld [vmem:[#allocation6 + $0x18e0] sm:$0xff]
    %v971 = vld [vmem:[#allocation6 + $0x18e8] sm:$0xff]
    %v972 = vld [vmem:[#allocation6 + $0x18f0] sm:$0xff]
    %v973 = vld [vmem:[#allocation6 + $0x18f8] sm:$0xff]
    %v974 = vld [vmem:[#allocation6 + $0x1900] sm:$0xff]
    %v975 = vld [vmem:[#allocation6 + $0x1908] sm:$0xff]
    %v976 = vld [vmem:[#allocation6 + $0x1910] sm:$0xff]
    %v977 = vld [vmem:[#allocation6 + $0x1918] sm:$0xff]
    %v978 = vld [vmem:[#allocation6 + $0x1920] sm:$0xff]
    %v979 = vld [vmem:[#allocation6 + $0x1928] sm:$0xff]
    %v980 = vld [vmem:[#allocation6 + $0x1930] sm:$0xff]
    %v981 = vld [vmem:[#allocation6 + $0x1938] sm:$0xff]
    %v982 = vld [vmem:[#allocation6 + $0x1940] sm:$0xff]
    %v983 = vld [vmem:[#allocation6 + $0x1948] sm:$0xff]
    %v984 = vld [vmem:[#allocation6 + $0x1950] sm:$0xff]
    %v985 = vld [vmem:[#allocation6 + $0x1958] sm:$0xff]
    %v986 = vld [vmem:[#allocation6 + $0x1960] sm:$0xff]
    %v987 = vld [vmem:[#allocation6 + $0x1968] sm:$0xff]
    %v988 = vld [vmem:[#allocation6 + $0x1970] sm:$0xff]
    %v989 = vld [vmem:[#allocation6 + $0x1978] sm:$0xff]
    %v990 = vld [vmem:[#allocation6 + $0x1980] sm:$0xff]
    %v991 = vld [vmem:[#allocation6 + $0x1988] sm:$0xff]
    %v992 = vld [vmem:[#allocation6 + $0x1990] sm:$0xff]
    %v993 = vld [vmem:[#allocation6 + $0x1998] sm:$0xff]
    %v994 = vld [vmem:[#allocation6 + $0x19a0] sm:$0xff]
    %v995 = vld [vmem:[#allocation6 + $0x19a8] sm:$0xff]
    %v996 = vld [vmem:[#allocation6 + $0x19b0] sm:$0xff]
    %v997 = vld [vmem:[#allocation6 + $0x19b8] sm:$0xff]
    %v998 = vld [vmem:[#allocation6 + $0x19c0] sm:$0xff]
    %v999 = vld [vmem:[#allocation6 + $0x19c8] sm:$0xff]
    %v1000 = vld [vmem:[#allocation6 + $0x19d0] sm:$0xff]
    %v1001 = vld [vmem:[#allocation6 + $0x19d8] sm:$0xff]
    %v1002 = vld [vmem:[#allocation6 + $0x19e0] sm:$0xff]
    %v1003 = vld [vmem:[#allocation6 + $0x19e8] sm:$0xff]
    %v1004 = vld [vmem:[#allocation6 + $0x19f0] sm:$0xff]
    %v1005 = vld [vmem:[#allocation6 + $0x19f8] sm:$0xff]
    %v1006 = vld [vmem:[#allocation6 + $0x1a00] sm:$0xff]
    %v1007 = vld [vmem:[#allocation6 + $0x1a08] sm:$0xff]
    %v1008 = vld [vmem:[#allocation6 + $0x1a10] sm:$0xff]
    %v1009 = vld [vmem:[#allocation6 + $0x1a18] sm:$0xff]
    %v1010 = vld [vmem:[#allocation6 + $0x1a20] sm:$0xff]
    %v1011 = vld [vmem:[#allocation6 + $0x1a28] sm:$0xff]
    %v1012 = vld [vmem:[#allocation6 + $0x1a30] sm:$0xff]
    %v1013 = vld [vmem:[#allocation6 + $0x1a38] sm:$0xff]
    %v1014 = vld [vmem:[#allocation6 + $0x1a40] sm:$0xff]
    %v1015 = vld [vmem:[#allocation6 + $0x1a48] sm:$0xff]
    %v1016 = vld [vmem:[#allocation6 + $0x1a50] sm:$0xff]
    %v1017 = vld [vmem:[#allocation6 + $0x1a58] sm:$0xff]
    %v1018 = vld [vmem:[#allocation6 + $0x1a60] sm:$0xff]
    %v1019 = vld [vmem:[#allocation6 + $0x1a68] sm:$0xff]
    %v1020 = vld [vmem:[#allocation6 + $0x1a70] sm:$0xff]
    %v1021 = vld [vmem:[#allocation6 + $0x1a78] sm:$0xff]
    %v1022 = vld [vmem:[#allocation6 + $0x1a80] sm:$0xff]
    %v1023 = vld [vmem:[#allocation6 + $0x1a88] sm:$0xff]
    %v1024 = vld [vmem:[#allocation6 + $0x1a90] sm:$0xff]
    %v1025 = vld [vmem:[#allocation6 + $0x1a98] sm:$0xff]
    %v1026 = vld [vmem:[#allocation6 + $0x1aa0] sm:$0xff]
    %v1027 = vld [vmem:[#allocation6 + $0x1aa8] sm:$0xff]
    %v1028 = vld [vmem:[#allocation6 + $0x1ab0] sm:$0xff]
    %v1029 = vld [vmem:[#allocation6 + $0x1ab8] sm:$0xff]
    %v1030 = vld [vmem:[#allocation6 + $0x1ac0] sm:$0xff]
    %v1031 = vld [vmem:[#allocation6 + $0x1ac8] sm:$0xff]
    %v1032 = vld [vmem:[#allocation6 + $0x1ad0] sm:$0xff]
    %v1033 = vld [vmem:[#allocation6 + $0x1ad8] sm:$0xff]
    %v1034 = vld [vmem:[#allocation6 + $0x1ae0] sm:$0xff]
    %v1035 = vld [vmem:[#allocation6 + $0x1ae8] sm:$0xff]
    %v1036 = vld [vmem:[#allocation6 + $0x1af0] sm:$0xff]
    %v1037 = vld [vmem:[#allocation6 + $0x1af8] sm:$0xff]
    %v1038 = vld [vmem:[#allocation6 + $0x1b00] sm:$0xff]
    %v1039 = vld [vmem:[#allocation6 + $0x1b08] sm:$0xff]
    %v1040 = vld [vmem:[#allocation6 + $0x1b10] sm:$0xff]
    %v1041 = vld [vmem:[#allocation6 + $0x1b18] sm:$0xff]
    %v1042 = vld [vmem:[#allocation6 + $0x1b20] sm:$0xff]
    %v1043 = vld [vmem:[#allocation6 + $0x1b28] sm:$0xff]
    %v1044 = vld [vmem:[#allocation6 + $0x1b30] sm:$0xff]
    %v1045 = vld [vmem:[#allocation6 + $0x1b38] sm:$0xff]
    %v1046 = vld [vmem:[#allocation6 + $0x1b40] sm:$0xff]
    %v1047 = vld [vmem:[#allocation6 + $0x1b48] sm:$0xff]
    %v1048 = vld [vmem:[#allocation6 + $0x1b50] sm:$0xff]
    %v1049 = vld [vmem:[#allocation6 + $0x1b58] sm:$0xff]
    %v1050 = vld [vmem:[#allocation6 + $0x1b60] sm:$0xff]
    %v1051 = vld [vmem:[#allocation6 + $0x1b68] sm:$0xff]
    %v1052 = vld [vmem:[#allocation6 + $0x1b70] sm:$0xff]
    %v1053 = vld [vmem:[#allocation6 + $0x1b78] sm:$0xff]
    %v1054 = vld [vmem:[#allocation6 + $0x1b80] sm:$0xff]
    %v1055 = vld [vmem:[#allocation6 + $0x1b88] sm:$0xff]
    %v1056 = vld [vmem:[#allocation6 + $0x1b90] sm:$0xff]
    %v1057 = vld [vmem:[#allocation6 + $0x1b98] sm:$0xff]
    %v1058 = vld [vmem:[#allocation6 + $0x1ba0] sm:$0xff]
    %v1059 = vld [vmem:[#allocation6 + $0x1ba8] sm:$0xff]
    %v1060 = vld [vmem:[#allocation6 + $0x1bb0] sm:$0xff]
    %v1061 = vld [vmem:[#allocation6 + $0x1bb8] sm:$0xff]
    %v1062 = vld [vmem:[#allocation6 + $0x1bc0] sm:$0xff]
    %v1063 = vld [vmem:[#allocation6 + $0x1bc8] sm:$0xff]
    %v1064 = vld [vmem:[#allocation6 + $0x1bd0] sm:$0xff]
    %v1065 = vld [vmem:[#allocation6 + $0x1bd8] sm:$0xff]
    %v1066 = vld [vmem:[#allocation6 + $0x1be0] sm:$0xff]
    %v1067 = vld [vmem:[#allocation6 + $0x1be8] sm:$0xff]
    %v1068 = vld [vmem:[#allocation6 + $0x1bf0] sm:$0xff]
    %v1069 = vld [vmem:[#allocation6 + $0x1bf8] sm:$0xff]
    %v1070 = vld [vmem:[#allocation6 + $0x1c00] sm:$0xff]
    %v1071 = vld [vmem:[#allocation6 + $0x1c08] sm:$0xff]
    %v1072 = vld [vmem:[#allocation6 + $0x1c10] sm:$0xff]
    %v1073 = vld [vmem:[#allocation6 + $0x1c18] sm:$0xff]
    %v1074 = vld [vmem:[#allocation6 + $0x1c20] sm:$0xff]
    %v1075 = vld [vmem:[#allocation6 + $0x1c28] sm:$0xff]
    %v1076 = vld [vmem:[#allocation6 + $0x1c30] sm:$0xff]
    %v1077 = vld [vmem:[#allocation6 + $0x1c38] sm:$0xff]
    %v1078 = vld [vmem:[#allocation6 + $0x1c40] sm:$0xff]
    %v1079 = vld [vmem:[#allocation6 + $0x1c48] sm:$0xff]
    %v1080 = vld [vmem:[#allocation6 + $0x1c50] sm:$0xff]
    %v1081 = vld [vmem:[#allocation6 + $0x1c58] sm:$0xff]
    %v1082 = vld [vmem:[#allocation6 + $0x1c60] sm:$0xff]
    %v1083 = vld [vmem:[#allocation6 + $0x1c68] sm:$0xff]
    %v1084 = vld [vmem:[#allocation6 + $0x1c70] sm:$0xff]
    %v1085 = vld [vmem:[#allocation6 + $0x1c78] sm:$0xff]
    %v1086 = vld [vmem:[#allocation6 + $0x1c80] sm:$0xff]
    %v1087 = vld [vmem:[#allocation6 + $0x1c88] sm:$0xff]
    %v1088 = vld [vmem:[#allocation6 + $0x1c90] sm:$0xff]
    %v1089 = vld [vmem:[#allocation6 + $0x1c98] sm:$0xff]
    %v1090 = vld [vmem:[#allocation6 + $0x1ca0] sm:$0xff]
    %v1091 = vld [vmem:[#allocation6 + $0x1ca8] sm:$0xff]
    %v1092 = vld [vmem:[#allocation6 + $0x1cb0] sm:$0xff]
    %v1093 = vld [vmem:[#allocation6 + $0x1cb8] sm:$0xff]
    %v1094 = vld [vmem:[#allocation6 + $0x1cc0] sm:$0xff]
    %v1095 = vld [vmem:[#allocation6 + $0x1cc8] sm:$0xff]
    %v1096 = vld [vmem:[#allocation6 + $0x1cd0] sm:$0xff]
    %v1097 = vld [vmem:[#allocation6 + $0x1cd8] sm:$0xff]
    %v1098 = vld [vmem:[#allocation6 + $0x1ce0] sm:$0xff]
    %v1099 = vld [vmem:[#allocation6 + $0x1ce8] sm:$0xff]
    %v1100 = vld [vmem:[#allocation6 + $0x1cf0] sm:$0xff]
    %v1101 = vld [vmem:[#allocation6 + $0x1cf8] sm:$0xff]
    %v1102 = vld [vmem:[#allocation6 + $0x1d00] sm:$0xff]
    %v1103 = vld [vmem:[#allocation6 + $0x1d08] sm:$0xff]
    %v1104 = vld [vmem:[#allocation6 + $0x1d10] sm:$0xff]
    %v1105 = vld [vmem:[#allocation6 + $0x1d18] sm:$0xff]
    %v1106 = vld [vmem:[#allocation6 + $0x1d20] sm:$0xff]
    %v1107 = vld [vmem:[#allocation6 + $0x1d28] sm:$0xff]
    %v1108 = vld [vmem:[#allocation6 + $0x1d30] sm:$0xff]
    %v1109 = vld [vmem:[#allocation6 + $0x1d38] sm:$0xff]
    %v1110 = vld [vmem:[#allocation6 + $0x1d40] sm:$0xff]
    %v1111 = vld [vmem:[#allocation6 + $0x1d48] sm:$0xff]
    %v1112 = vld [vmem:[#allocation6 + $0x1d50] sm:$0xff]
    %v1113 = vld [vmem:[#allocation6 + $0x1d58] sm:$0xff]
    %v1114 = vld [vmem:[#allocation6 + $0x1d60] sm:$0xff]
    %v1115 = vld [vmem:[#allocation6 + $0x1d68] sm:$0xff]
    %v1116 = vld [vmem:[#allocation6 + $0x1d70] sm:$0xff]
    %v1117 = vld [vmem:[#allocation6 + $0x1d78] sm:$0xff]
    %v1118 = vld [vmem:[#allocation6 + $0x1d80] sm:$0xff]
    %v1119 = vld [vmem:[#allocation6 + $0x1d88] sm:$0xff]
    %v1120 = vld [vmem:[#allocation6 + $0x1d90] sm:$0xff]
    %v1121 = vld [vmem:[#allocation6 + $0x1d98] sm:$0xff]
    %v1122 = vld [vmem:[#allocation6 + $0x1da0] sm:$0xff]
    %v1123 = vld [vmem:[#allocation6 + $0x1da8] sm:$0xff]
    %v1124 = vld [vmem:[#allocation6 + $0x1db0] sm:$0xff]
    %v1125 = vld [vmem:[#allocation6 + $0x1db8] sm:$0xff]
    %v1126 = vld [vmem:[#allocation6 + $0x1dc0] sm:$0xff]
    %v1127 = vld [vmem:[#allocation6 + $0x1dc8] sm:$0xff]
    %v1128 = vld [vmem:[#allocation6 + $0x1dd0] sm:$0xff]
    %v1129 = vld [vmem:[#allocation6 + $0x1dd8] sm:$0xff]
    %v1130 = vld [vmem:[#allocation6 + $0x1de0] sm:$0xff]
    %v1131 = vld [vmem:[#allocation6 + $0x1de8] sm:$0xff]
    %v1132 = vld [vmem:[#allocation6 + $0x1df0] sm:$0xff]
    %v1133 = vld [vmem:[#allocation6 + $0x1df8] sm:$0xff]
    %v1134 = vld [vmem:[#allocation6 + $0x1e00] sm:$0xff]
    %v1135 = vld [vmem:[#allocation6 + $0x1e08] sm:$0xff]
    %v1136 = vld [vmem:[#allocation6 + $0x1e10] sm:$0xff]
    %v1137 = vld [vmem:[#allocation6 + $0x1e18] sm:$0xff]
    %v1138 = vld [vmem:[#allocation6 + $0x1e20] sm:$0xff]
    %v1139 = vld [vmem:[#allocation6 + $0x1e28] sm:$0xff]
    %v1140 = vld [vmem:[#allocation6 + $0x1e30] sm:$0xff]
    %v1141 = vld [vmem:[#allocation6 + $0x1e38] sm:$0xff]
    %v1142 = vld [vmem:[#allocation6 + $0x1e40] sm:$0xff]
    %v1143 = vld [vmem:[#allocation6 + $0x1e48] sm:$0xff]
    %v1144 = vld [vmem:[#allocation6 + $0x1e50] sm:$0xff]
    %v1145 = vld [vmem:[#allocation6 + $0x1e58] sm:$0xff]
    %v1146 = vld [vmem:[#allocation6 + $0x1e60] sm:$0xff]
    %v1147 = vld [vmem:[#allocation6 + $0x1e68] sm:$0xff]
    %v1148 = vld [vmem:[#allocation6 + $0x1e70] sm:$0xff]
    %v1149 = vld [vmem:[#allocation6 + $0x1e78] sm:$0xff]
    %v1150 = vld [vmem:[#allocation6 + $0x1e80] sm:$0xff]
    %v1151 = vld [vmem:[#allocation6 + $0x1e88] sm:$0xff]
    %v1152 = vld [vmem:[#allocation6 + $0x1e90] sm:$0xff]
    %v1153 = vld [vmem:[#allocation6 + $0x1e98] sm:$0xff]
    %v1154 = vld [vmem:[#allocation6 + $0x1ea0] sm:$0xff]
    %v1155 = vld [vmem:[#allocation6 + $0x1ea8] sm:$0xff]
    %v1156 = vld [vmem:[#allocation6 + $0x1eb0] sm:$0xff]
    %v1157 = vld [vmem:[#allocation6 + $0x1eb8] sm:$0xff]
    %v1158 = vld [vmem:[#allocation6 + $0x1ec0] sm:$0xff]
    %v1159 = vld [vmem:[#allocation6 + $0x1ec8] sm:$0xff]
    %v1160 = vld [vmem:[#allocation6 + $0x1ed0] sm:$0xff]
    %v1161 = vld [vmem:[#allocation6 + $0x1ed8] sm:$0xff]
    %v1162 = vld [vmem:[#allocation6 + $0x1ee0] sm:$0xff]
    %v1163 = vld [vmem:[#allocation6 + $0x1ee8] sm:$0xff]
    %v1164 = vld [vmem:[#allocation6 + $0x1ef0] sm:$0xff]
    %v1165 = vld [vmem:[#allocation6 + $0x1ef8] sm:$0xff]
    %v1166 = vld [vmem:[#allocation6 + $0x1f00] sm:$0xff]
    %v1167 = vld [vmem:[#allocation6 + $0x1f08] sm:$0xff]
    %v1168 = vld [vmem:[#allocation6 + $0x1f10] sm:$0xff]
    %v1169 = vld [vmem:[#allocation6 + $0x1f18] sm:$0xff]
    %v1170 = vld [vmem:[#allocation6 + $0x1f20] sm:$0xff]
    %v1171 = vld [vmem:[#allocation6 + $0x1f28] sm:$0xff]
    %v1172 = vld [vmem:[#allocation6 + $0x1f30] sm:$0xff]
    %v1173 = vld [vmem:[#allocation6 + $0x1f38] sm:$0xff]
    %v1174 = vld [vmem:[#allocation6 + $0x1f40] sm:$0xff]
    %v1175 = vld [vmem:[#allocation6 + $0x1f48] sm:$0xff]
    %v1176 = vld [vmem:[#allocation6 + $0x1f50] sm:$0xff]
    %v1177 = vld [vmem:[#allocation6 + $0x1f58] sm:$0xff]
    %v1178 = vld [vmem:[#allocation6 + $0x1f60] sm:$0xff]
    %v1179 = vld [vmem:[#allocation6 + $0x1f68] sm:$0xff]
    %v1180 = vld [vmem:[#allocation6 + $0x1f70] sm:$0xff]
    %v1181 = vld [vmem:[#allocation6 + $0x1f78] sm:$0xff]
    %v1182 = vld [vmem:[#allocation6 + $0x1f80] sm:$0xff]
    %v1183 = vld [vmem:[#allocation6 + $0x1f88] sm:$0xff]
    %v1184 = vld [vmem:[#allocation6 + $0x1f90] sm:$0xff]
    %v1185 = vld [vmem:[#allocation6 + $0x1f98] sm:$0xff]
    %v1186 = vld [vmem:[#allocation6 + $0x1fa0] sm:$0xff]
    %v1187 = vld [vmem:[#allocation6 + $0x1fa8] sm:$0xff]
    %v1188 = vld [vmem:[#allocation6 + $0x1fb0] sm:$0xff]
    %v1189 = vld [vmem:[#allocation6 + $0x1fb8] sm:$0xff]
    %v1190 = vld [vmem:[#allocation6 + $0x1fc0] sm:$0xff]
    %v1191 = vld [vmem:[#allocation6 + $0x1fc8] sm:$0xff]
    %v1192 = vld [vmem:[#allocation6 + $0x1fd0] sm:$0xff]
    %v1193 = vld [vmem:[#allocation6 + $0x1fd8] sm:$0xff]
    %v1194 = vld [vmem:[#allocation6 + $0x1fe0] sm:$0xff]
    %v1195 = vld [vmem:[#allocation6 + $0x1fe8] sm:$0xff]
    %v1196 = vld [vmem:[#allocation6 + $0x1ff0] sm:$0xff]
    %v1197 = vld [vmem:[#allocation6 + $0x1ff8] sm:$0xff]
    %v1198 = vld [vmem:[#allocation6 + $0x2000] sm:$0xff]
    %v1199 = vld [vmem:[#allocation6 + $0x2008] sm:$0xff]
    %v1200 = vld [vmem:[#allocation6 + $0x2010] sm:$0xff]
    %v1201 = vld [vmem:[#allocation6 + $0x2018] sm:$0xff]
    %v1202 = vld [vmem:[#allocation6 + $0x2020] sm:$0xff]
    %v1203 = vld [vmem:[#allocation6 + $0x2028] sm:$0xff]
    %v1204 = vld [vmem:[#allocation6 + $0x2030] sm:$0xff]
    %v1205 = vld [vmem:[#allocation6 + $0x2038] sm:$0xff]
    %v1206 = vld [vmem:[#allocation6 + $0x2040] sm:$0xff]
    %v1207 = vld [vmem:[#allocation6 + $0x2048] sm:$0xff]
    %v1208 = vld [vmem:[#allocation6 + $0x2050] sm:$0xff]
    %v1209 = vld [vmem:[#allocation6 + $0x2058] sm:$0xff]
    %v1210 = vld [vmem:[#allocation6 + $0x2060] sm:$0xff]
    %v1211 = vld [vmem:[#allocation6 + $0x2068] sm:$0xff]
    %v1212 = vld [vmem:[#allocation6 + $0x2070] sm:$0xff]
    %v1213 = vld [vmem:[#allocation6 + $0x2078] sm:$0xff]
    %v1214 = vld [vmem:[#allocation6 + $0x2080] sm:$0xff]
    %v1215 = vld [vmem:[#allocation6 + $0x2088] sm:$0xff]
    %v1216 = vld [vmem:[#allocation6 + $0x2090] sm:$0xff]
    %v1217 = vld [vmem:[#allocation6 + $0x2098] sm:$0xff]
    %v1218 = vld [vmem:[#allocation6 + $0x20a0] sm:$0xff]
    %v1219 = vld [vmem:[#allocation6 + $0x20a8] sm:$0xff]
    %v1220 = vld [vmem:[#allocation6 + $0x20b0] sm:$0xff]
    %v1221 = vld [vmem:[#allocation6 + $0x20b8] sm:$0xff]
    %v1222 = vld [vmem:[#allocation6 + $0x20c0] sm:$0xff]
    %v1223 = vld [vmem:[#allocation6 + $0x20c8] sm:$0xff]
    %v1224 = vld [vmem:[#allocation6 + $0x20d0] sm:$0xff]
    %v1225 = vld [vmem:[#allocation6 + $0x20d8] sm:$0xff]
    %v1226 = vld [vmem:[#allocation6 + $0x20e0] sm:$0xff]
    %v1227 = vld [vmem:[#allocation6 + $0x20e8] sm:$0xff]
    %v1228 = vld [vmem:[#allocation6 + $0x20f0] sm:$0xff]
    %v1229 = vld [vmem:[#allocation6 + $0x20f8] sm:$0xff]
    %v1230 = vld [vmem:[#allocation6 + $0x2100] sm:$0xff]
    %v1231 = vld [vmem:[#allocation6 + $0x2108] sm:$0xff]
    %v1232 = vld [vmem:[#allocation6 + $0x2110] sm:$0xff]
    %v1233 = vld [vmem:[#allocation6 + $0x2118] sm:$0xff]
    %v1234 = vld [vmem:[#allocation6 + $0x2120] sm:$0xff]
    %v1235 = vld [vmem:[#allocation6 + $0x2128] sm:$0xff]
    %v1236 = vld [vmem:[#allocation6 + $0x2130] sm:$0xff]
    %v1237 = vld [vmem:[#allocation6 + $0x2138] sm:$0xff]
    %v1238 = vld [vmem:[#allocation6 + $0x2140] sm:$0xff]
    %v1239 = vld [vmem:[#allocation6 + $0x2148] sm:$0xff]
    %v1240 = vld [vmem:[#allocation6 + $0x2150] sm:$0xff]
    %v1241 = vld [vmem:[#allocation6 + $0x2158] sm:$0xff]
    %v1242 = vld [vmem:[#allocation6 + $0x2160] sm:$0xff]
    %v1243 = vld [vmem:[#allocation6 + $0x2168] sm:$0xff]
    %v1244 = vld [vmem:[#allocation6 + $0x2170] sm:$0xff]
    %v1245 = vld [vmem:[#allocation6 + $0x2178] sm:$0xff]
    %v1246 = vld [vmem:[#allocation6 + $0x2180] sm:$0xff]
    %v1247 = vld [vmem:[#allocation6 + $0x2188] sm:$0xff]
    %v1248 = vld [vmem:[#allocation6 + $0x2190] sm:$0xff]
    %v1249 = vld [vmem:[#allocation6 + $0x2198] sm:$0xff]
    %v1250 = vld [vmem:[#allocation6 + $0x21a0] sm:$0xff]
    %v1251 = vld [vmem:[#allocation6 + $0x21a8] sm:$0xff]
    %v1252 = vld [vmem:[#allocation6 + $0x21b0] sm:$0xff]
    %v1253 = vld [vmem:[#allocation6 + $0x21b8] sm:$0xff]
    %v1254 = vld [vmem:[#allocation6 + $0x21c0] sm:$0xff]
    %v1255 = vld [vmem:[#allocation6 + $0x21c8] sm:$0xff]
    %v1256 = vld [vmem:[#allocation6 + $0x21d0] sm:$0xff]
    %v1257 = vld [vmem:[#allocation6 + $0x21d8] sm:$0xff]
    %v1258 = vld [vmem:[#allocation6 + $0x21e0] sm:$0xff]
    %v1259 = vld [vmem:[#allocation6 + $0x21e8] sm:$0xff]
    %v1260 = vld [vmem:[#allocation6 + $0x21f0] sm:$0xff]
    %v1261 = vld [vmem:[#allocation6 + $0x21f8] sm:$0xff]
    %v1262 = vld [vmem:[#allocation6 + $0x2200] sm:$0xff]
    %v1263 = vld [vmem:[#allocation6 + $0x2208] sm:$0xff]
    %v1264 = vld [vmem:[#allocation6 + $0x2210] sm:$0xff]
    %v1265 = vld [vmem:[#allocation6 + $0x2218] sm:$0xff]
    %v1266 = vld [vmem:[#allocation6 + $0x2220] sm:$0xff]
    %v1267 = vld [vmem:[#allocation6 + $0x2228] sm:$0xff]
    %v1268 = vld [vmem:[#allocation6 + $0x2230] sm:$0xff]
    %v1269 = vld [vmem:[#allocation6 + $0x2238] sm:$0xff]
    %v1270 = vld [vmem:[#allocation6 + $0x2240] sm:$0xff]
    %v1271 = vld [vmem:[#allocation6 + $0x2248] sm:$0xff]
    %v1272 = vld [vmem:[#allocation6 + $0x2250] sm:$0xff]
    %v1273 = vld [vmem:[#allocation6 + $0x2258] sm:$0xff]
    %v1274 = vld [vmem:[#allocation6 + $0x2260] sm:$0xff]
    %v1275 = vld [vmem:[#allocation6 + $0x2268] sm:$0xff]
    %v1276 = vld [vmem:[#allocation6 + $0x2270] sm:$0xff]
    %v1277 = vld [vmem:[#allocation6 + $0x2278] sm:$0xff]
    %v1278 = vld [vmem:[#allocation6 + $0x2280] sm:$0xff]
    %v1279 = vld [vmem:[#allocation6 + $0x2288] sm:$0xff]
    %v1280 = vld [vmem:[#allocation6 + $0x2290] sm:$0xff]
    %v1281 = vld [vmem:[#allocation6 + $0x2298] sm:$0xff]
    %v1282 = vld [vmem:[#allocation6 + $0x22a0] sm:$0xff]
    %v1283 = vld [vmem:[#allocation6 + $0x22a8] sm:$0xff]
    %v1284 = vld [vmem:[#allocation6 + $0x22b0] sm:$0xff]
    %v1285 = vld [vmem:[#allocation6 + $0x22b8] sm:$0xff]
    %v1286 = vld [vmem:[#allocation6 + $0x22c0] sm:$0xff]
    %v1287 = vld [vmem:[#allocation6 + $0x22c8] sm:$0xff]
    %v1288 = vld [vmem:[#allocation6 + $0x22d0] sm:$0xff]
    %v1289 = vld [vmem:[#allocation6 + $0x22d8] sm:$0xff]
    %v1290 = vld [vmem:[#allocation6 + $0x22e0] sm:$0xff]
    %v1291 = vld [vmem:[#allocation6 + $0x22e8] sm:$0xff]
    %v1292 = vld [vmem:[#allocation6 + $0x22f0] sm:$0xff]
    %v1293 = vld [vmem:[#allocation6 + $0x22f8] sm:$0xff]
    %v1294 = vld [vmem:[#allocation6 + $0x2300] sm:$0xff]
    %v1295 = vld [vmem:[#allocation6 + $0x2308] sm:$0xff]
    %v1296 = vld [vmem:[#allocation6 + $0x2310] sm:$0xff]
    %v1297 = vld [vmem:[#allocation6 + $0x2318] sm:$0xff]
    %v1298 = vld [vmem:[#allocation6 + $0x2320] sm:$0xff]
    %v1299 = vld [vmem:[#allocation6 + $0x2328] sm:$0xff]
    %v1300 = vld [vmem:[#allocation6 + $0x2330] sm:$0xff]
    %v1301 = vld [vmem:[#allocation6 + $0x2338] sm:$0xff]
    %v1302 = vld [vmem:[#allocation6 + $0x2340] sm:$0xff]
    %v1303 = vld [vmem:[#allocation6 + $0x2348] sm:$0xff]
    %v1304 = vld [vmem:[#allocation6 + $0x2350] sm:$0xff]
    %v1305 = vld [vmem:[#allocation6 + $0x2358] sm:$0xff]
    %v1306 = vld [vmem:[#allocation6 + $0x2360] sm:$0xff]
    %v1307 = vld [vmem:[#allocation6 + $0x2368] sm:$0xff]
    %v1308 = vld [vmem:[#allocation6 + $0x2370] sm:$0xff]
    %v1309 = vld [vmem:[#allocation6 + $0x2378] sm:$0xff]
    %v1310 = vld [vmem:[#allocation6 + $0x2380] sm:$0xff]
    %v1311 = vld [vmem:[#allocation6 + $0x2388] sm:$0xff]
    %v1312 = vld [vmem:[#allocation6 + $0x2390] sm:$0xff]
    %v1313 = vld [vmem:[#allocation6 + $0x2398] sm:$0xff]
    %v1314 = vld [vmem:[#allocation6 + $0x23a0] sm:$0xff]
    %v1315 = vld [vmem:[#allocation6 + $0x23a8] sm:$0xff]
    %v1316 = vld [vmem:[#allocation6 + $0x23b0] sm:$0xff]
    %v1317 = vld [vmem:[#allocation6 + $0x23b8] sm:$0xff]
    %v1318 = vld [vmem:[#allocation6 + $0x23c0] sm:$0xff]
    %v1319 = vld [vmem:[#allocation6 + $0x23c8] sm:$0xff]
    %v1320 = vld [vmem:[#allocation6 + $0x23d0] sm:$0xff]
    %v1321 = vld [vmem:[#allocation6 + $0x23d8] sm:$0xff]
    %v1322 = vld [vmem:[#allocation6 + $0x23e0] sm:$0xff]
    %v1323 = vld [vmem:[#allocation6 + $0x23e8] sm:$0xff]
    %v1324 = vld [vmem:[#allocation6 + $0x23f0] sm:$0xff]
    %v1325 = vld [vmem:[#allocation6 + $0x23f8] sm:$0xff]
    %v1326 = vld [vmem:[#allocation6 + $0x2400] sm:$0xff]
    %v1327 = vld [vmem:[#allocation6 + $0x2408] sm:$0xff]
    %v1328 = vld [vmem:[#allocation6 + $0x2410] sm:$0xff]
    %v1329 = vld [vmem:[#allocation6 + $0x2418] sm:$0xff]
    %v1330 = vld [vmem:[#allocation6 + $0x2420] sm:$0xff]
    %v1331 = vld [vmem:[#allocation6 + $0x2428] sm:$0xff]
    %v1332 = vld [vmem:[#allocation6 + $0x2430] sm:$0xff]
    %v1333 = vld [vmem:[#allocation6 + $0x2438] sm:$0xff]
    %v1334 = vld [vmem:[#allocation6 + $0x2440] sm:$0xff]
    %v1335 = vld [vmem:[#allocation6 + $0x2448] sm:$0xff]
    %v1336 = vld [vmem:[#allocation6 + $0x2450] sm:$0xff]
    %v1337 = vld [vmem:[#allocation6 + $0x2458] sm:$0xff]
    %v1338 = vld [vmem:[#allocation6 + $0x2460] sm:$0xff]
    %v1339 = vld [vmem:[#allocation6 + $0x2468] sm:$0xff]
    %v1340 = vld [vmem:[#allocation6 + $0x2470] sm:$0xff]
    %v1341 = vld [vmem:[#allocation6 + $0x2478] sm:$0xff]
    %v1342 = vld [vmem:[#allocation6 + $0x2480] sm:$0xff]
    %v1343 = vld [vmem:[#allocation6 + $0x2488] sm:$0xff]
    %v1344 = vld [vmem:[#allocation6 + $0x2490] sm:$0xff]
    %v1345 = vld [vmem:[#allocation6 + $0x2498] sm:$0xff]
    %v1346 = vld [vmem:[#allocation6 + $0x24a0] sm:$0xff]
    %v1347 = vld [vmem:[#allocation6 + $0x24a8] sm:$0xff]
    %v1348 = vld [vmem:[#allocation6 + $0x24b0] sm:$0xff]
    %v1349 = vld [vmem:[#allocation6 + $0x24b8] sm:$0xff]
    %v1350 = vld [vmem:[#allocation6 + $0x24c0] sm:$0xff]
    %v1351 = vld [vmem:[#allocation6 + $0x24c8] sm:$0xff]
    %v1352 = vld [vmem:[#allocation6 + $0x24d0] sm:$0xff]
    %v1353 = vld [vmem:[#allocation6 + $0x24d8] sm:$0xff]
    %v1354 = vld [vmem:[#allocation6 + $0x24e0] sm:$0xff]
    %v1355 = vld [vmem:[#allocation6 + $0x24e8] sm:$0xff]
    %v1356 = vld [vmem:[#allocation6 + $0x24f0] sm:$0xff]
    %v1357 = vld [vmem:[#allocation6 + $0x24f8] sm:$0xff]
    %v1358 = vld [vmem:[#allocation6 + $0x2500] sm:$0xff]
    %v1359 = vld [vmem:[#allocation6 + $0x2508] sm:$0xff]
    %v1360 = vld [vmem:[#allocation6 + $0x2510] sm:$0xff]
    %v1361 = vld [vmem:[#allocation6 + $0x2518] sm:$0xff]
    %v1362 = vld [vmem:[#allocation6 + $0x2520] sm:$0xff]
    %v1363 = vld [vmem:[#allocation6 + $0x2528] sm:$0xff]
    %v1364 = vld [vmem:[#allocation6 + $0x2530] sm:$0xff]
    %v1365 = vld [vmem:[#allocation6 + $0x2538] sm:$0xff]
    %v1366 = vld [vmem:[#allocation6 + $0x2540] sm:$0xff]
    %v1367 = vld [vmem:[#allocation6 + $0x2548] sm:$0xff]
    %v1368 = vld [vmem:[#allocation6 + $0x2550] sm:$0xff]
    %v1369 = vld [vmem:[#allocation6 + $0x2558] sm:$0xff]
    %v1370 = vld [vmem:[#allocation6 + $0x2560] sm:$0xff]
    %v1371 = vld [vmem:[#allocation6 + $0x2568] sm:$0xff]
    %v1372 = vld [vmem:[#allocation6 + $0x2570] sm:$0xff]
    %v1373 = vld [vmem:[#allocation6 + $0x2578] sm:$0xff]
    %v1374 = vld [vmem:[#allocation6 + $0x2580] sm:$0xff]
    %v1375 = vld [vmem:[#allocation6 + $0x2588] sm:$0xff]
    %v1376 = vld [vmem:[#allocation6 + $0x2590] sm:$0xff]
    %v1377 = vld [vmem:[#allocation6 + $0x2598] sm:$0xff]
    %v1378 = vld [vmem:[#allocation6 + $0x25a0] sm:$0xff]
    %v1379 = vld [vmem:[#allocation6 + $0x25a8] sm:$0xff]
    %v1380 = vld [vmem:[#allocation6 + $0x25b0] sm:$0xff]
    %v1381 = vld [vmem:[#allocation6 + $0x25b8] sm:$0xff]
    %v1382 = vld [vmem:[#allocation6 + $0x25c0] sm:$0xff]
    %v1383 = vld [vmem:[#allocation6 + $0x25c8] sm:$0xff]
    %v1384 = vld [vmem:[#allocation6 + $0x25d0] sm:$0xff]
    %v1385 = vld [vmem:[#allocation6 + $0x25d8] sm:$0xff]
    %v1386 = vld [vmem:[#allocation6 + $0x25e0] sm:$0xff]
    %v1387 = vld [vmem:[#allocation6 + $0x25e8] sm:$0xff]
    %v1388 = vld [vmem:[#allocation6 + $0x25f0] sm:$0xff]
    %v1389 = vld [vmem:[#allocation6 + $0x25f8] sm:$0xff]
    %v1390 = vld [vmem:[#allocation6 + $0x2600] sm:$0xff]
    %v1391 = vld [vmem:[#allocation6 + $0x2608] sm:$0xff]
    %v1392 = vld [vmem:[#allocation6 + $0x2610] sm:$0xff]
    %v1393 = vld [vmem:[#allocation6 + $0x2618] sm:$0xff]
    %v1394 = vld [vmem:[#allocation6 + $0x2620] sm:$0xff]
    %v1395 = vld [vmem:[#allocation6 + $0x2628] sm:$0xff]
    %v1396 = vld [vmem:[#allocation6 + $0x2630] sm:$0xff]
    %v1397 = vld [vmem:[#allocation6 + $0x2638] sm:$0xff]
    %v1398 = vld [vmem:[#allocation6 + $0x2640] sm:$0xff]
    %v1399 = vld [vmem:[#allocation6 + $0x2648] sm:$0xff]
    %v1400 = vld [vmem:[#allocation6 + $0x2650] sm:$0xff]
    %v1401 = vld [vmem:[#allocation6 + $0x2658] sm:$0xff]
    %v1402 = vld [vmem:[#allocation6 + $0x2660] sm:$0xff]
    %v1403 = vld [vmem:[#allocation6 + $0x2668] sm:$0xff]
    %v1404 = vld [vmem:[#allocation6 + $0x2670] sm:$0xff]
    %v1405 = vld [vmem:[#allocation6 + $0x2678] sm:$0xff]
    %v1406 = vld [vmem:[#allocation6 + $0x2680] sm:$0xff]
    %v1407 = vld [vmem:[#allocation6 + $0x2688] sm:$0xff]
    %v1408 = vld [vmem:[#allocation6 + $0x2690] sm:$0xff]
    %v1409 = vld [vmem:[#allocation6 + $0x2698] sm:$0xff]
    %v1410 = vld [vmem:[#allocation6 + $0x26a0] sm:$0xff]
    %v1411 = vld [vmem:[#allocation6 + $0x26a8] sm:$0xff]
    %v1412 = vld [vmem:[#allocation6 + $0x26b0] sm:$0xff]
    %v1413 = vld [vmem:[#allocation6 + $0x26b8] sm:$0xff]
    %v1414 = vld [vmem:[#allocation6 + $0x26c0] sm:$0xff]
    %v1415 = vld [vmem:[#allocation6 + $0x26c8] sm:$0xff]
    %v1416 = vld [vmem:[#allocation6 + $0x26d0] sm:$0xff]
    %v1417 = vld [vmem:[#allocation6 + $0x26d8] sm:$0xff]
    %v1418 = vld [vmem:[#allocation6 + $0x26e0] sm:$0xff]
    %v1419 = vld [vmem:[#allocation6 + $0x26e8] sm:$0xff]
    %v1420 = vld [vmem:[#allocation6 + $0x26f0] sm:$0xff]
    %v1421 = vld [vmem:[#allocation6 + $0x26f8] sm:$0xff]
    %v1422 = vld [vmem:[#allocation6 + $0x2700] sm:$0xff]
    %v1423 = vld [vmem:[#allocation6 + $0x2708] sm:$0xff]
    %v1424 = vld [vmem:[#allocation6 + $0x2710] sm:$0xff]
    %v1425 = vld [vmem:[#allocation6 + $0x2718] sm:$0xff]
    %v1426 = vld [vmem:[#allocation6 + $0x2720] sm:$0xff]
    %v1427 = vld [vmem:[#allocation6 + $0x2728] sm:$0xff]
    %v1428 = vld [vmem:[#allocation6 + $0x2730] sm:$0xff]
    %v1429 = vld [vmem:[#allocation6 + $0x2738] sm:$0xff]
    %v1430 = vld [vmem:[#allocation6 + $0x2740] sm:$0xff]
    %v1431 = vld [vmem:[#allocation6 + $0x2748] sm:$0xff]
    %v1432 = vld [vmem:[#allocation6 + $0x2750] sm:$0xff]
    %v1433 = vld [vmem:[#allocation6 + $0x2758] sm:$0xff]
    %v1434 = vld [vmem:[#allocation6 + $0x2760] sm:$0xff]
    %v1435 = vld [vmem:[#allocation6 + $0x2768] sm:$0xff]
    %v1436 = vld [vmem:[#allocation6 + $0x2770] sm:$0xff]
    %v1437 = vld [vmem:[#allocation6 + $0x2778] sm:$0xff]
    %v1438 = vld [vmem:[#allocation6 + $0x2780] sm:$0xff]
    %v1439 = vld [vmem:[#allocation6 + $0x2788] sm:$0xff]
    %v1440 = vld [vmem:[#allocation6 + $0x2790] sm:$0xff]
    %v1441 = vld [vmem:[#allocation6 + $0x2798] sm:$0xff]
    %v1442 = vld [vmem:[#allocation6 + $0x27a0] sm:$0xff]
    %v1443 = vld [vmem:[#allocation6 + $0x27a8] sm:$0xff]
    %v1444 = vld [vmem:[#allocation6 + $0x27b0] sm:$0xff]
    %v1445 = vld [vmem:[#allocation6 + $0x27b8] sm:$0xff]
    %v1446 = vld [vmem:[#allocation6 + $0x27c0] sm:$0xff]
    %v1447 = vld [vmem:[#allocation6 + $0x27c8] sm:$0xff]
    %v1448 = vld [vmem:[#allocation6 + $0x27d0] sm:$0xff]
    %v1449 = vld [vmem:[#allocation6 + $0x27d8] sm:$0xff]
    %v1450 = vld [vmem:[#allocation6 + $0x27e0] sm:$0xff]
    %v1451 = vld [vmem:[#allocation6 + $0x27e8] sm:$0xff]
    %v1452 = vld [vmem:[#allocation6 + $0x27f0] sm:$0xff]
    %v1453 = vld [vmem:[#allocation6 + $0x27f8] sm:$0xff]
    %v1454 = vld [vmem:[#allocation4] ss:$8 sm:$0xf]
    %v1456 = vlaneseq
    %v1457 = vshrl.u32 %v1456, 7
    %v1458 = vsub.s32 0, %v1457
    %v1459 = vrot.slane %v1454, %v1458
    %v1460 = vlaneseq
    %v1461 = vshrl.u32 %v1460, 7
    %v1462 = vsub.s32 1, %v1461
    %v1463 = vrot.slane %v1454, %v1462
    %v1464 = vlaneseq
    %v1465 = vshrl.u32 %v1464, 7
    %v1466 = vsub.s32 2, %v1465
    %v1467 = vrot.slane %v1454, %v1466
    %v1468 = vlaneseq
    %v1469 = vshrl.u32 %v1468, 7
    %v1470 = vsub.s32 3, %v1469
    %v1471 = vrot.slane %v1454, %v1470
    %v1481 = vcombine.high %v169, %v169
    %v1483 = vunpack.c.l.s4 1983009808
    %v1484 = vunpack.c.0.s8 %v1483
    %v1485 = vlaneseq
    %v1486 = vshrl.u32 %v1485, 7
    %v1487 = vsub.s32 %v1484, %v1486
    %v1488 = vrot.slane %v169, %v1487
    %v1490 = vunpack.c.l.s4 1983009808
    %v1491 = vunpack.c.0.s8 %v1490
    %v1492 = vlaneseq
    %v1493 = vshrl.u32 %v1492, 7
    %v1494 = vsub.s32 %v1491, %v1493
    %v1495 = vrot.slane %v1481, %v1494
    %v1496 = vcombine.high %v1488, %v1488
    %v1497 = vcombine.high %v1495, %v1495
    %v1498 = vcombine.high %v170, %v170
    %v1500 = vunpack.c.l.s4 1983009808
    %v1501 = vunpack.c.0.s8 %v1500
    %v1502 = vlaneseq
    %v1503 = vshrl.u32 %v1502, 7
    %v1504 = vsub.s32 %v1501, %v1503
    %v1505 = vrot.slane %v170, %v1504
    %v1507 = vunpack.c.l.s4 1983009808
    %v1508 = vunpack.c.0.s8 %v1507
    %v1509 = vlaneseq
    %v1510 = vshrl.u32 %v1509, 7
    %v1511 = vsub.s32 %v1508, %v1510
    %v1512 = vrot.slane %v1498, %v1511
    %v1513 = vcombine.high %v1505, %v1505
    %v1514 = vcombine.high %v1512, %v1512
    %v1515 = vcombine.high %v171, %v171
    %v1517 = vunpack.c.l.s4 1983009808
    %v1518 = vunpack.c.0.s8 %v1517
    %v1519 = vlaneseq
    %v1520 = vshrl.u32 %v1519, 7
    %v1521 = vsub.s32 %v1518, %v1520
    %v1522 = vrot.slane %v171, %v1521
    %v1524 = vunpack.c.l.s4 1983009808
    %v1525 = vunpack.c.0.s8 %v1524
    %v1526 = vlaneseq
    %v1527 = vshrl.u32 %v1526, 7
    %v1528 = vsub.s32 %v1525, %v1527
    %v1529 = vrot.slane %v1515, %v1528
    %v1530 = vcombine.high %v1522, %v1522
    %v1531 = vcombine.high %v1529, %v1529
    %v1532 = vcombine.high %v172, %v172
    %v1534 = vunpack.c.l.s4 1983009808
    %v1535 = vunpack.c.0.s8 %v1534
    %v1536 = vlaneseq
    %v1537 = vshrl.u32 %v1536, 7
    %v1538 = vsub.s32 %v1535, %v1537
    %v1539 = vrot.slane %v172, %v1538
    %v1541 = vunpack.c.l.s4 1983009808
    %v1542 = vunpack.c.0.s8 %v1541
    %v1543 = vlaneseq
    %v1544 = vshrl.u32 %v1543, 7
    %v1545 = vsub.s32 %v1542, %v1544
    %v1546 = vrot.slane %v1532, %v1545
    %v1547 = vcombine.high %v1539, %v1539
    %v1548 = vcombine.high %v1546, %v1546
    %v1549 = vcombine.high %v173, %v173
    %v1551 = vunpack.c.l.s4 1983009808
    %v1552 = vunpack.c.0.s8 %v1551
    %v1553 = vlaneseq
    %v1554 = vshrl.u32 %v1553, 7
    %v1555 = vsub.s32 %v1552, %v1554
    %v1556 = vrot.slane %v173, %v1555
    %v1558 = vunpack.c.l.s4 1983009808
    %v1559 = vunpack.c.0.s8 %v1558
    %v1560 = vlaneseq
    %v1561 = vshrl.u32 %v1560, 7
    %v1562 = vsub.s32 %v1559, %v1561
    %v1563 = vrot.slane %v1549, %v1562
    %v1564 = vcombine.high %v1556, %v1556
    %v1565 = vcombine.high %v1563, %v1563
    %1586 = vmatprep.subr.mxu0 %v175
    %1587 = vmatpush1.msra.mxu0 %v174
    %1588 = vmatprep.subr.mxu0 %v179
    %1589 = vmatpush1.msra.mxu0 %v178
    %1590 = vmatprep.subr.mxu0 %v183
    %1591 = vmatpush1.msra.mxu0 %v182
    %1592 = vmatprep.subr.mxu0 %v187
    %1593 = vmatpush1.msra.mxu0 %v186
    %1594 = vmatprep.subr.mxu0 %v191
    %1595 = vmatpush1.msra.mxu0 %v190
    %1596 = vmatprep.subr.mxu0 %v195
    %1597 = vmatpush1.msra.mxu0 %v194
    %1598 = vmatprep.subr.mxu0 %v199
    %1599 = vmatpush1.msra.mxu0 %v198
    %1600 = vmatprep.subr.mxu0 %v203
    %1601 = vmatpush1.msra.mxu0 %v202
    %1602 = vmatprep.subr.mxu0 %v207
    %1603 = vmatpush1.msra.mxu0 %v206
    %1604 = vmatprep.subr.mxu0 %v211
    %1605 = vmatpush1.msra.mxu0 %v210
    %1606 = vmatprep.subr.mxu0 %v215
    %1607 = vmatpush1.msra.mxu0 %v214
    %1608 = vmatprep.subr.mxu0 %v219
    %1609 = vmatpush1.msra.mxu0 %v218
    %1610 = vmatprep.subr.mxu0 %v223
    %1611 = vmatpush1.msra.mxu0 %v222
    %1612 = vmatprep.subr.mxu0 %v227
    %1613 = vmatpush1.msra.mxu0 %v226
    %1614 = vmatprep.subr.mxu0 %v231
    %1615 = vmatpush1.msra.mxu0 %v230
    %1616 = vmatprep.subr.mxu0 %v235
    %1617 = vmatpush1.msra.mxu0 %v234
    %1618 = vmatprep.subr.mxu0 %v239
    %1619 = vmatpush1.msra.mxu0 %v238
    %1620 = vmatprep.subr.mxu0 %v243
    %1621 = vmatpush1.msra.mxu0 %v242
    %1622 = vmatprep.subr.mxu0 %v247
    %1623 = vmatpush1.msra.mxu0 %v246
    %1624 = vmatprep.subr.mxu0 %v251
    %1625 = vmatpush1.msra.mxu0 %v250
    %1626 = vmatprep.subr.mxu0 %v255
    %1627 = vmatpush1.msra.mxu0 %v254
    %1628 = vmatprep.subr.mxu0 %v259
    %1629 = vmatpush1.msra.mxu0 %v258
    %1630 = vmatprep.subr.mxu0 %v263
    %1631 = vmatpush1.msra.mxu0 %v262
    %1632 = vmatprep.subr.mxu0 %v267
    %1633 = vmatpush1.msra.mxu0 %v266
    %1634 = vmatprep.subr.mxu0 %v271
    %1635 = vmatpush1.msra.mxu0 %v270
    %1636 = vmatprep.subr.mxu0 %v275
    %1637 = vmatpush1.msra.mxu0 %v274
    %1638 = vmatprep.subr.mxu0 %v279
    %1639 = vmatpush1.msra.mxu0 %v278
    %1640 = vmatprep.subr.mxu0 %v283
    %1641 = vmatpush1.msra.mxu0 %v282
    %1642 = vmatprep.subr.mxu0 %v287
    %1643 = vmatpush1.msra.mxu0 %v286
    %1644 = vmatprep.subr.mxu0 %v291
    %1645 = vmatpush1.msra.mxu0 %v290
    %1646 = vmatprep.subr.mxu0 %v295
    %1647 = vmatpush1.msra.mxu0 %v294
    %1648 = vmatprep.subr.mxu0 %v299
    %1649 = vmatpush1.msra.mxu0 %v298
    %1650 = vmatprep.mubr.f32.mxu0 %v1496
    %1651 = vmatmul.mubr.f32.gmra.mrb[0].mxu0 %v1488
    %v1652 = vpop.f32.mrb[0].mxu0
    %v1653 = vadd.f32 %v1459, %v1652
    %v1654 = vpop.f32.mrb[0].mxu0
    %v1655 = vadd.f32 %v1463, %v1654
    %1656 = vdwg.mxu0
    %1657 = vmatprep.subr.mxu0 %v303
    %1658 = vmatpush1.msra.mxu0 %v302
    %1659 = vmatprep.subr.mxu0 %v307
    %1660 = vmatpush1.msra.mxu0 %v306
    %1661 = vmatprep.subr.mxu0 %v311
    %1662 = vmatpush1.msra.mxu0 %v310
    %1663 = vmatprep.subr.mxu0 %v315
    %1664 = vmatpush1.msra.mxu0 %v314
    %1665 = vmatprep.subr.mxu0 %v319
    %1666 = vmatpush1.msra.mxu0 %v318
    %1667 = vmatprep.subr.mxu0 %v323
    %1668 = vmatpush1.msra.mxu0 %v322
    %1669 = vmatprep.subr.mxu0 %v327
    %1670 = vmatpush1.msra.mxu0 %v326
    %1671 = vmatprep.subr.mxu0 %v331
    %1672 = vmatpush1.msra.mxu0 %v330
    %1673 = vmatprep.subr.mxu0 %v335
    %1674 = vmatpush1.msra.mxu0 %v334
    %1675 = vmatprep.subr.mxu0 %v339
    %1676 = vmatpush1.msra.mxu0 %v338
    %1677 = vmatprep.subr.mxu0 %v343
    %1678 = vmatpush1.msra.mxu0 %v342
    %1679 = vmatprep.subr.mxu0 %v347
    %1680 = vmatpush1.msra.mxu0 %v346
    %1681 = vmatprep.subr.mxu0 %v351
    %1682 = vmatpush1.msra.mxu0 %v350
    %1683 = vmatprep.subr.mxu0 %v355
    %1684 = vmatpush1.msra.mxu0 %v354
    %1685 = vmatprep.subr.mxu0 %v359
    %1686 = vmatpush1.msra.mxu0 %v358
    %1687 = vmatprep.subr.mxu0 %v363
    %1688 = vmatpush1.msra.mxu0 %v362
    %1689 = vmatprep.subr.mxu0 %v367
    %1690 = vmatpush1.msra.mxu0 %v366
    %1691 = vmatprep.subr.mxu0 %v371
    %1692 = vmatpush1.msra.mxu0 %v370
    %1693 = vmatprep.subr.mxu0 %v375
    %1694 = vmatpush1.msra.mxu0 %v374
    %1695 = vmatprep.subr.mxu0 %v379
    %1696 = vmatpush1.msra.mxu0 %v378
    %1697 = vmatprep.subr.mxu0 %v383
    %1698 = vmatpush1.msra.mxu0 %v382
    %1699 = vmatprep.subr.mxu0 %v387
    %1700 = vmatpush1.msra.mxu0 %v386
    %1701 = vmatprep.subr.mxu0 %v391
    %1702 = vmatpush1.msra.mxu0 %v390
    %1703 = vmatprep.subr.mxu0 %v395
    %1704 = vmatpush1.msra.mxu0 %v394
    %1705 = vmatprep.subr.mxu0 %v399
    %1706 = vmatpush1.msra.mxu0 %v398
    %1707 = vmatprep.subr.mxu0 %v403
    %1708 = vmatpush1.msra.mxu0 %v402
    %1709 = vmatprep.subr.mxu0 %v407
    %1710 = vmatpush1.msra.mxu0 %v406
    %1711 = vmatprep.subr.mxu0 %v411
    %1712 = vmatpush1.msra.mxu0 %v410
    %1713 = vmatprep.subr.mxu0 %v415
    %1714 = vmatpush1.msra.mxu0 %v414
    %1715 = vmatprep.subr.mxu0 %v419
    %1716 = vmatpush1.msra.mxu0 %v418
    %1717 = vmatprep.subr.mxu0 %v423
    %1718 = vmatpush1.msra.mxu0 %v422
    %1719 = vmatprep.subr.mxu0 %v427
    %1720 = vmatpush1.msra.mxu0 %v426
    %1721 = vmatprep.mubr.f32.mxu0 %v1497
    %1722 = vmatmul.mubr.f32.gmra.mrb[0].mxu0 %v1495
    %v1723 = vpop.f32.mrb[0].mxu0
    %v1724 = vadd.f32 %v1653, %v1723
    %v1725 = vpop.f32.mrb[0].mxu0
    %v1726 = vadd.f32 %v1655, %v1725
    %1727 = vdwg.mxu0
    %1728 = vmatprep.subr.mxu0 %v431
    %1729 = vmatpush1.msra.mxu0 %v430
    %1730 = vmatprep.subr.mxu0 %v435
    %1731 = vmatpush1.msra.mxu0 %v434
    %1732 = vmatprep.subr.mxu0 %v439
    %1733 = vmatpush1.msra.mxu0 %v438
    %1734 = vmatprep.subr.mxu0 %v443
    %1735 = vmatpush1.msra.mxu0 %v442
    %1736 = vmatprep.subr.mxu0 %v447
    %1737 = vmatpush1.msra.mxu0 %v446
    %1738 = vmatprep.subr.mxu0 %v451
    %1739 = vmatpush1.msra.mxu0 %v450
    %1740 = vmatprep.subr.mxu0 %v455
    %1741 = vmatpush1.msra.mxu0 %v454
    %1742 = vmatprep.subr.mxu0 %v459
    %1743 = vmatpush1.msra.mxu0 %v458
    %1744 = vmatprep.subr.mxu0 %v463
    %1745 = vmatpush1.msra.mxu0 %v462
    %1746 = vmatprep.subr.mxu0 %v467
    %1747 = vmatpush1.msra.mxu0 %v466
    %1748 = vmatprep.subr.mxu0 %v471
    %1749 = vmatpush1.msra.mxu0 %v470
    %1750 = vmatprep.subr.mxu0 %v475
    %1751 = vmatpush1.msra.mxu0 %v474
    %1752 = vmatprep.subr.mxu0 %v479
    %1753 = vmatpush1.msra.mxu0 %v478
    %1754 = vmatprep.subr.mxu0 %v483
    %1755 = vmatpush1.msra.mxu0 %v482
    %1756 = vmatprep.subr.mxu0 %v487
    %1757 = vmatpush1.msra.mxu0 %v486
    %1758 = vmatprep.subr.mxu0 %v491
    %1759 = vmatpush1.msra.mxu0 %v490
    %1760 = vmatprep.subr.mxu0 %v495
    %1761 = vmatpush1.msra.mxu0 %v494
    %1762 = vmatprep.subr.mxu0 %v499
    %1763 = vmatpush1.msra.mxu0 %v498
    %1764 = vmatprep.subr.mxu0 %v503
    %1765 = vmatpush1.msra.mxu0 %v502
    %1766 = vmatprep.subr.mxu0 %v507
    %1767 = vmatpush1.msra.mxu0 %v506
    %1768 = vmatprep.subr.mxu0 %v511
    %1769 = vmatpush1.msra.mxu0 %v510
    %1770 = vmatprep.subr.mxu0 %v515
    %1771 = vmatpush1.msra.mxu0 %v514
    %1772 = vmatprep.subr.mxu0 %v519
    %1773 = vmatpush1.msra.mxu0 %v518
    %1774 = vmatprep.subr.mxu0 %v523
    %1775 = vmatpush1.msra.mxu0 %v522
    %1776 = vmatprep.subr.mxu0 %v527
    %1777 = vmatpush1.msra.mxu0 %v526
    %1778 = vmatprep.subr.mxu0 %v531
    %1779 = vmatpush1.msra.mxu0 %v530
    %1780 = vmatprep.subr.mxu0 %v535
    %1781 = vmatpush1.msra.mxu0 %v534
    %1782 = vmatprep.subr.mxu0 %v539
    %1783 = vmatpush1.msra.mxu0 %v538
    %1784 = vmatprep.subr.mxu0 %v543
    %1785 = vmatpush1.msra.mxu0 %v542
    %1786 = vmatprep.subr.mxu0 %v547
    %1787 = vmatpush1.msra.mxu0 %v546
    %1788 = vmatprep.subr.mxu0 %v551
    %1789 = vmatpush1.msra.mxu0 %v550
    %1790 = vmatprep.subr.mxu0 %v555
    %1791 = vmatpush1.msra.mxu0 %v554
    %1792 = vmatprep.mubr.f32.mxu0 %v1513
    %1793 = vmatmul.mubr.f32.gmra.mrb[0].mxu0 %v1505
    %v1794 = vpop.f32.mrb[0].mxu0
    %v1795 = vadd.f32 %v1724, %v1794
    %v1796 = vpop.f32.mrb[0].mxu0
    %v1797 = vadd.f32 %v1726, %v1796
    %1798 = vdwg.mxu0
    %1799 = vmatprep.subr.mxu0 %v559
    %1800 = vmatpush1.msra.mxu0 %v558
    %1801 = vmatprep.subr.mxu0 %v563
    %1802 = vmatpush1.msra.mxu0 %v562
    %1803 = vmatprep.subr.mxu0 %v567
    %1804 = vmatpush1.msra.mxu0 %v566
    %1805 = vmatprep.subr.mxu0 %v571
    %1806 = vmatpush1.msra.mxu0 %v570
    %1807 = vmatprep.subr.mxu0 %v575
    %1808 = vmatpush1.msra.mxu0 %v574
    %1809 = vmatprep.subr.mxu0 %v579
    %1810 = vmatpush1.msra.mxu0 %v578
    %1811 = vmatprep.subr.mxu0 %v583
    %1812 = vmatpush1.msra.mxu0 %v582
    %1813 = vmatprep.subr.mxu0 %v587
    %1814 = vmatpush1.msra.mxu0 %v586
    %1815 = vmatprep.subr.mxu0 %v591
    %1816 = vmatpush1.msra.mxu0 %v590
    %1817 = vmatprep.subr.mxu0 %v595
    %1818 = vmatpush1.msra.mxu0 %v594
    %1819 = vmatprep.subr.mxu0 %v599
    %1820 = vmatpush1.msra.mxu0 %v598
    %1821 = vmatprep.subr.mxu0 %v603
    %1822 = vmatpush1.msra.mxu0 %v602
    %1823 = vmatprep.subr.mxu0 %v607
    %1824 = vmatpush1.msra.mxu0 %v606
    %1825 = vmatprep.subr.mxu0 %v611
    %1826 = vmatpush1.msra.mxu0 %v610
    %1827 = vmatprep.subr.mxu0 %v615
    %1828 = vmatpush1.msra.mxu0 %v614
    %1829 = vmatprep.subr.mxu0 %v619
    %1830 = vmatpush1.msra.mxu0 %v618
    %1831 = vmatprep.subr.mxu0 %v623
    %1832 = vmatpush1.msra.mxu0 %v622
    %1833 = vmatprep.subr.mxu0 %v627
    %1834 = vmatpush1.msra.mxu0 %v626
    %1835 = vmatprep.subr.mxu0 %v631
    %1836 = vmatpush1.msra.mxu0 %v630
    %1837 = vmatprep.subr.mxu0 %v635
    %1838 = vmatpush1.msra.mxu0 %v634
    %1839 = vmatprep.subr.mxu0 %v639
    %1840 = vmatpush1.msra.mxu0 %v638
    %1841 = vmatprep.subr.mxu0 %v643
    %1842 = vmatpush1.msra.mxu0 %v642
    %1843 = vmatprep.subr.mxu0 %v647
    %1844 = vmatpush1.msra.mxu0 %v646
    %1845 = vmatprep.subr.mxu0 %v651
    %1846 = vmatpush1.msra.mxu0 %v650
    %1847 = vmatprep.subr.mxu0 %v655
    %1848 = vmatpush1.msra.mxu0 %v654
    %1849 = vmatprep.subr.mxu0 %v659
    %1850 = vmatpush1.msra.mxu0 %v658
    %1851 = vmatprep.subr.mxu0 %v663
    %1852 = vmatpush1.msra.mxu0 %v662
    %1853 = vmatprep.subr.mxu0 %v667
    %1854 = vmatpush1.msra.mxu0 %v666
    %1855 = vmatprep.subr.mxu0 %v671
    %1856 = vmatpush1.msra.mxu0 %v670
    %1857 = vmatprep.subr.mxu0 %v675
    %1858 = vmatpush1.msra.mxu0 %v674
    %1859 = vmatprep.subr.mxu0 %v679
    %1860 = vmatpush1.msra.mxu0 %v678
    %1861 = vmatprep.subr.mxu0 %v683
    %1862 = vmatpush1.msra.mxu0 %v682
    %1863 = vmatprep.mubr.f32.mxu0 %v1514
    %1864 = vmatmul.mubr.f32.gmra.mrb[0].mxu0 %v1512
    %v1865 = vpop.f32.mrb[0].mxu0
    %v1866 = vadd.f32 %v1795, %v1865
    %v1867 = vpop.f32.mrb[0].mxu0
    %v1868 = vadd.f32 %v1797, %v1867
    %1869 = vdwg.mxu0
    %1870 = vmatprep.subr.mxu0 %v687
    %1871 = vmatpush1.msra.mxu0 %v686
    %1872 = vmatprep.subr.mxu0 %v691
    %1873 = vmatpush1.msra.mxu0 %v690
    %1874 = vmatprep.subr.mxu0 %v695
    %1875 = vmatpush1.msra.mxu0 %v694
    %1876 = vmatprep.subr.mxu0 %v699
    %1877 = vmatpush1.msra.mxu0 %v698
    %1878 = vmatprep.subr.mxu0 %v703
    %1879 = vmatpush1.msra.mxu0 %v702
    %1880 = vmatprep.subr.mxu0 %v707
    %1881 = vmatpush1.msra.mxu0 %v706
    %1882 = vmatprep.subr.mxu0 %v711
    %1883 = vmatpush1.msra.mxu0 %v710
    %1884 = vmatprep.subr.mxu0 %v715
    %1885 = vmatpush1.msra.mxu0 %v714
    %1886 = vmatprep.subr.mxu0 %v719
    %1887 = vmatpush1.msra.mxu0 %v718
    %1888 = vmatprep.subr.mxu0 %v723
    %1889 = vmatpush1.msra.mxu0 %v722
    %1890 = vmatprep.subr.mxu0 %v727
    %1891 = vmatpush1.msra.mxu0 %v726
    %1892 = vmatprep.subr.mxu0 %v731
    %1893 = vmatpush1.msra.mxu0 %v730
    %1894 = vmatprep.subr.mxu0 %v735
    %1895 = vmatpush1.msra.mxu0 %v734
    %1896 = vmatprep.subr.mxu0 %v739
    %1897 = vmatpush1.msra.mxu0 %v738
    %1898 = vmatprep.subr.mxu0 %v743
    %1899 = vmatpush1.msra.mxu0 %v742
    %1900 = vmatprep.subr.mxu0 %v747
    %1901 = vmatpush1.msra.mxu0 %v746
    %1902 = vmatprep.subr.mxu0 %v751
    %1903 = vmatpush1.msra.mxu0 %v750
    %1904 = vmatprep.subr.mxu0 %v755
    %1905 = vmatpush1.msra.mxu0 %v754
    %1906 = vmatprep.subr.mxu0 %v759
    %1907 = vmatpush1.msra.mxu0 %v758
    %1908 = vmatprep.subr.mxu0 %v763
    %1909 = vmatpush1.msra.mxu0 %v762
    %1910 = vmatprep.subr.mxu0 %v767
    %1911 = vmatpush1.msra.mxu0 %v766
    %1912 = vmatprep.subr.mxu0 %v771
    %1913 = vmatpush1.msra.mxu0 %v770
    %1914 = vmatprep.subr.mxu0 %v775
    %1915 = vmatpush1.msra.mxu0 %v774
    %1916 = vmatprep.subr.mxu0 %v779
    %1917 = vmatpush1.msra.mxu0 %v778
    %1918 = vmatprep.subr.mxu0 %v783
    %1919 = vmatpush1.msra.mxu0 %v782
    %1920 = vmatprep.subr.mxu0 %v787
    %1921 = vmatpush1.msra.mxu0 %v786
    %1922 = vmatprep.subr.mxu0 %v791
    %1923 = vmatpush1.msra.mxu0 %v790
    %1924 = vmatprep.subr.mxu0 %v795
    %1925 = vmatpush1.msra.mxu0 %v794
    %1926 = vmatprep.subr.mxu0 %v799
    %1927 = vmatpush1.msra.mxu0 %v798
    %1928 = vmatprep.subr.mxu0 %v803
    %1929 = vmatpush1.msra.mxu0 %v802
    %1930 = vmatprep.subr.mxu0 %v807
    %1931 = vmatpush1.msra.mxu0 %v806
    %1932 = vmatprep.subr.mxu0 %v811
    %1933 = vmatpush1.msra.mxu0 %v810
    %1934 = vmatprep.mubr.f32.mxu0 %v1530
    %1935 = vmatmul.mubr.f32.gmra.mrb[0].mxu0 %v1522
    %v1936 = vpop.f32.mrb[0].mxu0
    %v1937 = vadd.f32 %v1866, %v1936
    %v1938 = vpop.f32.mrb[0].mxu0
    %v1939 = vadd.f32 %v1868, %v1938
    %1940 = vdwg.mxu0
    %1941 = vmatprep.subr.mxu0 %v815
    %1942 = vmatpush1.msra.mxu0 %v814
    %1943 = vmatprep.subr.mxu0 %v819
    %1944 = vmatpush1.msra.mxu0 %v818
    %1945 = vmatprep.subr.mxu0 %v823
    %1946 = vmatpush1.msra.mxu0 %v822
    %1947 = vmatprep.subr.mxu0 %v827
    %1948 = vmatpush1.msra.mxu0 %v826
    %1949 = vmatprep.subr.mxu0 %v831
    %1950 = vmatpush1.msra.mxu0 %v830
    %1951 = vmatprep.subr.mxu0 %v835
    %1952 = vmatpush1.msra.mxu0 %v834
    %1953 = vmatprep.subr.mxu0 %v839
    %1954 = vmatpush1.msra.mxu0 %v838
    %1955 = vmatprep.subr.mxu0 %v843
    %1956 = vmatpush1.msra.mxu0 %v842
    %1957 = vmatprep.subr.mxu0 %v847
    %1958 = vmatpush1.msra.mxu0 %v846
    %1959 = vmatprep.subr.mxu0 %v851
    %1960 = vmatpush1.msra.mxu0 %v850
    %1961 = vmatprep.subr.mxu0 %v855
    %1962 = vmatpush1.msra.mxu0 %v854
    %1963 = vmatprep.subr.mxu0 %v859
    %1964 = vmatpush1.msra.mxu0 %v858
    %1965 = vmatprep.subr.mxu0 %v863
    %1966 = vmatpush1.msra.mxu0 %v862
    %1967 = vmatprep.subr.mxu0 %v867
    %1968 = vmatpush1.msra.mxu0 %v866
    %1969 = vmatprep.subr.mxu0 %v871
    %1970 = vmatpush1.msra.mxu0 %v870
    %1971 = vmatprep.subr.mxu0 %v875
    %1972 = vmatpush1.msra.mxu0 %v874
    %1973 = vmatprep.subr.mxu0 %v879
    %1974 = vmatpush1.msra.mxu0 %v878
    %1975 = vmatprep.subr.mxu0 %v883
    %1976 = vmatpush1.msra.mxu0 %v882
    %1977 = vmatprep.subr.mxu0 %v887
    %1978 = vmatpush1.msra.mxu0 %v886
    %1979 = vmatprep.subr.mxu0 %v891
    %1980 = vmatpush1.msra.mxu0 %v890
    %1981 = vmatprep.subr.mxu0 %v895
    %1982 = vmatpush1.msra.mxu0 %v894
    %1983 = vmatprep.subr.mxu0 %v899
    %1984 = vmatpush1.msra.mxu0 %v898
    %1985 = vmatprep.subr.mxu0 %v903
    %1986 = vmatpush1.msra.mxu0 %v902
    %1987 = vmatprep.subr.mxu0 %v907
    %1988 = vmatpush1.msra.mxu0 %v906
    %1989 = vmatprep.subr.mxu0 %v911
    %1990 = vmatpush1.msra.mxu0 %v910
    %1991 = vmatprep.subr.mxu0 %v915
    %1992 = vmatpush1.msra.mxu0 %v914
    %1993 = vmatprep.subr.mxu0 %v919
    %1994 = vmatpush1.msra.mxu0 %v918
    %1995 = vmatprep.subr.mxu0 %v923
    %1996 = vmatpush1.msra.mxu0 %v922
    %1997 = vmatprep.subr.mxu0 %v927
    %1998 = vmatpush1.msra.mxu0 %v926
    %1999 = vmatprep.subr.mxu0 %v931
    %2000 = vmatpush1.msra.mxu0 %v930
    %2001 = vmatprep.subr.mxu0 %v935
    %2002 = vmatpush1.msra.mxu0 %v934
    %2003 = vmatprep.subr.mxu0 %v939
    %2004 = vmatpush1.msra.mxu0 %v938
    %2005 = vmatprep.mubr.f32.mxu0 %v1531
    %2006 = vmatmul.mubr.f32.gmra.mrb[0].mxu0 %v1529
    %v2007 = vpop.f32.mrb[0].mxu0
    %v2008 = vadd.f32 %v1937, %v2007
    %v2009 = vpop.f32.mrb[0].mxu0
    %v2010 = vadd.f32 %v1939, %v2009
    %2011 = vdwg.mxu0
    %2012 = vmatprep.subr.mxu0 %v943
    %2013 = vmatpush1.msra.mxu0 %v942
    %2014 = vmatprep.subr.mxu0 %v947
    %2015 = vmatpush1.msra.mxu0 %v946
    %2016 = vmatprep.subr.mxu0 %v951
    %2017 = vmatpush1.msra.mxu0 %v950
    %2018 = vmatprep.subr.mxu0 %v955
    %2019 = vmatpush1.msra.mxu0 %v954
    %2020 = vmatprep.subr.mxu0 %v959
    %2021 = vmatpush1.msra.mxu0 %v958
    %2022 = vmatprep.subr.mxu0 %v963
    %2023 = vmatpush1.msra.mxu0 %v962
    %2024 = vmatprep.subr.mxu0 %v967
    %2025 = vmatpush1.msra.mxu0 %v966
    %2026 = vmatprep.subr.mxu0 %v971
    %2027 = vmatpush1.msra.mxu0 %v970
    %2028 = vmatprep.subr.mxu0 %v975
    %2029 = vmatpush1.msra.mxu0 %v974
    %2030 = vmatprep.subr.mxu0 %v979
    %2031 = vmatpush1.msra.mxu0 %v978
    %2032 = vmatprep.subr.mxu0 %v983
    %2033 = vmatpush1.msra.mxu0 %v982
    %2034 = vmatprep.subr.mxu0 %v987
    %2035 = vmatpush1.msra.mxu0 %v986
    %2036 = vmatprep.subr.mxu0 %v991
    %2037 = vmatpush1.msra.mxu0 %v990
    %2038 = vmatprep.subr.mxu0 %v995
    %2039 = vmatpush1.msra.mxu0 %v994
    %2040 = vmatprep.subr.mxu0 %v999
    %2041 = vmatpush1.msra.mxu0 %v998
    %2042 = vmatprep.subr.mxu0 %v1003
    %2043 = vmatpush1.msra.mxu0 %v1002
    %2044 = vmatprep.subr.mxu0 %v1007
    %2045 = vmatpush1.msra.mxu0 %v1006
    %2046 = vmatprep.subr.mxu0 %v1011
    %2047 = vmatpush1.msra.mxu0 %v1010
    %2048 = vmatprep.subr.mxu0 %v1015
    %2049 = vmatpush1.msra.mxu0 %v1014
    %2050 = vmatprep.subr.mxu0 %v1019
    %2051 = vmatpush1.msra.mxu0 %v1018
    %2052 = vmatprep.subr.mxu0 %v1023
    %2053 = vmatpush1.msra.mxu0 %v1022
    %2054 = vmatprep.subr.mxu0 %v1027
    %2055 = vmatpush1.msra.mxu0 %v1026
    %2056 = vmatprep.subr.mxu0 %v1031
    %2057 = vmatpush1.msra.mxu0 %v1030
    %2058 = vmatprep.subr.mxu0 %v1035
    %2059 = vmatpush1.msra.mxu0 %v1034
    %2060 = vmatprep.subr.mxu0 %v1039
    %2061 = vmatpush1.msra.mxu0 %v1038
    %2062 = vmatprep.subr.mxu0 %v1043
    %2063 = vmatpush1.msra.mxu0 %v1042
    %2064 = vmatprep.subr.mxu0 %v1047
    %2065 = vmatpush1.msra.mxu0 %v1046
    %2066 = vmatprep.subr.mxu0 %v1051
    %2067 = vmatpush1.msra.mxu0 %v1050
    %2068 = vmatprep.subr.mxu0 %v1055
    %2069 = vmatpush1.msra.mxu0 %v1054
    %2070 = vmatprep.subr.mxu0 %v1059
    %2071 = vmatpush1.msra.mxu0 %v1058
    %2072 = vmatprep.subr.mxu0 %v1063
    %2073 = vmatpush1.msra.mxu0 %v1062
    %2074 = vmatprep.subr.mxu0 %v1067
    %2075 = vmatpush1.msra.mxu0 %v1066
    %2076 = vmatprep.mubr.f32.mxu0 %v1547
    %2077 = vmatmul.mubr.f32.gmra.mrb[0].mxu0 %v1539
    %v2078 = vpop.f32.mrb[0].mxu0
    %v2079 = vadd.f32 %v2008, %v2078
    %v2080 = vpop.f32.mrb[0].mxu0
    %v2081 = vadd.f32 %v2010, %v2080
    %2082 = vdwg.mxu0
    %2083 = vmatprep.subr.mxu0 %v1071
    %2084 = vmatpush1.msra.mxu0 %v1070
    %2085 = vmatprep.subr.mxu0 %v1075
    %2086 = vmatpush1.msra.mxu0 %v1074
    %2087 = vmatprep.subr.mxu0 %v1079
    %2088 = vmatpush1.msra.mxu0 %v1078
    %2089 = vmatprep.subr.mxu0 %v1083
    %2090 = vmatpush1.msra.mxu0 %v1082
    %2091 = vmatprep.subr.mxu0 %v1087
    %2092 = vmatpush1.msra.mxu0 %v1086
    %2093 = vmatprep.subr.mxu0 %v1091
    %2094 = vmatpush1.msra.mxu0 %v1090
    %2095 = vmatprep.subr.mxu0 %v1095
    %2096 = vmatpush1.msra.mxu0 %v1094
    %2097 = vmatprep.subr.mxu0 %v1099
    %2098 = vmatpush1.msra.mxu0 %v1098
    %2099 = vmatprep.subr.mxu0 %v1103
    %2100 = vmatpush1.msra.mxu0 %v1102
    %2101 = vmatprep.subr.mxu0 %v1107
    %2102 = vmatpush1.msra.mxu0 %v1106
    %2103 = vmatprep.subr.mxu0 %v1111
    %2104 = vmatpush1.msra.mxu0 %v1110
    %2105 = vmatprep.subr.mxu0 %v1115
    %2106 = vmatpush1.msra.mxu0 %v1114
    %2107 = vmatprep.subr.mxu0 %v1119
    %2108 = vmatpush1.msra.mxu0 %v1118
    %2109 = vmatprep.subr.mxu0 %v1123
    %2110 = vmatpush1.msra.mxu0 %v1122
    %2111 = vmatprep.subr.mxu0 %v1127
    %2112 = vmatpush1.msra.mxu0 %v1126
    %2113 = vmatprep.subr.mxu0 %v1131
    %2114 = vmatpush1.msra.mxu0 %v1130
    %2115 = vmatprep.subr.mxu0 %v1135
    %2116 = vmatpush1.msra.mxu0 %v1134
    %2117 = vmatprep.subr.mxu0 %v1139
    %2118 = vmatpush1.msra.mxu0 %v1138
    %2119 = vmatprep.subr.mxu0 %v1143
    %2120 = vmatpush1.msra.mxu0 %v1142
    %2121 = vmatprep.subr.mxu0 %v1147
    %2122 = vmatpush1.msra.mxu0 %v1146
    %2123 = vmatprep.subr.mxu0 %v1151
    %2124 = vmatpush1.msra.mxu0 %v1150
    %2125 = vmatprep.subr.mxu0 %v1155
    %2126 = vmatpush1.msra.mxu0 %v1154
    %2127 = vmatprep.subr.mxu0 %v1159
    %2128 = vmatpush1.msra.mxu0 %v1158
    %2129 = vmatprep.subr.mxu0 %v1163
    %2130 = vmatpush1.msra.mxu0 %v1162
    %2131 = vmatprep.subr.mxu0 %v1167
    %2132 = vmatpush1.msra.mxu0 %v1166
    %2133 = vmatprep.subr.mxu0 %v1171
    %2134 = vmatpush1.msra.mxu0 %v1170
    %2135 = vmatprep.subr.mxu0 %v1175
    %2136 = vmatpush1.msra.mxu0 %v1174
    %2137 = vmatprep.subr.mxu0 %v1179
    %2138 = vmatpush1.msra.mxu0 %v1178
    %2139 = vmatprep.subr.mxu0 %v1183
    %2140 = vmatpush1.msra.mxu0 %v1182
    %2141 = vmatprep.subr.mxu0 %v1187
    %2142 = vmatpush1.msra.mxu0 %v1186
    %2143 = vmatprep.subr.mxu0 %v1191
    %2144 = vmatpush1.msra.mxu0 %v1190
    %2145 = vmatprep.subr.mxu0 %v1195
    %2146 = vmatpush1.msra.mxu0 %v1194
    %2147 = vmatprep.mubr.f32.mxu0 %v1548
    %2148 = vmatmul.mubr.f32.gmra.mrb[0].mxu0 %v1546
    %v2149 = vpop.f32.mrb[0].mxu0
    %v2150 = vadd.f32 %v2079, %v2149
    %v2151 = vpop.f32.mrb[0].mxu0
    %v2152 = vadd.f32 %v2081, %v2151
    %2153 = vdwg.mxu0
    %2154 = vmatprep.subr.mxu0 %v1199
    %2155 = vmatpush1.msra.mxu0 %v1198
    %2156 = vmatprep.subr.mxu0 %v1203
    %2157 = vmatpush1.msra.mxu0 %v1202
    %2158 = vmatprep.subr.mxu0 %v1207
    %2159 = vmatpush1.msra.mxu0 %v1206
    %2160 = vmatprep.subr.mxu0 %v1211
    %2161 = vmatpush1.msra.mxu0 %v1210
    %2162 = vmatprep.subr.mxu0 %v1215
    %2163 = vmatpush1.msra.mxu0 %v1214
    %2164 = vmatprep.subr.mxu0 %v1219
    %2165 = vmatpush1.msra.mxu0 %v1218
    %2166 = vmatprep.subr.mxu0 %v1223
    %2167 = vmatpush1.msra.mxu0 %v1222
    %2168 = vmatprep.subr.mxu0 %v1227
    %2169 = vmatpush1.msra.mxu0 %v1226
    %2170 = vmatprep.subr.mxu0 %v1231
    %2171 = vmatpush1.msra.mxu0 %v1230
    %2172 = vmatprep.subr.mxu0 %v1235
    %2173 = vmatpush1.msra.mxu0 %v1234
    %2174 = vmatprep.subr.mxu0 %v1239
    %2175 = vmatpush1.msra.mxu0 %v1238
    %2176 = vmatprep.subr.mxu0 %v1243
    %2177 = vmatpush1.msra.mxu0 %v1242
    %2178 = vmatprep.subr.mxu0 %v1247
    %2179 = vmatpush1.msra.mxu0 %v1246
    %2180 = vmatprep.subr.mxu0 %v1251
    %2181 = vmatpush1.msra.mxu0 %v1250
    %2182 = vmatprep.subr.mxu0 %v1255
    %2183 = vmatpush1.msra.mxu0 %v1254
    %2184 = vmatprep.subr.mxu0 %v1259
    %2185 = vmatpush1.msra.mxu0 %v1258
    %2186 = vmatprep.subr.mxu0 %v1263
    %2187 = vmatpush1.msra.mxu0 %v1262
    %2188 = vmatprep.subr.mxu0 %v1267
    %2189 = vmatpush1.msra.mxu0 %v1266
    %2190 = vmatprep.subr.mxu0 %v1271
    %2191 = vmatpush1.msra.mxu0 %v1270
    %2192 = vmatprep.subr.mxu0 %v1275
    %2193 = vmatpush1.msra.mxu0 %v1274
    %2194 = vmatprep.subr.mxu0 %v1279
    %2195 = vmatpush1.msra.mxu0 %v1278
    %2196 = vmatprep.subr.mxu0 %v1283
    %2197 = vmatpush1.msra.mxu0 %v1282
    %2198 = vmatprep.subr.mxu0 %v1287
    %2199 = vmatpush1.msra.mxu0 %v1286
    %2200 = vmatprep.subr.mxu0 %v1291
    %2201 = vmatpush1.msra.mxu0 %v1290
    %2202 = vmatprep.subr.mxu0 %v1295
    %2203 = vmatpush1.msra.mxu0 %v1294
    %2204 = vmatprep.subr.mxu0 %v1299
    %2205 = vmatpush1.msra.mxu0 %v1298
    %2206 = vmatprep.subr.mxu0 %v1303
    %2207 = vmatpush1.msra.mxu0 %v1302
    %2208 = vmatprep.subr.mxu0 %v1307
    %2209 = vmatpush1.msra.mxu0 %v1306
    %2210 = vmatprep.subr.mxu0 %v1311
    %2211 = vmatpush1.msra.mxu0 %v1310
    %2212 = vmatprep.subr.mxu0 %v1315
    %2213 = vmatpush1.msra.mxu0 %v1314
    %2214 = vmatprep.subr.mxu0 %v1319
    %2215 = vmatpush1.msra.mxu0 %v1318
    %2216 = vmatprep.subr.mxu0 %v1323
    %2217 = vmatpush1.msra.mxu0 %v1322
    %2218 = vmatprep.mubr.f32.mxu0 %v1564
    %2219 = vmatmul.mubr.f32.gmra.mrb[0].mxu0 %v1556
    %v2220 = vpop.f32.mrb[0].mxu0
    %v2221 = vadd.f32 %v2150, %v2220
    %v2222 = vpop.f32.mrb[0].mxu0
    %v2223 = vadd.f32 %v2152, %v2222
    %2224 = vdwg.mxu0
    %2225 = vmatprep.subr.mxu0 %v1327
    %2226 = vmatpush1.msra.mxu0 %v1326
    %2227 = vmatprep.subr.mxu0 %v1331
    %2228 = vmatpush1.msra.mxu0 %v1330
    %2229 = vmatprep.subr.mxu0 %v1335
    %2230 = vmatpush1.msra.mxu0 %v1334
    %2231 = vmatprep.subr.mxu0 %v1339
    %2232 = vmatpush1.msra.mxu0 %v1338
    %2233 = vmatprep.subr.mxu0 %v1343
    %2234 = vmatpush1.msra.mxu0 %v1342
    %2235 = vmatprep.subr.mxu0 %v1347
    %2236 = vmatpush1.msra.mxu0 %v1346
    %2237 = vmatprep.subr.mxu0 %v1351
    %2238 = vmatpush1.msra.mxu0 %v1350
    %2239 = vmatprep.subr.mxu0 %v1355
    %2240 = vmatpush1.msra.mxu0 %v1354
    %2241 = vmatprep.subr.mxu0 %v1359
    %2242 = vmatpush1.msra.mxu0 %v1358
    %2243 = vmatprep.subr.mxu0 %v1363
    %2244 = vmatpush1.msra.mxu0 %v1362
    %2245 = vmatprep.subr.mxu0 %v1367
    %2246 = vmatpush1.msra.mxu0 %v1366
    %2247 = vmatprep.subr.mxu0 %v1371
    %2248 = vmatpush1.msra.mxu0 %v1370
    %2249 = vmatprep.subr.mxu0 %v1375
    %2250 = vmatpush1.msra.mxu0 %v1374
    %2251 = vmatprep.subr.mxu0 %v1379
    %2252 = vmatpush1.msra.mxu0 %v1378
    %2253 = vmatprep.subr.mxu0 %v1383
    %2254 = vmatpush1.msra.mxu0 %v1382
    %2255 = vmatprep.subr.mxu0 %v1387
    %2256 = vmatpush1.msra.mxu0 %v1386
    %2257 = vmatprep.subr.mxu0 %v1391
    %2258 = vmatpush1.msra.mxu0 %v1390
    %2259 = vmatprep.subr.mxu0 %v1395
    %2260 = vmatpush1.msra.mxu0 %v1394
    %2261 = vmatprep.subr.mxu0 %v1399
    %2262 = vmatpush1.msra.mxu0 %v1398
    %2263 = vmatprep.subr.mxu0 %v1403
    %2264 = vmatpush1.msra.mxu0 %v1402
    %2265 = vmatprep.subr.mxu0 %v1407
    %2266 = vmatpush1.msra.mxu0 %v1406
    %2267 = vmatprep.subr.mxu0 %v1411
    %2268 = vmatpush1.msra.mxu0 %v1410
    %2269 = vmatprep.subr.mxu0 %v1415
    %2270 = vmatpush1.msra.mxu0 %v1414
    %2271 = vmatprep.subr.mxu0 %v1419
    %2272 = vmatpush1.msra.mxu0 %v1418
    %2273 = vmatprep.subr.mxu0 %v1423
    %2274 = vmatpush1.msra.mxu0 %v1422
    %2275 = vmatprep.subr.mxu0 %v1427
    %2276 = vmatpush1.msra.mxu0 %v1426
    %2277 = vmatprep.subr.mxu0 %v1431
    %2278 = vmatpush1.msra.mxu0 %v1430
    %2279 = vmatprep.subr.mxu0 %v1435
    %2280 = vmatpush1.msra.mxu0 %v1434
    %2281 = vmatprep.subr.mxu0 %v1439
    %2282 = vmatpush1.msra.mxu0 %v1438
    %2283 = vmatprep.subr.mxu0 %v1443
    %2284 = vmatpush1.msra.mxu0 %v1442
    %2285 = vmatprep.subr.mxu0 %v1447
    %2286 = vmatpush1.msra.mxu0 %v1446
    %2287 = vmatprep.subr.mxu0 %v1451
    %2288 = vmatpush1.msra.mxu0 %v1450
    %2289 = vmatprep.mubr.f32.mxu0 %v1565
    %2290 = vmatmul.mubr.f32.gmra.mrb[0].mxu0 %v1563
    %v2291 = vpop.f32.mrb[0].mxu0
    %v2292 = vadd.f32 %v2221, %v2291
    %v2293 = vpop.f32.mrb[0].mxu0
    %v2294 = vadd.f32 %v2223, %v2293
    %2295 = vdwg.mxu0
    %2296 = vmatprep.subr.mxu0 %v177
    %2297 = vmatpush1.msra.mxu0 %v176
    %2298 = vmatprep.subr.mxu0 %v181
    %2299 = vmatpush1.msra.mxu0 %v180
    %2300 = vmatprep.subr.mxu0 %v185
    %2301 = vmatpush1.msra.mxu0 %v184
    %2302 = vmatprep.subr.mxu0 %v189
    %2303 = vmatpush1.msra.mxu0 %v188
    %2304 = vmatprep.subr.mxu0 %v193
    %2305 = vmatpush1.msra.mxu0 %v192
    %2306 = vmatprep.subr.mxu0 %v197
    %2307 = vmatpush1.msra.mxu0 %v196
    %2308 = vmatprep.subr.mxu0 %v201
    %2309 = vmatpush1.msra.mxu0 %v200
    %2310 = vmatprep.subr.mxu0 %v205
    %2311 = vmatpush1.msra.mxu0 %v204
    %2312 = vmatprep.subr.mxu0 %v209
    %2313 = vmatpush1.msra.mxu0 %v208
    %2314 = vmatprep.subr.mxu0 %v213
    %2315 = vmatpush1.msra.mxu0 %v212
    %2316 = vmatprep.subr.mxu0 %v217
    %2317 = vmatpush1.msra.mxu0 %v216
    %2318 = vmatprep.subr.mxu0 %v221
    %2319 = vmatpush1.msra.mxu0 %v220
    %2320 = vmatprep.subr.mxu0 %v225
    %2321 = vmatpush1.msra.mxu0 %v224
    %2322 = vmatprep.subr.mxu0 %v229
    %2323 = vmatpush1.msra.mxu0 %v228
    %2324 = vmatprep.subr.mxu0 %v233
    %2325 = vmatpush1.msra.mxu0 %v232
    %2326 = vmatprep.subr.mxu0 %v237
    %2327 = vmatpush1.msra.mxu0 %v236
    %2328 = vmatprep.subr.mxu0 %v241
    %2329 = vmatpush1.msra.mxu0 %v240
    %2330 = vmatprep.subr.mxu0 %v245
    %2331 = vmatpush1.msra.mxu0 %v244
    %2332 = vmatprep.subr.mxu0 %v249
    %2333 = vmatpush1.msra.mxu0 %v248
    %2334 = vmatprep.subr.mxu0 %v253
    %2335 = vmatpush1.msra.mxu0 %v252
    %2336 = vmatprep.subr.mxu0 %v257
    %2337 = vmatpush1.msra.mxu0 %v256
    %2338 = vmatprep.subr.mxu0 %v261
    %2339 = vmatpush1.msra.mxu0 %v260
    %2340 = vmatprep.subr.mxu0 %v265
    %2341 = vmatpush1.msra.mxu0 %v264
    %2342 = vmatprep.subr.mxu0 %v269
    %2343 = vmatpush1.msra.mxu0 %v268
    %2344 = vmatprep.subr.mxu0 %v273
    %2345 = vmatpush1.msra.mxu0 %v272
    %2346 = vmatprep.subr.mxu0 %v277
    %2347 = vmatpush1.msra.mxu0 %v276
    %2348 = vmatprep.subr.mxu0 %v281
    %2349 = vmatpush1.msra.mxu0 %v280
    %2350 = vmatprep.subr.mxu0 %v285
    %2351 = vmatpush1.msra.mxu0 %v284
    %2352 = vmatprep.subr.mxu0 %v289
    %2353 = vmatpush1.msra.mxu0 %v288
    %2354 = vmatprep.subr.mxu0 %v293
    %2355 = vmatpush1.msra.mxu0 %v292
    %2356 = vmatprep.subr.mxu0 %v297
    %2357 = vmatpush1.msra.mxu0 %v296
    %2358 = vmatprep.subr.mxu0 %v301
    %2359 = vmatpush1.msra.mxu0 %v300
    %2360 = vmatprep.mubr.f32.mxu0 %v1496
    %2361 = vmatmul.mubr.f32.gmra.mrb[0].mxu0 %v1488
    %v2362 = vpop.f32.mrb[0].mxu0
    %v2363 = vadd.f32 %v1467, %v2362
    %v2364 = vpop.f32.mrb[0].mxu0
    %v2365 = vadd.f32 %v1471, %v2364
    %2366 = vdwg.mxu0
    %2367 = vmatprep.subr.mxu0 %v305
    %2368 = vmatpush1.msra.mxu0 %v304
    %2369 = vmatprep.subr.mxu0 %v309
    %2370 = vmatpush1.msra.mxu0 %v308
    %2371 = vmatprep.subr.mxu0 %v313
    %2372 = vmatpush1.msra.mxu0 %v312
    %2373 = vmatprep.subr.mxu0 %v317
    %2374 = vmatpush1.msra.mxu0 %v316
    %2375 = vmatprep.subr.mxu0 %v321
    %2376 = vmatpush1.msra.mxu0 %v320
    %2377 = vmatprep.subr.mxu0 %v325
    %2378 = vmatpush1.msra.mxu0 %v324
    %2379 = vmatprep.subr.mxu0 %v329
    %2380 = vmatpush1.msra.mxu0 %v328
    %2381 = vmatprep.subr.mxu0 %v333
    %2382 = vmatpush1.msra.mxu0 %v332
    %2383 = vmatprep.subr.mxu0 %v337
    %2384 = vmatpush1.msra.mxu0 %v336
    %2385 = vmatprep.subr.mxu0 %v341
    %2386 = vmatpush1.msra.mxu0 %v340
    %2387 = vmatprep.subr.mxu0 %v345
    %2388 = vmatpush1.msra.mxu0 %v344
    %2389 = vmatprep.subr.mxu0 %v349
    %2390 = vmatpush1.msra.mxu0 %v348
    %2391 = vmatprep.subr.mxu0 %v353
    %2392 = vmatpush1.msra.mxu0 %v352
    %2393 = vmatprep.subr.mxu0 %v357
    %2394 = vmatpush1.msra.mxu0 %v356
    %2395 = vmatprep.subr.mxu0 %v361
    %2396 = vmatpush1.msra.mxu0 %v360
    %2397 = vmatprep.subr.mxu0 %v365
    %2398 = vmatpush1.msra.mxu0 %v364
    %2399 = vmatprep.subr.mxu0 %v369
    %2400 = vmatpush1.msra.mxu0 %v368
    %2401 = vmatprep.subr.mxu0 %v373
    %2402 = vmatpush1.msra.mxu0 %v372
    %2403 = vmatprep.subr.mxu0 %v377
    %2404 = vmatpush1.msra.mxu0 %v376
    %2405 = vmatprep.subr.mxu0 %v381
    %2406 = vmatpush1.msra.mxu0 %v380
    %2407 = vmatprep.subr.mxu0 %v385
    %2408 = vmatpush1.msra.mxu0 %v384
    %2409 = vmatprep.subr.mxu0 %v389
    %2410 = vmatpush1.msra.mxu0 %v388
    %2411 = vmatprep.subr.mxu0 %v393
    %2412 = vmatpush1.msra.mxu0 %v392
    %2413 = vmatprep.subr.mxu0 %v397
    %2414 = vmatpush1.msra.mxu0 %v396
    %2415 = vmatprep.subr.mxu0 %v401
    %2416 = vmatpush1.msra.mxu0 %v400
    %2417 = vmatprep.subr.mxu0 %v405
    %2418 = vmatpush1.msra.mxu0 %v404
    %2419 = vmatprep.subr.mxu0 %v409
    %2420 = vmatpush1.msra.mxu0 %v408
    %2421 = vmatprep.subr.mxu0 %v413
    %2422 = vmatpush1.msra.mxu0 %v412
    %2423 = vmatprep.subr.mxu0 %v417
    %2424 = vmatpush1.msra.mxu0 %v416
    %2425 = vmatprep.subr.mxu0 %v421
    %2426 = vmatpush1.msra.mxu0 %v420
    %2427 = vmatprep.subr.mxu0 %v425
    %2428 = vmatpush1.msra.mxu0 %v424
    %2429 = vmatprep.subr.mxu0 %v429
    %2430 = vmatpush1.msra.mxu0 %v428
    %2431 = vmatprep.mubr.f32.mxu0 %v1497
    %2432 = vmatmul.mubr.f32.gmra.mrb[0].mxu0 %v1495
    %v2433 = vpop.f32.mrb[0].mxu0
    %v2434 = vadd.f32 %v2363, %v2433
    %v2435 = vpop.f32.mrb[0].mxu0
    %v2436 = vadd.f32 %v2365, %v2435
    %2437 = vdwg.mxu0
    %2438 = vmatprep.subr.mxu0 %v433
    %2439 = vmatpush1.msra.mxu0 %v432
    %2440 = vmatprep.subr.mxu0 %v437
    %2441 = vmatpush1.msra.mxu0 %v436
    %2442 = vmatprep.subr.mxu0 %v441
    %2443 = vmatpush1.msra.mxu0 %v440
    %2444 = vmatprep.subr.mxu0 %v445
    %2445 = vmatpush1.msra.mxu0 %v444
    %2446 = vmatprep.subr.mxu0 %v449
    %2447 = vmatpush1.msra.mxu0 %v448
    %2448 = vmatprep.subr.mxu0 %v453
    %2449 = vmatpush1.msra.mxu0 %v452
    %2450 = vmatprep.subr.mxu0 %v457
    %2451 = vmatpush1.msra.mxu0 %v456
    %2452 = vmatprep.subr.mxu0 %v461
    %2453 = vmatpush1.msra.mxu0 %v460
    %2454 = vmatprep.subr.mxu0 %v465
    %2455 = vmatpush1.msra.mxu0 %v464
    %2456 = vmatprep.subr.mxu0 %v469
    %2457 = vmatpush1.msra.mxu0 %v468
    %2458 = vmatprep.subr.mxu0 %v473
    %2459 = vmatpush1.msra.mxu0 %v472
    %2460 = vmatprep.subr.mxu0 %v477
    %2461 = vmatpush1.msra.mxu0 %v476
    %2462 = vmatprep.subr.mxu0 %v481
    %2463 = vmatpush1.msra.mxu0 %v480
    %2464 = vmatprep.subr.mxu0 %v485
    %2465 = vmatpush1.msra.mxu0 %v484
    %2466 = vmatprep.subr.mxu0 %v489
    %2467 = vmatpush1.msra.mxu0 %v488
    %2468 = vmatprep.subr.mxu0 %v493
    %2469 = vmatpush1.msra.mxu0 %v492
    %2470 = vmatprep.subr.mxu0 %v497
    %2471 = vmatpush1.msra.mxu0 %v496
    %2472 = vmatprep.subr.mxu0 %v501
    %2473 = vmatpush1.msra.mxu0 %v500
    %2474 = vmatprep.subr.mxu0 %v505
    %2475 = vmatpush1.msra.mxu0 %v504
    %2476 = vmatprep.subr.mxu0 %v509
    %2477 = vmatpush1.msra.mxu0 %v508
    %2478 = vmatprep.subr.mxu0 %v513
    %2479 = vmatpush1.msra.mxu0 %v512
    %2480 = vmatprep.subr.mxu0 %v517
    %2481 = vmatpush1.msra.mxu0 %v516
    %2482 = vmatprep.subr.mxu0 %v521
    %2483 = vmatpush1.msra.mxu0 %v520
    %2484 = vmatprep.subr.mxu0 %v525
    %2485 = vmatpush1.msra.mxu0 %v524
    %2486 = vmatprep.subr.mxu0 %v529
    %2487 = vmatpush1.msra.mxu0 %v528
    %2488 = vmatprep.subr.mxu0 %v533
    %2489 = vmatpush1.msra.mxu0 %v532
    %2490 = vmatprep.subr.mxu0 %v537
    %2491 = vmatpush1.msra.mxu0 %v536
    %2492 = vmatprep.subr.mxu0 %v541
    %2493 = vmatpush1.msra.mxu0 %v540
    %2494 = vmatprep.subr.mxu0 %v545
    %2495 = vmatpush1.msra.mxu0 %v544
    %2496 = vmatprep.subr.mxu0 %v549
    %2497 = vmatpush1.msra.mxu0 %v548
    %2498 = vmatprep.subr.mxu0 %v553
    %2499 = vmatpush1.msra.mxu0 %v552
    %2500 = vmatprep.subr.mxu0 %v557
    %2501 = vmatpush1.msra.mxu0 %v556
    %2502 = vmatprep.mubr.f32.mxu0 %v1513
    %2503 = vmatmul.mubr.f32.gmra.mrb[0].mxu0 %v1505
    %v2504 = vpop.f32.mrb[0].mxu0
    %v2505 = vadd.f32 %v2434, %v2504
    %v2506 = vpop.f32.mrb[0].mxu0
    %v2507 = vadd.f32 %v2436, %v2506
    %2508 = vdwg.mxu0
    %2509 = vmatprep.subr.mxu0 %v561
    %2510 = vmatpush1.msra.mxu0 %v560
    %2511 = vmatprep.subr.mxu0 %v565
    %2512 = vmatpush1.msra.mxu0 %v564
    %2513 = vmatprep.subr.mxu0 %v569
    %2514 = vmatpush1.msra.mxu0 %v568
    %2515 = vmatprep.subr.mxu0 %v573
    %2516 = vmatpush1.msra.mxu0 %v572
    %2517 = vmatprep.subr.mxu0 %v577
    %2518 = vmatpush1.msra.mxu0 %v576
    %2519 = vmatprep.subr.mxu0 %v581
    %2520 = vmatpush1.msra.mxu0 %v580
    %2521 = vmatprep.subr.mxu0 %v585
    %2522 = vmatpush1.msra.mxu0 %v584
    %2523 = vmatprep.subr.mxu0 %v589
    %2524 = vmatpush1.msra.mxu0 %v588
    %2525 = vmatprep.subr.mxu0 %v593
    %2526 = vmatpush1.msra.mxu0 %v592
    %2527 = vmatprep.subr.mxu0 %v597
    %2528 = vmatpush1.msra.mxu0 %v596
    %2529 = vmatprep.subr.mxu0 %v601
    %2530 = vmatpush1.msra.mxu0 %v600
    %2531 = vmatprep.subr.mxu0 %v605
    %2532 = vmatpush1.msra.mxu0 %v604
    %2533 = vmatprep.subr.mxu0 %v609
    %2534 = vmatpush1.msra.mxu0 %v608
    %2535 = vmatprep.subr.mxu0 %v613
    %2536 = vmatpush1.msra.mxu0 %v612
    %2537 = vmatprep.subr.mxu0 %v617
    %2538 = vmatpush1.msra.mxu0 %v616
    %2539 = vmatprep.subr.mxu0 %v621
    %2540 = vmatpush1.msra.mxu0 %v620
    %2541 = vmatprep.subr.mxu0 %v625
    %2542 = vmatpush1.msra.mxu0 %v624
    %2543 = vmatprep.subr.mxu0 %v629
    %2544 = vmatpush1.msra.mxu0 %v628
    %2545 = vmatprep.subr.mxu0 %v633
    %2546 = vmatpush1.msra.mxu0 %v632
    %2547 = vmatprep.subr.mxu0 %v637
    %2548 = vmatpush1.msra.mxu0 %v636
    %2549 = vmatprep.subr.mxu0 %v641
    %2550 = vmatpush1.msra.mxu0 %v640
    %2551 = vmatprep.subr.mxu0 %v645
    %2552 = vmatpush1.msra.mxu0 %v644
    %2553 = vmatprep.subr.mxu0 %v649
    %2554 = vmatpush1.msra.mxu0 %v648
    %2555 = vmatprep.subr.mxu0 %v653
    %2556 = vmatpush1.msra.mxu0 %v652
    %2557 = vmatprep.subr.mxu0 %v657
    %2558 = vmatpush1.msra.mxu0 %v656
    %2559 = vmatprep.subr.mxu0 %v661
    %2560 = vmatpush1.msra.mxu0 %v660
    %2561 = vmatprep.subr.mxu0 %v665
    %2562 = vmatpush1.msra.mxu0 %v664
    %2563 = vmatprep.subr.mxu0 %v669
    %2564 = vmatpush1.msra.mxu0 %v668
    %2565 = vmatprep.subr.mxu0 %v673
    %2566 = vmatpush1.msra.mxu0 %v672
    %2567 = vmatprep.subr.mxu0 %v677
    %2568 = vmatpush1.msra.mxu0 %v676
    %2569 = vmatprep.subr.mxu0 %v681
    %2570 = vmatpush1.msra.mxu0 %v680
    %2571 = vmatprep.subr.mxu0 %v685
    %2572 = vmatpush1.msra.mxu0 %v684
    %2573 = vmatprep.mubr.f32.mxu0 %v1514
    %2574 = vmatmul.mubr.f32.gmra.mrb[0].mxu0 %v1512
    %v2575 = vpop.f32.mrb[0].mxu0
    %v2576 = vadd.f32 %v2505, %v2575
    %v2577 = vpop.f32.mrb[0].mxu0
    %v2578 = vadd.f32 %v2507, %v2577
    %2579 = vdwg.mxu0
    %2580 = vmatprep.subr.mxu0 %v689
    %2581 = vmatpush1.msra.mxu0 %v688
    %2582 = vmatprep.subr.mxu0 %v693
    %2583 = vmatpush1.msra.mxu0 %v692
    %2584 = vmatprep.subr.mxu0 %v697
    %2585 = vmatpush1.msra.mxu0 %v696
    %2586 = vmatprep.subr.mxu0 %v701
    %2587 = vmatpush1.msra.mxu0 %v700
    %2588 = vmatprep.subr.mxu0 %v705
    %2589 = vmatpush1.msra.mxu0 %v704
    %2590 = vmatprep.subr.mxu0 %v709
    %2591 = vmatpush1.msra.mxu0 %v708
    %2592 = vmatprep.subr.mxu0 %v713
    %2593 = vmatpush1.msra.mxu0 %v712
    %2594 = vmatprep.subr.mxu0 %v717
    %2595 = vmatpush1.msra.mxu0 %v716
    %2596 = vmatprep.subr.mxu0 %v721
    %2597 = vmatpush1.msra.mxu0 %v720
    %2598 = vmatprep.subr.mxu0 %v725
    %2599 = vmatpush1.msra.mxu0 %v724
    %2600 = vmatprep.subr.mxu0 %v729
    %2601 = vmatpush1.msra.mxu0 %v728
    %2602 = vmatprep.subr.mxu0 %v733
    %2603 = vmatpush1.msra.mxu0 %v732
    %2604 = vmatprep.subr.mxu0 %v737
    %2605 = vmatpush1.msra.mxu0 %v736
    %2606 = vmatprep.subr.mxu0 %v741
    %2607 = vmatpush1.msra.mxu0 %v740
    %2608 = vmatprep.subr.mxu0 %v745
    %2609 = vmatpush1.msra.mxu0 %v744
    %2610 = vmatprep.subr.mxu0 %v749
    %2611 = vmatpush1.msra.mxu0 %v748
    %2612 = vmatprep.subr.mxu0 %v753
    %2613 = vmatpush1.msra.mxu0 %v752
    %2614 = vmatprep.subr.mxu0 %v757
    %2615 = vmatpush1.msra.mxu0 %v756
    %2616 = vmatprep.subr.mxu0 %v761
    %2617 = vmatpush1.msra.mxu0 %v760
    %2618 = vmatprep.subr.mxu0 %v765
    %2619 = vmatpush1.msra.mxu0 %v764
    %2620 = vmatprep.subr.mxu0 %v769
    %2621 = vmatpush1.msra.mxu0 %v768
    %2622 = vmatprep.subr.mxu0 %v773
    %2623 = vmatpush1.msra.mxu0 %v772
    %2624 = vmatprep.subr.mxu0 %v777
    %2625 = vmatpush1.msra.mxu0 %v776
    %2626 = vmatprep.subr.mxu0 %v781
    %2627 = vmatpush1.msra.mxu0 %v780
    %2628 = vmatprep.subr.mxu0 %v785
    %2629 = vmatpush1.msra.mxu0 %v784
    %2630 = vmatprep.subr.mxu0 %v789
    %2631 = vmatpush1.msra.mxu0 %v788
    %2632 = vmatprep.subr.mxu0 %v793
    %2633 = vmatpush1.msra.mxu0 %v792
    %2634 = vmatprep.subr.mxu0 %v797
    %2635 = vmatpush1.msra.mxu0 %v796
    %2636 = vmatprep.subr.mxu0 %v801
    %2637 = vmatpush1.msra.mxu0 %v800
    %2638 = vmatprep.subr.mxu0 %v805
    %2639 = vmatpush1.msra.mxu0 %v804
    %2640 = vmatprep.subr.mxu0 %v809
    %2641 = vmatpush1.msra.mxu0 %v808
    %2642 = vmatprep.subr.mxu0 %v813
    %2643 = vmatpush1.msra.mxu0 %v812
    %2644 = vmatprep.mubr.f32.mxu0 %v1530
    %2645 = vmatmul.mubr.f32.gmra.mrb[0].mxu0 %v1522
    %v2646 = vpop.f32.mrb[0].mxu0
    %v2647 = vadd.f32 %v2576, %v2646
    %v2648 = vpop.f32.mrb[0].mxu0
    %v2649 = vadd.f32 %v2578, %v2648
    %2650 = vdwg.mxu0
    %2651 = vmatprep.subr.mxu0 %v817
    %2652 = vmatpush1.msra.mxu0 %v816
    %2653 = vmatprep.subr.mxu0 %v821
    %2654 = vmatpush1.msra.mxu0 %v820
    %2655 = vmatprep.subr.mxu0 %v825
    %2656 = vmatpush1.msra.mxu0 %v824
    %2657 = vmatprep.subr.mxu0 %v829
    %2658 = vmatpush1.msra.mxu0 %v828
    %2659 = vmatprep.subr.mxu0 %v833
    %2660 = vmatpush1.msra.mxu0 %v832
    %2661 = vmatprep.subr.mxu0 %v837
    %2662 = vmatpush1.msra.mxu0 %v836
    %2663 = vmatprep.subr.mxu0 %v841
    %2664 = vmatpush1.msra.mxu0 %v840
    %2665 = vmatprep.subr.mxu0 %v845
    %2666 = vmatpush1.msra.mxu0 %v844
    %2667 = vmatprep.subr.mxu0 %v849
    %2668 = vmatpush1.msra.mxu0 %v848
    %2669 = vmatprep.subr.mxu0 %v853
    %2670 = vmatpush1.msra.mxu0 %v852
    %2671 = vmatprep.subr.mxu0 %v857
    %2672 = vmatpush1.msra.mxu0 %v856
    %2673 = vmatprep.subr.mxu0 %v861
    %2674 = vmatpush1.msra.mxu0 %v860
    %2675 = vmatprep.subr.mxu0 %v865
    %2676 = vmatpush1.msra.mxu0 %v864
    %2677 = vmatprep.subr.mxu0 %v869
    %2678 = vmatpush1.msra.mxu0 %v868
    %2679 = vmatprep.subr.mxu0 %v873
    %2680 = vmatpush1.msra.mxu0 %v872
    %2681 = vmatprep.subr.mxu0 %v877
    %2682 = vmatpush1.msra.mxu0 %v876
    %2683 = vmatprep.subr.mxu0 %v881
    %2684 = vmatpush1.msra.mxu0 %v880
    %2685 = vmatprep.subr.mxu0 %v885
    %2686 = vmatpush1.msra.mxu0 %v884
    %2687 = vmatprep.subr.mxu0 %v889
    %2688 = vmatpush1.msra.mxu0 %v888
    %2689 = vmatprep.subr.mxu0 %v893
    %2690 = vmatpush1.msra.mxu0 %v892
    %2691 = vmatprep.subr.mxu0 %v897
    %2692 = vmatpush1.msra.mxu0 %v896
    %2693 = vmatprep.subr.mxu0 %v901
    %2694 = vmatpush1.msra.mxu0 %v900
    %2695 = vmatprep.subr.mxu0 %v905
    %2696 = vmatpush1.msra.mxu0 %v904
    %2697 = vmatprep.subr.mxu0 %v909
    %2698 = vmatpush1.msra.mxu0 %v908
    %2699 = vmatprep.subr.mxu0 %v913
    %2700 = vmatpush1.msra.mxu0 %v912
    %2701 = vmatprep.subr.mxu0 %v917
    %2702 = vmatpush1.msra.mxu0 %v916
    %2703 = vmatprep.subr.mxu0 %v921
    %2704 = vmatpush1.msra.mxu0 %v920
    %2705 = vmatprep.subr.mxu0 %v925
    %2706 = vmatpush1.msra.mxu0 %v924
    %2707 = vmatprep.subr.mxu0 %v929
    %2708 = vmatpush1.msra.mxu0 %v928
    %2709 = vmatprep.subr.mxu0 %v933
    %2710 = vmatpush1.msra.mxu0 %v932
    %2711 = vmatprep.subr.mxu0 %v937
    %2712 = vmatpush1.msra.mxu0 %v936
    %2713 = vmatprep.subr.mxu0 %v941
    %2714 = vmatpush1.msra.mxu0 %v940
    %2715 = vmatprep.mubr.f32.mxu0 %v1531
    %2716 = vmatmul.mubr.f32.gmra.mrb[0].mxu0 %v1529
    %v2717 = vpop.f32.mrb[0].mxu0
    %v2718 = vadd.f32 %v2647, %v2717
    %v2719 = vpop.f32.mrb[0].mxu0
    %v2720 = vadd.f32 %v2649, %v2719
    %2721 = vdwg.mxu0
    %2722 = vmatprep.subr.mxu0 %v945
    %2723 = vmatpush1.msra.mxu0 %v944
    %2724 = vmatprep.subr.mxu0 %v949
    %2725 = vmatpush1.msra.mxu0 %v948
    %2726 = vmatprep.subr.mxu0 %v953
    %2727 = vmatpush1.msra.mxu0 %v952
    %2728 = vmatprep.subr.mxu0 %v957
    %2729 = vmatpush1.msra.mxu0 %v956
    %2730 = vmatprep.subr.mxu0 %v961
    %2731 = vmatpush1.msra.mxu0 %v960
    %2732 = vmatprep.subr.mxu0 %v965
    %2733 = vmatpush1.msra.mxu0 %v964
    %2734 = vmatprep.subr.mxu0 %v969
    %2735 = vmatpush1.msra.mxu0 %v968
    %2736 = vmatprep.subr.mxu0 %v973
    %2737 = vmatpush1.msra.mxu0 %v972
    %2738 = vmatprep.subr.mxu0 %v977
    %2739 = vmatpush1.msra.mxu0 %v976
    %2740 = vmatprep.subr.mxu0 %v981
    %2741 = vmatpush1.msra.mxu0 %v980
    %2742 = vmatprep.subr.mxu0 %v985
    %2743 = vmatpush1.msra.mxu0 %v984
    %2744 = vmatprep.subr.mxu0 %v989
    %2745 = vmatpush1.msra.mxu0 %v988
    %2746 = vmatprep.subr.mxu0 %v993
    %2747 = vmatpush1.msra.mxu0 %v992
    %2748 = vmatprep.subr.mxu0 %v997
    %2749 = vmatpush1.msra.mxu0 %v996
    %2750 = vmatprep.subr.mxu0 %v1001
    %2751 = vmatpush1.msra.mxu0 %v1000
    %2752 = vmatprep.subr.mxu0 %v1005
    %2753 = vmatpush1.msra.mxu0 %v1004
    %2754 = vmatprep.subr.mxu0 %v1009
    %2755 = vmatpush1.msra.mxu0 %v1008
    %2756 = vmatprep.subr.mxu0 %v1013
    %2757 = vmatpush1.msra.mxu0 %v1012
    %2758 = vmatprep.subr.mxu0 %v1017
    %2759 = vmatpush1.msra.mxu0 %v1016
    %2760 = vmatprep.subr.mxu0 %v1021
    %2761 = vmatpush1.msra.mxu0 %v1020
    %2762 = vmatprep.subr.mxu0 %v1025
    %2763 = vmatpush1.msra.mxu0 %v1024
    %2764 = vmatprep.subr.mxu0 %v1029
    %2765 = vmatpush1.msra.mxu0 %v1028
    %2766 = vmatprep.subr.mxu0 %v1033
    %2767 = vmatpush1.msra.mxu0 %v1032
    %2768 = vmatprep.subr.mxu0 %v1037
    %2769 = vmatpush1.msra.mxu0 %v1036
    %2770 = vmatprep.subr.mxu0 %v1041
    %2771 = vmatpush1.msra.mxu0 %v1040
    %2772 = vmatprep.subr.mxu0 %v1045
    %2773 = vmatpush1.msra.mxu0 %v1044
    %2774 = vmatprep.subr.mxu0 %v1049
    %2775 = vmatpush1.msra.mxu0 %v1048
    %2776 = vmatprep.subr.mxu0 %v1053
    %2777 = vmatpush1.msra.mxu0 %v1052
    %2778 = vmatprep.subr.mxu0 %v1057
    %2779 = vmatpush1.msra.mxu0 %v1056
    %2780 = vmatprep.subr.mxu0 %v1061
    %2781 = vmatpush1.msra.mxu0 %v1060
    %2782 = vmatprep.subr.mxu0 %v1065
    %2783 = vmatpush1.msra.mxu0 %v1064
    %2784 = vmatprep.subr.mxu0 %v1069
    %2785 = vmatpush1.msra.mxu0 %v1068
    %2786 = vmatprep.mubr.f32.mxu0 %v1547
    %2787 = vmatmul.mubr.f32.gmra.mrb[0].mxu0 %v1539
    %v2788 = vpop.f32.mrb[0].mxu0
    %v2789 = vadd.f32 %v2718, %v2788
    %v2790 = vpop.f32.mrb[0].mxu0
    %v2791 = vadd.f32 %v2720, %v2790
    %2792 = vdwg.mxu0
    %2793 = vmatprep.subr.mxu0 %v1073
    %2794 = vmatpush1.msra.mxu0 %v1072
    %2795 = vmatprep.subr.mxu0 %v1077
    %2796 = vmatpush1.msra.mxu0 %v1076
    %2797 = vmatprep.subr.mxu0 %v1081
    %2798 = vmatpush1.msra.mxu0 %v1080
    %2799 = vmatprep.subr.mxu0 %v1085
    %2800 = vmatpush1.msra.mxu0 %v1084
    %2801 = vmatprep.subr.mxu0 %v1089
    %2802 = vmatpush1.msra.mxu0 %v1088
    %2803 = vmatprep.subr.mxu0 %v1093
    %2804 = vmatpush1.msra.mxu0 %v1092
    %2805 = vmatprep.subr.mxu0 %v1097
    %2806 = vmatpush1.msra.mxu0 %v1096
    %2807 = vmatprep.subr.mxu0 %v1101
    %2808 = vmatpush1.msra.mxu0 %v1100
    %2809 = vmatprep.subr.mxu0 %v1105
    %2810 = vmatpush1.msra.mxu0 %v1104
    %2811 = vmatprep.subr.mxu0 %v1109
    %2812 = vmatpush1.msra.mxu0 %v1108
    %2813 = vmatprep.subr.mxu0 %v1113
    %2814 = vmatpush1.msra.mxu0 %v1112
    %2815 = vmatprep.subr.mxu0 %v1117
    %2816 = vmatpush1.msra.mxu0 %v1116
    %2817 = vmatprep.subr.mxu0 %v1121
    %2818 = vmatpush1.msra.mxu0 %v1120
    %2819 = vmatprep.subr.mxu0 %v1125
    %2820 = vmatpush1.msra.mxu0 %v1124
    %2821 = vmatprep.subr.mxu0 %v1129
    %2822 = vmatpush1.msra.mxu0 %v1128
    %2823 = vmatprep.subr.mxu0 %v1133
    %2824 = vmatpush1.msra.mxu0 %v1132
    %2825 = vmatprep.subr.mxu0 %v1137
    %2826 = vmatpush1.msra.mxu0 %v1136
    %2827 = vmatprep.subr.mxu0 %v1141
    %2828 = vmatpush1.msra.mxu0 %v1140
    %2829 = vmatprep.subr.mxu0 %v1145
    %2830 = vmatpush1.msra.mxu0 %v1144
    %2831 = vmatprep.subr.mxu0 %v1149
    %2832 = vmatpush1.msra.mxu0 %v1148
    %2833 = vmatprep.subr.mxu0 %v1153
    %2834 = vmatpush1.msra.mxu0 %v1152
    %2835 = vmatprep.subr.mxu0 %v1157
    %2836 = vmatpush1.msra.mxu0 %v1156
    %2837 = vmatprep.subr.mxu0 %v1161
    %2838 = vmatpush1.msra.mxu0 %v1160
    %2839 = vmatprep.subr.mxu0 %v1165
    %2840 = vmatpush1.msra.mxu0 %v1164
    %2841 = vmatprep.subr.mxu0 %v1169
    %2842 = vmatpush1.msra.mxu0 %v1168
    %2843 = vmatprep.subr.mxu0 %v1173
    %2844 = vmatpush1.msra.mxu0 %v1172
    %2845 = vmatprep.subr.mxu0 %v1177
    %2846 = vmatpush1.msra.mxu0 %v1176
    %2847 = vmatprep.subr.mxu0 %v1181
    %2848 = vmatpush1.msra.mxu0 %v1180
    %2849 = vmatprep.subr.mxu0 %v1185
    %2850 = vmatpush1.msra.mxu0 %v1184
    %2851 = vmatprep.subr.mxu0 %v1189
    %2852 = vmatpush1.msra.mxu0 %v1188
    %2853 = vmatprep.subr.mxu0 %v1193
    %2854 = vmatpush1.msra.mxu0 %v1192
    %2855 = vmatprep.subr.mxu0 %v1197
    %2856 = vmatpush1.msra.mxu0 %v1196
    %2857 = vmatprep.mubr.f32.mxu0 %v1548
    %2858 = vmatmul.mubr.f32.gmra.mrb[0].mxu0 %v1546
    %v2859 = vpop.f32.mrb[0].mxu0
    %v2860 = vadd.f32 %v2789, %v2859
    %v2861 = vpop.f32.mrb[0].mxu0
    %v2862 = vadd.f32 %v2791, %v2861
    %2863 = vdwg.mxu0
    %2864 = vmatprep.subr.mxu0 %v1201
    %2865 = vmatpush1.msra.mxu0 %v1200
    %2866 = vmatprep.subr.mxu0 %v1205
    %2867 = vmatpush1.msra.mxu0 %v1204
    %2868 = vmatprep.subr.mxu0 %v1209
    %2869 = vmatpush1.msra.mxu0 %v1208
    %2870 = vmatprep.subr.mxu0 %v1213
    %2871 = vmatpush1.msra.mxu0 %v1212
    %2872 = vmatprep.subr.mxu0 %v1217
    %2873 = vmatpush1.msra.mxu0 %v1216
    %2874 = vmatprep.subr.mxu0 %v1221
    %2875 = vmatpush1.msra.mxu0 %v1220
    %2876 = vmatprep.subr.mxu0 %v1225
    %2877 = vmatpush1.msra.mxu0 %v1224
    %2878 = vmatprep.subr.mxu0 %v1229
    %2879 = vmatpush1.msra.mxu0 %v1228
    %2880 = vmatprep.subr.mxu0 %v1233
    %2881 = vmatpush1.msra.mxu0 %v1232
    %2882 = vmatprep.subr.mxu0 %v1237
    %2883 = vmatpush1.msra.mxu0 %v1236
    %2884 = vmatprep.subr.mxu0 %v1241
    %2885 = vmatpush1.msra.mxu0 %v1240
    %2886 = vmatprep.subr.mxu0 %v1245
    %2887 = vmatpush1.msra.mxu0 %v1244
    %2888 = vmatprep.subr.mxu0 %v1249
    %2889 = vmatpush1.msra.mxu0 %v1248
    %2890 = vmatprep.subr.mxu0 %v1253
    %2891 = vmatpush1.msra.mxu0 %v1252
    %2892 = vmatprep.subr.mxu0 %v1257
    %2893 = vmatpush1.msra.mxu0 %v1256
    %2894 = vmatprep.subr.mxu0 %v1261
    %2895 = vmatpush1.msra.mxu0 %v1260
    %2896 = vmatprep.subr.mxu0 %v1265
    %2897 = vmatpush1.msra.mxu0 %v1264
    %2898 = vmatprep.subr.mxu0 %v1269
    %2899 = vmatpush1.msra.mxu0 %v1268
    %2900 = vmatprep.subr.mxu0 %v1273
    %2901 = vmatpush1.msra.mxu0 %v1272
    %2902 = vmatprep.subr.mxu0 %v1277
    %2903 = vmatpush1.msra.mxu0 %v1276
    %2904 = vmatprep.subr.mxu0 %v1281
    %2905 = vmatpush1.msra.mxu0 %v1280
    %2906 = vmatprep.subr.mxu0 %v1285
    %2907 = vmatpush1.msra.mxu0 %v1284
    %2908 = vmatprep.subr.mxu0 %v1289
    %2909 = vmatpush1.msra.mxu0 %v1288
    %2910 = vmatprep.subr.mxu0 %v1293
    %2911 = vmatpush1.msra.mxu0 %v1292
    %2912 = vmatprep.subr.mxu0 %v1297
    %2913 = vmatpush1.msra.mxu0 %v1296
    %2914 = vmatprep.subr.mxu0 %v1301
    %2915 = vmatpush1.msra.mxu0 %v1300
    %2916 = vmatprep.subr.mxu0 %v1305
    %2917 = vmatpush1.msra.mxu0 %v1304
    %2918 = vmatprep.subr.mxu0 %v1309
    %2919 = vmatpush1.msra.mxu0 %v1308
    %2920 = vmatprep.subr.mxu0 %v1313
    %2921 = vmatpush1.msra.mxu0 %v1312
    %2922 = vmatprep.subr.mxu0 %v1317
    %2923 = vmatpush1.msra.mxu0 %v1316
    %2924 = vmatprep.subr.mxu0 %v1321
    %2925 = vmatpush1.msra.mxu0 %v1320
    %2926 = vmatprep.subr.mxu0 %v1325
    %2927 = vmatpush1.msra.mxu0 %v1324
    %2928 = vmatprep.mubr.f32.mxu0 %v1564
    %2929 = vmatmul.mubr.f32.gmra.mrb[0].mxu0 %v1556
    %v2930 = vpop.f32.mrb[0].mxu0
    %v2931 = vadd.f32 %v2860, %v2930
    %v2932 = vpop.f32.mrb[0].mxu0
    %v2933 = vadd.f32 %v2862, %v2932
    %2934 = vdwg.mxu0
    %2935 = vmatprep.subr.mxu0 %v1329
    %2936 = vmatpush1.msra.mxu0 %v1328
    %2937 = vmatprep.subr.mxu0 %v1333
    %2938 = vmatpush1.msra.mxu0 %v1332
    %2939 = vmatprep.subr.mxu0 %v1337
    %2940 = vmatpush1.msra.mxu0 %v1336
    %2941 = vmatprep.subr.mxu0 %v1341
    %2942 = vmatpush1.msra.mxu0 %v1340
    %2943 = vmatprep.subr.mxu0 %v1345
    %2944 = vmatpush1.msra.mxu0 %v1344
    %2945 = vmatprep.subr.mxu0 %v1349
    %2946 = vmatpush1.msra.mxu0 %v1348
    %2947 = vmatprep.subr.mxu0 %v1353
    %2948 = vmatpush1.msra.mxu0 %v1352
    %2949 = vmatprep.subr.mxu0 %v1357
    %2950 = vmatpush1.msra.mxu0 %v1356
    %2951 = vmatprep.subr.mxu0 %v1361
    %2952 = vmatpush1.msra.mxu0 %v1360
    %2953 = vmatprep.subr.mxu0 %v1365
    %2954 = vmatpush1.msra.mxu0 %v1364
    %2955 = vmatprep.subr.mxu0 %v1369
    %2956 = vmatpush1.msra.mxu0 %v1368
    %2957 = vmatprep.subr.mxu0 %v1373
    %2958 = vmatpush1.msra.mxu0 %v1372
    %2959 = vmatprep.subr.mxu0 %v1377
    %2960 = vmatpush1.msra.mxu0 %v1376
    %2961 = vmatprep.subr.mxu0 %v1381
    %2962 = vmatpush1.msra.mxu0 %v1380
    %2963 = vmatprep.subr.mxu0 %v1385
    %2964 = vmatpush1.msra.mxu0 %v1384
    %2965 = vmatprep.subr.mxu0 %v1389
    %2966 = vmatpush1.msra.mxu0 %v1388
    %2967 = vmatprep.subr.mxu0 %v1393
    %2968 = vmatpush1.msra.mxu0 %v1392
    %2969 = vmatprep.subr.mxu0 %v1397
    %2970 = vmatpush1.msra.mxu0 %v1396
    %2971 = vmatprep.subr.mxu0 %v1401
    %2972 = vmatpush1.msra.mxu0 %v1400
    %2973 = vmatprep.subr.mxu0 %v1405
    %2974 = vmatpush1.msra.mxu0 %v1404
    %2975 = vmatprep.subr.mxu0 %v1409
    %2976 = vmatpush1.msra.mxu0 %v1408
    %2977 = vmatprep.subr.mxu0 %v1413
    %2978 = vmatpush1.msra.mxu0 %v1412
    %2979 = vmatprep.subr.mxu0 %v1417
    %2980 = vmatpush1.msra.mxu0 %v1416
    %2981 = vmatprep.subr.mxu0 %v1421
    %2982 = vmatpush1.msra.mxu0 %v1420
    %2983 = vmatprep.subr.mxu0 %v1425
    %2984 = vmatpush1.msra.mxu0 %v1424
    %2985 = vmatprep.subr.mxu0 %v1429
    %2986 = vmatpush1.msra.mxu0 %v1428
    %2987 = vmatprep.subr.mxu0 %v1433
    %2988 = vmatpush1.msra.mxu0 %v1432
    %2989 = vmatprep.subr.mxu0 %v1437
    %2990 = vmatpush1.msra.mxu0 %v1436
    %2991 = vmatprep.subr.mxu0 %v1441
    %2992 = vmatpush1.msra.mxu0 %v1440
    %2993 = vmatprep.subr.mxu0 %v1445
    %2994 = vmatpush1.msra.mxu0 %v1444
    %2995 = vmatprep.subr.mxu0 %v1449
    %2996 = vmatpush1.msra.mxu0 %v1448
    %2997 = vmatprep.subr.mxu0 %v1453
    %2998 = vmatpush1.msra.mxu0 %v1452
    %2999 = vmatprep.mubr.f32.mxu0 %v1565
    %3000 = vmatmul.mubr.f32.gmra.mrb[0].mxu0 %v1563
    %v3001 = vpop.f32.mrb[0].mxu0
    %v3002 = vadd.f32 %v2931, %v3001
    %v3003 = vpop.f32.mrb[0].mxu0
    %v3004 = vadd.f32 %v2933, %v3003
    %3005 = vdwg.mxu0
    %v3006 = vld [vmem:[#allocation7] sm:$0xff]
    %v3007 = vld [vmem:[#allocation7 + $0x8] sm:$0xff]
    %v3008 = vld [vmem:[#allocation7 + $0x10] sm:$0xff]
    %v3009 = vld [vmem:[#allocation7 + $0x18] sm:$0xff]
    %v3010 = vld [vmem:[#allocation7 + $0x20] sm:$0xff]
    %v3011 = vld [vmem:[#allocation7 + $0x28] sm:$0xff]
    %v3012 = vld [vmem:[#allocation7 + $0x30] sm:$0xff]
    %v3013 = vld [vmem:[#allocation7 + $0x38] sm:$0xff]
    %v3014 = vld [vmem:[#allocation7 + $0x40] sm:$0xff]
    %v3015 = vld [vmem:[#allocation7 + $0x48] sm:$0xff]
    %v3016 = vld [vmem:[#allocation7 + $0x50] sm:$0xff]
    %v3017 = vld [vmem:[#allocation7 + $0x58] sm:$0xff]
    %v3018 = vld [vmem:[#allocation7 + $0x60] sm:$0xff]
    %v3019 = vld [vmem:[#allocation7 + $0x68] sm:$0xff]
    %v3020 = vld [vmem:[#allocation7 + $0x70] sm:$0xff]
    %v3021 = vld [vmem:[#allocation7 + $0x78] sm:$0xff]
    %v3022 = vld [vmem:[#allocation7 + $0x80] sm:$0xff]
    %v3023 = vld [vmem:[#allocation7 + $0x88] sm:$0xff]
    %v3024 = vld [vmem:[#allocation7 + $0x90] sm:$0xff]
    %v3025 = vld [vmem:[#allocation7 + $0x98] sm:$0xff]
    %v3026 = vld [vmem:[#allocation7 + $0xa0] sm:$0xff]
    %v3027 = vld [vmem:[#allocation7 + $0xa8] sm:$0xff]
    %v3028 = vld [vmem:[#allocation7 + $0xb0] sm:$0xff]
    %v3029 = vld [vmem:[#allocation7 + $0xb8] sm:$0xff]
    %v3030 = vld [vmem:[#allocation7 + $0xc0] sm:$0xff]
    %v3031 = vld [vmem:[#allocation7 + $0xc8] sm:$0xff]
    %v3032 = vld [vmem:[#allocation7 + $0xd0] sm:$0xff]
    %v3033 = vld [vmem:[#allocation7 + $0xd8] sm:$0xff]
    %v3034 = vld [vmem:[#allocation7 + $0xe0] sm:$0xff]
    %v3035 = vld [vmem:[#allocation7 + $0xe8] sm:$0xff]
    %v3036 = vld [vmem:[#allocation7 + $0xf0] sm:$0xff]
    %v3037 = vld [vmem:[#allocation7 + $0xf8] sm:$0xff]
    %v3038 = vld [vmem:[#allocation7 + $0x100] sm:$0xff]
    %v3039 = vld [vmem:[#allocation7 + $0x108] sm:$0xff]
    %v3040 = vld [vmem:[#allocation7 + $0x110] sm:$0xff]
    %v3041 = vld [vmem:[#allocation7 + $0x118] sm:$0xff]
    %v3042 = vld [vmem:[#allocation7 + $0x120] sm:$0xff]
    %v3043 = vld [vmem:[#allocation7 + $0x128] sm:$0xff]
    %v3044 = vld [vmem:[#allocation7 + $0x130] sm:$0xff]
    %v3045 = vld [vmem:[#allocation7 + $0x138] sm:$0xff]
    %v3046 = vld [vmem:[#allocation7 + $0x140] sm:$0xff]
    %v3047 = vld [vmem:[#allocation7 + $0x148] sm:$0xff]
    %v3048 = vld [vmem:[#allocation7 + $0x150] sm:$0xff]
    %v3049 = vld [vmem:[#allocation7 + $0x158] sm:$0xff]
    %v3050 = vld [vmem:[#allocation7 + $0x160] sm:$0xff]
    %v3051 = vld [vmem:[#allocation7 + $0x168] sm:$0xff]
    %v3052 = vld [vmem:[#allocation7 + $0x170] sm:$0xff]
    %v3053 = vld [vmem:[#allocation7 + $0x178] sm:$0xff]
    %v3054 = vld [vmem:[#allocation7 + $0x180] sm:$0xff]
    %v3055 = vld [vmem:[#allocation7 + $0x188] sm:$0xff]
    %v3056 = vld [vmem:[#allocation7 + $0x190] sm:$0xff]
    %v3057 = vld [vmem:[#allocation7 + $0x198] sm:$0xff]
    %v3058 = vld [vmem:[#allocation7 + $0x1a0] sm:$0xff]
    %v3059 = vld [vmem:[#allocation7 + $0x1a8] sm:$0xff]
    %v3060 = vld [vmem:[#allocation7 + $0x1b0] sm:$0xff]
    %v3061 = vld [vmem:[#allocation7 + $0x1b8] sm:$0xff]
    %v3062 = vld [vmem:[#allocation7 + $0x1c0] sm:$0xff]
    %v3063 = vld [vmem:[#allocation7 + $0x1c8] sm:$0xff]
    %v3064 = vld [vmem:[#allocation7 + $0x1d0] sm:$0xff]
    %v3065 = vld [vmem:[#allocation7 + $0x1d8] sm:$0xff]
    %v3066 = vld [vmem:[#allocation7 + $0x1e0] sm:$0xff]
    %v3067 = vld [vmem:[#allocation7 + $0x1e8] sm:$0xff]
    %v3068 = vld [vmem:[#allocation7 + $0x1f0] sm:$0xff]
    %v3069 = vld [vmem:[#allocation7 + $0x1f8] sm:$0xff]
    %v3070 = vld [vmem:[#allocation7 + $0x200] sm:$0xff]
    %v3071 = vld [vmem:[#allocation7 + $0x208] sm:$0xff]
    %v3072 = vld [vmem:[#allocation7 + $0x210] sm:$0xff]
    %v3073 = vld [vmem:[#allocation7 + $0x218] sm:$0xff]
    %v3074 = vld [vmem:[#allocation7 + $0x220] sm:$0xff]
    %v3075 = vld [vmem:[#allocation7 + $0x228] sm:$0xff]
    %v3076 = vld [vmem:[#allocation7 + $0x230] sm:$0xff]
    %v3077 = vld [vmem:[#allocation7 + $0x238] sm:$0xff]
    %v3078 = vld [vmem:[#allocation7 + $0x240] sm:$0xff]
    %v3079 = vld [vmem:[#allocation7 + $0x248] sm:$0xff]
    %v3080 = vld [vmem:[#allocation7 + $0x250] sm:$0xff]
    %v3081 = vld [vmem:[#allocation7 + $0x258] sm:$0xff]
    %v3082 = vld [vmem:[#allocation7 + $0x260] sm:$0xff]
    %v3083 = vld [vmem:[#allocation7 + $0x268] sm:$0xff]
    %v3084 = vld [vmem:[#allocation7 + $0x270] sm:$0xff]
    %v3085 = vld [vmem:[#allocation7 + $0x278] sm:$0xff]
    %v3086 = vld [vmem:[#allocation7 + $0x280] sm:$0xff]
    %v3087 = vld [vmem:[#allocation7 + $0x288] sm:$0xff]
    %v3088 = vld [vmem:[#allocation7 + $0x290] sm:$0xff]
    %v3089 = vld [vmem:[#allocation7 + $0x298] sm:$0xff]
    %v3090 = vld [vmem:[#allocation7 + $0x2a0] sm:$0xff]
    %v3091 = vld [vmem:[#allocation7 + $0x2a8] sm:$0xff]
    %v3092 = vld [vmem:[#allocation7 + $0x2b0] sm:$0xff]
    %v3093 = vld [vmem:[#allocation7 + $0x2b8] sm:$0xff]
    %v3094 = vld [vmem:[#allocation7 + $0x2c0] sm:$0xff]
    %v3095 = vld [vmem:[#allocation7 + $0x2c8] sm:$0xff]
    %v3096 = vld [vmem:[#allocation7 + $0x2d0] sm:$0xff]
    %v3097 = vld [vmem:[#allocation7 + $0x2d8] sm:$0xff]
    %v3098 = vld [vmem:[#allocation7 + $0x2e0] sm:$0xff]
    %v3099 = vld [vmem:[#allocation7 + $0x2e8] sm:$0xff]
    %v3100 = vld [vmem:[#allocation7 + $0x2f0] sm:$0xff]
    %v3101 = vld [vmem:[#allocation7 + $0x2f8] sm:$0xff]
    %v3102 = vld [vmem:[#allocation7 + $0x300] sm:$0xff]
    %v3103 = vld [vmem:[#allocation7 + $0x308] sm:$0xff]
    %v3104 = vld [vmem:[#allocation7 + $0x310] sm:$0xff]
    %v3105 = vld [vmem:[#allocation7 + $0x318] sm:$0xff]
    %v3106 = vld [vmem:[#allocation7 + $0x320] sm:$0xff]
    %v3107 = vld [vmem:[#allocation7 + $0x328] sm:$0xff]
    %v3108 = vld [vmem:[#allocation7 + $0x330] sm:$0xff]
    %v3109 = vld [vmem:[#allocation7 + $0x338] sm:$0xff]
    %v3110 = vld [vmem:[#allocation7 + $0x340] sm:$0xff]
    %v3111 = vld [vmem:[#allocation7 + $0x348] sm:$0xff]
    %v3112 = vld [vmem:[#allocation7 + $0x350] sm:$0xff]
    %v3113 = vld [vmem:[#allocation7 + $0x358] sm:$0xff]
    %v3114 = vld [vmem:[#allocation7 + $0x360] sm:$0xff]
    %v3115 = vld [vmem:[#allocation7 + $0x368] sm:$0xff]
    %v3116 = vld [vmem:[#allocation7 + $0x370] sm:$0xff]
    %v3117 = vld [vmem:[#allocation7 + $0x378] sm:$0xff]
    %v3118 = vld [vmem:[#allocation7 + $0x380] sm:$0xff]
    %v3119 = vld [vmem:[#allocation7 + $0x388] sm:$0xff]
    %v3120 = vld [vmem:[#allocation7 + $0x390] sm:$0xff]
    %v3121 = vld [vmem:[#allocation7 + $0x398] sm:$0xff]
    %v3122 = vld [vmem:[#allocation7 + $0x3a0] sm:$0xff]
    %v3123 = vld [vmem:[#allocation7 + $0x3a8] sm:$0xff]
    %v3124 = vld [vmem:[#allocation7 + $0x3b0] sm:$0xff]
    %v3125 = vld [vmem:[#allocation7 + $0x3b8] sm:$0xff]
    %v3126 = vld [vmem:[#allocation7 + $0x3c0] sm:$0xff]
    %v3127 = vld [vmem:[#allocation7 + $0x3c8] sm:$0xff]
    %v3128 = vld [vmem:[#allocation7 + $0x3d0] sm:$0xff]
    %v3129 = vld [vmem:[#allocation7 + $0x3d8] sm:$0xff]
    %v3130 = vld [vmem:[#allocation7 + $0x3e0] sm:$0xff]
    %v3131 = vld [vmem:[#allocation7 + $0x3e8] sm:$0xff]
    %v3132 = vld [vmem:[#allocation7 + $0x3f0] sm:$0xff]
    %v3133 = vld [vmem:[#allocation7 + $0x3f8] sm:$0xff]
    %v3134 = vld [vmem:[#allocation7 + $0x400] sm:$0xff]
    %v3135 = vld [vmem:[#allocation7 + $0x408] sm:$0xff]
    %v3136 = vld [vmem:[#allocation7 + $0x410] sm:$0xff]
    %v3137 = vld [vmem:[#allocation7 + $0x418] sm:$0xff]
    %v3138 = vld [vmem:[#allocation7 + $0x420] sm:$0xff]
    %v3139 = vld [vmem:[#allocation7 + $0x428] sm:$0xff]
    %v3140 = vld [vmem:[#allocation7 + $0x430] sm:$0xff]
    %v3141 = vld [vmem:[#allocation7 + $0x438] sm:$0xff]
    %v3142 = vld [vmem:[#allocation7 + $0x440] sm:$0xff]
    %v3143 = vld [vmem:[#allocation7 + $0x448] sm:$0xff]
    %v3144 = vld [vmem:[#allocation7 + $0x450] sm:$0xff]
    %v3145 = vld [vmem:[#allocation7 + $0x458] sm:$0xff]
    %v3146 = vld [vmem:[#allocation7 + $0x460] sm:$0xff]
    %v3147 = vld [vmem:[#allocation7 + $0x468] sm:$0xff]
    %v3148 = vld [vmem:[#allocation7 + $0x470] sm:$0xff]
    %v3149 = vld [vmem:[#allocation7 + $0x478] sm:$0xff]
    %v3150 = vld [vmem:[#allocation7 + $0x480] sm:$0xff]
    %v3151 = vld [vmem:[#allocation7 + $0x488] sm:$0xff]
    %v3152 = vld [vmem:[#allocation7 + $0x490] sm:$0xff]
    %v3153 = vld [vmem:[#allocation7 + $0x498] sm:$0xff]
    %v3154 = vld [vmem:[#allocation7 + $0x4a0] sm:$0xff]
    %v3155 = vld [vmem:[#allocation7 + $0x4a8] sm:$0xff]
    %v3156 = vld [vmem:[#allocation7 + $0x4b0] sm:$0xff]
    %v3157 = vld [vmem:[#allocation7 + $0x4b8] sm:$0xff]
    %v3158 = vld [vmem:[#allocation7 + $0x4c0] sm:$0xff]
    %v3159 = vld [vmem:[#allocation7 + $0x4c8] sm:$0xff]
    %v3160 = vld [vmem:[#allocation7 + $0x4d0] sm:$0xff]
    %v3161 = vld [vmem:[#allocation7 + $0x4d8] sm:$0xff]
    %v3162 = vld [vmem:[#allocation7 + $0x4e0] sm:$0xff]
    %v3163 = vld [vmem:[#allocation7 + $0x4e8] sm:$0xff]
    %v3164 = vld [vmem:[#allocation7 + $0x4f0] sm:$0xff]
    %v3165 = vld [vmem:[#allocation7 + $0x4f8] sm:$0xff]
    %v3166 = vld [vmem:[#allocation7 + $0x500] sm:$0xff]
    %v3167 = vld [vmem:[#allocation7 + $0x508] sm:$0xff]
    %v3168 = vld [vmem:[#allocation7 + $0x510] sm:$0xff]
    %v3169 = vld [vmem:[#allocation7 + $0x518] sm:$0xff]
    %v3170 = vld [vmem:[#allocation7 + $0x520] sm:$0xff]
    %v3171 = vld [vmem:[#allocation7 + $0x528] sm:$0xff]
    %v3172 = vld [vmem:[#allocation7 + $0x530] sm:$0xff]
    %v3173 = vld [vmem:[#allocation7 + $0x538] sm:$0xff]
    %v3174 = vld [vmem:[#allocation7 + $0x540] sm:$0xff]
    %v3175 = vld [vmem:[#allocation7 + $0x548] sm:$0xff]
    %v3176 = vld [vmem:[#allocation7 + $0x550] sm:$0xff]
    %v3177 = vld [vmem:[#allocation7 + $0x558] sm:$0xff]
    %v3178 = vld [vmem:[#allocation7 + $0x560] sm:$0xff]
    %v3179 = vld [vmem:[#allocation7 + $0x568] sm:$0xff]
    %v3180 = vld [vmem:[#allocation7 + $0x570] sm:$0xff]
    %v3181 = vld [vmem:[#allocation7 + $0x578] sm:$0xff]
    %v3182 = vld [vmem:[#allocation7 + $0x580] sm:$0xff]
    %v3183 = vld [vmem:[#allocation7 + $0x588] sm:$0xff]
    %v3184 = vld [vmem:[#allocation7 + $0x590] sm:$0xff]
    %v3185 = vld [vmem:[#allocation7 + $0x598] sm:$0xff]
    %v3186 = vld [vmem:[#allocation7 + $0x5a0] sm:$0xff]
    %v3187 = vld [vmem:[#allocation7 + $0x5a8] sm:$0xff]
    %v3188 = vld [vmem:[#allocation7 + $0x5b0] sm:$0xff]
    %v3189 = vld [vmem:[#allocation7 + $0x5b8] sm:$0xff]
    %v3190 = vld [vmem:[#allocation7 + $0x5c0] sm:$0xff]
    %v3191 = vld [vmem:[#allocation7 + $0x5c8] sm:$0xff]
    %v3192 = vld [vmem:[#allocation7 + $0x5d0] sm:$0xff]
    %v3193 = vld [vmem:[#allocation7 + $0x5d8] sm:$0xff]
    %v3194 = vld [vmem:[#allocation7 + $0x5e0] sm:$0xff]
    %v3195 = vld [vmem:[#allocation7 + $0x5e8] sm:$0xff]
    %v3196 = vld [vmem:[#allocation7 + $0x5f0] sm:$0xff]
    %v3197 = vld [vmem:[#allocation7 + $0x5f8] sm:$0xff]
    %v3198 = vld [vmem:[#allocation7 + $0x600] sm:$0xff]
    %v3199 = vld [vmem:[#allocation7 + $0x608] sm:$0xff]
    %v3200 = vld [vmem:[#allocation7 + $0x610] sm:$0xff]
    %v3201 = vld [vmem:[#allocation7 + $0x618] sm:$0xff]
    %v3202 = vld [vmem:[#allocation7 + $0x620] sm:$0xff]
    %v3203 = vld [vmem:[#allocation7 + $0x628] sm:$0xff]
    %v3204 = vld [vmem:[#allocation7 + $0x630] sm:$0xff]
    %v3205 = vld [vmem:[#allocation7 + $0x638] sm:$0xff]
    %v3206 = vld [vmem:[#allocation7 + $0x640] sm:$0xff]
    %v3207 = vld [vmem:[#allocation7 + $0x648] sm:$0xff]
    %v3208 = vld [vmem:[#allocation7 + $0x650] sm:$0xff]
    %v3209 = vld [vmem:[#allocation7 + $0x658] sm:$0xff]
    %v3210 = vld [vmem:[#allocation7 + $0x660] sm:$0xff]
    %v3211 = vld [vmem:[#allocation7 + $0x668] sm:$0xff]
    %v3212 = vld [vmem:[#allocation7 + $0x670] sm:$0xff]
    %v3213 = vld [vmem:[#allocation7 + $0x678] sm:$0xff]
    %v3214 = vld [vmem:[#allocation7 + $0x680] sm:$0xff]
    %v3215 = vld [vmem:[#allocation7 + $0x688] sm:$0xff]
    %v3216 = vld [vmem:[#allocation7 + $0x690] sm:$0xff]
    %v3217 = vld [vmem:[#allocation7 + $0x698] sm:$0xff]
    %v3218 = vld [vmem:[#allocation7 + $0x6a0] sm:$0xff]
    %v3219 = vld [vmem:[#allocation7 + $0x6a8] sm:$0xff]
    %v3220 = vld [vmem:[#allocation7 + $0x6b0] sm:$0xff]
    %v3221 = vld [vmem:[#allocation7 + $0x6b8] sm:$0xff]
    %v3222 = vld [vmem:[#allocation7 + $0x6c0] sm:$0xff]
    %v3223 = vld [vmem:[#allocation7 + $0x6c8] sm:$0xff]
    %v3224 = vld [vmem:[#allocation7 + $0x6d0] sm:$0xff]
    %v3225 = vld [vmem:[#allocation7 + $0x6d8] sm:$0xff]
    %v3226 = vld [vmem:[#allocation7 + $0x6e0] sm:$0xff]
    %v3227 = vld [vmem:[#allocation7 + $0x6e8] sm:$0xff]
    %v3228 = vld [vmem:[#allocation7 + $0x6f0] sm:$0xff]
    %v3229 = vld [vmem:[#allocation7 + $0x6f8] sm:$0xff]
    %v3230 = vld [vmem:[#allocation7 + $0x700] sm:$0xff]
    %v3231 = vld [vmem:[#allocation7 + $0x708] sm:$0xff]
    %v3232 = vld [vmem:[#allocation7 + $0x710] sm:$0xff]
    %v3233 = vld [vmem:[#allocation7 + $0x718] sm:$0xff]
    %v3234 = vld [vmem:[#allocation7 + $0x720] sm:$0xff]
    %v3235 = vld [vmem:[#allocation7 + $0x728] sm:$0xff]
    %v3236 = vld [vmem:[#allocation7 + $0x730] sm:$0xff]
    %v3237 = vld [vmem:[#allocation7 + $0x738] sm:$0xff]
    %v3238 = vld [vmem:[#allocation7 + $0x740] sm:$0xff]
    %v3239 = vld [vmem:[#allocation7 + $0x748] sm:$0xff]
    %v3240 = vld [vmem:[#allocation7 + $0x750] sm:$0xff]
    %v3241 = vld [vmem:[#allocation7 + $0x758] sm:$0xff]
    %v3242 = vld [vmem:[#allocation7 + $0x760] sm:$0xff]
    %v3243 = vld [vmem:[#allocation7 + $0x768] sm:$0xff]
    %v3244 = vld [vmem:[#allocation7 + $0x770] sm:$0xff]
    %v3245 = vld [vmem:[#allocation7 + $0x778] sm:$0xff]
    %v3246 = vld [vmem:[#allocation7 + $0x780] sm:$0xff]
    %v3247 = vld [vmem:[#allocation7 + $0x788] sm:$0xff]
    %v3248 = vld [vmem:[#allocation7 + $0x790] sm:$0xff]
    %v3249 = vld [vmem:[#allocation7 + $0x798] sm:$0xff]
    %v3250 = vld [vmem:[#allocation7 + $0x7a0] sm:$0xff]
    %v3251 = vld [vmem:[#allocation7 + $0x7a8] sm:$0xff]
    %v3252 = vld [vmem:[#allocation7 + $0x7b0] sm:$0xff]
    %v3253 = vld [vmem:[#allocation7 + $0x7b8] sm:$0xff]
    %v3254 = vld [vmem:[#allocation7 + $0x7c0] sm:$0xff]
    %v3255 = vld [vmem:[#allocation7 + $0x7c8] sm:$0xff]
    %v3256 = vld [vmem:[#allocation7 + $0x7d0] sm:$0xff]
    %v3257 = vld [vmem:[#allocation7 + $0x7d8] sm:$0xff]
    %v3258 = vld [vmem:[#allocation7 + $0x7e0] sm:$0xff]
    %v3259 = vld [vmem:[#allocation7 + $0x7e8] sm:$0xff]
    %v3260 = vld [vmem:[#allocation7 + $0x7f0] sm:$0xff]
    %v3261 = vld [vmem:[#allocation7 + $0x7f8] sm:$0xff]
    %v3262 = vld [vmem:[#allocation7 + $0x800] sm:$0xff]
    %v3263 = vld [vmem:[#allocation7 + $0x808] sm:$0xff]
    %v3264 = vld [vmem:[#allocation7 + $0x810] sm:$0xff]
    %v3265 = vld [vmem:[#allocation7 + $0x818] sm:$0xff]
    %v3266 = vld [vmem:[#allocation7 + $0x820] sm:$0xff]
    %v3267 = vld [vmem:[#allocation7 + $0x828] sm:$0xff]
    %v3268 = vld [vmem:[#allocation7 + $0x830] sm:$0xff]
    %v3269 = vld [vmem:[#allocation7 + $0x838] sm:$0xff]
    %v3270 = vld [vmem:[#allocation7 + $0x840] sm:$0xff]
    %v3271 = vld [vmem:[#allocation7 + $0x848] sm:$0xff]
    %v3272 = vld [vmem:[#allocation7 + $0x850] sm:$0xff]
    %v3273 = vld [vmem:[#allocation7 + $0x858] sm:$0xff]
    %v3274 = vld [vmem:[#allocation7 + $0x860] sm:$0xff]
    %v3275 = vld [vmem:[#allocation7 + $0x868] sm:$0xff]
    %v3276 = vld [vmem:[#allocation7 + $0x870] sm:$0xff]
    %v3277 = vld [vmem:[#allocation7 + $0x878] sm:$0xff]
    %v3278 = vld [vmem:[#allocation7 + $0x880] sm:$0xff]
    %v3279 = vld [vmem:[#allocation7 + $0x888] sm:$0xff]
    %v3280 = vld [vmem:[#allocation7 + $0x890] sm:$0xff]
    %v3281 = vld [vmem:[#allocation7 + $0x898] sm:$0xff]
    %v3282 = vld [vmem:[#allocation7 + $0x8a0] sm:$0xff]
    %v3283 = vld [vmem:[#allocation7 + $0x8a8] sm:$0xff]
    %v3284 = vld [vmem:[#allocation7 + $0x8b0] sm:$0xff]
    %v3285 = vld [vmem:[#allocation7 + $0x8b8] sm:$0xff]
    %v3286 = vld [vmem:[#allocation7 + $0x8c0] sm:$0xff]
    %v3287 = vld [vmem:[#allocation7 + $0x8c8] sm:$0xff]
    %v3288 = vld [vmem:[#allocation7 + $0x8d0] sm:$0xff]
    %v3289 = vld [vmem:[#allocation7 + $0x8d8] sm:$0xff]
    %v3290 = vld [vmem:[#allocation7 + $0x8e0] sm:$0xff]
    %v3291 = vld [vmem:[#allocation7 + $0x8e8] sm:$0xff]
    %v3292 = vld [vmem:[#allocation7 + $0x8f0] sm:$0xff]
    %v3293 = vld [vmem:[#allocation7 + $0x8f8] sm:$0xff]
    %v3294 = vld [vmem:[#allocation7 + $0x900] sm:$0xff]
    %v3295 = vld [vmem:[#allocation7 + $0x908] sm:$0xff]
    %v3296 = vld [vmem:[#allocation7 + $0x910] sm:$0xff]
    %v3297 = vld [vmem:[#allocation7 + $0x918] sm:$0xff]
    %v3298 = vld [vmem:[#allocation7 + $0x920] sm:$0xff]
    %v3299 = vld [vmem:[#allocation7 + $0x928] sm:$0xff]
    %v3300 = vld [vmem:[#allocation7 + $0x930] sm:$0xff]
    %v3301 = vld [vmem:[#allocation7 + $0x938] sm:$0xff]
    %v3302 = vld [vmem:[#allocation7 + $0x940] sm:$0xff]
    %v3303 = vld [vmem:[#allocation7 + $0x948] sm:$0xff]
    %v3304 = vld [vmem:[#allocation7 + $0x950] sm:$0xff]
    %v3305 = vld [vmem:[#allocation7 + $0x958] sm:$0xff]
    %v3306 = vld [vmem:[#allocation7 + $0x960] sm:$0xff]
    %v3307 = vld [vmem:[#allocation7 + $0x968] sm:$0xff]
    %v3308 = vld [vmem:[#allocation7 + $0x970] sm:$0xff]
    %v3309 = vld [vmem:[#allocation7 + $0x978] sm:$0xff]
    %v3310 = vld [vmem:[#allocation7 + $0x980] sm:$0xff]
    %v3311 = vld [vmem:[#allocation7 + $0x988] sm:$0xff]
    %v3312 = vld [vmem:[#allocation7 + $0x990] sm:$0xff]
    %v3313 = vld [vmem:[#allocation7 + $0x998] sm:$0xff]
    %v3314 = vld [vmem:[#allocation7 + $0x9a0] sm:$0xff]
    %v3315 = vld [vmem:[#allocation7 + $0x9a8] sm:$0xff]
    %v3316 = vld [vmem:[#allocation7 + $0x9b0] sm:$0xff]
    %v3317 = vld [vmem:[#allocation7 + $0x9b8] sm:$0xff]
    %v3318 = vld [vmem:[#allocation7 + $0x9c0] sm:$0xff]
    %v3319 = vld [vmem:[#allocation7 + $0x9c8] sm:$0xff]
    %v3320 = vld [vmem:[#allocation7 + $0x9d0] sm:$0xff]
    %v3321 = vld [vmem:[#allocation7 + $0x9d8] sm:$0xff]
    %v3322 = vld [vmem:[#allocation7 + $0x9e0] sm:$0xff]
    %v3323 = vld [vmem:[#allocation7 + $0x9e8] sm:$0xff]
    %v3324 = vld [vmem:[#allocation7 + $0x9f0] sm:$0xff]
    %v3325 = vld [vmem:[#allocation7 + $0x9f8] sm:$0xff]
    %v3326 = vld [vmem:[#allocation7 + $0xa00] sm:$0xff]
    %v3327 = vld [vmem:[#allocation7 + $0xa08] sm:$0xff]
    %v3328 = vld [vmem:[#allocation7 + $0xa10] sm:$0xff]
    %v3329 = vld [vmem:[#allocation7 + $0xa18] sm:$0xff]
    %v3330 = vld [vmem:[#allocation7 + $0xa20] sm:$0xff]
    %v3331 = vld [vmem:[#allocation7 + $0xa28] sm:$0xff]
    %v3332 = vld [vmem:[#allocation7 + $0xa30] sm:$0xff]
    %v3333 = vld [vmem:[#allocation7 + $0xa38] sm:$0xff]
    %v3334 = vld [vmem:[#allocation7 + $0xa40] sm:$0xff]
    %v3335 = vld [vmem:[#allocation7 + $0xa48] sm:$0xff]
    %v3336 = vld [vmem:[#allocation7 + $0xa50] sm:$0xff]
    %v3337 = vld [vmem:[#allocation7 + $0xa58] sm:$0xff]
    %v3338 = vld [vmem:[#allocation7 + $0xa60] sm:$0xff]
    %v3339 = vld [vmem:[#allocation7 + $0xa68] sm:$0xff]
    %v3340 = vld [vmem:[#allocation7 + $0xa70] sm:$0xff]
    %v3341 = vld [vmem:[#allocation7 + $0xa78] sm:$0xff]
    %v3342 = vld [vmem:[#allocation7 + $0xa80] sm:$0xff]
    %v3343 = vld [vmem:[#allocation7 + $0xa88] sm:$0xff]
    %v3344 = vld [vmem:[#allocation7 + $0xa90] sm:$0xff]
    %v3345 = vld [vmem:[#allocation7 + $0xa98] sm:$0xff]
    %v3346 = vld [vmem:[#allocation7 + $0xaa0] sm:$0xff]
    %v3347 = vld [vmem:[#allocation7 + $0xaa8] sm:$0xff]
    %v3348 = vld [vmem:[#allocation7 + $0xab0] sm:$0xff]
    %v3349 = vld [vmem:[#allocation7 + $0xab8] sm:$0xff]
    %v3350 = vld [vmem:[#allocation7 + $0xac0] sm:$0xff]
    %v3351 = vld [vmem:[#allocation7 + $0xac8] sm:$0xff]
    %v3352 = vld [vmem:[#allocation7 + $0xad0] sm:$0xff]
    %v3353 = vld [vmem:[#allocation7 + $0xad8] sm:$0xff]
    %v3354 = vld [vmem:[#allocation7 + $0xae0] sm:$0xff]
    %v3355 = vld [vmem:[#allocation7 + $0xae8] sm:$0xff]
    %v3356 = vld [vmem:[#allocation7 + $0xaf0] sm:$0xff]
    %v3357 = vld [vmem:[#allocation7 + $0xaf8] sm:$0xff]
    %v3358 = vld [vmem:[#allocation7 + $0xb00] sm:$0xff]
    %v3359 = vld [vmem:[#allocation7 + $0xb08] sm:$0xff]
    %v3360 = vld [vmem:[#allocation7 + $0xb10] sm:$0xff]
    %v3361 = vld [vmem:[#allocation7 + $0xb18] sm:$0xff]
    %v3362 = vld [vmem:[#allocation7 + $0xb20] sm:$0xff]
    %v3363 = vld [vmem:[#allocation7 + $0xb28] sm:$0xff]
    %v3364 = vld [vmem:[#allocation7 + $0xb30] sm:$0xff]
    %v3365 = vld [vmem:[#allocation7 + $0xb38] sm:$0xff]
    %v3366 = vld [vmem:[#allocation7 + $0xb40] sm:$0xff]
    %v3367 = vld [vmem:[#allocation7 + $0xb48] sm:$0xff]
    %v3368 = vld [vmem:[#allocation7 + $0xb50] sm:$0xff]
    %v3369 = vld [vmem:[#allocation7 + $0xb58] sm:$0xff]
    %v3370 = vld [vmem:[#allocation7 + $0xb60] sm:$0xff]
    %v3371 = vld [vmem:[#allocation7 + $0xb68] sm:$0xff]
    %v3372 = vld [vmem:[#allocation7 + $0xb70] sm:$0xff]
    %v3373 = vld [vmem:[#allocation7 + $0xb78] sm:$0xff]
    %v3374 = vld [vmem:[#allocation7 + $0xb80] sm:$0xff]
    %v3375 = vld [vmem:[#allocation7 + $0xb88] sm:$0xff]
    %v3376 = vld [vmem:[#allocation7 + $0xb90] sm:$0xff]
    %v3377 = vld [vmem:[#allocation7 + $0xb98] sm:$0xff]
    %v3378 = vld [vmem:[#allocation7 + $0xba0] sm:$0xff]
    %v3379 = vld [vmem:[#allocation7 + $0xba8] sm:$0xff]
    %v3380 = vld [vmem:[#allocation7 + $0xbb0] sm:$0xff]
    %v3381 = vld [vmem:[#allocation7 + $0xbb8] sm:$0xff]
    %v3382 = vld [vmem:[#allocation7 + $0xbc0] sm:$0xff]
    %v3383 = vld [vmem:[#allocation7 + $0xbc8] sm:$0xff]
    %v3384 = vld [vmem:[#allocation7 + $0xbd0] sm:$0xff]
    %v3385 = vld [vmem:[#allocation7 + $0xbd8] sm:$0xff]
    %v3386 = vld [vmem:[#allocation7 + $0xbe0] sm:$0xff]
    %v3387 = vld [vmem:[#allocation7 + $0xbe8] sm:$0xff]
    %v3388 = vld [vmem:[#allocation7 + $0xbf0] sm:$0xff]
    %v3389 = vld [vmem:[#allocation7 + $0xbf8] sm:$0xff]
    %v3390 = vld [vmem:[#allocation7 + $0xc00] sm:$0xff]
    %v3391 = vld [vmem:[#allocation7 + $0xc08] sm:$0xff]
    %v3392 = vld [vmem:[#allocation7 + $0xc10] sm:$0xff]
    %v3393 = vld [vmem:[#allocation7 + $0xc18] sm:$0xff]
    %v3394 = vld [vmem:[#allocation7 + $0xc20] sm:$0xff]
    %v3395 = vld [vmem:[#allocation7 + $0xc28] sm:$0xff]
    %v3396 = vld [vmem:[#allocation7 + $0xc30] sm:$0xff]
    %v3397 = vld [vmem:[#allocation7 + $0xc38] sm:$0xff]
    %v3398 = vld [vmem:[#allocation7 + $0xc40] sm:$0xff]
    %v3399 = vld [vmem:[#allocation7 + $0xc48] sm:$0xff]
    %v3400 = vld [vmem:[#allocation7 + $0xc50] sm:$0xff]
    %v3401 = vld [vmem:[#allocation7 + $0xc58] sm:$0xff]
    %v3402 = vld [vmem:[#allocation7 + $0xc60] sm:$0xff]
    %v3403 = vld [vmem:[#allocation7 + $0xc68] sm:$0xff]
    %v3404 = vld [vmem:[#allocation7 + $0xc70] sm:$0xff]
    %v3405 = vld [vmem:[#allocation7 + $0xc78] sm:$0xff]
    %v3406 = vld [vmem:[#allocation7 + $0xc80] sm:$0xff]
    %v3407 = vld [vmem:[#allocation7 + $0xc88] sm:$0xff]
    %v3408 = vld [vmem:[#allocation7 + $0xc90] sm:$0xff]
    %v3409 = vld [vmem:[#allocation7 + $0xc98] sm:$0xff]
    %v3410 = vld [vmem:[#allocation7 + $0xca0] sm:$0xff]
    %v3411 = vld [vmem:[#allocation7 + $0xca8] sm:$0xff]
    %v3412 = vld [vmem:[#allocation7 + $0xcb0] sm:$0xff]
    %v3413 = vld [vmem:[#allocation7 + $0xcb8] sm:$0xff]
    %v3414 = vld [vmem:[#allocation7 + $0xcc0] sm:$0xff]
    %v3415 = vld [vmem:[#allocation7 + $0xcc8] sm:$0xff]
    %v3416 = vld [vmem:[#allocation7 + $0xcd0] sm:$0xff]
    %v3417 = vld [vmem:[#allocation7 + $0xcd8] sm:$0xff]
    %v3418 = vld [vmem:[#allocation7 + $0xce0] sm:$0xff]
    %v3419 = vld [vmem:[#allocation7 + $0xce8] sm:$0xff]
    %v3420 = vld [vmem:[#allocation7 + $0xcf0] sm:$0xff]
    %v3421 = vld [vmem:[#allocation7 + $0xcf8] sm:$0xff]
    %v3422 = vld [vmem:[#allocation7 + $0xd00] sm:$0xff]
    %v3423 = vld [vmem:[#allocation7 + $0xd08] sm:$0xff]
    %v3424 = vld [vmem:[#allocation7 + $0xd10] sm:$0xff]
    %v3425 = vld [vmem:[#allocation7 + $0xd18] sm:$0xff]
    %v3426 = vld [vmem:[#allocation7 + $0xd20] sm:$0xff]
    %v3427 = vld [vmem:[#allocation7 + $0xd28] sm:$0xff]
    %v3428 = vld [vmem:[#allocation7 + $0xd30] sm:$0xff]
    %v3429 = vld [vmem:[#allocation7 + $0xd38] sm:$0xff]
    %v3430 = vld [vmem:[#allocation7 + $0xd40] sm:$0xff]
    %v3431 = vld [vmem:[#allocation7 + $0xd48] sm:$0xff]
    %v3432 = vld [vmem:[#allocation7 + $0xd50] sm:$0xff]
    %v3433 = vld [vmem:[#allocation7 + $0xd58] sm:$0xff]
    %v3434 = vld [vmem:[#allocation7 + $0xd60] sm:$0xff]
    %v3435 = vld [vmem:[#allocation7 + $0xd68] sm:$0xff]
    %v3436 = vld [vmem:[#allocation7 + $0xd70] sm:$0xff]
    %v3437 = vld [vmem:[#allocation7 + $0xd78] sm:$0xff]
    %v3438 = vld [vmem:[#allocation7 + $0xd80] sm:$0xff]
    %v3439 = vld [vmem:[#allocation7 + $0xd88] sm:$0xff]
    %v3440 = vld [vmem:[#allocation7 + $0xd90] sm:$0xff]
    %v3441 = vld [vmem:[#allocation7 + $0xd98] sm:$0xff]
    %v3442 = vld [vmem:[#allocation7 + $0xda0] sm:$0xff]
    %v3443 = vld [vmem:[#allocation7 + $0xda8] sm:$0xff]
    %v3444 = vld [vmem:[#allocation7 + $0xdb0] sm:$0xff]
    %v3445 = vld [vmem:[#allocation7 + $0xdb8] sm:$0xff]
    %v3446 = vld [vmem:[#allocation7 + $0xdc0] sm:$0xff]
    %v3447 = vld [vmem:[#allocation7 + $0xdc8] sm:$0xff]
    %v3448 = vld [vmem:[#allocation7 + $0xdd0] sm:$0xff]
    %v3449 = vld [vmem:[#allocation7 + $0xdd8] sm:$0xff]
    %v3450 = vld [vmem:[#allocation7 + $0xde0] sm:$0xff]
    %v3451 = vld [vmem:[#allocation7 + $0xde8] sm:$0xff]
    %v3452 = vld [vmem:[#allocation7 + $0xdf0] sm:$0xff]
    %v3453 = vld [vmem:[#allocation7 + $0xdf8] sm:$0xff]
    %v3454 = vld [vmem:[#allocation7 + $0xe00] sm:$0xff]
    %v3455 = vld [vmem:[#allocation7 + $0xe08] sm:$0xff]
    %v3456 = vld [vmem:[#allocation7 + $0xe10] sm:$0xff]
    %v3457 = vld [vmem:[#allocation7 + $0xe18] sm:$0xff]
    %v3458 = vld [vmem:[#allocation7 + $0xe20] sm:$0xff]
    %v3459 = vld [vmem:[#allocation7 + $0xe28] sm:$0xff]
    %v3460 = vld [vmem:[#allocation7 + $0xe30] sm:$0xff]
    %v3461 = vld [vmem:[#allocation7 + $0xe38] sm:$0xff]
    %v3462 = vld [vmem:[#allocation7 + $0xe40] sm:$0xff]
    %v3463 = vld [vmem:[#allocation7 + $0xe48] sm:$0xff]
    %v3464 = vld [vmem:[#allocation7 + $0xe50] sm:$0xff]
    %v3465 = vld [vmem:[#allocation7 + $0xe58] sm:$0xff]
    %v3466 = vld [vmem:[#allocation7 + $0xe60] sm:$0xff]
    %v3467 = vld [vmem:[#allocation7 + $0xe68] sm:$0xff]
    %v3468 = vld [vmem:[#allocation7 + $0xe70] sm:$0xff]
    %v3469 = vld [vmem:[#allocation7 + $0xe78] sm:$0xff]
    %v3470 = vld [vmem:[#allocation7 + $0xe80] sm:$0xff]
    %v3471 = vld [vmem:[#allocation7 + $0xe88] sm:$0xff]
    %v3472 = vld [vmem:[#allocation7 + $0xe90] sm:$0xff]
    %v3473 = vld [vmem:[#allocation7 + $0xe98] sm:$0xff]
    %v3474 = vld [vmem:[#allocation7 + $0xea0] sm:$0xff]
    %v3475 = vld [vmem:[#allocation7 + $0xea8] sm:$0xff]
    %v3476 = vld [vmem:[#allocation7 + $0xeb0] sm:$0xff]
    %v3477 = vld [vmem:[#allocation7 + $0xeb8] sm:$0xff]
    %v3478 = vld [vmem:[#allocation7 + $0xec0] sm:$0xff]
    %v3479 = vld [vmem:[#allocation7 + $0xec8] sm:$0xff]
    %v3480 = vld [vmem:[#allocation7 + $0xed0] sm:$0xff]
    %v3481 = vld [vmem:[#allocation7 + $0xed8] sm:$0xff]
    %v3482 = vld [vmem:[#allocation7 + $0xee0] sm:$0xff]
    %v3483 = vld [vmem:[#allocation7 + $0xee8] sm:$0xff]
    %v3484 = vld [vmem:[#allocation7 + $0xef0] sm:$0xff]
    %v3485 = vld [vmem:[#allocation7 + $0xef8] sm:$0xff]
    %v3486 = vld [vmem:[#allocation7 + $0xf00] sm:$0xff]
    %v3487 = vld [vmem:[#allocation7 + $0xf08] sm:$0xff]
    %v3488 = vld [vmem:[#allocation7 + $0xf10] sm:$0xff]
    %v3489 = vld [vmem:[#allocation7 + $0xf18] sm:$0xff]
    %v3490 = vld [vmem:[#allocation7 + $0xf20] sm:$0xff]
    %v3491 = vld [vmem:[#allocation7 + $0xf28] sm:$0xff]
    %v3492 = vld [vmem:[#allocation7 + $0xf30] sm:$0xff]
    %v3493 = vld [vmem:[#allocation7 + $0xf38] sm:$0xff]
    %v3494 = vld [vmem:[#allocation7 + $0xf40] sm:$0xff]
    %v3495 = vld [vmem:[#allocation7 + $0xf48] sm:$0xff]
    %v3496 = vld [vmem:[#allocation7 + $0xf50] sm:$0xff]
    %v3497 = vld [vmem:[#allocation7 + $0xf58] sm:$0xff]
    %v3498 = vld [vmem:[#allocation7 + $0xf60] sm:$0xff]
    %v3499 = vld [vmem:[#allocation7 + $0xf68] sm:$0xff]
    %v3500 = vld [vmem:[#allocation7 + $0xf70] sm:$0xff]
    %v3501 = vld [vmem:[#allocation7 + $0xf78] sm:$0xff]
    %v3502 = vld [vmem:[#allocation7 + $0xf80] sm:$0xff]
    %v3503 = vld [vmem:[#allocation7 + $0xf88] sm:$0xff]
    %v3504 = vld [vmem:[#allocation7 + $0xf90] sm:$0xff]
    %v3505 = vld [vmem:[#allocation7 + $0xf98] sm:$0xff]
    %v3506 = vld [vmem:[#allocation7 + $0xfa0] sm:$0xff]
    %v3507 = vld [vmem:[#allocation7 + $0xfa8] sm:$0xff]
    %v3508 = vld [vmem:[#allocation7 + $0xfb0] sm:$0xff]
    %v3509 = vld [vmem:[#allocation7 + $0xfb8] sm:$0xff]
    %v3510 = vld [vmem:[#allocation7 + $0xfc0] sm:$0xff]
    %v3511 = vld [vmem:[#allocation7 + $0xfc8] sm:$0xff]
    %v3512 = vld [vmem:[#allocation7 + $0xfd0] sm:$0xff]
    %v3513 = vld [vmem:[#allocation7 + $0xfd8] sm:$0xff]
    %v3514 = vld [vmem:[#allocation7 + $0xfe0] sm:$0xff]
    %v3515 = vld [vmem:[#allocation7 + $0xfe8] sm:$0xff]
    %v3516 = vld [vmem:[#allocation7 + $0xff0] sm:$0xff]
    %v3517 = vld [vmem:[#allocation7 + $0xff8] sm:$0xff]
    %s3518 = scalar_lea.vmem [#allocation4], 1
    %v3519 = vld [vmem:[%s3518] ss:$8 sm:$0xf]
    %v3520 = vld [vmem:[%s3518] ss:$8 sm:$0xf0]
    %v3521 = vor.u32 %v3519, %v3520
    %v3523 = vlaneseq
    %v3524 = vshrl.u32 %v3523, 7
    %v3525 = vsub.s32 0, %v3524
    %v3526 = vrot.slane %v3521, %v3525
    %v3527 = vlaneseq
    %v3528 = vshrl.u32 %v3527, 7
    %v3529 = vsub.s32 1, %v3528
    %v3530 = vrot.slane %v3521, %v3529
    %v3531 = vlaneseq
    %v3532 = vshrl.u32 %v3531, 7
    %v3533 = vsub.s32 2, %v3532
    %v3534 = vrot.slane %v3521, %v3533
    %v3535 = vlaneseq
    %v3536 = vshrl.u32 %v3535, 7
    %v3537 = vsub.s32 3, %v3536
    %v3538 = vrot.slane %v3521, %v3537
    %v3539 = vlaneseq
    %v3540 = vshrl.u32 %v3539, 7
    %v3541 = vsub.s32 4, %v3540
    %v3542 = vrot.slane %v3521, %v3541
    %v3543 = vlaneseq
    %v3544 = vshrl.u32 %v3543, 7
    %v3545 = vsub.s32 5, %v3544
    %v3546 = vrot.slane %v3521, %v3545
    %v3547 = vlaneseq
    %v3548 = vshrl.u32 %v3547, 7
    %v3549 = vsub.s32 6, %v3548
    %v3550 = vrot.slane %v3521, %v3549
    %v3551 = vlaneseq
    %v3552 = vshrl.u32 %v3551, 7
    %v3553 = vsub.s32 7, %v3552
    %v3554 = vrot.slane %v3521, %v3553
    %3563 = vmatprep.subr.mxu0 %v3007
    %3564 = vmatpush1.msra.mxu0 %v3006
    %3565 = vmatprep.subr.mxu0 %v3015
    %3566 = vmatpush1.msra.mxu0 %v3014
    %3567 = vmatprep.subr.mxu0 %v3023
    %3568 = vmatpush1.msra.mxu0 %v3022
    %3569 = vmatprep.subr.mxu0 %v3031
    %3570 = vmatpush1.msra.mxu0 %v3030
    %3571 = vmatprep.subr.mxu0 %v3039
    %3572 = vmatpush1.msra.mxu0 %v3038
    %3573 = vmatprep.subr.mxu0 %v3047
    %3574 = vmatpush1.msra.mxu0 %v3046
    %3575 = vmatprep.subr.mxu0 %v3055
    %3576 = vmatpush1.msra.mxu0 %v3054
    %3577 = vmatprep.subr.mxu0 %v3063
    %3578 = vmatpush1.msra.mxu0 %v3062
    %3579 = vmatprep.subr.mxu0 %v3071
    %3580 = vmatpush1.msra.mxu0 %v3070
    %3581 = vmatprep.subr.mxu0 %v3079
    %3582 = vmatpush1.msra.mxu0 %v3078
    %3583 = vmatprep.subr.mxu0 %v3087
    %3584 = vmatpush1.msra.mxu0 %v3086
    %3585 = vmatprep.subr.mxu0 %v3095
    %3586 = vmatpush1.msra.mxu0 %v3094
    %3587 = vmatprep.subr.mxu0 %v3103
    %3588 = vmatpush1.msra.mxu0 %v3102
    %3589 = vmatprep.subr.mxu0 %v3111
    %3590 = vmatpush1.msra.mxu0 %v3110
    %3591 = vmatprep.subr.mxu0 %v3119
    %3592 = vmatpush1.msra.mxu0 %v3118
    %3593 = vmatprep.subr.mxu0 %v3127
    %3594 = vmatpush1.msra.mxu0 %v3126
    %3595 = vmatprep.subr.mxu0 %v3135
    %3596 = vmatpush1.msra.mxu0 %v3134
    %3597 = vmatprep.subr.mxu0 %v3143
    %3598 = vmatpush1.msra.mxu0 %v3142
    %3599 = vmatprep.subr.mxu0 %v3151
    %3600 = vmatpush1.msra.mxu0 %v3150
    %3601 = vmatprep.subr.mxu0 %v3159
    %3602 = vmatpush1.msra.mxu0 %v3158
    %3603 = vmatprep.subr.mxu0 %v3167
    %3604 = vmatpush1.msra.mxu0 %v3166
    %3605 = vmatprep.subr.mxu0 %v3175
    %3606 = vmatpush1.msra.mxu0 %v3174
    %3607 = vmatprep.subr.mxu0 %v3183
    %3608 = vmatpush1.msra.mxu0 %v3182
    %3609 = vmatprep.subr.mxu0 %v3191
    %3610 = vmatpush1.msra.mxu0 %v3190
    %3611 = vmatprep.subr.mxu0 %v3199
    %3612 = vmatpush1.msra.mxu0 %v3198
    %3613 = vmatprep.subr.mxu0 %v3207
    %3614 = vmatpush1.msra.mxu0 %v3206
    %3615 = vmatprep.subr.mxu0 %v3215
    %3616 = vmatpush1.msra.mxu0 %v3214
    %3617 = vmatprep.subr.mxu0 %v3223
    %3618 = vmatpush1.msra.mxu0 %v3222
    %3619 = vmatprep.subr.mxu0 %v3231
    %3620 = vmatpush1.msra.mxu0 %v3230
    %3621 = vmatprep.subr.mxu0 %v3239
    %3622 = vmatpush1.msra.mxu0 %v3238
    %3623 = vmatprep.subr.mxu0 %v3247
    %3624 = vmatpush1.msra.mxu0 %v3246
    %3625 = vmatprep.subr.mxu0 %v3255
    %3626 = vmatpush1.msra.mxu0 %v3254
    %3627 = vmatprep.mubr.f32.mxu0 %v2294
    %3628 = vmatmul.mubr.f32.gmra.mrb[0].mxu0 %v2292
    %v3629 = vpop.f32.mrb[0].mxu0
    %v3630 = vadd.f32 %v3526, %v3629
    %v3631 = vpop.f32.mrb[0].mxu0
    %v3632 = vadd.f32 %v3530, %v3631
    %3633 = vdwg.mxu0
    %3634 = vmatprep.subr.mxu0 %v3263
    %3635 = vmatpush1.msra.mxu0 %v3262
    %3636 = vmatprep.subr.mxu0 %v3271
    %3637 = vmatpush1.msra.mxu0 %v3270
    %3638 = vmatprep.subr.mxu0 %v3279
    %3639 = vmatpush1.msra.mxu0 %v3278
    %3640 = vmatprep.subr.mxu0 %v3287
    %3641 = vmatpush1.msra.mxu0 %v3286
    %3642 = vmatprep.subr.mxu0 %v3295
    %3643 = vmatpush1.msra.mxu0 %v3294
    %3644 = vmatprep.subr.mxu0 %v3303
    %3645 = vmatpush1.msra.mxu0 %v3302
    %3646 = vmatprep.subr.mxu0 %v3311
    %3647 = vmatpush1.msra.mxu0 %v3310
    %3648 = vmatprep.subr.mxu0 %v3319
    %3649 = vmatpush1.msra.mxu0 %v3318
    %3650 = vmatprep.subr.mxu0 %v3327
    %3651 = vmatpush1.msra.mxu0 %v3326
    %3652 = vmatprep.subr.mxu0 %v3335
    %3653 = vmatpush1.msra.mxu0 %v3334
    %3654 = vmatprep.subr.mxu0 %v3343
    %3655 = vmatpush1.msra.mxu0 %v3342
    %3656 = vmatprep.subr.mxu0 %v3351
    %3657 = vmatpush1.msra.mxu0 %v3350
    %3658 = vmatprep.subr.mxu0 %v3359
    %3659 = vmatpush1.msra.mxu0 %v3358
    %3660 = vmatprep.subr.mxu0 %v3367
    %3661 = vmatpush1.msra.mxu0 %v3366
    %3662 = vmatprep.subr.mxu0 %v3375
    %3663 = vmatpush1.msra.mxu0 %v3374
    %3664 = vmatprep.subr.mxu0 %v3383
    %3665 = vmatpush1.msra.mxu0 %v3382
    %3666 = vmatprep.subr.mxu0 %v3391
    %3667 = vmatpush1.msra.mxu0 %v3390
    %3668 = vmatprep.subr.mxu0 %v3399
    %3669 = vmatpush1.msra.mxu0 %v3398
    %3670 = vmatprep.subr.mxu0 %v3407
    %3671 = vmatpush1.msra.mxu0 %v3406
    %3672 = vmatprep.subr.mxu0 %v3415
    %3673 = vmatpush1.msra.mxu0 %v3414
    %3674 = vmatprep.subr.mxu0 %v3423
    %3675 = vmatpush1.msra.mxu0 %v3422
    %3676 = vmatprep.subr.mxu0 %v3431
    %3677 = vmatpush1.msra.mxu0 %v3430
    %3678 = vmatprep.subr.mxu0 %v3439
    %3679 = vmatpush1.msra.mxu0 %v3438
    %3680 = vmatprep.subr.mxu0 %v3447
    %3681 = vmatpush1.msra.mxu0 %v3446
    %3682 = vmatprep.subr.mxu0 %v3455
    %3683 = vmatpush1.msra.mxu0 %v3454
    %3684 = vmatprep.subr.mxu0 %v3463
    %3685 = vmatpush1.msra.mxu0 %v3462
    %3686 = vmatprep.subr.mxu0 %v3471
    %3687 = vmatpush1.msra.mxu0 %v3470
    %3688 = vmatprep.subr.mxu0 %v3479
    %3689 = vmatpush1.msra.mxu0 %v3478
    %3690 = vmatprep.subr.mxu0 %v3487
    %3691 = vmatpush1.msra.mxu0 %v3486
    %3692 = vmatprep.subr.mxu0 %v3495
    %3693 = vmatpush1.msra.mxu0 %v3494
    %3694 = vmatprep.subr.mxu0 %v3503
    %3695 = vmatpush1.msra.mxu0 %v3502
    %3696 = vmatprep.subr.mxu0 %v3511
    %3697 = vmatpush1.msra.mxu0 %v3510
    %3698 = vmatprep.mubr.f32.mxu0 %v3004
    %3699 = vmatmul.mubr.f32.gmra.mrb[0].mxu0 %v3002
    %v3700 = vpop.f32.mrb[0].mxu0
    %v3701 = vadd.f32 %v3630, %v3700
    %v3702 = vpop.f32.mrb[0].mxu0
    %v3703 = vadd.f32 %v3632, %v3702
    %3704 = vdwg.mxu0
    %3705 = vmatprep.subr.mxu0 %v3009
    %3706 = vmatpush1.msra.mxu0 %v3008
    %3707 = vmatprep.subr.mxu0 %v3017
    %3708 = vmatpush1.msra.mxu0 %v3016
    %3709 = vmatprep.subr.mxu0 %v3025
    %3710 = vmatpush1.msra.mxu0 %v3024
    %3711 = vmatprep.subr.mxu0 %v3033
    %3712 = vmatpush1.msra.mxu0 %v3032
    %3713 = vmatprep.subr.mxu0 %v3041
    %3714 = vmatpush1.msra.mxu0 %v3040
    %3715 = vmatprep.subr.mxu0 %v3049
    %3716 = vmatpush1.msra.mxu0 %v3048
    %3717 = vmatprep.subr.mxu0 %v3057
    %3718 = vmatpush1.msra.mxu0 %v3056
    %3719 = vmatprep.subr.mxu0 %v3065
    %3720 = vmatpush1.msra.mxu0 %v3064
    %3721 = vmatprep.subr.mxu0 %v3073
    %3722 = vmatpush1.msra.mxu0 %v3072
    %3723 = vmatprep.subr.mxu0 %v3081
    %3724 = vmatpush1.msra.mxu0 %v3080
    %3725 = vmatprep.subr.mxu0 %v3089
    %3726 = vmatpush1.msra.mxu0 %v3088
    %3727 = vmatprep.subr.mxu0 %v3097
    %3728 = vmatpush1.msra.mxu0 %v3096
    %3729 = vmatprep.subr.mxu0 %v3105
    %3730 = vmatpush1.msra.mxu0 %v3104
    %3731 = vmatprep.subr.mxu0 %v3113
    %3732 = vmatpush1.msra.mxu0 %v3112
    %3733 = vmatprep.subr.mxu0 %v3121
    %3734 = vmatpush1.msra.mxu0 %v3120
    %3735 = vmatprep.subr.mxu0 %v3129
    %3736 = vmatpush1.msra.mxu0 %v3128
    %3737 = vmatprep.subr.mxu0 %v3137
    %3738 = vmatpush1.msra.mxu0 %v3136
    %3739 = vmatprep.subr.mxu0 %v3145
    %3740 = vmatpush1.msra.mxu0 %v3144
    %3741 = vmatprep.subr.mxu0 %v3153
    %3742 = vmatpush1.msra.mxu0 %v3152
    %3743 = vmatprep.subr.mxu0 %v3161
    %3744 = vmatpush1.msra.mxu0 %v3160
    %3745 = vmatprep.subr.mxu0 %v3169
    %3746 = vmatpush1.msra.mxu0 %v3168
    %3747 = vmatprep.subr.mxu0 %v3177
    %3748 = vmatpush1.msra.mxu0 %v3176
    %3749 = vmatprep.subr.mxu0 %v3185
    %3750 = vmatpush1.msra.mxu0 %v3184
    %3751 = vmatprep.subr.mxu0 %v3193
    %3752 = vmatpush1.msra.mxu0 %v3192
    %3753 = vmatprep.subr.mxu0 %v3201
    %3754 = vmatpush1.msra.mxu0 %v3200
    %3755 = vmatprep.subr.mxu0 %v3209
    %3756 = vmatpush1.msra.mxu0 %v3208
    %3757 = vmatprep.subr.mxu0 %v3217
    %3758 = vmatpush1.msra.mxu0 %v3216
    %3759 = vmatprep.subr.mxu0 %v3225
    %3760 = vmatpush1.msra.mxu0 %v3224
    %3761 = vmatprep.subr.mxu0 %v3233
    %3762 = vmatpush1.msra.mxu0 %v3232
    %3763 = vmatprep.subr.mxu0 %v3241
    %3764 = vmatpush1.msra.mxu0 %v3240
    %3765 = vmatprep.subr.mxu0 %v3249
    %3766 = vmatpush1.msra.mxu0 %v3248
    %3767 = vmatprep.subr.mxu0 %v3257
    %3768 = vmatpush1.msra.mxu0 %v3256
    %3769 = vmatprep.mubr.f32.mxu0 %v2294
    %3770 = vmatmul.mubr.f32.gmra.mrb[0].mxu0 %v2292
    %v3771 = vpop.f32.mrb[0].mxu0
    %v3772 = vadd.f32 %v3534, %v3771
    %v3773 = vpop.f32.mrb[0].mxu0
    %v3774 = vadd.f32 %v3538, %v3773
    %3775 = vdwg.mxu0
    %3776 = vmatprep.subr.mxu0 %v3265
    %3777 = vmatpush1.msra.mxu0 %v3264
    %3778 = vmatprep.subr.mxu0 %v3273
    %3779 = vmatpush1.msra.mxu0 %v3272
    %3780 = vmatprep.subr.mxu0 %v3281
    %3781 = vmatpush1.msra.mxu0 %v3280
    %3782 = vmatprep.subr.mxu0 %v3289
    %3783 = vmatpush1.msra.mxu0 %v3288
    %3784 = vmatprep.subr.mxu0 %v3297
    %3785 = vmatpush1.msra.mxu0 %v3296
    %3786 = vmatprep.subr.mxu0 %v3305
    %3787 = vmatpush1.msra.mxu0 %v3304
    %3788 = vmatprep.subr.mxu0 %v3313
    %3789 = vmatpush1.msra.mxu0 %v3312
    %3790 = vmatprep.subr.mxu0 %v3321
    %3791 = vmatpush1.msra.mxu0 %v3320
    %3792 = vmatprep.subr.mxu0 %v3329
    %3793 = vmatpush1.msra.mxu0 %v3328
    %3794 = vmatprep.subr.mxu0 %v3337
    %3795 = vmatpush1.msra.mxu0 %v3336
    %3796 = vmatprep.subr.mxu0 %v3345
    %3797 = vmatpush1.msra.mxu0 %v3344
    %3798 = vmatprep.subr.mxu0 %v3353
    %3799 = vmatpush1.msra.mxu0 %v3352
    %3800 = vmatprep.subr.mxu0 %v3361
    %3801 = vmatpush1.msra.mxu0 %v3360
    %3802 = vmatprep.subr.mxu0 %v3369
    %3803 = vmatpush1.msra.mxu0 %v3368
    %3804 = vmatprep.subr.mxu0 %v3377
    %3805 = vmatpush1.msra.mxu0 %v3376
    %3806 = vmatprep.subr.mxu0 %v3385
    %3807 = vmatpush1.msra.mxu0 %v3384
    %3808 = vmatprep.subr.mxu0 %v3393
    %3809 = vmatpush1.msra.mxu0 %v3392
    %3810 = vmatprep.subr.mxu0 %v3401
    %3811 = vmatpush1.msra.mxu0 %v3400
    %3812 = vmatprep.subr.mxu0 %v3409
    %3813 = vmatpush1.msra.mxu0 %v3408
    %3814 = vmatprep.subr.mxu0 %v3417
    %3815 = vmatpush1.msra.mxu0 %v3416
    %3816 = vmatprep.subr.mxu0 %v3425
    %3817 = vmatpush1.msra.mxu0 %v3424
    %3818 = vmatprep.subr.mxu0 %v3433
    %3819 = vmatpush1.msra.mxu0 %v3432
    %3820 = vmatprep.subr.mxu0 %v3441
    %3821 = vmatpush1.msra.mxu0 %v3440
    %3822 = vmatprep.subr.mxu0 %v3449
    %3823 = vmatpush1.msra.mxu0 %v3448
    %3824 = vmatprep.subr.mxu0 %v3457
    %3825 = vmatpush1.msra.mxu0 %v3456
    %3826 = vmatprep.subr.mxu0 %v3465
    %3827 = vmatpush1.msra.mxu0 %v3464
    %3828 = vmatprep.subr.mxu0 %v3473
    %3829 = vmatpush1.msra.mxu0 %v3472
    %3830 = vmatprep.subr.mxu0 %v3481
    %3831 = vmatpush1.msra.mxu0 %v3480
    %3832 = vmatprep.subr.mxu0 %v3489
    %3833 = vmatpush1.msra.mxu0 %v3488
    %3834 = vmatprep.subr.mxu0 %v3497
    %3835 = vmatpush1.msra.mxu0 %v3496
    %3836 = vmatprep.subr.mxu0 %v3505
    %3837 = vmatpush1.msra.mxu0 %v3504
    %3838 = vmatprep.subr.mxu0 %v3513
    %3839 = vmatpush1.msra.mxu0 %v3512
    %3840 = vmatprep.mubr.f32.mxu0 %v3004
    %3841 = vmatmul.mubr.f32.gmra.mrb[0].mxu0 %v3002
    %v3842 = vpop.f32.mrb[0].mxu0
    %v3843 = vadd.f32 %v3772, %v3842
    %v3844 = vpop.f32.mrb[0].mxu0
    %v3845 = vadd.f32 %v3774, %v3844
    %3846 = vdwg.mxu0
    %3847 = vmatprep.subr.mxu0 %v3011
    %3848 = vmatpush1.msra.mxu0 %v3010
    %3849 = vmatprep.subr.mxu0 %v3019
    %3850 = vmatpush1.msra.mxu0 %v3018
    %3851 = vmatprep.subr.mxu0 %v3027
    %3852 = vmatpush1.msra.mxu0 %v3026
    %3853 = vmatprep.subr.mxu0 %v3035
    %3854 = vmatpush1.msra.mxu0 %v3034
    %3855 = vmatprep.subr.mxu0 %v3043
    %3856 = vmatpush1.msra.mxu0 %v3042
    %3857 = vmatprep.subr.mxu0 %v3051
    %3858 = vmatpush1.msra.mxu0 %v3050
    %3859 = vmatprep.subr.mxu0 %v3059
    %3860 = vmatpush1.msra.mxu0 %v3058
    %3861 = vmatprep.subr.mxu0 %v3067
    %3862 = vmatpush1.msra.mxu0 %v3066
    %3863 = vmatprep.subr.mxu0 %v3075
    %3864 = vmatpush1.msra.mxu0 %v3074
    %3865 = vmatprep.subr.mxu0 %v3083
    %3866 = vmatpush1.msra.mxu0 %v3082
    %3867 = vmatprep.subr.mxu0 %v3091
    %3868 = vmatpush1.msra.mxu0 %v3090
    %3869 = vmatprep.subr.mxu0 %v3099
    %3870 = vmatpush1.msra.mxu0 %v3098
    %3871 = vmatprep.subr.mxu0 %v3107
    %3872 = vmatpush1.msra.mxu0 %v3106
    %3873 = vmatprep.subr.mxu0 %v3115
    %3874 = vmatpush1.msra.mxu0 %v3114
    %3875 = vmatprep.subr.mxu0 %v3123
    %3876 = vmatpush1.msra.mxu0 %v3122
    %3877 = vmatprep.subr.mxu0 %v3131
    %3878 = vmatpush1.msra.mxu0 %v3130
    %3879 = vmatprep.subr.mxu0 %v3139
    %3880 = vmatpush1.msra.mxu0 %v3138
    %3881 = vmatprep.subr.mxu0 %v3147
    %3882 = vmatpush1.msra.mxu0 %v3146
    %3883 = vmatprep.subr.mxu0 %v3155
    %3884 = vmatpush1.msra.mxu0 %v3154
    %3885 = vmatprep.subr.mxu0 %v3163
    %3886 = vmatpush1.msra.mxu0 %v3162
    %3887 = vmatprep.subr.mxu0 %v3171
    %3888 = vmatpush1.msra.mxu0 %v3170
    %3889 = vmatprep.subr.mxu0 %v3179
    %3890 = vmatpush1.msra.mxu0 %v3178
    %3891 = vmatprep.subr.mxu0 %v3187
    %3892 = vmatpush1.msra.mxu0 %v3186
    %3893 = vmatprep.subr.mxu0 %v3195
    %3894 = vmatpush1.msra.mxu0 %v3194
    %3895 = vmatprep.subr.mxu0 %v3203
    %3896 = vmatpush1.msra.mxu0 %v3202
    %3897 = vmatprep.subr.mxu0 %v3211
    %3898 = vmatpush1.msra.mxu0 %v3210
    %3899 = vmatprep.subr.mxu0 %v3219
    %3900 = vmatpush1.msra.mxu0 %v3218
    %3901 = vmatprep.subr.mxu0 %v3227
    %3902 = vmatpush1.msra.mxu0 %v3226
    %3903 = vmatprep.subr.mxu0 %v3235
    %3904 = vmatpush1.msra.mxu0 %v3234
    %3905 = vmatprep.subr.mxu0 %v3243
    %3906 = vmatpush1.msra.mxu0 %v3242
    %3907 = vmatprep.subr.mxu0 %v3251
    %3908 = vmatpush1.msra.mxu0 %v3250
    %3909 = vmatprep.subr.mxu0 %v3259
    %3910 = vmatpush1.msra.mxu0 %v3258
    %3911 = vmatprep.mubr.f32.mxu0 %v2294
    %3912 = vmatmul.mubr.f32.gmra.mrb[0].mxu0 %v2292
    %v3913 = vpop.f32.mrb[0].mxu0
    %v3914 = vadd.f32 %v3542, %v3913
    %v3915 = vpop.f32.mrb[0].mxu0
    %v3916 = vadd.f32 %v3546, %v3915
    %3917 = vdwg.mxu0
    %3918 = vmatprep.subr.mxu0 %v3267
    %3919 = vmatpush1.msra.mxu0 %v3266
    %3920 = vmatprep.subr.mxu0 %v3275
    %3921 = vmatpush1.msra.mxu0 %v3274
    %3922 = vmatprep.subr.mxu0 %v3283
    %3923 = vmatpush1.msra.mxu0 %v3282
    %3924 = vmatprep.subr.mxu0 %v3291
    %3925 = vmatpush1.msra.mxu0 %v3290
    %3926 = vmatprep.subr.mxu0 %v3299
    %3927 = vmatpush1.msra.mxu0 %v3298
    %3928 = vmatprep.subr.mxu0 %v3307
    %3929 = vmatpush1.msra.mxu0 %v3306
    %3930 = vmatprep.subr.mxu0 %v3315
    %3931 = vmatpush1.msra.mxu0 %v3314
    %3932 = vmatprep.subr.mxu0 %v3323
    %3933 = vmatpush1.msra.mxu0 %v3322
    %3934 = vmatprep.subr.mxu0 %v3331
    %3935 = vmatpush1.msra.mxu0 %v3330
    %3936 = vmatprep.subr.mxu0 %v3339
    %3937 = vmatpush1.msra.mxu0 %v3338
    %3938 = vmatprep.subr.mxu0 %v3347
    %3939 = vmatpush1.msra.mxu0 %v3346
    %3940 = vmatprep.subr.mxu0 %v3355
    %3941 = vmatpush1.msra.mxu0 %v3354
    %3942 = vmatprep.subr.mxu0 %v3363
    %3943 = vmatpush1.msra.mxu0 %v3362
    %3944 = vmatprep.subr.mxu0 %v3371
    %3945 = vmatpush1.msra.mxu0 %v3370
    %3946 = vmatprep.subr.mxu0 %v3379
    %3947 = vmatpush1.msra.mxu0 %v3378
    %3948 = vmatprep.subr.mxu0 %v3387
    %3949 = vmatpush1.msra.mxu0 %v3386
    %3950 = vmatprep.subr.mxu0 %v3395
    %3951 = vmatpush1.msra.mxu0 %v3394
    %3952 = vmatprep.subr.mxu0 %v3403
    %3953 = vmatpush1.msra.mxu0 %v3402
    %3954 = vmatprep.subr.mxu0 %v3411
    %3955 = vmatpush1.msra.mxu0 %v3410
    %3956 = vmatprep.subr.mxu0 %v3419
    %3957 = vmatpush1.msra.mxu0 %v3418
    %3958 = vmatprep.subr.mxu0 %v3427
    %3959 = vmatpush1.msra.mxu0 %v3426
    %3960 = vmatprep.subr.mxu0 %v3435
    %3961 = vmatpush1.msra.mxu0 %v3434
    %3962 = vmatprep.subr.mxu0 %v3443
    %3963 = vmatpush1.msra.mxu0 %v3442
    %3964 = vmatprep.subr.mxu0 %v3451
    %3965 = vmatpush1.msra.mxu0 %v3450
    %3966 = vmatprep.subr.mxu0 %v3459
    %3967 = vmatpush1.msra.mxu0 %v3458
    %3968 = vmatprep.subr.mxu0 %v3467
    %3969 = vmatpush1.msra.mxu0 %v3466
    %3970 = vmatprep.subr.mxu0 %v3475
    %3971 = vmatpush1.msra.mxu0 %v3474
    %3972 = vmatprep.subr.mxu0 %v3483
    %3973 = vmatpush1.msra.mxu0 %v3482
    %3974 = vmatprep.subr.mxu0 %v3491
    %3975 = vmatpush1.msra.mxu0 %v3490
    %3976 = vmatprep.subr.mxu0 %v3499
    %3977 = vmatpush1.msra.mxu0 %v3498
    %3978 = vmatprep.subr.mxu0 %v3507
    %3979 = vmatpush1.msra.mxu0 %v3506
    %3980 = vmatprep.subr.mxu0 %v3515
    %3981 = vmatpush1.msra.mxu0 %v3514
    %3982 = vmatprep.mubr.f32.mxu0 %v3004
    %3983 = vmatmul.mubr.f32.gmra.mrb[0].mxu0 %v3002
    %v3984 = vpop.f32.mrb[0].mxu0
    %v3985 = vadd.f32 %v3914, %v3984
    %v3986 = vpop.f32.mrb[0].mxu0
    %v3987 = vadd.f32 %v3916, %v3986
    %3988 = vdwg.mxu0
    %3989 = vmatprep.subr.mxu0 %v3013
    %3990 = vmatpush1.msra.mxu0 %v3012
    %3991 = vmatprep.subr.mxu0 %v3021
    %3992 = vmatpush1.msra.mxu0 %v3020
    %3993 = vmatprep.subr.mxu0 %v3029
    %3994 = vmatpush1.msra.mxu0 %v3028
    %3995 = vmatprep.subr.mxu0 %v3037
    %3996 = vmatpush1.msra.mxu0 %v3036
    %3997 = vmatprep.subr.mxu0 %v3045
    %3998 = vmatpush1.msra.mxu0 %v3044
    %3999 = vmatprep.subr.mxu0 %v3053
    %4000 = vmatpush1.msra.mxu0 %v3052
    %4001 = vmatprep.subr.mxu0 %v3061
    %4002 = vmatpush1.msra.mxu0 %v3060
    %4003 = vmatprep.subr.mxu0 %v3069
    %4004 = vmatpush1.msra.mxu0 %v3068
    %4005 = vmatprep.subr.mxu0 %v3077
    %4006 = vmatpush1.msra.mxu0 %v3076
    %4007 = vmatprep.subr.mxu0 %v3085
    %4008 = vmatpush1.msra.mxu0 %v3084
    %4009 = vmatprep.subr.mxu0 %v3093
    %4010 = vmatpush1.msra.mxu0 %v3092
    %4011 = vmatprep.subr.mxu0 %v3101
    %4012 = vmatpush1.msra.mxu0 %v3100
    %4013 = vmatprep.subr.mxu0 %v3109
    %4014 = vmatpush1.msra.mxu0 %v3108
    %4015 = vmatprep.subr.mxu0 %v3117
    %4016 = vmatpush1.msra.mxu0 %v3116
    %4017 = vmatprep.subr.mxu0 %v3125
    %4018 = vmatpush1.msra.mxu0 %v3124
    %4019 = vmatprep.subr.mxu0 %v3133
    %4020 = vmatpush1.msra.mxu0 %v3132
    %4021 = vmatprep.subr.mxu0 %v3141
    %4022 = vmatpush1.msra.mxu0 %v3140
    %4023 = vmatprep.subr.mxu0 %v3149
    %4024 = vmatpush1.msra.mxu0 %v3148
    %4025 = vmatprep.subr.mxu0 %v3157
    %4026 = vmatpush1.msra.mxu0 %v3156
    %4027 = vmatprep.subr.mxu0 %v3165
    %4028 = vmatpush1.msra.mxu0 %v3164
    %4029 = vmatprep.subr.mxu0 %v3173
    %4030 = vmatpush1.msra.mxu0 %v3172
    %4031 = vmatprep.subr.mxu0 %v3181
    %4032 = vmatpush1.msra.mxu0 %v3180
    %4033 = vmatprep.subr.mxu0 %v3189
    %4034 = vmatpush1.msra.mxu0 %v3188
    %4035 = vmatprep.subr.mxu0 %v3197
    %4036 = vmatpush1.msra.mxu0 %v3196
    %4037 = vmatprep.subr.mxu0 %v3205
    %4038 = vmatpush1.msra.mxu0 %v3204
    %4039 = vmatprep.subr.mxu0 %v3213
    %4040 = vmatpush1.msra.mxu0 %v3212
    %4041 = vmatprep.subr.mxu0 %v3221
    %4042 = vmatpush1.msra.mxu0 %v3220
    %4043 = vmatprep.subr.mxu0 %v3229
    %4044 = vmatpush1.msra.mxu0 %v3228
    %4045 = vmatprep.subr.mxu0 %v3237
    %4046 = vmatpush1.msra.mxu0 %v3236
    %4047 = vmatprep.subr.mxu0 %v3245
    %4048 = vmatpush1.msra.mxu0 %v3244
    %4049 = vmatprep.subr.mxu0 %v3253
    %4050 = vmatpush1.msra.mxu0 %v3252
    %4051 = vmatprep.subr.mxu0 %v3261
    %4052 = vmatpush1.msra.mxu0 %v3260
    %4053 = vmatprep.mubr.f32.mxu0 %v2294
    %4054 = vmatmul.mubr.f32.gmra.mrb[0].mxu0 %v2292
    %v4055 = vpop.f32.mrb[0].mxu0
    %v4056 = vadd.f32 %v3550, %v4055
    %v4057 = vpop.f32.mrb[0].mxu0
    %v4058 = vadd.f32 %v3554, %v4057
    %4059 = vdwg.mxu0
    %4060 = vmatprep.subr.mxu0 %v3269
    %4061 = vmatpush1.msra.mxu0 %v3268
    %4062 = vmatprep.subr.mxu0 %v3277
    %4063 = vmatpush1.msra.mxu0 %v3276
    %4064 = vmatprep.subr.mxu0 %v3285
    %4065 = vmatpush1.msra.mxu0 %v3284
    %4066 = vmatprep.subr.mxu0 %v3293
    %4067 = vmatpush1.msra.mxu0 %v3292
    %4068 = vmatprep.subr.mxu0 %v3301
    %4069 = vmatpush1.msra.mxu0 %v3300
    %4070 = vmatprep.subr.mxu0 %v3309
    %4071 = vmatpush1.msra.mxu0 %v3308
    %4072 = vmatprep.subr.mxu0 %v3317
    %4073 = vmatpush1.msra.mxu0 %v3316
    %4074 = vmatprep.subr.mxu0 %v3325
    %4075 = vmatpush1.msra.mxu0 %v3324
    %4076 = vmatprep.subr.mxu0 %v3333
    %4077 = vmatpush1.msra.mxu0 %v3332
    %4078 = vmatprep.subr.mxu0 %v3341
    %4079 = vmatpush1.msra.mxu0 %v3340
    %4080 = vmatprep.subr.mxu0 %v3349
    %4081 = vmatpush1.msra.mxu0 %v3348
    %4082 = vmatprep.subr.mxu0 %v3357
    %4083 = vmatpush1.msra.mxu0 %v3356
    %4084 = vmatprep.subr.mxu0 %v3365
    %4085 = vmatpush1.msra.mxu0 %v3364
    %4086 = vmatprep.subr.mxu0 %v3373
    %4087 = vmatpush1.msra.mxu0 %v3372
    %4088 = vmatprep.subr.mxu0 %v3381
    %4089 = vmatpush1.msra.mxu0 %v3380
    %4090 = vmatprep.subr.mxu0 %v3389
    %4091 = vmatpush1.msra.mxu0 %v3388
    %4092 = vmatprep.subr.mxu0 %v3397
    %4093 = vmatpush1.msra.mxu0 %v3396
    %4094 = vmatprep.subr.mxu0 %v3405
    %4095 = vmatpush1.msra.mxu0 %v3404
    %4096 = vmatprep.subr.mxu0 %v3413
    %4097 = vmatpush1.msra.mxu0 %v3412
    %4098 = vmatprep.subr.mxu0 %v3421
    %4099 = vmatpush1.msra.mxu0 %v3420
    %4100 = vmatprep.subr.mxu0 %v3429
    %4101 = vmatpush1.msra.mxu0 %v3428
    %4102 = vmatprep.subr.mxu0 %v3437
    %4103 = vmatpush1.msra.mxu0 %v3436
    %4104 = vmatprep.subr.mxu0 %v3445
    %4105 = vmatpush1.msra.mxu0 %v3444
    %4106 = vmatprep.subr.mxu0 %v3453
    %4107 = vmatpush1.msra.mxu0 %v3452
    %4108 = vmatprep.subr.mxu0 %v3461
    %4109 = vmatpush1.msra.mxu0 %v3460
    %4110 = vmatprep.subr.mxu0 %v3469
    %4111 = vmatpush1.msra.mxu0 %v3468
    %4112 = vmatprep.subr.mxu0 %v3477
    %4113 = vmatpush1.msra.mxu0 %v3476
    %4114 = vmatprep.subr.mxu0 %v3485
    %4115 = vmatpush1.msra.mxu0 %v3484
    %4116 = vmatprep.subr.mxu0 %v3493
    %4117 = vmatpush1.msra.mxu0 %v3492
    %4118 = vmatprep.subr.mxu0 %v3501
    %4119 = vmatpush1.msra.mxu0 %v3500
    %4120 = vmatprep.subr.mxu0 %v3509
    %4121 = vmatpush1.msra.mxu0 %v3508
    %4122 = vmatprep.subr.mxu0 %v3517
    %4123 = vmatpush1.msra.mxu0 %v3516
    %4124 = vmatprep.mubr.f32.mxu0 %v3004
    %4125 = vmatmul.mubr.f32.gmra.mrb[0].mxu0 %v3002
    %v4126 = vpop.f32.mrb[0].mxu0
    %v4127 = vadd.f32 %v4056, %v4126
    %v4128 = vpop.f32.mrb[0].mxu0
    %v4129 = vadd.f32 %v4058, %v4128
    %4130 = vdwg.mxu0
    %s4131 = scalar_lea.vmem [#allocation4], 2
    %v4132 = vld [vmem:[%s4131] ss:$8 sm:$0xf]
    %v4133 = vld [vmem:[%s4131] ss:$8 sm:$0xf0]
    %v4134 = vor.u32 %v4132, %v4133
    %v4136 = vlaneseq
    %v4137 = vshrl.u32 %v4136, 7
    %v4138 = vsub.s32 0, %v4137
    %v4139 = vrot.slane %v4134, %v4138
    %v4140 = vlaneseq
    %v4141 = vshrl.u32 %v4140, 7
    %v4142 = vsub.s32 1, %v4141
    %v4143 = vrot.slane %v4134, %v4142
    %v4144 = vlaneseq
    %v4145 = vshrl.u32 %v4144, 7
    %v4146 = vsub.s32 2, %v4145
    %v4147 = vrot.slane %v4134, %v4146
    %v4148 = vlaneseq
    %v4149 = vshrl.u32 %v4148, 7
    %v4150 = vsub.s32 3, %v4149
    %v4151 = vrot.slane %v4134, %v4150
    %v4152 = vlaneseq
    %v4153 = vshrl.u32 %v4152, 7
    %v4154 = vsub.s32 4, %v4153
    %v4155 = vrot.slane %v4134, %v4154
    %v4156 = vlaneseq
    %v4157 = vshrl.u32 %v4156, 7
    %v4158 = vsub.s32 5, %v4157
    %v4159 = vrot.slane %v4134, %v4158
    %v4160 = vlaneseq
    %v4161 = vshrl.u32 %v4160, 7
    %v4162 = vsub.s32 6, %v4161
    %v4163 = vrot.slane %v4134, %v4162
    %v4164 = vlaneseq
    %v4165 = vshrl.u32 %v4164, 7
    %v4166 = vsub.s32 7, %v4165
    %v4167 = vrot.slane %v4134, %v4166
    %v4176 = vmul.f32 %v3701, %v4139
    %v4177 = vmul.f32 %v3703, %v4143
    %v4178 = vmul.f32 %v3843, %v4147
    %v4179 = vmul.f32 %v3845, %v4151
    %v4180 = vmul.f32 %v3985, %v4155
    %v4181 = vmul.f32 %v3987, %v4159
    %v4182 = vmul.f32 %v4127, %v4163
    %v4183 = vmul.f32 %v4129, %v4167
    %s4184 = scalar_lea.vmem [#allocation4], 3
    %v4185 = vld [vmem:[%s4184] ss:$8 sm:$0xf]
    %v4186 = vld [vmem:[%s4184] ss:$8 sm:$0xf0]
    %v4187 = vor.u32 %v4185, %v4186
    %v4189 = vlaneseq
    %v4190 = vshrl.u32 %v4189, 7
    %v4191 = vsub.s32 0, %v4190
    %v4192 = vrot.slane %v4187, %v4191
    %v4193 = vlaneseq
    %v4194 = vshrl.u32 %v4193, 7
    %v4195 = vsub.s32 1, %v4194
    %v4196 = vrot.slane %v4187, %v4195
    %v4197 = vlaneseq
    %v4198 = vshrl.u32 %v4197, 7
    %v4199 = vsub.s32 2, %v4198
    %v4200 = vrot.slane %v4187, %v4199
    %v4201 = vlaneseq
    %v4202 = vshrl.u32 %v4201, 7
    %v4203 = vsub.s32 3, %v4202
    %v4204 = vrot.slane %v4187, %v4203
    %v4205 = vlaneseq
    %v4206 = vshrl.u32 %v4205, 7
    %v4207 = vsub.s32 4, %v4206
    %v4208 = vrot.slane %v4187, %v4207
    %v4209 = vlaneseq
    %v4210 = vshrl.u32 %v4209, 7
    %v4211 = vsub.s32 5, %v4210
    %v4212 = vrot.slane %v4187, %v4211
    %v4213 = vlaneseq
    %v4214 = vshrl.u32 %v4213, 7
    %v4215 = vsub.s32 6, %v4214
    %v4216 = vrot.slane %v4187, %v4215
    %v4217 = vlaneseq
    %v4218 = vshrl.u32 %v4217, 7
    %v4219 = vsub.s32 7, %v4218
    %v4220 = vrot.slane %v4187, %v4219
    %v4229 = vadd.f32 %v4176, %v4192
    %v4230 = vadd.f32 %v4177, %v4196
    %v4231 = vadd.f32 %v4178, %v4200
    %v4232 = vadd.f32 %v4179, %v4204
    %v4233 = vadd.f32 %v4180, %v4208
    %v4234 = vadd.f32 %v4181, %v4212
    %v4235 = vadd.f32 %v4182, %v4216
    %v4236 = vadd.f32 %v4183, %v4220
    %v4237 = vmax.f32 %v4229, 0.0
    %v4238 = vmax.f32 %v4230, 0.0
    %v4239 = vmax.f32 %v4231, 0.0
    %v4240 = vmax.f32 %v4232, 0.0
    %v4241 = vmax.f32 %v4233, 0.0
    %v4242 = vmax.f32 %v4234, 0.0
    %v4243 = vmax.f32 %v4235, 0.0
    %v4244 = vmax.f32 %v4236, 0.0
    %v4245 = vld [vmem:[#allocation9] sm:$0xff]
    %v4246 = vld [vmem:[#allocation9 + $0x8] sm:$0xff]
    %v4247 = vld [vmem:[#allocation9 + $0x10] sm:$0xff]
    %v4248 = vld [vmem:[#allocation9 + $0x18] sm:$0xff]
    %v4249 = vld [vmem:[#allocation9 + $0x20] sm:$0xff]
    %v4250 = vld [vmem:[#allocation9 + $0x28] sm:$0xff]
    %v4251 = vld [vmem:[#allocation9 + $0x30] sm:$0xff]
    %v4252 = vld [vmem:[#allocation9 + $0x38] sm:$0xff]
    %v4253 = vld [vmem:[#allocation9 + $0x40] sm:$0xff]
    %v4254 = vld [vmem:[#allocation9 + $0x48] sm:$0xff]
    %v4255 = vld [vmem:[#allocation9 + $0x50] sm:$0xff]
    %v4256 = vld [vmem:[#allocation9 + $0x58] sm:$0xff]
    %v4257 = vld [vmem:[#allocation9 + $0x60] sm:$0xff]
    %v4258 = vld [vmem:[#allocation9 + $0x68] sm:$0xff]
    %v4259 = vld [vmem:[#allocation9 + $0x70] sm:$0xff]
    %v4260 = vld [vmem:[#allocation9 + $0x78] sm:$0xff]
    %v4261 = vld [vmem:[#allocation9 + $0x80] sm:$0xff]
    %v4262 = vld [vmem:[#allocation9 + $0x88] sm:$0xff]
    %v4263 = vld [vmem:[#allocation9 + $0x90] sm:$0xff]
    %v4264 = vld [vmem:[#allocation9 + $0x98] sm:$0xff]
    %v4265 = vld [vmem:[#allocation9 + $0xa0] sm:$0xff]
    %v4266 = vld [vmem:[#allocation9 + $0xa8] sm:$0xff]
    %v4267 = vld [vmem:[#allocation9 + $0xb0] sm:$0xff]
    %v4268 = vld [vmem:[#allocation9 + $0xb8] sm:$0xff]
    %v4269 = vld [vmem:[#allocation9 + $0xc0] sm:$0xff]
    %v4270 = vld [vmem:[#allocation9 + $0xc8] sm:$0xff]
    %v4271 = vld [vmem:[#allocation9 + $0xd0] sm:$0xff]
    %v4272 = vld [vmem:[#allocation9 + $0xd8] sm:$0xff]
    %v4273 = vld [vmem:[#allocation9 + $0xe0] sm:$0xff]
    %v4274 = vld [vmem:[#allocation9 + $0xe8] sm:$0xff]
    %v4275 = vld [vmem:[#allocation9 + $0xf0] sm:$0xff]
    %v4276 = vld [vmem:[#allocation9 + $0xf8] sm:$0xff]
    %v4277 = vld [vmem:[#allocation9 + $0x100] sm:$0xff]
    %v4278 = vld [vmem:[#allocation9 + $0x108] sm:$0xff]
    %v4279 = vld [vmem:[#allocation9 + $0x110] sm:$0xff]
    %v4280 = vld [vmem:[#allocation9 + $0x118] sm:$0xff]
    %v4281 = vld [vmem:[#allocation9 + $0x120] sm:$0xff]
    %v4282 = vld [vmem:[#allocation9 + $0x128] sm:$0xff]
    %v4283 = vld [vmem:[#allocation9 + $0x130] sm:$0xff]
    %v4284 = vld [vmem:[#allocation9 + $0x138] sm:$0xff]
    %v4285 = vld [vmem:[#allocation9 + $0x140] sm:$0xff]
    %v4286 = vld [vmem:[#allocation9 + $0x148] sm:$0xff]
    %v4287 = vld [vmem:[#allocation9 + $0x150] sm:$0xff]
    %v4288 = vld [vmem:[#allocation9 + $0x158] sm:$0xff]
    %v4289 = vld [vmem:[#allocation9 + $0x160] sm:$0xff]
    %v4290 = vld [vmem:[#allocation9 + $0x168] sm:$0xff]
    %v4291 = vld [vmem:[#allocation9 + $0x170] sm:$0xff]
    %v4292 = vld [vmem:[#allocation9 + $0x178] sm:$0xff]
    %v4293 = vld [vmem:[#allocation9 + $0x180] sm:$0xff]
    %v4294 = vld [vmem:[#allocation9 + $0x188] sm:$0xff]
    %v4295 = vld [vmem:[#allocation9 + $0x190] sm:$0xff]
    %v4296 = vld [vmem:[#allocation9 + $0x198] sm:$0xff]
    %v4297 = vld [vmem:[#allocation9 + $0x1a0] sm:$0xff]
    %v4298 = vld [vmem:[#allocation9 + $0x1a8] sm:$0xff]
    %v4299 = vld [vmem:[#allocation9 + $0x1b0] sm:$0xff]
    %v4300 = vld [vmem:[#allocation9 + $0x1b8] sm:$0xff]
    %v4301 = vld [vmem:[#allocation9 + $0x1c0] sm:$0xff]
    %v4302 = vld [vmem:[#allocation9 + $0x1c8] sm:$0xff]
    %v4303 = vld [vmem:[#allocation9 + $0x1d0] sm:$0xff]
    %v4304 = vld [vmem:[#allocation9 + $0x1d8] sm:$0xff]
    %v4305 = vld [vmem:[#allocation9 + $0x1e0] sm:$0xff]
    %v4306 = vld [vmem:[#allocation9 + $0x1e8] sm:$0xff]
    %v4307 = vld [vmem:[#allocation9 + $0x1f0] sm:$0xff]
    %v4308 = vld [vmem:[#allocation9 + $0x1f8] sm:$0xff]
    %v4309 = vld [vmem:[#allocation9 + $0x200] sm:$0xff]
    %v4310 = vld [vmem:[#allocation9 + $0x208] sm:$0xff]
    %v4311 = vld [vmem:[#allocation9 + $0x210] sm:$0xff]
    %v4312 = vld [vmem:[#allocation9 + $0x218] sm:$0xff]
    %v4313 = vld [vmem:[#allocation9 + $0x220] sm:$0xff]
    %v4314 = vld [vmem:[#allocation9 + $0x228] sm:$0xff]
    %v4315 = vld [vmem:[#allocation9 + $0x230] sm:$0xff]
    %v4316 = vld [vmem:[#allocation9 + $0x238] sm:$0xff]
    %v4317 = vld [vmem:[#allocation9 + $0x240] sm:$0xff]
    %v4318 = vld [vmem:[#allocation9 + $0x248] sm:$0xff]
    %v4319 = vld [vmem:[#allocation9 + $0x250] sm:$0xff]
    %v4320 = vld [vmem:[#allocation9 + $0x258] sm:$0xff]
    %v4321 = vld [vmem:[#allocation9 + $0x260] sm:$0xff]
    %v4322 = vld [vmem:[#allocation9 + $0x268] sm:$0xff]
    %v4323 = vld [vmem:[#allocation9 + $0x270] sm:$0xff]
    %v4324 = vld [vmem:[#allocation9 + $0x278] sm:$0xff]
    %v4325 = vld [vmem:[#allocation9 + $0x280] sm:$0xff]
    %v4326 = vld [vmem:[#allocation9 + $0x288] sm:$0xff]
    %v4327 = vld [vmem:[#allocation9 + $0x290] sm:$0xff]
    %v4328 = vld [vmem:[#allocation9 + $0x298] sm:$0xff]
    %v4329 = vld [vmem:[#allocation9 + $0x2a0] sm:$0xff]
    %v4330 = vld [vmem:[#allocation9 + $0x2a8] sm:$0xff]
    %v4331 = vld [vmem:[#allocation9 + $0x2b0] sm:$0xff]
    %v4332 = vld [vmem:[#allocation9 + $0x2b8] sm:$0xff]
    %v4333 = vld [vmem:[#allocation9 + $0x2c0] sm:$0xff]
    %v4334 = vld [vmem:[#allocation9 + $0x2c8] sm:$0xff]
    %v4335 = vld [vmem:[#allocation9 + $0x2d0] sm:$0xff]
    %v4336 = vld [vmem:[#allocation9 + $0x2d8] sm:$0xff]
    %v4337 = vld [vmem:[#allocation9 + $0x2e0] sm:$0xff]
    %v4338 = vld [vmem:[#allocation9 + $0x2e8] sm:$0xff]
    %v4339 = vld [vmem:[#allocation9 + $0x2f0] sm:$0xff]
    %v4340 = vld [vmem:[#allocation9 + $0x2f8] sm:$0xff]
    %v4341 = vld [vmem:[#allocation9 + $0x300] sm:$0xff]
    %v4342 = vld [vmem:[#allocation9 + $0x308] sm:$0xff]
    %v4343 = vld [vmem:[#allocation9 + $0x310] sm:$0xff]
    %v4344 = vld [vmem:[#allocation9 + $0x318] sm:$0xff]
    %v4345 = vld [vmem:[#allocation9 + $0x320] sm:$0xff]
    %v4346 = vld [vmem:[#allocation9 + $0x328] sm:$0xff]
    %v4347 = vld [vmem:[#allocation9 + $0x330] sm:$0xff]
    %v4348 = vld [vmem:[#allocation9 + $0x338] sm:$0xff]
    %v4349 = vld [vmem:[#allocation9 + $0x340] sm:$0xff]
    %v4350 = vld [vmem:[#allocation9 + $0x348] sm:$0xff]
    %v4351 = vld [vmem:[#allocation9 + $0x350] sm:$0xff]
    %v4352 = vld [vmem:[#allocation9 + $0x358] sm:$0xff]
    %v4353 = vld [vmem:[#allocation9 + $0x360] sm:$0xff]
    %v4354 = vld [vmem:[#allocation9 + $0x368] sm:$0xff]
    %v4355 = vld [vmem:[#allocation9 + $0x370] sm:$0xff]
    %v4356 = vld [vmem:[#allocation9 + $0x378] sm:$0xff]
    %v4357 = vld [vmem:[#allocation9 + $0x380] sm:$0xff]
    %v4358 = vld [vmem:[#allocation9 + $0x388] sm:$0xff]
    %v4359 = vld [vmem:[#allocation9 + $0x390] sm:$0xff]
    %v4360 = vld [vmem:[#allocation9 + $0x398] sm:$0xff]
    %v4361 = vld [vmem:[#allocation9 + $0x3a0] sm:$0xff]
    %v4362 = vld [vmem:[#allocation9 + $0x3a8] sm:$0xff]
    %v4363 = vld [vmem:[#allocation9 + $0x3b0] sm:$0xff]
    %v4364 = vld [vmem:[#allocation9 + $0x3b8] sm:$0xff]
    %v4365 = vld [vmem:[#allocation9 + $0x3c0] sm:$0xff]
    %v4366 = vld [vmem:[#allocation9 + $0x3c8] sm:$0xff]
    %v4367 = vld [vmem:[#allocation9 + $0x3d0] sm:$0xff]
    %v4368 = vld [vmem:[#allocation9 + $0x3d8] sm:$0xff]
    %v4369 = vld [vmem:[#allocation9 + $0x3e0] sm:$0xff]
    %v4370 = vld [vmem:[#allocation9 + $0x3e8] sm:$0xff]
    %v4371 = vld [vmem:[#allocation9 + $0x3f0] sm:$0xff]
    %v4372 = vld [vmem:[#allocation9 + $0x3f8] sm:$0xff]
    %v4373 = vld [vmem:[#allocation9 + $0x400] sm:$0xff]
    %v4374 = vld [vmem:[#allocation9 + $0x408] sm:$0xff]
    %v4375 = vld [vmem:[#allocation9 + $0x410] sm:$0xff]
    %v4376 = vld [vmem:[#allocation9 + $0x418] sm:$0xff]
    %v4377 = vld [vmem:[#allocation9 + $0x420] sm:$0xff]
    %v4378 = vld [vmem:[#allocation9 + $0x428] sm:$0xff]
    %v4379 = vld [vmem:[#allocation9 + $0x430] sm:$0xff]
    %v4380 = vld [vmem:[#allocation9 + $0x438] sm:$0xff]
    %v4381 = vld [vmem:[#allocation9 + $0x440] sm:$0xff]
    %v4382 = vld [vmem:[#allocation9 + $0x448] sm:$0xff]
    %v4383 = vld [vmem:[#allocation9 + $0x450] sm:$0xff]
    %v4384 = vld [vmem:[#allocation9 + $0x458] sm:$0xff]
    %v4385 = vld [vmem:[#allocation9 + $0x460] sm:$0xff]
    %v4386 = vld [vmem:[#allocation9 + $0x468] sm:$0xff]
    %v4387 = vld [vmem:[#allocation9 + $0x470] sm:$0xff]
    %v4388 = vld [vmem:[#allocation9 + $0x478] sm:$0xff]
    %v4389 = vld [vmem:[#allocation9 + $0x480] sm:$0xff]
    %v4390 = vld [vmem:[#allocation9 + $0x488] sm:$0xff]
    %v4391 = vld [vmem:[#allocation9 + $0x490] sm:$0xff]
    %v4392 = vld [vmem:[#allocation9 + $0x498] sm:$0xff]
    %v4393 = vld [vmem:[#allocation9 + $0x4a0] sm:$0xff]
    %v4394 = vld [vmem:[#allocation9 + $0x4a8] sm:$0xff]
    %v4395 = vld [vmem:[#allocation9 + $0x4b0] sm:$0xff]
    %v4396 = vld [vmem:[#allocation9 + $0x4b8] sm:$0xff]
    %v4397 = vld [vmem:[#allocation9 + $0x4c0] sm:$0xff]
    %v4398 = vld [vmem:[#allocation9 + $0x4c8] sm:$0xff]
    %v4399 = vld [vmem:[#allocation9 + $0x4d0] sm:$0xff]
    %v4400 = vld [vmem:[#allocation9 + $0x4d8] sm:$0xff]
    %v4401 = vld [vmem:[#allocation9 + $0x4e0] sm:$0xff]
    %v4402 = vld [vmem:[#allocation9 + $0x4e8] sm:$0xff]
    %v4403 = vld [vmem:[#allocation9 + $0x4f0] sm:$0xff]
    %v4404 = vld [vmem:[#allocation9 + $0x4f8] sm:$0xff]
    %v4405 = vld [vmem:[#allocation9 + $0x500] sm:$0xff]
    %v4406 = vld [vmem:[#allocation9 + $0x508] sm:$0xff]
    %v4407 = vld [vmem:[#allocation9 + $0x510] sm:$0xff]
    %v4408 = vld [vmem:[#allocation9 + $0x518] sm:$0xff]
    %v4409 = vld [vmem:[#allocation9 + $0x520] sm:$0xff]
    %v4410 = vld [vmem:[#allocation9 + $0x528] sm:$0xff]
    %v4411 = vld [vmem:[#allocation9 + $0x530] sm:$0xff]
    %v4412 = vld [vmem:[#allocation9 + $0x538] sm:$0xff]
    %v4413 = vld [vmem:[#allocation9 + $0x540] sm:$0xff]
    %v4414 = vld [vmem:[#allocation9 + $0x548] sm:$0xff]
    %v4415 = vld [vmem:[#allocation9 + $0x550] sm:$0xff]
    %v4416 = vld [vmem:[#allocation9 + $0x558] sm:$0xff]
    %v4417 = vld [vmem:[#allocation9 + $0x560] sm:$0xff]
    %v4418 = vld [vmem:[#allocation9 + $0x568] sm:$0xff]
    %v4419 = vld [vmem:[#allocation9 + $0x570] sm:$0xff]
    %v4420 = vld [vmem:[#allocation9 + $0x578] sm:$0xff]
    %v4421 = vld [vmem:[#allocation9 + $0x580] sm:$0xff]
    %v4422 = vld [vmem:[#allocation9 + $0x588] sm:$0xff]
    %v4423 = vld [vmem:[#allocation9 + $0x590] sm:$0xff]
    %v4424 = vld [vmem:[#allocation9 + $0x598] sm:$0xff]
    %v4425 = vld [vmem:[#allocation9 + $0x5a0] sm:$0xff]
    %v4426 = vld [vmem:[#allocation9 + $0x5a8] sm:$0xff]
    %v4427 = vld [vmem:[#allocation9 + $0x5b0] sm:$0xff]
    %v4428 = vld [vmem:[#allocation9 + $0x5b8] sm:$0xff]
    %v4429 = vld [vmem:[#allocation9 + $0x5c0] sm:$0xff]
    %v4430 = vld [vmem:[#allocation9 + $0x5c8] sm:$0xff]
    %v4431 = vld [vmem:[#allocation9 + $0x5d0] sm:$0xff]
    %v4432 = vld [vmem:[#allocation9 + $0x5d8] sm:$0xff]
    %v4433 = vld [vmem:[#allocation9 + $0x5e0] sm:$0xff]
    %v4434 = vld [vmem:[#allocation9 + $0x5e8] sm:$0xff]
    %v4435 = vld [vmem:[#allocation9 + $0x5f0] sm:$0xff]
    %v4436 = vld [vmem:[#allocation9 + $0x5f8] sm:$0xff]
    %v4437 = vld [vmem:[#allocation9 + $0x600] sm:$0xff]
    %v4438 = vld [vmem:[#allocation9 + $0x608] sm:$0xff]
    %v4439 = vld [vmem:[#allocation9 + $0x610] sm:$0xff]
    %v4440 = vld [vmem:[#allocation9 + $0x618] sm:$0xff]
    %v4441 = vld [vmem:[#allocation9 + $0x620] sm:$0xff]
    %v4442 = vld [vmem:[#allocation9 + $0x628] sm:$0xff]
    %v4443 = vld [vmem:[#allocation9 + $0x630] sm:$0xff]
    %v4444 = vld [vmem:[#allocation9 + $0x638] sm:$0xff]
    %v4445 = vld [vmem:[#allocation9 + $0x640] sm:$0xff]
    %v4446 = vld [vmem:[#allocation9 + $0x648] sm:$0xff]
    %v4447 = vld [vmem:[#allocation9 + $0x650] sm:$0xff]
    %v4448 = vld [vmem:[#allocation9 + $0x658] sm:$0xff]
    %v4449 = vld [vmem:[#allocation9 + $0x660] sm:$0xff]
    %v4450 = vld [vmem:[#allocation9 + $0x668] sm:$0xff]
    %v4451 = vld [vmem:[#allocation9 + $0x670] sm:$0xff]
    %v4452 = vld [vmem:[#allocation9 + $0x678] sm:$0xff]
    %v4453 = vld [vmem:[#allocation9 + $0x680] sm:$0xff]
    %v4454 = vld [vmem:[#allocation9 + $0x688] sm:$0xff]
    %v4455 = vld [vmem:[#allocation9 + $0x690] sm:$0xff]
    %v4456 = vld [vmem:[#allocation9 + $0x698] sm:$0xff]
    %v4457 = vld [vmem:[#allocation9 + $0x6a0] sm:$0xff]
    %v4458 = vld [vmem:[#allocation9 + $0x6a8] sm:$0xff]
    %v4459 = vld [vmem:[#allocation9 + $0x6b0] sm:$0xff]
    %v4460 = vld [vmem:[#allocation9 + $0x6b8] sm:$0xff]
    %v4461 = vld [vmem:[#allocation9 + $0x6c0] sm:$0xff]
    %v4462 = vld [vmem:[#allocation9 + $0x6c8] sm:$0xff]
    %v4463 = vld [vmem:[#allocation9 + $0x6d0] sm:$0xff]
    %v4464 = vld [vmem:[#allocation9 + $0x6d8] sm:$0xff]
    %v4465 = vld [vmem:[#allocation9 + $0x6e0] sm:$0xff]
    %v4466 = vld [vmem:[#allocation9 + $0x6e8] sm:$0xff]
    %v4467 = vld [vmem:[#allocation9 + $0x6f0] sm:$0xff]
    %v4468 = vld [vmem:[#allocation9 + $0x6f8] sm:$0xff]
    %v4469 = vld [vmem:[#allocation9 + $0x700] sm:$0xff]
    %v4470 = vld [vmem:[#allocation9 + $0x708] sm:$0xff]
    %v4471 = vld [vmem:[#allocation9 + $0x710] sm:$0xff]
    %v4472 = vld [vmem:[#allocation9 + $0x718] sm:$0xff]
    %v4473 = vld [vmem:[#allocation9 + $0x720] sm:$0xff]
    %v4474 = vld [vmem:[#allocation9 + $0x728] sm:$0xff]
    %v4475 = vld [vmem:[#allocation9 + $0x730] sm:$0xff]
    %v4476 = vld [vmem:[#allocation9 + $0x738] sm:$0xff]
    %v4477 = vld [vmem:[#allocation9 + $0x740] sm:$0xff]
    %v4478 = vld [vmem:[#allocation9 + $0x748] sm:$0xff]
    %v4479 = vld [vmem:[#allocation9 + $0x750] sm:$0xff]
    %v4480 = vld [vmem:[#allocation9 + $0x758] sm:$0xff]
    %v4481 = vld [vmem:[#allocation9 + $0x760] sm:$0xff]
    %v4482 = vld [vmem:[#allocation9 + $0x768] sm:$0xff]
    %v4483 = vld [vmem:[#allocation9 + $0x770] sm:$0xff]
    %v4484 = vld [vmem:[#allocation9 + $0x778] sm:$0xff]
    %v4485 = vld [vmem:[#allocation9 + $0x780] sm:$0xff]
    %v4486 = vld [vmem:[#allocation9 + $0x788] sm:$0xff]
    %v4487 = vld [vmem:[#allocation9 + $0x790] sm:$0xff]
    %v4488 = vld [vmem:[#allocation9 + $0x798] sm:$0xff]
    %v4489 = vld [vmem:[#allocation9 + $0x7a0] sm:$0xff]
    %v4490 = vld [vmem:[#allocation9 + $0x7a8] sm:$0xff]
    %v4491 = vld [vmem:[#allocation9 + $0x7b0] sm:$0xff]
    %v4492 = vld [vmem:[#allocation9 + $0x7b8] sm:$0xff]
    %v4493 = vld [vmem:[#allocation9 + $0x7c0] sm:$0xff]
    %v4494 = vld [vmem:[#allocation9 + $0x7c8] sm:$0xff]
    %v4495 = vld [vmem:[#allocation9 + $0x7d0] sm:$0xff]
    %v4496 = vld [vmem:[#allocation9 + $0x7d8] sm:$0xff]
    %v4497 = vld [vmem:[#allocation9 + $0x7e0] sm:$0xff]
    %v4498 = vld [vmem:[#allocation9 + $0x7e8] sm:$0xff]
    %v4499 = vld [vmem:[#allocation9 + $0x7f0] sm:$0xff]
    %v4500 = vld [vmem:[#allocation9 + $0x7f8] sm:$0xff]
    %v4501 = vld [vmem:[#allocation9 + $0x800] sm:$0xff]
    %v4502 = vld [vmem:[#allocation9 + $0x808] sm:$0xff]
    %v4503 = vld [vmem:[#allocation9 + $0x810] sm:$0xff]
    %v4504 = vld [vmem:[#allocation9 + $0x818] sm:$0xff]
    %v4505 = vld [vmem:[#allocation9 + $0x820] sm:$0xff]
    %v4506 = vld [vmem:[#allocation9 + $0x828] sm:$0xff]
    %v4507 = vld [vmem:[#allocation9 + $0x830] sm:$0xff]
    %v4508 = vld [vmem:[#allocation9 + $0x838] sm:$0xff]
    %v4509 = vld [vmem:[#allocation9 + $0x840] sm:$0xff]
    %v4510 = vld [vmem:[#allocation9 + $0x848] sm:$0xff]
    %v4511 = vld [vmem:[#allocation9 + $0x850] sm:$0xff]
    %v4512 = vld [vmem:[#allocation9 + $0x858] sm:$0xff]
    %v4513 = vld [vmem:[#allocation9 + $0x860] sm:$0xff]
    %v4514 = vld [vmem:[#allocation9 + $0x868] sm:$0xff]
    %v4515 = vld [vmem:[#allocation9 + $0x870] sm:$0xff]
    %v4516 = vld [vmem:[#allocation9 + $0x878] sm:$0xff]
    %v4517 = vld [vmem:[#allocation9 + $0x880] sm:$0xff]
    %v4518 = vld [vmem:[#allocation9 + $0x888] sm:$0xff]
    %v4519 = vld [vmem:[#allocation9 + $0x890] sm:$0xff]
    %v4520 = vld [vmem:[#allocation9 + $0x898] sm:$0xff]
    %v4521 = vld [vmem:[#allocation9 + $0x8a0] sm:$0xff]
    %v4522 = vld [vmem:[#allocation9 + $0x8a8] sm:$0xff]
    %v4523 = vld [vmem:[#allocation9 + $0x8b0] sm:$0xff]
    %v4524 = vld [vmem:[#allocation9 + $0x8b8] sm:$0xff]
    %v4525 = vld [vmem:[#allocation9 + $0x8c0] sm:$0xff]
    %v4526 = vld [vmem:[#allocation9 + $0x8c8] sm:$0xff]
    %v4527 = vld [vmem:[#allocation9 + $0x8d0] sm:$0xff]
    %v4528 = vld [vmem:[#allocation9 + $0x8d8] sm:$0xff]
    %v4529 = vld [vmem:[#allocation9 + $0x8e0] sm:$0xff]
    %v4530 = vld [vmem:[#allocation9 + $0x8e8] sm:$0xff]
    %v4531 = vld [vmem:[#allocation9 + $0x8f0] sm:$0xff]
    %v4532 = vld [vmem:[#allocation9 + $0x8f8] sm:$0xff]
    %v4533 = vld [vmem:[#allocation9 + $0x900] sm:$0xff]
    %v4534 = vld [vmem:[#allocation9 + $0x908] sm:$0xff]
    %v4535 = vld [vmem:[#allocation9 + $0x910] sm:$0xff]
    %v4536 = vld [vmem:[#allocation9 + $0x918] sm:$0xff]
    %v4537 = vld [vmem:[#allocation9 + $0x920] sm:$0xff]
    %v4538 = vld [vmem:[#allocation9 + $0x928] sm:$0xff]
    %v4539 = vld [vmem:[#allocation9 + $0x930] sm:$0xff]
    %v4540 = vld [vmem:[#allocation9 + $0x938] sm:$0xff]
    %v4541 = vld [vmem:[#allocation9 + $0x940] sm:$0xff]
    %v4542 = vld [vmem:[#allocation9 + $0x948] sm:$0xff]
    %v4543 = vld [vmem:[#allocation9 + $0x950] sm:$0xff]
    %v4544 = vld [vmem:[#allocation9 + $0x958] sm:$0xff]
    %v4545 = vld [vmem:[#allocation9 + $0x960] sm:$0xff]
    %v4546 = vld [vmem:[#allocation9 + $0x968] sm:$0xff]
    %v4547 = vld [vmem:[#allocation9 + $0x970] sm:$0xff]
    %v4548 = vld [vmem:[#allocation9 + $0x978] sm:$0xff]
    %v4549 = vld [vmem:[#allocation9 + $0x980] sm:$0xff]
    %v4550 = vld [vmem:[#allocation9 + $0x988] sm:$0xff]
    %v4551 = vld [vmem:[#allocation9 + $0x990] sm:$0xff]
    %v4552 = vld [vmem:[#allocation9 + $0x998] sm:$0xff]
    %v4553 = vld [vmem:[#allocation9 + $0x9a0] sm:$0xff]
    %v4554 = vld [vmem:[#allocation9 + $0x9a8] sm:$0xff]
    %v4555 = vld [vmem:[#allocation9 + $0x9b0] sm:$0xff]
    %v4556 = vld [vmem:[#allocation9 + $0x9b8] sm:$0xff]
    %v4557 = vld [vmem:[#allocation9 + $0x9c0] sm:$0xff]
    %v4558 = vld [vmem:[#allocation9 + $0x9c8] sm:$0xff]
    %v4559 = vld [vmem:[#allocation9 + $0x9d0] sm:$0xff]
    %v4560 = vld [vmem:[#allocation9 + $0x9d8] sm:$0xff]
    %v4561 = vld [vmem:[#allocation9 + $0x9e0] sm:$0xff]
    %v4562 = vld [vmem:[#allocation9 + $0x9e8] sm:$0xff]
    %v4563 = vld [vmem:[#allocation9 + $0x9f0] sm:$0xff]
    %v4564 = vld [vmem:[#allocation9 + $0x9f8] sm:$0xff]
    %v4565 = vld [vmem:[#allocation9 + $0xa00] sm:$0xff]
    %v4566 = vld [vmem:[#allocation9 + $0xa08] sm:$0xff]
    %v4567 = vld [vmem:[#allocation9 + $0xa10] sm:$0xff]
    %v4568 = vld [vmem:[#allocation9 + $0xa18] sm:$0xff]
    %v4569 = vld [vmem:[#allocation9 + $0xa20] sm:$0xff]
    %v4570 = vld [vmem:[#allocation9 + $0xa28] sm:$0xff]
    %v4571 = vld [vmem:[#allocation9 + $0xa30] sm:$0xff]
    %v4572 = vld [vmem:[#allocation9 + $0xa38] sm:$0xff]
    %v4573 = vld [vmem:[#allocation9 + $0xa40] sm:$0xff]
    %v4574 = vld [vmem:[#allocation9 + $0xa48] sm:$0xff]
    %v4575 = vld [vmem:[#allocation9 + $0xa50] sm:$0xff]
    %v4576 = vld [vmem:[#allocation9 + $0xa58] sm:$0xff]
    %v4577 = vld [vmem:[#allocation9 + $0xa60] sm:$0xff]
    %v4578 = vld [vmem:[#allocation9 + $0xa68] sm:$0xff]
    %v4579 = vld [vmem:[#allocation9 + $0xa70] sm:$0xff]
    %v4580 = vld [vmem:[#allocation9 + $0xa78] sm:$0xff]
    %v4581 = vld [vmem:[#allocation9 + $0xa80] sm:$0xff]
    %v4582 = vld [vmem:[#allocation9 + $0xa88] sm:$0xff]
    %v4583 = vld [vmem:[#allocation9 + $0xa90] sm:$0xff]
    %v4584 = vld [vmem:[#allocation9 + $0xa98] sm:$0xff]
    %v4585 = vld [vmem:[#allocation9 + $0xaa0] sm:$0xff]
    %v4586 = vld [vmem:[#allocation9 + $0xaa8] sm:$0xff]
    %v4587 = vld [vmem:[#allocation9 + $0xab0] sm:$0xff]
    %v4588 = vld [vmem:[#allocation9 + $0xab8] sm:$0xff]
    %v4589 = vld [vmem:[#allocation9 + $0xac0] sm:$0xff]
    %v4590 = vld [vmem:[#allocation9 + $0xac8] sm:$0xff]
    %v4591 = vld [vmem:[#allocation9 + $0xad0] sm:$0xff]
    %v4592 = vld [vmem:[#allocation9 + $0xad8] sm:$0xff]
    %v4593 = vld [vmem:[#allocation9 + $0xae0] sm:$0xff]
    %v4594 = vld [vmem:[#allocation9 + $0xae8] sm:$0xff]
    %v4595 = vld [vmem:[#allocation9 + $0xaf0] sm:$0xff]
    %v4596 = vld [vmem:[#allocation9 + $0xaf8] sm:$0xff]
    %v4597 = vld [vmem:[#allocation9 + $0xb00] sm:$0xff]
    %v4598 = vld [vmem:[#allocation9 + $0xb08] sm:$0xff]
    %v4599 = vld [vmem:[#allocation9 + $0xb10] sm:$0xff]
    %v4600 = vld [vmem:[#allocation9 + $0xb18] sm:$0xff]
    %v4601 = vld [vmem:[#allocation9 + $0xb20] sm:$0xff]
    %v4602 = vld [vmem:[#allocation9 + $0xb28] sm:$0xff]
    %v4603 = vld [vmem:[#allocation9 + $0xb30] sm:$0xff]
    %v4604 = vld [vmem:[#allocation9 + $0xb38] sm:$0xff]
    %v4605 = vld [vmem:[#allocation9 + $0xb40] sm:$0xff]
    %v4606 = vld [vmem:[#allocation9 + $0xb48] sm:$0xff]
    %v4607 = vld [vmem:[#allocation9 + $0xb50] sm:$0xff]
    %v4608 = vld [vmem:[#allocation9 + $0xb58] sm:$0xff]
    %v4609 = vld [vmem:[#allocation9 + $0xb60] sm:$0xff]
    %v4610 = vld [vmem:[#allocation9 + $0xb68] sm:$0xff]
    %v4611 = vld [vmem:[#allocation9 + $0xb70] sm:$0xff]
    %v4612 = vld [vmem:[#allocation9 + $0xb78] sm:$0xff]
    %v4613 = vld [vmem:[#allocation9 + $0xb80] sm:$0xff]
    %v4614 = vld [vmem:[#allocation9 + $0xb88] sm:$0xff]
    %v4615 = vld [vmem:[#allocation9 + $0xb90] sm:$0xff]
    %v4616 = vld [vmem:[#allocation9 + $0xb98] sm:$0xff]
    %v4617 = vld [vmem:[#allocation9 + $0xba0] sm:$0xff]
    %v4618 = vld [vmem:[#allocation9 + $0xba8] sm:$0xff]
    %v4619 = vld [vmem:[#allocation9 + $0xbb0] sm:$0xff]
    %v4620 = vld [vmem:[#allocation9 + $0xbb8] sm:$0xff]
    %v4621 = vld [vmem:[#allocation9 + $0xbc0] sm:$0xff]
    %v4622 = vld [vmem:[#allocation9 + $0xbc8] sm:$0xff]
    %v4623 = vld [vmem:[#allocation9 + $0xbd0] sm:$0xff]
    %v4624 = vld [vmem:[#allocation9 + $0xbd8] sm:$0xff]
    %v4625 = vld [vmem:[#allocation9 + $0xbe0] sm:$0xff]
    %v4626 = vld [vmem:[#allocation9 + $0xbe8] sm:$0xff]
    %v4627 = vld [vmem:[#allocation9 + $0xbf0] sm:$0xff]
    %v4628 = vld [vmem:[#allocation9 + $0xbf8] sm:$0xff]
    %v4629 = vld [vmem:[#allocation9 + $0xc00] sm:$0xff]
    %v4630 = vld [vmem:[#allocation9 + $0xc08] sm:$0xff]
    %v4631 = vld [vmem:[#allocation9 + $0xc10] sm:$0xff]
    %v4632 = vld [vmem:[#allocation9 + $0xc18] sm:$0xff]
    %v4633 = vld [vmem:[#allocation9 + $0xc20] sm:$0xff]
    %v4634 = vld [vmem:[#allocation9 + $0xc28] sm:$0xff]
    %v4635 = vld [vmem:[#allocation9 + $0xc30] sm:$0xff]
    %v4636 = vld [vmem:[#allocation9 + $0xc38] sm:$0xff]
    %v4637 = vld [vmem:[#allocation9 + $0xc40] sm:$0xff]
    %v4638 = vld [vmem:[#allocation9 + $0xc48] sm:$0xff]
    %v4639 = vld [vmem:[#allocation9 + $0xc50] sm:$0xff]
    %v4640 = vld [vmem:[#allocation9 + $0xc58] sm:$0xff]
    %v4641 = vld [vmem:[#allocation9 + $0xc60] sm:$0xff]
    %v4642 = vld [vmem:[#allocation9 + $0xc68] sm:$0xff]
    %v4643 = vld [vmem:[#allocation9 + $0xc70] sm:$0xff]
    %v4644 = vld [vmem:[#allocation9 + $0xc78] sm:$0xff]
    %v4645 = vld [vmem:[#allocation9 + $0xc80] sm:$0xff]
    %v4646 = vld [vmem:[#allocation9 + $0xc88] sm:$0xff]
    %v4647 = vld [vmem:[#allocation9 + $0xc90] sm:$0xff]
    %v4648 = vld [vmem:[#allocation9 + $0xc98] sm:$0xff]
    %v4649 = vld [vmem:[#allocation9 + $0xca0] sm:$0xff]
    %v4650 = vld [vmem:[#allocation9 + $0xca8] sm:$0xff]
    %v4651 = vld [vmem:[#allocation9 + $0xcb0] sm:$0xff]
    %v4652 = vld [vmem:[#allocation9 + $0xcb8] sm:$0xff]
    %v4653 = vld [vmem:[#allocation9 + $0xcc0] sm:$0xff]
    %v4654 = vld [vmem:[#allocation9 + $0xcc8] sm:$0xff]
    %v4655 = vld [vmem:[#allocation9 + $0xcd0] sm:$0xff]
    %v4656 = vld [vmem:[#allocation9 + $0xcd8] sm:$0xff]
    %v4657 = vld [vmem:[#allocation9 + $0xce0] sm:$0xff]
    %v4658 = vld [vmem:[#allocation9 + $0xce8] sm:$0xff]
    %v4659 = vld [vmem:[#allocation9 + $0xcf0] sm:$0xff]
    %v4660 = vld [vmem:[#allocation9 + $0xcf8] sm:$0xff]
    %v4661 = vld [vmem:[#allocation9 + $0xd00] sm:$0xff]
    %v4662 = vld [vmem:[#allocation9 + $0xd08] sm:$0xff]
    %v4663 = vld [vmem:[#allocation9 + $0xd10] sm:$0xff]
    %v4664 = vld [vmem:[#allocation9 + $0xd18] sm:$0xff]
    %v4665 = vld [vmem:[#allocation9 + $0xd20] sm:$0xff]
    %v4666 = vld [vmem:[#allocation9 + $0xd28] sm:$0xff]
    %v4667 = vld [vmem:[#allocation9 + $0xd30] sm:$0xff]
    %v4668 = vld [vmem:[#allocation9 + $0xd38] sm:$0xff]
    %v4669 = vld [vmem:[#allocation9 + $0xd40] sm:$0xff]
    %v4670 = vld [vmem:[#allocation9 + $0xd48] sm:$0xff]
    %v4671 = vld [vmem:[#allocation9 + $0xd50] sm:$0xff]
    %v4672 = vld [vmem:[#allocation9 + $0xd58] sm:$0xff]
    %v4673 = vld [vmem:[#allocation9 + $0xd60] sm:$0xff]
    %v4674 = vld [vmem:[#allocation9 + $0xd68] sm:$0xff]
    %v4675 = vld [vmem:[#allocation9 + $0xd70] sm:$0xff]
    %v4676 = vld [vmem:[#allocation9 + $0xd78] sm:$0xff]
    %v4677 = vld [vmem:[#allocation9 + $0xd80] sm:$0xff]
    %v4678 = vld [vmem:[#allocation9 + $0xd88] sm:$0xff]
    %v4679 = vld [vmem:[#allocation9 + $0xd90] sm:$0xff]
    %v4680 = vld [vmem:[#allocation9 + $0xd98] sm:$0xff]
    %v4681 = vld [vmem:[#allocation9 + $0xda0] sm:$0xff]
    %v4682 = vld [vmem:[#allocation9 + $0xda8] sm:$0xff]
    %v4683 = vld [vmem:[#allocation9 + $0xdb0] sm:$0xff]
    %v4684 = vld [vmem:[#allocation9 + $0xdb8] sm:$0xff]
    %v4685 = vld [vmem:[#allocation9 + $0xdc0] sm:$0xff]
    %v4686 = vld [vmem:[#allocation9 + $0xdc8] sm:$0xff]
    %v4687 = vld [vmem:[#allocation9 + $0xdd0] sm:$0xff]
    %v4688 = vld [vmem:[#allocation9 + $0xdd8] sm:$0xff]
    %v4689 = vld [vmem:[#allocation9 + $0xde0] sm:$0xff]
    %v4690 = vld [vmem:[#allocation9 + $0xde8] sm:$0xff]
    %v4691 = vld [vmem:[#allocation9 + $0xdf0] sm:$0xff]
    %v4692 = vld [vmem:[#allocation9 + $0xdf8] sm:$0xff]
    %v4693 = vld [vmem:[#allocation9 + $0xe00] sm:$0xff]
    %v4694 = vld [vmem:[#allocation9 + $0xe08] sm:$0xff]
    %v4695 = vld [vmem:[#allocation9 + $0xe10] sm:$0xff]
    %v4696 = vld [vmem:[#allocation9 + $0xe18] sm:$0xff]
    %v4697 = vld [vmem:[#allocation9 + $0xe20] sm:$0xff]
    %v4698 = vld [vmem:[#allocation9 + $0xe28] sm:$0xff]
    %v4699 = vld [vmem:[#allocation9 + $0xe30] sm:$0xff]
    %v4700 = vld [vmem:[#allocation9 + $0xe38] sm:$0xff]
    %v4701 = vld [vmem:[#allocation9 + $0xe40] sm:$0xff]
    %v4702 = vld [vmem:[#allocation9 + $0xe48] sm:$0xff]
    %v4703 = vld [vmem:[#allocation9 + $0xe50] sm:$0xff]
    %v4704 = vld [vmem:[#allocation9 + $0xe58] sm:$0xff]
    %v4705 = vld [vmem:[#allocation9 + $0xe60] sm:$0xff]
    %v4706 = vld [vmem:[#allocation9 + $0xe68] sm:$0xff]
    %v4707 = vld [vmem:[#allocation9 + $0xe70] sm:$0xff]
    %v4708 = vld [vmem:[#allocation9 + $0xe78] sm:$0xff]
    %v4709 = vld [vmem:[#allocation9 + $0xe80] sm:$0xff]
    %v4710 = vld [vmem:[#allocation9 + $0xe88] sm:$0xff]
    %v4711 = vld [vmem:[#allocation9 + $0xe90] sm:$0xff]
    %v4712 = vld [vmem:[#allocation9 + $0xe98] sm:$0xff]
    %v4713 = vld [vmem:[#allocation9 + $0xea0] sm:$0xff]
    %v4714 = vld [vmem:[#allocation9 + $0xea8] sm:$0xff]
    %v4715 = vld [vmem:[#allocation9 + $0xeb0] sm:$0xff]
    %v4716 = vld [vmem:[#allocation9 + $0xeb8] sm:$0xff]
    %v4717 = vld [vmem:[#allocation9 + $0xec0] sm:$0xff]
    %v4718 = vld [vmem:[#allocation9 + $0xec8] sm:$0xff]
    %v4719 = vld [vmem:[#allocation9 + $0xed0] sm:$0xff]
    %v4720 = vld [vmem:[#allocation9 + $0xed8] sm:$0xff]
    %v4721 = vld [vmem:[#allocation9 + $0xee0] sm:$0xff]
    %v4722 = vld [vmem:[#allocation9 + $0xee8] sm:$0xff]
    %v4723 = vld [vmem:[#allocation9 + $0xef0] sm:$0xff]
    %v4724 = vld [vmem:[#allocation9 + $0xef8] sm:$0xff]
    %v4725 = vld [vmem:[#allocation9 + $0xf00] sm:$0xff]
    %v4726 = vld [vmem:[#allocation9 + $0xf08] sm:$0xff]
    %v4727 = vld [vmem:[#allocation9 + $0xf10] sm:$0xff]
    %v4728 = vld [vmem:[#allocation9 + $0xf18] sm:$0xff]
    %v4729 = vld [vmem:[#allocation9 + $0xf20] sm:$0xff]
    %v4730 = vld [vmem:[#allocation9 + $0xf28] sm:$0xff]
    %v4731 = vld [vmem:[#allocation9 + $0xf30] sm:$0xff]
    %v4732 = vld [vmem:[#allocation9 + $0xf38] sm:$0xff]
    %v4733 = vld [vmem:[#allocation9 + $0xf40] sm:$0xff]
    %v4734 = vld [vmem:[#allocation9 + $0xf48] sm:$0xff]
    %v4735 = vld [vmem:[#allocation9 + $0xf50] sm:$0xff]
    %v4736 = vld [vmem:[#allocation9 + $0xf58] sm:$0xff]
    %v4737 = vld [vmem:[#allocation9 + $0xf60] sm:$0xff]
    %v4738 = vld [vmem:[#allocation9 + $0xf68] sm:$0xff]
    %v4739 = vld [vmem:[#allocation9 + $0xf70] sm:$0xff]
    %v4740 = vld [vmem:[#allocation9 + $0xf78] sm:$0xff]
    %v4741 = vld [vmem:[#allocation9 + $0xf80] sm:$0xff]
    %v4742 = vld [vmem:[#allocation9 + $0xf88] sm:$0xff]
    %v4743 = vld [vmem:[#allocation9 + $0xf90] sm:$0xff]
    %v4744 = vld [vmem:[#allocation9 + $0xf98] sm:$0xff]
    %v4745 = vld [vmem:[#allocation9 + $0xfa0] sm:$0xff]
    %v4746 = vld [vmem:[#allocation9 + $0xfa8] sm:$0xff]
    %v4747 = vld [vmem:[#allocation9 + $0xfb0] sm:$0xff]
    %v4748 = vld [vmem:[#allocation9 + $0xfb8] sm:$0xff]
    %v4749 = vld [vmem:[#allocation9 + $0xfc0] sm:$0xff]
    %v4750 = vld [vmem:[#allocation9 + $0xfc8] sm:$0xff]
    %v4751 = vld [vmem:[#allocation9 + $0xfd0] sm:$0xff]
    %v4752 = vld [vmem:[#allocation9 + $0xfd8] sm:$0xff]
    %v4753 = vld [vmem:[#allocation9 + $0xfe0] sm:$0xff]
    %v4754 = vld [vmem:[#allocation9 + $0xfe8] sm:$0xff]
    %v4755 = vld [vmem:[#allocation9 + $0xff0] sm:$0xff]
    %v4756 = vld [vmem:[#allocation9 + $0xff8] sm:$0xff]
    %s4757 = scalar_lea.vmem [#allocation4], 4
    %v4758 = vld [vmem:[%s4757] ss:$8 sm:$0xf]
    %v4760 = vlaneseq
    %v4761 = vshrl.u32 %v4760, 7
    %v4762 = vsub.s32 0, %v4761
    %v4763 = vrot.slane %v4758, %v4762
    %v4764 = vlaneseq
    %v4765 = vshrl.u32 %v4764, 7
    %v4766 = vsub.s32 1, %v4765
    %v4767 = vrot.slane %v4758, %v4766
    %v4768 = vlaneseq
    %v4769 = vshrl.u32 %v4768, 7
    %v4770 = vsub.s32 2, %v4769
    %v4771 = vrot.slane %v4758, %v4770
    %v4772 = vlaneseq
    %v4773 = vshrl.u32 %v4772, 7
    %v4774 = vsub.s32 3, %v4773
    %v4775 = vrot.slane %v4758, %v4774
    %4780 = vmatprep.subr.mxu0 %v4246
    %4781 = vmatpush1.msra.mxu0 %v4245
    %4782 = vmatprep.subr.mxu0 %v4250
    %4783 = vmatpush1.msra.mxu0 %v4249
    %4784 = vmatprep.subr.mxu0 %v4254
    %4785 = vmatpush1.msra.mxu0 %v4253
    %4786 = vmatprep.subr.mxu0 %v4258
    %4787 = vmatpush1.msra.mxu0 %v4257
    %4788 = vmatprep.subr.mxu0 %v4262
    %4789 = vmatpush1.msra.mxu0 %v4261
    %4790 = vmatprep.subr.mxu0 %v4266
    %4791 = vmatpush1.msra.mxu0 %v4265
    %4792 = vmatprep.subr.mxu0 %v4270
    %4793 = vmatpush1.msra.mxu0 %v4269
    %4794 = vmatprep.subr.mxu0 %v4274
    %4795 = vmatpush1.msra.mxu0 %v4273
    %4796 = vmatprep.subr.mxu0 %v4278
    %4797 = vmatpush1.msra.mxu0 %v4277
    %4798 = vmatprep.subr.mxu0 %v4282
    %4799 = vmatpush1.msra.mxu0 %v4281
    %4800 = vmatprep.subr.mxu0 %v4286
    %4801 = vmatpush1.msra.mxu0 %v4285
    %4802 = vmatprep.subr.mxu0 %v4290
    %4803 = vmatpush1.msra.mxu0 %v4289
    %4804 = vmatprep.subr.mxu0 %v4294
    %4805 = vmatpush1.msra.mxu0 %v4293
    %4806 = vmatprep.subr.mxu0 %v4298
    %4807 = vmatpush1.msra.mxu0 %v4297
    %4808 = vmatprep.subr.mxu0 %v4302
    %4809 = vmatpush1.msra.mxu0 %v4301
    %4810 = vmatprep.subr.mxu0 %v4306
    %4811 = vmatpush1.msra.mxu0 %v4305
    %4812 = vmatprep.subr.mxu0 %v4310
    %4813 = vmatpush1.msra.mxu0 %v4309
    %4814 = vmatprep.subr.mxu0 %v4314
    %4815 = vmatpush1.msra.mxu0 %v4313
    %4816 = vmatprep.subr.mxu0 %v4318
    %4817 = vmatpush1.msra.mxu0 %v4317
    %4818 = vmatprep.subr.mxu0 %v4322
    %4819 = vmatpush1.msra.mxu0 %v4321
    %4820 = vmatprep.subr.mxu0 %v4326
    %4821 = vmatpush1.msra.mxu0 %v4325
    %4822 = vmatprep.subr.mxu0 %v4330
    %4823 = vmatpush1.msra.mxu0 %v4329
    %4824 = vmatprep.subr.mxu0 %v4334
    %4825 = vmatpush1.msra.mxu0 %v4333
    %4826 = vmatprep.subr.mxu0 %v4338
    %4827 = vmatpush1.msra.mxu0 %v4337
    %4828 = vmatprep.subr.mxu0 %v4342
    %4829 = vmatpush1.msra.mxu0 %v4341
    %4830 = vmatprep.subr.mxu0 %v4346
    %4831 = vmatpush1.msra.mxu0 %v4345
    %4832 = vmatprep.subr.mxu0 %v4350
    %4833 = vmatpush1.msra.mxu0 %v4349
    %4834 = vmatprep.subr.mxu0 %v4354
    %4835 = vmatpush1.msra.mxu0 %v4353
    %4836 = vmatprep.subr.mxu0 %v4358
    %4837 = vmatpush1.msra.mxu0 %v4357
    %4838 = vmatprep.subr.mxu0 %v4362
    %4839 = vmatpush1.msra.mxu0 %v4361
    %4840 = vmatprep.subr.mxu0 %v4366
    %4841 = vmatpush1.msra.mxu0 %v4365
    %4842 = vmatprep.subr.mxu0 %v4370
    %4843 = vmatpush1.msra.mxu0 %v4369
    %4844 = vmatprep.mubr.f32.mxu0 %v4238
    %4845 = vmatmul.mubr.f32.gmra.mrb[0].mxu0 %v4237
    %v4846 = vpop.f32.mrb[0].mxu0
    %v4847 = vadd.f32 %v4763, %v4846
    %v4848 = vpop.f32.mrb[0].mxu0
    %v4849 = vadd.f32 %v4767, %v4848
    %4850 = vdwg.mxu0
    %4851 = vmatprep.subr.mxu0 %v4374
    %4852 = vmatpush1.msra.mxu0 %v4373
    %4853 = vmatprep.subr.mxu0 %v4378
    %4854 = vmatpush1.msra.mxu0 %v4377
    %4855 = vmatprep.subr.mxu0 %v4382
    %4856 = vmatpush1.msra.mxu0 %v4381
    %4857 = vmatprep.subr.mxu0 %v4386
    %4858 = vmatpush1.msra.mxu0 %v4385
    %4859 = vmatprep.subr.mxu0 %v4390
    %4860 = vmatpush1.msra.mxu0 %v4389
    %4861 = vmatprep.subr.mxu0 %v4394
    %4862 = vmatpush1.msra.mxu0 %v4393
    %4863 = vmatprep.subr.mxu0 %v4398
    %4864 = vmatpush1.msra.mxu0 %v4397
    %4865 = vmatprep.subr.mxu0 %v4402
    %4866 = vmatpush1.msra.mxu0 %v4401
    %4867 = vmatprep.subr.mxu0 %v4406
    %4868 = vmatpush1.msra.mxu0 %v4405
    %4869 = vmatprep.subr.mxu0 %v4410
    %4870 = vmatpush1.msra.mxu0 %v4409
    %4871 = vmatprep.subr.mxu0 %v4414
    %4872 = vmatpush1.msra.mxu0 %v4413
    %4873 = vmatprep.subr.mxu0 %v4418
    %4874 = vmatpush1.msra.mxu0 %v4417
    %4875 = vmatprep.subr.mxu0 %v4422
    %4876 = vmatpush1.msra.mxu0 %v4421
    %4877 = vmatprep.subr.mxu0 %v4426
    %4878 = vmatpush1.msra.mxu0 %v4425
    %4879 = vmatprep.subr.mxu0 %v4430
    %4880 = vmatpush1.msra.mxu0 %v4429
    %4881 = vmatprep.subr.mxu0 %v4434
    %4882 = vmatpush1.msra.mxu0 %v4433
    %4883 = vmatprep.subr.mxu0 %v4438
    %4884 = vmatpush1.msra.mxu0 %v4437
    %4885 = vmatprep.subr.mxu0 %v4442
    %4886 = vmatpush1.msra.mxu0 %v4441
    %4887 = vmatprep.subr.mxu0 %v4446
    %4888 = vmatpush1.msra.mxu0 %v4445
    %4889 = vmatprep.subr.mxu0 %v4450
    %4890 = vmatpush1.msra.mxu0 %v4449
    %4891 = vmatprep.subr.mxu0 %v4454
    %4892 = vmatpush1.msra.mxu0 %v4453
    %4893 = vmatprep.subr.mxu0 %v4458
    %4894 = vmatpush1.msra.mxu0 %v4457
    %4895 = vmatprep.subr.mxu0 %v4462
    %4896 = vmatpush1.msra.mxu0 %v4461
    %4897 = vmatprep.subr.mxu0 %v4466
    %4898 = vmatpush1.msra.mxu0 %v4465
    %4899 = vmatprep.subr.mxu0 %v4470
    %4900 = vmatpush1.msra.mxu0 %v4469
    %4901 = vmatprep.subr.mxu0 %v4474
    %4902 = vmatpush1.msra.mxu0 %v4473
    %4903 = vmatprep.subr.mxu0 %v4478
    %4904 = vmatpush1.msra.mxu0 %v4477
    %4905 = vmatprep.subr.mxu0 %v4482
    %4906 = vmatpush1.msra.mxu0 %v4481
    %4907 = vmatprep.subr.mxu0 %v4486
    %4908 = vmatpush1.msra.mxu0 %v4485
    %4909 = vmatprep.subr.mxu0 %v4490
    %4910 = vmatpush1.msra.mxu0 %v4489
    %4911 = vmatprep.subr.mxu0 %v4494
    %4912 = vmatpush1.msra.mxu0 %v4493
    %4913 = vmatprep.subr.mxu0 %v4498
    %4914 = vmatpush1.msra.mxu0 %v4497
    %4915 = vmatprep.mubr.f32.mxu0 %v4240
    %4916 = vmatmul.mubr.f32.gmra.mrb[0].mxu0 %v4239
    %v4917 = vpop.f32.mrb[0].mxu0
    %v4918 = vadd.f32 %v4847, %v4917
    %v4919 = vpop.f32.mrb[0].mxu0
    %v4920 = vadd.f32 %v4849, %v4919
    %4921 = vdwg.mxu0
    %4922 = vmatprep.subr.mxu0 %v4502
    %4923 = vmatpush1.msra.mxu0 %v4501
    %4924 = vmatprep.subr.mxu0 %v4506
    %4925 = vmatpush1.msra.mxu0 %v4505
    %4926 = vmatprep.subr.mxu0 %v4510
    %4927 = vmatpush1.msra.mxu0 %v4509
    %4928 = vmatprep.subr.mxu0 %v4514
    %4929 = vmatpush1.msra.mxu0 %v4513
    %4930 = vmatprep.subr.mxu0 %v4518
    %4931 = vmatpush1.msra.mxu0 %v4517
    %4932 = vmatprep.subr.mxu0 %v4522
    %4933 = vmatpush1.msra.mxu0 %v4521
    %4934 = vmatprep.subr.mxu0 %v4526
    %4935 = vmatpush1.msra.mxu0 %v4525
    %4936 = vmatprep.subr.mxu0 %v4530
    %4937 = vmatpush1.msra.mxu0 %v4529
    %4938 = vmatprep.subr.mxu0 %v4534
    %4939 = vmatpush1.msra.mxu0 %v4533
    %4940 = vmatprep.subr.mxu0 %v4538
    %4941 = vmatpush1.msra.mxu0 %v4537
    %4942 = vmatprep.subr.mxu0 %v4542
    %4943 = vmatpush1.msra.mxu0 %v4541
    %4944 = vmatprep.subr.mxu0 %v4546
    %4945 = vmatpush1.msra.mxu0 %v4545
    %4946 = vmatprep.subr.mxu0 %v4550
    %4947 = vmatpush1.msra.mxu0 %v4549
    %4948 = vmatprep.subr.mxu0 %v4554
    %4949 = vmatpush1.msra.mxu0 %v4553
    %4950 = vmatprep.subr.mxu0 %v4558
    %4951 = vmatpush1.msra.mxu0 %v4557
    %4952 = vmatprep.subr.mxu0 %v4562
    %4953 = vmatpush1.msra.mxu0 %v4561
    %4954 = vmatprep.subr.mxu0 %v4566
    %4955 = vmatpush1.msra.mxu0 %v4565
    %4956 = vmatprep.subr.mxu0 %v4570
    %4957 = vmatpush1.msra.mxu0 %v4569
    %4958 = vmatprep.subr.mxu0 %v4574
    %4959 = vmatpush1.msra.mxu0 %v4573
    %4960 = vmatprep.subr.mxu0 %v4578
    %4961 = vmatpush1.msra.mxu0 %v4577
    %4962 = vmatprep.subr.mxu0 %v4582
    %4963 = vmatpush1.msra.mxu0 %v4581
    %4964 = vmatprep.subr.mxu0 %v4586
    %4965 = vmatpush1.msra.mxu0 %v4585
    %4966 = vmatprep.subr.mxu0 %v4590
    %4967 = vmatpush1.msra.mxu0 %v4589
    %4968 = vmatprep.subr.mxu0 %v4594
    %4969 = vmatpush1.msra.mxu0 %v4593
    %4970 = vmatprep.subr.mxu0 %v4598
    %4971 = vmatpush1.msra.mxu0 %v4597
    %4972 = vmatprep.subr.mxu0 %v4602
    %4973 = vmatpush1.msra.mxu0 %v4601
    %4974 = vmatprep.subr.mxu0 %v4606
    %4975 = vmatpush1.msra.mxu0 %v4605
    %4976 = vmatprep.subr.mxu0 %v4610
    %4977 = vmatpush1.msra.mxu0 %v4609
    %4978 = vmatprep.subr.mxu0 %v4614
    %4979 = vmatpush1.msra.mxu0 %v4613
    %4980 = vmatprep.subr.mxu0 %v4618
    %4981 = vmatpush1.msra.mxu0 %v4617
    %4982 = vmatprep.subr.mxu0 %v4622
    %4983 = vmatpush1.msra.mxu0 %v4621
    %4984 = vmatprep.subr.mxu0 %v4626
    %4985 = vmatpush1.msra.mxu0 %v4625
    %4986 = vmatprep.mubr.f32.mxu0 %v4242
    %4987 = vmatmul.mubr.f32.gmra.mrb[0].mxu0 %v4241
    %v4988 = vpop.f32.mrb[0].mxu0
    %v4989 = vadd.f32 %v4918, %v4988
    %v4990 = vpop.f32.mrb[0].mxu0
    %v4991 = vadd.f32 %v4920, %v4990
    %4992 = vdwg.mxu0
    %4993 = vmatprep.subr.mxu0 %v4630
    %4994 = vmatpush1.msra.mxu0 %v4629
    %4995 = vmatprep.subr.mxu0 %v4634
    %4996 = vmatpush1.msra.mxu0 %v4633
    %4997 = vmatprep.subr.mxu0 %v4638
    %4998 = vmatpush1.msra.mxu0 %v4637
    %4999 = vmatprep.subr.mxu0 %v4642
    %5000 = vmatpush1.msra.mxu0 %v4641
    %5001 = vmatprep.subr.mxu0 %v4646
    %5002 = vmatpush1.msra.mxu0 %v4645
    %5003 = vmatprep.subr.mxu0 %v4650
    %5004 = vmatpush1.msra.mxu0 %v4649
    %5005 = vmatprep.subr.mxu0 %v4654
    %5006 = vmatpush1.msra.mxu0 %v4653
    %5007 = vmatprep.subr.mxu0 %v4658
    %5008 = vmatpush1.msra.mxu0 %v4657
    %5009 = vmatprep.subr.mxu0 %v4662
    %5010 = vmatpush1.msra.mxu0 %v4661
    %5011 = vmatprep.subr.mxu0 %v4666
    %5012 = vmatpush1.msra.mxu0 %v4665
    %5013 = vmatprep.subr.mxu0 %v4670
    %5014 = vmatpush1.msra.mxu0 %v4669
    %5015 = vmatprep.subr.mxu0 %v4674
    %5016 = vmatpush1.msra.mxu0 %v4673
    %5017 = vmatprep.subr.mxu0 %v4678
    %5018 = vmatpush1.msra.mxu0 %v4677
    %5019 = vmatprep.subr.mxu0 %v4682
    %5020 = vmatpush1.msra.mxu0 %v4681
    %5021 = vmatprep.subr.mxu0 %v4686
    %5022 = vmatpush1.msra.mxu0 %v4685
    %5023 = vmatprep.subr.mxu0 %v4690
    %5024 = vmatpush1.msra.mxu0 %v4689
    %5025 = vmatprep.subr.mxu0 %v4694
    %5026 = vmatpush1.msra.mxu0 %v4693
    %5027 = vmatprep.subr.mxu0 %v4698
    %5028 = vmatpush1.msra.mxu0 %v4697
    %5029 = vmatprep.subr.mxu0 %v4702
    %5030 = vmatpush1.msra.mxu0 %v4701
    %5031 = vmatprep.subr.mxu0 %v4706
    %5032 = vmatpush1.msra.mxu0 %v4705
    %5033 = vmatprep.subr.mxu0 %v4710
    %5034 = vmatpush1.msra.mxu0 %v4709
    %5035 = vmatprep.subr.mxu0 %v4714
    %5036 = vmatpush1.msra.mxu0 %v4713
    %5037 = vmatprep.subr.mxu0 %v4718
    %5038 = vmatpush1.msra.mxu0 %v4717
    %5039 = vmatprep.subr.mxu0 %v4722
    %5040 = vmatpush1.msra.mxu0 %v4721
    %5041 = vmatprep.subr.mxu0 %v4726
    %5042 = vmatpush1.msra.mxu0 %v4725
    %5043 = vmatprep.subr.mxu0 %v4730
    %5044 = vmatpush1.msra.mxu0 %v4729
    %5045 = vmatprep.subr.mxu0 %v4734
    %5046 = vmatpush1.msra.mxu0 %v4733
    %5047 = vmatprep.subr.mxu0 %v4738
    %5048 = vmatpush1.msra.mxu0 %v4737
    %5049 = vmatprep.subr.mxu0 %v4742
    %5050 = vmatpush1.msra.mxu0 %v4741
    %5051 = vmatprep.subr.mxu0 %v4746
    %5052 = vmatpush1.msra.mxu0 %v4745
    %5053 = vmatprep.subr.mxu0 %v4750
    %5054 = vmatpush1.msra.mxu0 %v4749
    %5055 = vmatprep.subr.mxu0 %v4754
    %5056 = vmatpush1.msra.mxu0 %v4753
    %5057 = vmatprep.mubr.f32.mxu0 %v4244
    %5058 = vmatmul.mubr.f32.gmra.mrb[0].mxu0 %v4243
    %v5059 = vpop.f32.mrb[0].mxu0
    %v5060 = vadd.f32 %v4989, %v5059
    %v5061 = vpop.f32.mrb[0].mxu0
    %v5062 = vadd.f32 %v4991, %v5061
    %5063 = vdwg.mxu0
    %5064 = vmatprep.subr.mxu0 %v4248
    %5065 = vmatpush1.msra.mxu0 %v4247
    %5066 = vmatprep.subr.mxu0 %v4252
    %5067 = vmatpush1.msra.mxu0 %v4251
    %5068 = vmatprep.subr.mxu0 %v4256
    %5069 = vmatpush1.msra.mxu0 %v4255
    %5070 = vmatprep.subr.mxu0 %v4260
    %5071 = vmatpush1.msra.mxu0 %v4259
    %5072 = vmatprep.subr.mxu0 %v4264
    %5073 = vmatpush1.msra.mxu0 %v4263
    %5074 = vmatprep.subr.mxu0 %v4268
    %5075 = vmatpush1.msra.mxu0 %v4267
    %5076 = vmatprep.subr.mxu0 %v4272
    %5077 = vmatpush1.msra.mxu0 %v4271
    %5078 = vmatprep.subr.mxu0 %v4276
    %5079 = vmatpush1.msra.mxu0 %v4275
    %5080 = vmatprep.subr.mxu0 %v4280
    %5081 = vmatpush1.msra.mxu0 %v4279
    %5082 = vmatprep.subr.mxu0 %v4284
    %5083 = vmatpush1.msra.mxu0 %v4283
    %5084 = vmatprep.subr.mxu0 %v4288
    %5085 = vmatpush1.msra.mxu0 %v4287
    %5086 = vmatprep.subr.mxu0 %v4292
    %5087 = vmatpush1.msra.mxu0 %v4291
    %5088 = vmatprep.subr.mxu0 %v4296
    %5089 = vmatpush1.msra.mxu0 %v4295
    %5090 = vmatprep.subr.mxu0 %v4300
    %5091 = vmatpush1.msra.mxu0 %v4299
    %5092 = vmatprep.subr.mxu0 %v4304
    %5093 = vmatpush1.msra.mxu0 %v4303
    %5094 = vmatprep.subr.mxu0 %v4308
    %5095 = vmatpush1.msra.mxu0 %v4307
    %5096 = vmatprep.subr.mxu0 %v4312
    %5097 = vmatpush1.msra.mxu0 %v4311
    %5098 = vmatprep.subr.mxu0 %v4316
    %5099 = vmatpush1.msra.mxu0 %v4315
    %5100 = vmatprep.subr.mxu0 %v4320
    %5101 = vmatpush1.msra.mxu0 %v4319
    %5102 = vmatprep.subr.mxu0 %v4324
    %5103 = vmatpush1.msra.mxu0 %v4323
    %5104 = vmatprep.subr.mxu0 %v4328
    %5105 = vmatpush1.msra.mxu0 %v4327
    %5106 = vmatprep.subr.mxu0 %v4332
    %5107 = vmatpush1.msra.mxu0 %v4331
    %5108 = vmatprep.subr.mxu0 %v4336
    %5109 = vmatpush1.msra.mxu0 %v4335
    %5110 = vmatprep.subr.mxu0 %v4340
    %5111 = vmatpush1.msra.mxu0 %v4339
    %5112 = vmatprep.subr.mxu0 %v4344
    %5113 = vmatpush1.msra.mxu0 %v4343
    %5114 = vmatprep.subr.mxu0 %v4348
    %5115 = vmatpush1.msra.mxu0 %v4347
    %5116 = vmatprep.subr.mxu0 %v4352
    %5117 = vmatpush1.msra.mxu0 %v4351
    %5118 = vmatprep.subr.mxu0 %v4356
    %5119 = vmatpush1.msra.mxu0 %v4355
    %5120 = vmatprep.subr.mxu0 %v4360
    %5121 = vmatpush1.msra.mxu0 %v4359
    %5122 = vmatprep.subr.mxu0 %v4364
    %5123 = vmatpush1.msra.mxu0 %v4363
    %5124 = vmatprep.subr.mxu0 %v4368
    %5125 = vmatpush1.msra.mxu0 %v4367
    %5126 = vmatprep.subr.mxu0 %v4372
    %5127 = vmatpush1.msra.mxu0 %v4371
    %5128 = vmatprep.mubr.f32.mxu0 %v4238
    %5129 = vmatmul.mubr.f32.gmra.mrb[0].mxu0 %v4237
    %v5130 = vpop.f32.mrb[0].mxu0
    %v5131 = vadd.f32 %v4771, %v5130
    %v5132 = vpop.f32.mrb[0].mxu0
    %v5133 = vadd.f32 %v4775, %v5132
    %5134 = vdwg.mxu0
    %5135 = vmatprep.subr.mxu0 %v4376
    %5136 = vmatpush1.msra.mxu0 %v4375
    %5137 = vmatprep.subr.mxu0 %v4380
    %5138 = vmatpush1.msra.mxu0 %v4379
    %5139 = vmatprep.subr.mxu0 %v4384
    %5140 = vmatpush1.msra.mxu0 %v4383
    %5141 = vmatprep.subr.mxu0 %v4388
    %5142 = vmatpush1.msra.mxu0 %v4387
    %5143 = vmatprep.subr.mxu0 %v4392
    %5144 = vmatpush1.msra.mxu0 %v4391
    %5145 = vmatprep.subr.mxu0 %v4396
    %5146 = vmatpush1.msra.mxu0 %v4395
    %5147 = vmatprep.subr.mxu0 %v4400
    %5148 = vmatpush1.msra.mxu0 %v4399
    %5149 = vmatprep.subr.mxu0 %v4404
    %5150 = vmatpush1.msra.mxu0 %v4403
    %5151 = vmatprep.subr.mxu0 %v4408
    %5152 = vmatpush1.msra.mxu0 %v4407
    %5153 = vmatprep.subr.mxu0 %v4412
    %5154 = vmatpush1.msra.mxu0 %v4411
    %5155 = vmatprep.subr.mxu0 %v4416
    %5156 = vmatpush1.msra.mxu0 %v4415
    %5157 = vmatprep.subr.mxu0 %v4420
    %5158 = vmatpush1.msra.mxu0 %v4419
    %5159 = vmatprep.subr.mxu0 %v4424
    %5160 = vmatpush1.msra.mxu0 %v4423
    %5161 = vmatprep.subr.mxu0 %v4428
    %5162 = vmatpush1.msra.mxu0 %v4427
    %5163 = vmatprep.subr.mxu0 %v4432
    %5164 = vmatpush1.msra.mxu0 %v4431
    %5165 = vmatprep.subr.mxu0 %v4436
    %5166 = vmatpush1.msra.mxu0 %v4435
    %5167 = vmatprep.subr.mxu0 %v4440
    %5168 = vmatpush1.msra.mxu0 %v4439
    %5169 = vmatprep.subr.mxu0 %v4444
    %5170 = vmatpush1.msra.mxu0 %v4443
    %5171 = vmatprep.subr.mxu0 %v4448
    %5172 = vmatpush1.msra.mxu0 %v4447
    %5173 = vmatprep.subr.mxu0 %v4452
    %5174 = vmatpush1.msra.mxu0 %v4451
    %5175 = vmatprep.subr.mxu0 %v4456
    %5176 = vmatpush1.msra.mxu0 %v4455
    %5177 = vmatprep.subr.mxu0 %v4460
    %5178 = vmatpush1.msra.mxu0 %v4459
    %5179 = vmatprep.subr.mxu0 %v4464
    %5180 = vmatpush1.msra.mxu0 %v4463
    %5181 = vmatprep.subr.mxu0 %v4468
    %5182 = vmatpush1.msra.mxu0 %v4467
    %5183 = vmatprep.subr.mxu0 %v4472
    %5184 = vmatpush1.msra.mxu0 %v4471
    %5185 = vmatprep.subr.mxu0 %v4476
    %5186 = vmatpush1.msra.mxu0 %v4475
    %5187 = vmatprep.subr.mxu0 %v4480
    %5188 = vmatpush1.msra.mxu0 %v4479
    %5189 = vmatprep.subr.mxu0 %v4484
    %5190 = vmatpush1.msra.mxu0 %v4483
    %5191 = vmatprep.subr.mxu0 %v4488
    %5192 = vmatpush1.msra.mxu0 %v4487
    %5193 = vmatprep.subr.mxu0 %v4492
    %5194 = vmatpush1.msra.mxu0 %v4491
    %5195 = vmatprep.subr.mxu0 %v4496
    %5196 = vmatpush1.msra.mxu0 %v4495
    %5197 = vmatprep.subr.mxu0 %v4500
    %5198 = vmatpush1.msra.mxu0 %v4499
    %5199 = vmatprep.mubr.f32.mxu0 %v4240
    %5200 = vmatmul.mubr.f32.gmra.mrb[0].mxu0 %v4239
    %v5201 = vpop.f32.mrb[0].mxu0
    %v5202 = vadd.f32 %v5131, %v5201
    %v5203 = vpop.f32.mrb[0].mxu0
    %v5204 = vadd.f32 %v5133, %v5203
    %5205 = vdwg.mxu0
    %5206 = vmatprep.subr.mxu0 %v4504
    %5207 = vmatpush1.msra.mxu0 %v4503
    %5208 = vmatprep.subr.mxu0 %v4508
    %5209 = vmatpush1.msra.mxu0 %v4507
    %5210 = vmatprep.subr.mxu0 %v4512
    %5211 = vmatpush1.msra.mxu0 %v4511
    %5212 = vmatprep.subr.mxu0 %v4516
    %5213 = vmatpush1.msra.mxu0 %v4515
    %5214 = vmatprep.subr.mxu0 %v4520
    %5215 = vmatpush1.msra.mxu0 %v4519
    %5216 = vmatprep.subr.mxu0 %v4524
    %5217 = vmatpush1.msra.mxu0 %v4523
    %5218 = vmatprep.subr.mxu0 %v4528
    %5219 = vmatpush1.msra.mxu0 %v4527
    %5220 = vmatprep.subr.mxu0 %v4532
    %5221 = vmatpush1.msra.mxu0 %v4531
    %5222 = vmatprep.subr.mxu0 %v4536
    %5223 = vmatpush1.msra.mxu0 %v4535
    %5224 = vmatprep.subr.mxu0 %v4540
    %5225 = vmatpush1.msra.mxu0 %v4539
    %5226 = vmatprep.subr.mxu0 %v4544
    %5227 = vmatpush1.msra.mxu0 %v4543
    %5228 = vmatprep.subr.mxu0 %v4548
    %5229 = vmatpush1.msra.mxu0 %v4547
    %5230 = vmatprep.subr.mxu0 %v4552
    %5231 = vmatpush1.msra.mxu0 %v4551
    %5232 = vmatprep.subr.mxu0 %v4556
    %5233 = vmatpush1.msra.mxu0 %v4555
    %5234 = vmatprep.subr.mxu0 %v4560
    %5235 = vmatpush1.msra.mxu0 %v4559
    %5236 = vmatprep.subr.mxu0 %v4564
    %5237 = vmatpush1.msra.mxu0 %v4563
    %5238 = vmatprep.subr.mxu0 %v4568
    %5239 = vmatpush1.msra.mxu0 %v4567
    %5240 = vmatprep.subr.mxu0 %v4572
    %5241 = vmatpush1.msra.mxu0 %v4571
    %5242 = vmatprep.subr.mxu0 %v4576
    %5243 = vmatpush1.msra.mxu0 %v4575
    %5244 = vmatprep.subr.mxu0 %v4580
    %5245 = vmatpush1.msra.mxu0 %v4579
    %5246 = vmatprep.subr.mxu0 %v4584
    %5247 = vmatpush1.msra.mxu0 %v4583
    %5248 = vmatprep.subr.mxu0 %v4588
    %5249 = vmatpush1.msra.mxu0 %v4587
    %5250 = vmatprep.subr.mxu0 %v4592
    %5251 = vmatpush1.msra.mxu0 %v4591
    %5252 = vmatprep.subr.mxu0 %v4596
    %5253 = vmatpush1.msra.mxu0 %v4595
    %5254 = vmatprep.subr.mxu0 %v4600
    %5255 = vmatpush1.msra.mxu0 %v4599
    %5256 = vmatprep.subr.mxu0 %v4604
    %5257 = vmatpush1.msra.mxu0 %v4603
    %5258 = vmatprep.subr.mxu0 %v4608
    %5259 = vmatpush1.msra.mxu0 %v4607
    %5260 = vmatprep.subr.mxu0 %v4612
    %5261 = vmatpush1.msra.mxu0 %v4611
    %5262 = vmatprep.subr.mxu0 %v4616
    %5263 = vmatpush1.msra.mxu0 %v4615
    %5264 = vmatprep.subr.mxu0 %v4620
    %5265 = vmatpush1.msra.mxu0 %v4619
    %5266 = vmatprep.subr.mxu0 %v4624
    %5267 = vmatpush1.msra.mxu0 %v4623
    %5268 = vmatprep.subr.mxu0 %v4628
    %5269 = vmatpush1.msra.mxu0 %v4627
    %5270 = vmatprep.mubr.f32.mxu0 %v4242
    %5271 = vmatmul.mubr.f32.gmra.mrb[0].mxu0 %v4241
    %v5272 = vpop.f32.mrb[0].mxu0
    %v5273 = vadd.f32 %v5202, %v5272
    %v5274 = vpop.f32.mrb[0].mxu0
    %v5275 = vadd.f32 %v5204, %v5274
    %5276 = vdwg.mxu0
    %5277 = vmatprep.subr.mxu0 %v4632
    %5278 = vmatpush1.msra.mxu0 %v4631
    %5279 = vmatprep.subr.mxu0 %v4636
    %5280 = vmatpush1.msra.mxu0 %v4635
    %5281 = vmatprep.subr.mxu0 %v4640
    %5282 = vmatpush1.msra.mxu0 %v4639
    %5283 = vmatprep.subr.mxu0 %v4644
    %5284 = vmatpush1.msra.mxu0 %v4643
    %5285 = vmatprep.subr.mxu0 %v4648
    %5286 = vmatpush1.msra.mxu0 %v4647
    %5287 = vmatprep.subr.mxu0 %v4652
    %5288 = vmatpush1.msra.mxu0 %v4651
    %5289 = vmatprep.subr.mxu0 %v4656
    %5290 = vmatpush1.msra.mxu0 %v4655
    %5291 = vmatprep.subr.mxu0 %v4660
    %5292 = vmatpush1.msra.mxu0 %v4659
    %5293 = vmatprep.subr.mxu0 %v4664
    %5294 = vmatpush1.msra.mxu0 %v4663
    %5295 = vmatprep.subr.mxu0 %v4668
    %5296 = vmatpush1.msra.mxu0 %v4667
    %5297 = vmatprep.subr.mxu0 %v4672
    %5298 = vmatpush1.msra.mxu0 %v4671
    %5299 = vmatprep.subr.mxu0 %v4676
    %5300 = vmatpush1.msra.mxu0 %v4675
    %5301 = vmatprep.subr.mxu0 %v4680
    %5302 = vmatpush1.msra.mxu0 %v4679
    %5303 = vmatprep.subr.mxu0 %v4684
    %5304 = vmatpush1.msra.mxu0 %v4683
    %5305 = vmatprep.subr.mxu0 %v4688
    %5306 = vmatpush1.msra.mxu0 %v4687
    %5307 = vmatprep.subr.mxu0 %v4692
    %5308 = vmatpush1.msra.mxu0 %v4691
    %5309 = vmatprep.subr.mxu0 %v4696
    %5310 = vmatpush1.msra.mxu0 %v4695
    %5311 = vmatprep.subr.mxu0 %v4700
    %5312 = vmatpush1.msra.mxu0 %v4699
    %5313 = vmatprep.subr.mxu0 %v4704
    %5314 = vmatpush1.msra.mxu0 %v4703
    %5315 = vmatprep.subr.mxu0 %v4708
    %5316 = vmatpush1.msra.mxu0 %v4707
    %5317 = vmatprep.subr.mxu0 %v4712
    %5318 = vmatpush1.msra.mxu0 %v4711
    %5319 = vmatprep.subr.mxu0 %v4716
    %5320 = vmatpush1.msra.mxu0 %v4715
    %5321 = vmatprep.subr.mxu0 %v4720
    %5322 = vmatpush1.msra.mxu0 %v4719
    %5323 = vmatprep.subr.mxu0 %v4724
    %5324 = vmatpush1.msra.mxu0 %v4723
    %5325 = vmatprep.subr.mxu0 %v4728
    %5326 = vmatpush1.msra.mxu0 %v4727
    %5327 = vmatprep.subr.mxu0 %v4732
    %5328 = vmatpush1.msra.mxu0 %v4731
    %5329 = vmatprep.subr.mxu0 %v4736
    %5330 = vmatpush1.msra.mxu0 %v4735
    %5331 = vmatprep.subr.mxu0 %v4740
    %5332 = vmatpush1.msra.mxu0 %v4739
    %5333 = vmatprep.subr.mxu0 %v4744
    %5334 = vmatpush1.msra.mxu0 %v4743
    %5335 = vmatprep.subr.mxu0 %v4748
    %5336 = vmatpush1.msra.mxu0 %v4747
    %5337 = vmatprep.subr.mxu0 %v4752
    %5338 = vmatpush1.msra.mxu0 %v4751
    %5339 = vmatprep.subr.mxu0 %v4756
    %5340 = vmatpush1.msra.mxu0 %v4755
    %5341 = vmatprep.mubr.f32.mxu0 %v4244
    %5342 = vmatmul.mubr.f32.gmra.mrb[0].mxu0 %v4243
    %v5343 = vpop.f32.mrb[0].mxu0
    %v5344 = vadd.f32 %v5273, %v5343
    %v5345 = vpop.f32.mrb[0].mxu0
    %v5346 = vadd.f32 %v5275, %v5345
    %5347 = vdwg.mxu0
    %v5348 = vmax.f32 %v5060, 0.0
    %v5349 = vmax.f32 %v5062, 0.0
    %v5350 = vmax.f32 %v5344, 0.0
    %v5351 = vmax.f32 %v5346, 0.0
    %v5352 = vld [vmem:[#allocation10] sm:$0xff]
    %v5353 = vld [vmem:[#allocation10 + $0x8] sm:$0xff]
    %v5354 = vld [vmem:[#allocation10 + $0x10] sm:$0xff]
    %v5355 = vld [vmem:[#allocation10 + $0x18] sm:$0xff]
    %v5356 = vld [vmem:[#allocation10 + $0x20] sm:$0xff]
    %v5357 = vld [vmem:[#allocation10 + $0x28] sm:$0xff]
    %v5358 = vld [vmem:[#allocation10 + $0x30] sm:$0xff]
    %v5359 = vld [vmem:[#allocation10 + $0x38] sm:$0xff]
    %v5360 = vld [vmem:[#allocation10 + $0x40] sm:$0xff]
    %v5361 = vld [vmem:[#allocation10 + $0x48] sm:$0xff]
    %v5362 = vld [vmem:[#allocation10 + $0x50] sm:$0xff]
    %v5363 = vld [vmem:[#allocation10 + $0x58] sm:$0xff]
    %v5364 = vld [vmem:[#allocation10 + $0x60] sm:$0xff]
    %v5365 = vld [vmem:[#allocation10 + $0x68] sm:$0xff]
    %v5366 = vld [vmem:[#allocation10 + $0x70] sm:$0xff]
    %v5367 = vld [vmem:[#allocation10 + $0x78] sm:$0xff]
    %v5368 = vld [vmem:[#allocation10 + $0x80] sm:$0xff]
    %v5369 = vld [vmem:[#allocation10 + $0x88] sm:$0xff]
    %v5370 = vld [vmem:[#allocation10 + $0x90] sm:$0xff]
    %v5371 = vld [vmem:[#allocation10 + $0x98] sm:$0xff]
    %v5372 = vld [vmem:[#allocation10 + $0xa0] sm:$0xff]
    %v5373 = vld [vmem:[#allocation10 + $0xa8] sm:$0xff]
    %v5374 = vld [vmem:[#allocation10 + $0xb0] sm:$0xff]
    %v5375 = vld [vmem:[#allocation10 + $0xb8] sm:$0xff]
    %v5376 = vld [vmem:[#allocation10 + $0xc0] sm:$0xff]
    %v5377 = vld [vmem:[#allocation10 + $0xc8] sm:$0xff]
    %v5378 = vld [vmem:[#allocation10 + $0xd0] sm:$0xff]
    %v5379 = vld [vmem:[#allocation10 + $0xd8] sm:$0xff]
    %v5380 = vld [vmem:[#allocation10 + $0xe0] sm:$0xff]
    %v5381 = vld [vmem:[#allocation10 + $0xe8] sm:$0xff]
    %v5382 = vld [vmem:[#allocation10 + $0xf0] sm:$0xff]
    %v5383 = vld [vmem:[#allocation10 + $0xf8] sm:$0xff]
    %v5384 = vld [vmem:[#allocation10 + $0x100] sm:$0xff]
    %v5385 = vld [vmem:[#allocation10 + $0x108] sm:$0xff]
    %v5386 = vld [vmem:[#allocation10 + $0x110] sm:$0xff]
    %v5387 = vld [vmem:[#allocation10 + $0x118] sm:$0xff]
    %v5388 = vld [vmem:[#allocation10 + $0x120] sm:$0xff]
    %v5389 = vld [vmem:[#allocation10 + $0x128] sm:$0xff]
    %v5390 = vld [vmem:[#allocation10 + $0x130] sm:$0xff]
    %v5391 = vld [vmem:[#allocation10 + $0x138] sm:$0xff]
    %v5392 = vld [vmem:[#allocation10 + $0x140] sm:$0xff]
    %v5393 = vld [vmem:[#allocation10 + $0x148] sm:$0xff]
    %v5394 = vld [vmem:[#allocation10 + $0x150] sm:$0xff]
    %v5395 = vld [vmem:[#allocation10 + $0x158] sm:$0xff]
    %v5396 = vld [vmem:[#allocation10 + $0x160] sm:$0xff]
    %v5397 = vld [vmem:[#allocation10 + $0x168] sm:$0xff]
    %v5398 = vld [vmem:[#allocation10 + $0x170] sm:$0xff]
    %v5399 = vld [vmem:[#allocation10 + $0x178] sm:$0xff]
    %v5400 = vld [vmem:[#allocation10 + $0x180] sm:$0xff]
    %v5401 = vld [vmem:[#allocation10 + $0x188] sm:$0xff]
    %v5402 = vld [vmem:[#allocation10 + $0x190] sm:$0xff]
    %v5403 = vld [vmem:[#allocation10 + $0x198] sm:$0xff]
    %v5404 = vld [vmem:[#allocation10 + $0x1a0] sm:$0xff]
    %v5405 = vld [vmem:[#allocation10 + $0x1a8] sm:$0xff]
    %v5406 = vld [vmem:[#allocation10 + $0x1b0] sm:$0xff]
    %v5407 = vld [vmem:[#allocation10 + $0x1b8] sm:$0xff]
    %v5408 = vld [vmem:[#allocation10 + $0x1c0] sm:$0xff]
    %v5409 = vld [vmem:[#allocation10 + $0x1c8] sm:$0xff]
    %v5410 = vld [vmem:[#allocation10 + $0x1d0] sm:$0xff]
    %v5411 = vld [vmem:[#allocation10 + $0x1d8] sm:$0xff]
    %v5412 = vld [vmem:[#allocation10 + $0x1e0] sm:$0xff]
    %v5413 = vld [vmem:[#allocation10 + $0x1e8] sm:$0xff]
    %v5414 = vld [vmem:[#allocation10 + $0x1f0] sm:$0xff]
    %v5415 = vld [vmem:[#allocation10 + $0x1f8] sm:$0xff]
    %v5416 = vld [vmem:[#allocation10 + $0x200] sm:$0xff]
    %v5417 = vld [vmem:[#allocation10 + $0x208] sm:$0xff]
    %v5418 = vld [vmem:[#allocation10 + $0x210] sm:$0xff]
    %v5419 = vld [vmem:[#allocation10 + $0x218] sm:$0xff]
    %v5420 = vld [vmem:[#allocation10 + $0x220] sm:$0xff]
    %v5421 = vld [vmem:[#allocation10 + $0x228] sm:$0xff]
    %v5422 = vld [vmem:[#allocation10 + $0x230] sm:$0xff]
    %v5423 = vld [vmem:[#allocation10 + $0x238] sm:$0xff]
    %v5424 = vld [vmem:[#allocation10 + $0x240] sm:$0xff]
    %v5425 = vld [vmem:[#allocation10 + $0x248] sm:$0xff]
    %v5426 = vld [vmem:[#allocation10 + $0x250] sm:$0xff]
    %v5427 = vld [vmem:[#allocation10 + $0x258] sm:$0xff]
    %v5428 = vld [vmem:[#allocation10 + $0x260] sm:$0xff]
    %v5429 = vld [vmem:[#allocation10 + $0x268] sm:$0xff]
    %v5430 = vld [vmem:[#allocation10 + $0x270] sm:$0xff]
    %v5431 = vld [vmem:[#allocation10 + $0x278] sm:$0xff]
    %v5432 = vld [vmem:[#allocation10 + $0x280] sm:$0xff]
    %v5433 = vld [vmem:[#allocation10 + $0x288] sm:$0xff]
    %v5434 = vld [vmem:[#allocation10 + $0x290] sm:$0xff]
    %v5435 = vld [vmem:[#allocation10 + $0x298] sm:$0xff]
    %v5436 = vld [vmem:[#allocation10 + $0x2a0] sm:$0xff]
    %v5437 = vld [vmem:[#allocation10 + $0x2a8] sm:$0xff]
    %v5438 = vld [vmem:[#allocation10 + $0x2b0] sm:$0xff]
    %v5439 = vld [vmem:[#allocation10 + $0x2b8] sm:$0xff]
    %v5440 = vld [vmem:[#allocation10 + $0x2c0] sm:$0xff]
    %v5441 = vld [vmem:[#allocation10 + $0x2c8] sm:$0xff]
    %v5442 = vld [vmem:[#allocation10 + $0x2d0] sm:$0xff]
    %v5443 = vld [vmem:[#allocation10 + $0x2d8] sm:$0xff]
    %v5444 = vld [vmem:[#allocation10 + $0x2e0] sm:$0xff]
    %v5445 = vld [vmem:[#allocation10 + $0x2e8] sm:$0xff]
    %v5446 = vld [vmem:[#allocation10 + $0x2f0] sm:$0xff]
    %v5447 = vld [vmem:[#allocation10 + $0x2f8] sm:$0xff]
    %v5448 = vld [vmem:[#allocation10 + $0x300] sm:$0xff]
    %v5449 = vld [vmem:[#allocation10 + $0x308] sm:$0xff]
    %v5450 = vld [vmem:[#allocation10 + $0x310] sm:$0xff]
    %v5451 = vld [vmem:[#allocation10 + $0x318] sm:$0xff]
    %v5452 = vld [vmem:[#allocation10 + $0x320] sm:$0xff]
    %v5453 = vld [vmem:[#allocation10 + $0x328] sm:$0xff]
    %v5454 = vld [vmem:[#allocation10 + $0x330] sm:$0xff]
    %v5455 = vld [vmem:[#allocation10 + $0x338] sm:$0xff]
    %v5456 = vld [vmem:[#allocation10 + $0x340] sm:$0xff]
    %v5457 = vld [vmem:[#allocation10 + $0x348] sm:$0xff]
    %v5458 = vld [vmem:[#allocation10 + $0x350] sm:$0xff]
    %v5459 = vld [vmem:[#allocation10 + $0x358] sm:$0xff]
    %v5460 = vld [vmem:[#allocation10 + $0x360] sm:$0xff]
    %v5461 = vld [vmem:[#allocation10 + $0x368] sm:$0xff]
    %v5462 = vld [vmem:[#allocation10 + $0x370] sm:$0xff]
    %v5463 = vld [vmem:[#allocation10 + $0x378] sm:$0xff]
    %v5464 = vld [vmem:[#allocation10 + $0x380] sm:$0xff]
    %v5465 = vld [vmem:[#allocation10 + $0x388] sm:$0xff]
    %v5466 = vld [vmem:[#allocation10 + $0x390] sm:$0xff]
    %v5467 = vld [vmem:[#allocation10 + $0x398] sm:$0xff]
    %v5468 = vld [vmem:[#allocation10 + $0x3a0] sm:$0xff]
    %v5469 = vld [vmem:[#allocation10 + $0x3a8] sm:$0xff]
    %v5470 = vld [vmem:[#allocation10 + $0x3b0] sm:$0xff]
    %v5471 = vld [vmem:[#allocation10 + $0x3b8] sm:$0xff]
    %v5472 = vld [vmem:[#allocation10 + $0x3c0] sm:$0xff]
    %v5473 = vld [vmem:[#allocation10 + $0x3c8] sm:$0xff]
    %v5474 = vld [vmem:[#allocation10 + $0x3d0] sm:$0xff]
    %v5475 = vld [vmem:[#allocation10 + $0x3d8] sm:$0xff]
    %v5476 = vld [vmem:[#allocation10 + $0x3e0] sm:$0xff]
    %v5477 = vld [vmem:[#allocation10 + $0x3e8] sm:$0xff]
    %v5478 = vld [vmem:[#allocation10 + $0x3f0] sm:$0xff]
    %v5479 = vld [vmem:[#allocation10 + $0x3f8] sm:$0xff]
    %v5480 = vld [vmem:[#allocation10 + $0x400] sm:$0xff]
    %v5481 = vld [vmem:[#allocation10 + $0x408] sm:$0xff]
    %v5482 = vld [vmem:[#allocation10 + $0x410] sm:$0xff]
    %v5483 = vld [vmem:[#allocation10 + $0x418] sm:$0xff]
    %v5484 = vld [vmem:[#allocation10 + $0x420] sm:$0xff]
    %v5485 = vld [vmem:[#allocation10 + $0x428] sm:$0xff]
    %v5486 = vld [vmem:[#allocation10 + $0x430] sm:$0xff]
    %v5487 = vld [vmem:[#allocation10 + $0x438] sm:$0xff]
    %v5488 = vld [vmem:[#allocation10 + $0x440] sm:$0xff]
    %v5489 = vld [vmem:[#allocation10 + $0x448] sm:$0xff]
    %v5490 = vld [vmem:[#allocation10 + $0x450] sm:$0xff]
    %v5491 = vld [vmem:[#allocation10 + $0x458] sm:$0xff]
    %v5492 = vld [vmem:[#allocation10 + $0x460] sm:$0xff]
    %v5493 = vld [vmem:[#allocation10 + $0x468] sm:$0xff]
    %v5494 = vld [vmem:[#allocation10 + $0x470] sm:$0xff]
    %v5495 = vld [vmem:[#allocation10 + $0x478] sm:$0xff]
    %v5496 = vld [vmem:[#allocation10 + $0x480] sm:$0xff]
    %v5497 = vld [vmem:[#allocation10 + $0x488] sm:$0xff]
    %v5498 = vld [vmem:[#allocation10 + $0x490] sm:$0xff]
    %v5499 = vld [vmem:[#allocation10 + $0x498] sm:$0xff]
    %v5500 = vld [vmem:[#allocation10 + $0x4a0] sm:$0xff]
    %v5501 = vld [vmem:[#allocation10 + $0x4a8] sm:$0xff]
    %v5502 = vld [vmem:[#allocation10 + $0x4b0] sm:$0xff]
    %v5503 = vld [vmem:[#allocation10 + $0x4b8] sm:$0xff]
    %v5504 = vld [vmem:[#allocation10 + $0x4c0] sm:$0xff]
    %v5505 = vld [vmem:[#allocation10 + $0x4c8] sm:$0xff]
    %v5506 = vld [vmem:[#allocation10 + $0x4d0] sm:$0xff]
    %v5507 = vld [vmem:[#allocation10 + $0x4d8] sm:$0xff]
    %v5508 = vld [vmem:[#allocation10 + $0x4e0] sm:$0xff]
    %v5509 = vld [vmem:[#allocation10 + $0x4e8] sm:$0xff]
    %v5510 = vld [vmem:[#allocation10 + $0x4f0] sm:$0xff]
    %v5511 = vld [vmem:[#allocation10 + $0x4f8] sm:$0xff]
    %v5512 = vld [vmem:[#allocation10 + $0x500] sm:$0xff]
    %v5513 = vld [vmem:[#allocation10 + $0x508] sm:$0xff]
    %v5514 = vld [vmem:[#allocation10 + $0x510] sm:$0xff]
    %v5515 = vld [vmem:[#allocation10 + $0x518] sm:$0xff]
    %v5516 = vld [vmem:[#allocation10 + $0x520] sm:$0xff]
    %v5517 = vld [vmem:[#allocation10 + $0x528] sm:$0xff]
    %v5518 = vld [vmem:[#allocation10 + $0x530] sm:$0xff]
    %v5519 = vld [vmem:[#allocation10 + $0x538] sm:$0xff]
    %v5520 = vld [vmem:[#allocation10 + $0x540] sm:$0xff]
    %v5521 = vld [vmem:[#allocation10 + $0x548] sm:$0xff]
    %v5522 = vld [vmem:[#allocation10 + $0x550] sm:$0xff]
    %v5523 = vld [vmem:[#allocation10 + $0x558] sm:$0xff]
    %v5524 = vld [vmem:[#allocation10 + $0x560] sm:$0xff]
    %v5525 = vld [vmem:[#allocation10 + $0x568] sm:$0xff]
    %v5526 = vld [vmem:[#allocation10 + $0x570] sm:$0xff]
    %v5527 = vld [vmem:[#allocation10 + $0x578] sm:$0xff]
    %v5528 = vld [vmem:[#allocation10 + $0x580] sm:$0xff]
    %v5529 = vld [vmem:[#allocation10 + $0x588] sm:$0xff]
    %v5530 = vld [vmem:[#allocation10 + $0x590] sm:$0xff]
    %v5531 = vld [vmem:[#allocation10 + $0x598] sm:$0xff]
    %v5532 = vld [vmem:[#allocation10 + $0x5a0] sm:$0xff]
    %v5533 = vld [vmem:[#allocation10 + $0x5a8] sm:$0xff]
    %v5534 = vld [vmem:[#allocation10 + $0x5b0] sm:$0xff]
    %v5535 = vld [vmem:[#allocation10 + $0x5b8] sm:$0xff]
    %v5536 = vld [vmem:[#allocation10 + $0x5c0] sm:$0xff]
    %v5537 = vld [vmem:[#allocation10 + $0x5c8] sm:$0xff]
    %v5538 = vld [vmem:[#allocation10 + $0x5d0] sm:$0xff]
    %v5539 = vld [vmem:[#allocation10 + $0x5d8] sm:$0xff]
    %v5540 = vld [vmem:[#allocation10 + $0x5e0] sm:$0xff]
    %v5541 = vld [vmem:[#allocation10 + $0x5e8] sm:$0xff]
    %v5542 = vld [vmem:[#allocation10 + $0x5f0] sm:$0xff]
    %v5543 = vld [vmem:[#allocation10 + $0x5f8] sm:$0xff]
    %v5544 = vld [vmem:[#allocation10 + $0x600] sm:$0xff]
    %v5545 = vld [vmem:[#allocation10 + $0x608] sm:$0xff]
    %v5546 = vld [vmem:[#allocation10 + $0x610] sm:$0xff]
    %v5547 = vld [vmem:[#allocation10 + $0x618] sm:$0xff]
    %v5548 = vld [vmem:[#allocation10 + $0x620] sm:$0xff]
    %v5549 = vld [vmem:[#allocation10 + $0x628] sm:$0xff]
    %v5550 = vld [vmem:[#allocation10 + $0x630] sm:$0xff]
    %v5551 = vld [vmem:[#allocation10 + $0x638] sm:$0xff]
    %v5552 = vld [vmem:[#allocation10 + $0x640] sm:$0xff]
    %v5553 = vld [vmem:[#allocation10 + $0x648] sm:$0xff]
    %v5554 = vld [vmem:[#allocation10 + $0x650] sm:$0xff]
    %v5555 = vld [vmem:[#allocation10 + $0x658] sm:$0xff]
    %v5556 = vld [vmem:[#allocation10 + $0x660] sm:$0xff]
    %v5557 = vld [vmem:[#allocation10 + $0x668] sm:$0xff]
    %v5558 = vld [vmem:[#allocation10 + $0x670] sm:$0xff]
    %v5559 = vld [vmem:[#allocation10 + $0x678] sm:$0xff]
    %v5560 = vld [vmem:[#allocation10 + $0x680] sm:$0xff]
    %v5561 = vld [vmem:[#allocation10 + $0x688] sm:$0xff]
    %v5562 = vld [vmem:[#allocation10 + $0x690] sm:$0xff]
    %v5563 = vld [vmem:[#allocation10 + $0x698] sm:$0xff]
    %v5564 = vld [vmem:[#allocation10 + $0x6a0] sm:$0xff]
    %v5565 = vld [vmem:[#allocation10 + $0x6a8] sm:$0xff]
    %v5566 = vld [vmem:[#allocation10 + $0x6b0] sm:$0xff]
    %v5567 = vld [vmem:[#allocation10 + $0x6b8] sm:$0xff]
    %v5568 = vld [vmem:[#allocation10 + $0x6c0] sm:$0xff]
    %v5569 = vld [vmem:[#allocation10 + $0x6c8] sm:$0xff]
    %v5570 = vld [vmem:[#allocation10 + $0x6d0] sm:$0xff]
    %v5571 = vld [vmem:[#allocation10 + $0x6d8] sm:$0xff]
    %v5572 = vld [vmem:[#allocation10 + $0x6e0] sm:$0xff]
    %v5573 = vld [vmem:[#allocation10 + $0x6e8] sm:$0xff]
    %v5574 = vld [vmem:[#allocation10 + $0x6f0] sm:$0xff]
    %v5575 = vld [vmem:[#allocation10 + $0x6f8] sm:$0xff]
    %v5576 = vld [vmem:[#allocation10 + $0x700] sm:$0xff]
    %v5577 = vld [vmem:[#allocation10 + $0x708] sm:$0xff]
    %v5578 = vld [vmem:[#allocation10 + $0x710] sm:$0xff]
    %v5579 = vld [vmem:[#allocation10 + $0x718] sm:$0xff]
    %v5580 = vld [vmem:[#allocation10 + $0x720] sm:$0xff]
    %v5581 = vld [vmem:[#allocation10 + $0x728] sm:$0xff]
    %v5582 = vld [vmem:[#allocation10 + $0x730] sm:$0xff]
    %v5583 = vld [vmem:[#allocation10 + $0x738] sm:$0xff]
    %v5584 = vld [vmem:[#allocation10 + $0x740] sm:$0xff]
    %v5585 = vld [vmem:[#allocation10 + $0x748] sm:$0xff]
    %v5586 = vld [vmem:[#allocation10 + $0x750] sm:$0xff]
    %v5587 = vld [vmem:[#allocation10 + $0x758] sm:$0xff]
    %v5588 = vld [vmem:[#allocation10 + $0x760] sm:$0xff]
    %v5589 = vld [vmem:[#allocation10 + $0x768] sm:$0xff]
    %v5590 = vld [vmem:[#allocation10 + $0x770] sm:$0xff]
    %v5591 = vld [vmem:[#allocation10 + $0x778] sm:$0xff]
    %v5592 = vld [vmem:[#allocation10 + $0x780] sm:$0xff]
    %v5593 = vld [vmem:[#allocation10 + $0x788] sm:$0xff]
    %v5594 = vld [vmem:[#allocation10 + $0x790] sm:$0xff]
    %v5595 = vld [vmem:[#allocation10 + $0x798] sm:$0xff]
    %v5596 = vld [vmem:[#allocation10 + $0x7a0] sm:$0xff]
    %v5597 = vld [vmem:[#allocation10 + $0x7a8] sm:$0xff]
    %v5598 = vld [vmem:[#allocation10 + $0x7b0] sm:$0xff]
    %v5599 = vld [vmem:[#allocation10 + $0x7b8] sm:$0xff]
    %v5600 = vld [vmem:[#allocation10 + $0x7c0] sm:$0xff]
    %v5601 = vld [vmem:[#allocation10 + $0x7c8] sm:$0xff]
    %v5602 = vld [vmem:[#allocation10 + $0x7d0] sm:$0xff]
    %v5603 = vld [vmem:[#allocation10 + $0x7d8] sm:$0xff]
    %v5604 = vld [vmem:[#allocation10 + $0x7e0] sm:$0xff]
    %v5605 = vld [vmem:[#allocation10 + $0x7e8] sm:$0xff]
    %v5606 = vld [vmem:[#allocation10 + $0x7f0] sm:$0xff]
    %v5607 = vld [vmem:[#allocation10 + $0x7f8] sm:$0xff]
    %s5608 = scalar_lea.vmem [#allocation9], 4096
    %v5609 = vld [vmem:[%s5608] sm:$0xff]
    %v5610 = vld [vmem:[%s5608 + $0x8] sm:$0xff]
    %v5611 = vld [vmem:[%s5608 + $0x10] sm:$0xff]
    %v5612 = vld [vmem:[%s5608 + $0x18] sm:$0xff]
    %v5613 = vld [vmem:[%s5608 + $0x20] sm:$0xff]
    %v5614 = vld [vmem:[%s5608 + $0x28] sm:$0xff]
    %v5615 = vld [vmem:[%s5608 + $0x30] sm:$0xff]
    %v5616 = vld [vmem:[%s5608 + $0x38] sm:$0xff]
    %v5617 = vld [vmem:[%s5608 + $0x40] sm:$0xff]
    %v5618 = vld [vmem:[%s5608 + $0x48] sm:$0xff]
    %v5619 = vld [vmem:[%s5608 + $0x50] sm:$0xff]
    %v5620 = vld [vmem:[%s5608 + $0x58] sm:$0xff]
    %v5621 = vld [vmem:[%s5608 + $0x60] sm:$0xff]
    %v5622 = vld [vmem:[%s5608 + $0x68] sm:$0xff]
    %v5623 = vld [vmem:[%s5608 + $0x70] sm:$0xff]
    %v5624 = vld [vmem:[%s5608 + $0x78] sm:$0xff]
    %v5625 = vld [vmem:[%s5608 + $0x80] sm:$0xff]
    %v5626 = vld [vmem:[%s5608 + $0x88] sm:$0xff]
    %v5627 = vld [vmem:[%s5608 + $0x90] sm:$0xff]
    %v5628 = vld [vmem:[%s5608 + $0x98] sm:$0xff]
    %v5629 = vld [vmem:[%s5608 + $0xa0] sm:$0xff]
    %v5630 = vld [vmem:[%s5608 + $0xa8] sm:$0xff]
    %v5631 = vld [vmem:[%s5608 + $0xb0] sm:$0xff]
    %v5632 = vld [vmem:[%s5608 + $0xb8] sm:$0xff]
    %v5633 = vld [vmem:[%s5608 + $0xc0] sm:$0xff]
    %v5634 = vld [vmem:[%s5608 + $0xc8] sm:$0xff]
    %v5635 = vld [vmem:[%s5608 + $0xd0] sm:$0xff]
    %v5636 = vld [vmem:[%s5608 + $0xd8] sm:$0xff]
    %v5637 = vld [vmem:[%s5608 + $0xe0] sm:$0xff]
    %v5638 = vld [vmem:[%s5608 + $0xe8] sm:$0xff]
    %v5639 = vld [vmem:[%s5608 + $0xf0] sm:$0xff]
    %v5640 = vld [vmem:[%s5608 + $0xf8] sm:$0xff]
    %v5641 = vld [vmem:[%s5608 + $0x100] sm:$0xff]
    %v5642 = vld [vmem:[%s5608 + $0x108] sm:$0xff]
    %v5643 = vld [vmem:[%s5608 + $0x110] sm:$0xff]
    %v5644 = vld [vmem:[%s5608 + $0x118] sm:$0xff]
    %v5645 = vld [vmem:[%s5608 + $0x120] sm:$0xff]
    %v5646 = vld [vmem:[%s5608 + $0x128] sm:$0xff]
    %v5647 = vld [vmem:[%s5608 + $0x130] sm:$0xff]
    %v5648 = vld [vmem:[%s5608 + $0x138] sm:$0xff]
    %v5649 = vld [vmem:[%s5608 + $0x140] sm:$0xff]
    %v5650 = vld [vmem:[%s5608 + $0x148] sm:$0xff]
    %v5651 = vld [vmem:[%s5608 + $0x150] sm:$0xff]
    %v5652 = vld [vmem:[%s5608 + $0x158] sm:$0xff]
    %v5653 = vld [vmem:[%s5608 + $0x160] sm:$0xff]
    %v5654 = vld [vmem:[%s5608 + $0x168] sm:$0xff]
    %v5655 = vld [vmem:[%s5608 + $0x170] sm:$0xff]
    %v5656 = vld [vmem:[%s5608 + $0x178] sm:$0xff]
    %v5657 = vld [vmem:[%s5608 + $0x180] sm:$0xff]
    %v5658 = vld [vmem:[%s5608 + $0x188] sm:$0xff]
    %v5659 = vld [vmem:[%s5608 + $0x190] sm:$0xff]
    %v5660 = vld [vmem:[%s5608 + $0x198] sm:$0xff]
    %v5661 = vld [vmem:[%s5608 + $0x1a0] sm:$0xff]
    %v5662 = vld [vmem:[%s5608 + $0x1a8] sm:$0xff]
    %v5663 = vld [vmem:[%s5608 + $0x1b0] sm:$0xff]
    %v5664 = vld [vmem:[%s5608 + $0x1b8] sm:$0xff]
    %v5665 = vld [vmem:[%s5608 + $0x1c0] sm:$0xff]
    %v5666 = vld [vmem:[%s5608 + $0x1c8] sm:$0xff]
    %v5667 = vld [vmem:[%s5608 + $0x1d0] sm:$0xff]
    %v5668 = vld [vmem:[%s5608 + $0x1d8] sm:$0xff]
    %v5669 = vld [vmem:[%s5608 + $0x1e0] sm:$0xff]
    %v5670 = vld [vmem:[%s5608 + $0x1e8] sm:$0xff]
    %v5671 = vld [vmem:[%s5608 + $0x1f0] sm:$0xff]
    %v5672 = vld [vmem:[%s5608 + $0x1f8] sm:$0xff]
    %v5673 = vld [vmem:[%s5608 + $0x200] sm:$0xff]
    %v5674 = vld [vmem:[%s5608 + $0x208] sm:$0xff]
    %v5675 = vld [vmem:[%s5608 + $0x210] sm:$0xff]
    %v5676 = vld [vmem:[%s5608 + $0x218] sm:$0xff]
    %v5677 = vld [vmem:[%s5608 + $0x220] sm:$0xff]
    %v5678 = vld [vmem:[%s5608 + $0x228] sm:$0xff]
    %v5679 = vld [vmem:[%s5608 + $0x230] sm:$0xff]
    %v5680 = vld [vmem:[%s5608 + $0x238] sm:$0xff]
    %v5681 = vld [vmem:[%s5608 + $0x240] sm:$0xff]
    %v5682 = vld [vmem:[%s5608 + $0x248] sm:$0xff]
    %v5683 = vld [vmem:[%s5608 + $0x250] sm:$0xff]
    %v5684 = vld [vmem:[%s5608 + $0x258] sm:$0xff]
    %v5685 = vld [vmem:[%s5608 + $0x260] sm:$0xff]
    %v5686 = vld [vmem:[%s5608 + $0x268] sm:$0xff]
    %v5687 = vld [vmem:[%s5608 + $0x270] sm:$0xff]
    %v5688 = vld [vmem:[%s5608 + $0x278] sm:$0xff]
    %v5689 = vld [vmem:[%s5608 + $0x280] sm:$0xff]
    %v5690 = vld [vmem:[%s5608 + $0x288] sm:$0xff]
    %v5691 = vld [vmem:[%s5608 + $0x290] sm:$0xff]
    %v5692 = vld [vmem:[%s5608 + $0x298] sm:$0xff]
    %v5693 = vld [vmem:[%s5608 + $0x2a0] sm:$0xff]
    %v5694 = vld [vmem:[%s5608 + $0x2a8] sm:$0xff]
    %v5695 = vld [vmem:[%s5608 + $0x2b0] sm:$0xff]
    %v5696 = vld [vmem:[%s5608 + $0x2b8] sm:$0xff]
    %v5697 = vld [vmem:[%s5608 + $0x2c0] sm:$0xff]
    %v5698 = vld [vmem:[%s5608 + $0x2c8] sm:$0xff]
    %v5699 = vld [vmem:[%s5608 + $0x2d0] sm:$0xff]
    %v5700 = vld [vmem:[%s5608 + $0x2d8] sm:$0xff]
    %v5701 = vld [vmem:[%s5608 + $0x2e0] sm:$0xff]
    %v5702 = vld [vmem:[%s5608 + $0x2e8] sm:$0xff]
    %v5703 = vld [vmem:[%s5608 + $0x2f0] sm:$0xff]
    %v5704 = vld [vmem:[%s5608 + $0x2f8] sm:$0xff]
    %v5705 = vld [vmem:[%s5608 + $0x300] sm:$0xff]
    %v5706 = vld [vmem:[%s5608 + $0x308] sm:$0xff]
    %v5707 = vld [vmem:[%s5608 + $0x310] sm:$0xff]
    %v5708 = vld [vmem:[%s5608 + $0x318] sm:$0xff]
    %v5709 = vld [vmem:[%s5608 + $0x320] sm:$0xff]
    %v5710 = vld [vmem:[%s5608 + $0x328] sm:$0xff]
    %v5711 = vld [vmem:[%s5608 + $0x330] sm:$0xff]
    %v5712 = vld [vmem:[%s5608 + $0x338] sm:$0xff]
    %v5713 = vld [vmem:[%s5608 + $0x340] sm:$0xff]
    %v5714 = vld [vmem:[%s5608 + $0x348] sm:$0xff]
    %v5715 = vld [vmem:[%s5608 + $0x350] sm:$0xff]
    %v5716 = vld [vmem:[%s5608 + $0x358] sm:$0xff]
    %v5717 = vld [vmem:[%s5608 + $0x360] sm:$0xff]
    %v5718 = vld [vmem:[%s5608 + $0x368] sm:$0xff]
    %v5719 = vld [vmem:[%s5608 + $0x370] sm:$0xff]
    %v5720 = vld [vmem:[%s5608 + $0x378] sm:$0xff]
    %v5721 = vld [vmem:[%s5608 + $0x380] sm:$0xff]
    %v5722 = vld [vmem:[%s5608 + $0x388] sm:$0xff]
    %v5723 = vld [vmem:[%s5608 + $0x390] sm:$0xff]
    %v5724 = vld [vmem:[%s5608 + $0x398] sm:$0xff]
    %v5725 = vld [vmem:[%s5608 + $0x3a0] sm:$0xff]
    %v5726 = vld [vmem:[%s5608 + $0x3a8] sm:$0xff]
    %v5727 = vld [vmem:[%s5608 + $0x3b0] sm:$0xff]
    %v5728 = vld [vmem:[%s5608 + $0x3b8] sm:$0xff]
    %v5729 = vld [vmem:[%s5608 + $0x3c0] sm:$0xff]
    %v5730 = vld [vmem:[%s5608 + $0x3c8] sm:$0xff]
    %v5731 = vld [vmem:[%s5608 + $0x3d0] sm:$0xff]
    %v5732 = vld [vmem:[%s5608 + $0x3d8] sm:$0xff]
    %v5733 = vld [vmem:[%s5608 + $0x3e0] sm:$0xff]
    %v5734 = vld [vmem:[%s5608 + $0x3e8] sm:$0xff]
    %v5735 = vld [vmem:[%s5608 + $0x3f0] sm:$0xff]
    %v5736 = vld [vmem:[%s5608 + $0x3f8] sm:$0xff]
    %v5737 = vld [vmem:[%s5608 + $0x400] sm:$0xff]
    %v5738 = vld [vmem:[%s5608 + $0x408] sm:$0xff]
    %v5739 = vld [vmem:[%s5608 + $0x410] sm:$0xff]
    %v5740 = vld [vmem:[%s5608 + $0x418] sm:$0xff]
    %v5741 = vld [vmem:[%s5608 + $0x420] sm:$0xff]
    %v5742 = vld [vmem:[%s5608 + $0x428] sm:$0xff]
    %v5743 = vld [vmem:[%s5608 + $0x430] sm:$0xff]
    %v5744 = vld [vmem:[%s5608 + $0x438] sm:$0xff]
    %v5745 = vld [vmem:[%s5608 + $0x440] sm:$0xff]
    %v5746 = vld [vmem:[%s5608 + $0x448] sm:$0xff]
    %v5747 = vld [vmem:[%s5608 + $0x450] sm:$0xff]
    %v5748 = vld [vmem:[%s5608 + $0x458] sm:$0xff]
    %v5749 = vld [vmem:[%s5608 + $0x460] sm:$0xff]
    %v5750 = vld [vmem:[%s5608 + $0x468] sm:$0xff]
    %v5751 = vld [vmem:[%s5608 + $0x470] sm:$0xff]
    %v5752 = vld [vmem:[%s5608 + $0x478] sm:$0xff]
    %v5753 = vld [vmem:[%s5608 + $0x480] sm:$0xff]
    %v5754 = vld [vmem:[%s5608 + $0x488] sm:$0xff]
    %v5755 = vld [vmem:[%s5608 + $0x490] sm:$0xff]
    %v5756 = vld [vmem:[%s5608 + $0x498] sm:$0xff]
    %v5757 = vld [vmem:[%s5608 + $0x4a0] sm:$0xff]
    %v5758 = vld [vmem:[%s5608 + $0x4a8] sm:$0xff]
    %v5759 = vld [vmem:[%s5608 + $0x4b0] sm:$0xff]
    %v5760 = vld [vmem:[%s5608 + $0x4b8] sm:$0xff]
    %v5761 = vld [vmem:[%s5608 + $0x4c0] sm:$0xff]
    %v5762 = vld [vmem:[%s5608 + $0x4c8] sm:$0xff]
    %v5763 = vld [vmem:[%s5608 + $0x4d0] sm:$0xff]
    %v5764 = vld [vmem:[%s5608 + $0x4d8] sm:$0xff]
    %v5765 = vld [vmem:[%s5608 + $0x4e0] sm:$0xff]
    %v5766 = vld [vmem:[%s5608 + $0x4e8] sm:$0xff]
    %v5767 = vld [vmem:[%s5608 + $0x4f0] sm:$0xff]
    %v5768 = vld [vmem:[%s5608 + $0x4f8] sm:$0xff]
    %v5769 = vld [vmem:[%s5608 + $0x500] sm:$0xff]
    %v5770 = vld [vmem:[%s5608 + $0x508] sm:$0xff]
    %v5771 = vld [vmem:[%s5608 + $0x510] sm:$0xff]
    %v5772 = vld [vmem:[%s5608 + $0x518] sm:$0xff]
    %v5773 = vld [vmem:[%s5608 + $0x520] sm:$0xff]
    %v5774 = vld [vmem:[%s5608 + $0x528] sm:$0xff]
    %v5775 = vld [vmem:[%s5608 + $0x530] sm:$0xff]
    %v5776 = vld [vmem:[%s5608 + $0x538] sm:$0xff]
    %v5777 = vld [vmem:[%s5608 + $0x540] sm:$0xff]
    %v5778 = vld [vmem:[%s5608 + $0x548] sm:$0xff]
    %v5779 = vld [vmem:[%s5608 + $0x550] sm:$0xff]
    %v5780 = vld [vmem:[%s5608 + $0x558] sm:$0xff]
    %v5781 = vld [vmem:[%s5608 + $0x560] sm:$0xff]
    %v5782 = vld [vmem:[%s5608 + $0x568] sm:$0xff]
    %v5783 = vld [vmem:[%s5608 + $0x570] sm:$0xff]
    %v5784 = vld [vmem:[%s5608 + $0x578] sm:$0xff]
    %v5785 = vld [vmem:[%s5608 + $0x580] sm:$0xff]
    %v5786 = vld [vmem:[%s5608 + $0x588] sm:$0xff]
    %v5787 = vld [vmem:[%s5608 + $0x590] sm:$0xff]
    %v5788 = vld [vmem:[%s5608 + $0x598] sm:$0xff]
    %v5789 = vld [vmem:[%s5608 + $0x5a0] sm:$0xff]
    %v5790 = vld [vmem:[%s5608 + $0x5a8] sm:$0xff]
    %v5791 = vld [vmem:[%s5608 + $0x5b0] sm:$0xff]
    %v5792 = vld [vmem:[%s5608 + $0x5b8] sm:$0xff]
    %v5793 = vld [vmem:[%s5608 + $0x5c0] sm:$0xff]
    %v5794 = vld [vmem:[%s5608 + $0x5c8] sm:$0xff]
    %v5795 = vld [vmem:[%s5608 + $0x5d0] sm:$0xff]
    %v5796 = vld [vmem:[%s5608 + $0x5d8] sm:$0xff]
    %v5797 = vld [vmem:[%s5608 + $0x5e0] sm:$0xff]
    %v5798 = vld [vmem:[%s5608 + $0x5e8] sm:$0xff]
    %v5799 = vld [vmem:[%s5608 + $0x5f0] sm:$0xff]
    %v5800 = vld [vmem:[%s5608 + $0x5f8] sm:$0xff]
    %v5801 = vld [vmem:[%s5608 + $0x600] sm:$0xff]
    %v5802 = vld [vmem:[%s5608 + $0x608] sm:$0xff]
    %v5803 = vld [vmem:[%s5608 + $0x610] sm:$0xff]
    %v5804 = vld [vmem:[%s5608 + $0x618] sm:$0xff]
    %v5805 = vld [vmem:[%s5608 + $0x620] sm:$0xff]
    %v5806 = vld [vmem:[%s5608 + $0x628] sm:$0xff]
    %v5807 = vld [vmem:[%s5608 + $0x630] sm:$0xff]
    %v5808 = vld [vmem:[%s5608 + $0x638] sm:$0xff]
    %v5809 = vld [vmem:[%s5608 + $0x640] sm:$0xff]
    %v5810 = vld [vmem:[%s5608 + $0x648] sm:$0xff]
    %v5811 = vld [vmem:[%s5608 + $0x650] sm:$0xff]
    %v5812 = vld [vmem:[%s5608 + $0x658] sm:$0xff]
    %v5813 = vld [vmem:[%s5608 + $0x660] sm:$0xff]
    %v5814 = vld [vmem:[%s5608 + $0x668] sm:$0xff]
    %v5815 = vld [vmem:[%s5608 + $0x670] sm:$0xff]
    %v5816 = vld [vmem:[%s5608 + $0x678] sm:$0xff]
    %v5817 = vld [vmem:[%s5608 + $0x680] sm:$0xff]
    %v5818 = vld [vmem:[%s5608 + $0x688] sm:$0xff]
    %v5819 = vld [vmem:[%s5608 + $0x690] sm:$0xff]
    %v5820 = vld [vmem:[%s5608 + $0x698] sm:$0xff]
    %v5821 = vld [vmem:[%s5608 + $0x6a0] sm:$0xff]
    %v5822 = vld [vmem:[%s5608 + $0x6a8] sm:$0xff]
    %v5823 = vld [vmem:[%s5608 + $0x6b0] sm:$0xff]
    %v5824 = vld [vmem:[%s5608 + $0x6b8] sm:$0xff]
    %v5825 = vld [vmem:[%s5608 + $0x6c0] sm:$0xff]
    %v5826 = vld [vmem:[%s5608 + $0x6c8] sm:$0xff]
    %v5827 = vld [vmem:[%s5608 + $0x6d0] sm:$0xff]
    %v5828 = vld [vmem:[%s5608 + $0x6d8] sm:$0xff]
    %v5829 = vld [vmem:[%s5608 + $0x6e0] sm:$0xff]
    %v5830 = vld [vmem:[%s5608 + $0x6e8] sm:$0xff]
    %v5831 = vld [vmem:[%s5608 + $0x6f0] sm:$0xff]
    %v5832 = vld [vmem:[%s5608 + $0x6f8] sm:$0xff]
    %v5833 = vld [vmem:[%s5608 + $0x700] sm:$0xff]
    %v5834 = vld [vmem:[%s5608 + $0x708] sm:$0xff]
    %v5835 = vld [vmem:[%s5608 + $0x710] sm:$0xff]
    %v5836 = vld [vmem:[%s5608 + $0x718] sm:$0xff]
    %v5837 = vld [vmem:[%s5608 + $0x720] sm:$0xff]
    %v5838 = vld [vmem:[%s5608 + $0x728] sm:$0xff]
    %v5839 = vld [vmem:[%s5608 + $0x730] sm:$0xff]
    %v5840 = vld [vmem:[%s5608 + $0x738] sm:$0xff]
    %v5841 = vld [vmem:[%s5608 + $0x740] sm:$0xff]
    %v5842 = vld [vmem:[%s5608 + $0x748] sm:$0xff]
    %v5843 = vld [vmem:[%s5608 + $0x750] sm:$0xff]
    %v5844 = vld [vmem:[%s5608 + $0x758] sm:$0xff]
    %v5845 = vld [vmem:[%s5608 + $0x760] sm:$0xff]
    %v5846 = vld [vmem:[%s5608 + $0x768] sm:$0xff]
    %v5847 = vld [vmem:[%s5608 + $0x770] sm:$0xff]
    %v5848 = vld [vmem:[%s5608 + $0x778] sm:$0xff]
    %v5849 = vld [vmem:[%s5608 + $0x780] sm:$0xff]
    %v5850 = vld [vmem:[%s5608 + $0x788] sm:$0xff]
    %v5851 = vld [vmem:[%s5608 + $0x790] sm:$0xff]
    %v5852 = vld [vmem:[%s5608 + $0x798] sm:$0xff]
    %v5853 = vld [vmem:[%s5608 + $0x7a0] sm:$0xff]
    %v5854 = vld [vmem:[%s5608 + $0x7a8] sm:$0xff]
    %v5855 = vld [vmem:[%s5608 + $0x7b0] sm:$0xff]
    %v5856 = vld [vmem:[%s5608 + $0x7b8] sm:$0xff]
    %v5857 = vld [vmem:[%s5608 + $0x7c0] sm:$0xff]
    %v5858 = vld [vmem:[%s5608 + $0x7c8] sm:$0xff]
    %v5859 = vld [vmem:[%s5608 + $0x7d0] sm:$0xff]
    %v5860 = vld [vmem:[%s5608 + $0x7d8] sm:$0xff]
    %v5861 = vld [vmem:[%s5608 + $0x7e0] sm:$0xff]
    %v5862 = vld [vmem:[%s5608 + $0x7e8] sm:$0xff]
    %v5863 = vld [vmem:[%s5608 + $0x7f0] sm:$0xff]
    %v5864 = vld [vmem:[%s5608 + $0x7f8] sm:$0xff]
    %v5865 = vld [vmem:[%s5608 + $0x800] sm:$0xff]
    %v5866 = vld [vmem:[%s5608 + $0x808] sm:$0xff]
    %v5867 = vld [vmem:[%s5608 + $0x810] sm:$0xff]
    %v5868 = vld [vmem:[%s5608 + $0x818] sm:$0xff]
    %v5869 = vld [vmem:[%s5608 + $0x820] sm:$0xff]
    %v5870 = vld [vmem:[%s5608 + $0x828] sm:$0xff]
    %v5871 = vld [vmem:[%s5608 + $0x830] sm:$0xff]
    %v5872 = vld [vmem:[%s5608 + $0x838] sm:$0xff]
    %v5873 = vld [vmem:[%s5608 + $0x840] sm:$0xff]
    %v5874 = vld [vmem:[%s5608 + $0x848] sm:$0xff]
    %v5875 = vld [vmem:[%s5608 + $0x850] sm:$0xff]
    %v5876 = vld [vmem:[%s5608 + $0x858] sm:$0xff]
    %v5877 = vld [vmem:[%s5608 + $0x860] sm:$0xff]
    %v5878 = vld [vmem:[%s5608 + $0x868] sm:$0xff]
    %v5879 = vld [vmem:[%s5608 + $0x870] sm:$0xff]
    %v5880 = vld [vmem:[%s5608 + $0x878] sm:$0xff]
    %v5881 = vld [vmem:[%s5608 + $0x880] sm:$0xff]
    %v5882 = vld [vmem:[%s5608 + $0x888] sm:$0xff]
    %v5883 = vld [vmem:[%s5608 + $0x890] sm:$0xff]
    %v5884 = vld [vmem:[%s5608 + $0x898] sm:$0xff]
    %v5885 = vld [vmem:[%s5608 + $0x8a0] sm:$0xff]
    %v5886 = vld [vmem:[%s5608 + $0x8a8] sm:$0xff]
    %v5887 = vld [vmem:[%s5608 + $0x8b0] sm:$0xff]
    %v5888 = vld [vmem:[%s5608 + $0x8b8] sm:$0xff]
    %v5889 = vld [vmem:[%s5608 + $0x8c0] sm:$0xff]
    %v5890 = vld [vmem:[%s5608 + $0x8c8] sm:$0xff]
    %v5891 = vld [vmem:[%s5608 + $0x8d0] sm:$0xff]
    %v5892 = vld [vmem:[%s5608 + $0x8d8] sm:$0xff]
    %v5893 = vld [vmem:[%s5608 + $0x8e0] sm:$0xff]
    %v5894 = vld [vmem:[%s5608 + $0x8e8] sm:$0xff]
    %v5895 = vld [vmem:[%s5608 + $0x8f0] sm:$0xff]
    %v5896 = vld [vmem:[%s5608 + $0x8f8] sm:$0xff]
    %v5897 = vld [vmem:[%s5608 + $0x900] sm:$0xff]
    %v5898 = vld [vmem:[%s5608 + $0x908] sm:$0xff]
    %v5899 = vld [vmem:[%s5608 + $0x910] sm:$0xff]
    %v5900 = vld [vmem:[%s5608 + $0x918] sm:$0xff]
    %v5901 = vld [vmem:[%s5608 + $0x920] sm:$0xff]
    %v5902 = vld [vmem:[%s5608 + $0x928] sm:$0xff]
    %v5903 = vld [vmem:[%s5608 + $0x930] sm:$0xff]
    %v5904 = vld [vmem:[%s5608 + $0x938] sm:$0xff]
    %v5905 = vld [vmem:[%s5608 + $0x940] sm:$0xff]
    %v5906 = vld [vmem:[%s5608 + $0x948] sm:$0xff]
    %v5907 = vld [vmem:[%s5608 + $0x950] sm:$0xff]
    %v5908 = vld [vmem:[%s5608 + $0x958] sm:$0xff]
    %v5909 = vld [vmem:[%s5608 + $0x960] sm:$0xff]
    %v5910 = vld [vmem:[%s5608 + $0x968] sm:$0xff]
    %v5911 = vld [vmem:[%s5608 + $0x970] sm:$0xff]
    %v5912 = vld [vmem:[%s5608 + $0x978] sm:$0xff]
    %v5913 = vld [vmem:[%s5608 + $0x980] sm:$0xff]
    %v5914 = vld [vmem:[%s5608 + $0x988] sm:$0xff]
    %v5915 = vld [vmem:[%s5608 + $0x990] sm:$0xff]
    %v5916 = vld [vmem:[%s5608 + $0x998] sm:$0xff]
    %v5917 = vld [vmem:[%s5608 + $0x9a0] sm:$0xff]
    %v5918 = vld [vmem:[%s5608 + $0x9a8] sm:$0xff]
    %v5919 = vld [vmem:[%s5608 + $0x9b0] sm:$0xff]
    %v5920 = vld [vmem:[%s5608 + $0x9b8] sm:$0xff]
    %v5921 = vld [vmem:[%s5608 + $0x9c0] sm:$0xff]
    %v5922 = vld [vmem:[%s5608 + $0x9c8] sm:$0xff]
    %v5923 = vld [vmem:[%s5608 + $0x9d0] sm:$0xff]
    %v5924 = vld [vmem:[%s5608 + $0x9d8] sm:$0xff]
    %v5925 = vld [vmem:[%s5608 + $0x9e0] sm:$0xff]
    %v5926 = vld [vmem:[%s5608 + $0x9e8] sm:$0xff]
    %v5927 = vld [vmem:[%s5608 + $0x9f0] sm:$0xff]
    %v5928 = vld [vmem:[%s5608 + $0x9f8] sm:$0xff]
    %v5929 = vld [vmem:[%s5608 + $0xa00] sm:$0xff]
    %v5930 = vld [vmem:[%s5608 + $0xa08] sm:$0xff]
    %v5931 = vld [vmem:[%s5608 + $0xa10] sm:$0xff]
    %v5932 = vld [vmem:[%s5608 + $0xa18] sm:$0xff]
    %v5933 = vld [vmem:[%s5608 + $0xa20] sm:$0xff]
    %v5934 = vld [vmem:[%s5608 + $0xa28] sm:$0xff]
    %v5935 = vld [vmem:[%s5608 + $0xa30] sm:$0xff]
    %v5936 = vld [vmem:[%s5608 + $0xa38] sm:$0xff]
    %v5937 = vld [vmem:[%s5608 + $0xa40] sm:$0xff]
    %v5938 = vld [vmem:[%s5608 + $0xa48] sm:$0xff]
    %v5939 = vld [vmem:[%s5608 + $0xa50] sm:$0xff]
    %v5940 = vld [vmem:[%s5608 + $0xa58] sm:$0xff]
    %v5941 = vld [vmem:[%s5608 + $0xa60] sm:$0xff]
    %v5942 = vld [vmem:[%s5608 + $0xa68] sm:$0xff]
    %v5943 = vld [vmem:[%s5608 + $0xa70] sm:$0xff]
    %v5944 = vld [vmem:[%s5608 + $0xa78] sm:$0xff]
    %v5945 = vld [vmem:[%s5608 + $0xa80] sm:$0xff]
    %v5946 = vld [vmem:[%s5608 + $0xa88] sm:$0xff]
    %v5947 = vld [vmem:[%s5608 + $0xa90] sm:$0xff]
    %v5948 = vld [vmem:[%s5608 + $0xa98] sm:$0xff]
    %v5949 = vld [vmem:[%s5608 + $0xaa0] sm:$0xff]
    %v5950 = vld [vmem:[%s5608 + $0xaa8] sm:$0xff]
    %v5951 = vld [vmem:[%s5608 + $0xab0] sm:$0xff]
    %v5952 = vld [vmem:[%s5608 + $0xab8] sm:$0xff]
    %v5953 = vld [vmem:[%s5608 + $0xac0] sm:$0xff]
    %v5954 = vld [vmem:[%s5608 + $0xac8] sm:$0xff]
    %v5955 = vld [vmem:[%s5608 + $0xad0] sm:$0xff]
    %v5956 = vld [vmem:[%s5608 + $0xad8] sm:$0xff]
    %v5957 = vld [vmem:[%s5608 + $0xae0] sm:$0xff]
    %v5958 = vld [vmem:[%s5608 + $0xae8] sm:$0xff]
    %v5959 = vld [vmem:[%s5608 + $0xaf0] sm:$0xff]
    %v5960 = vld [vmem:[%s5608 + $0xaf8] sm:$0xff]
    %v5961 = vld [vmem:[%s5608 + $0xb00] sm:$0xff]
    %v5962 = vld [vmem:[%s5608 + $0xb08] sm:$0xff]
    %v5963 = vld [vmem:[%s5608 + $0xb10] sm:$0xff]
    %v5964 = vld [vmem:[%s5608 + $0xb18] sm:$0xff]
    %v5965 = vld [vmem:[%s5608 + $0xb20] sm:$0xff]
    %v5966 = vld [vmem:[%s5608 + $0xb28] sm:$0xff]
    %v5967 = vld [vmem:[%s5608 + $0xb30] sm:$0xff]
    %v5968 = vld [vmem:[%s5608 + $0xb38] sm:$0xff]
    %v5969 = vld [vmem:[%s5608 + $0xb40] sm:$0xff]
    %v5970 = vld [vmem:[%s5608 + $0xb48] sm:$0xff]
    %v5971 = vld [vmem:[%s5608 + $0xb50] sm:$0xff]
    %v5972 = vld [vmem:[%s5608 + $0xb58] sm:$0xff]
    %v5973 = vld [vmem:[%s5608 + $0xb60] sm:$0xff]
    %v5974 = vld [vmem:[%s5608 + $0xb68] sm:$0xff]
    %v5975 = vld [vmem:[%s5608 + $0xb70] sm:$0xff]
    %v5976 = vld [vmem:[%s5608 + $0xb78] sm:$0xff]
    %v5977 = vld [vmem:[%s5608 + $0xb80] sm:$0xff]
    %v5978 = vld [vmem:[%s5608 + $0xb88] sm:$0xff]
    %v5979 = vld [vmem:[%s5608 + $0xb90] sm:$0xff]
    %v5980 = vld [vmem:[%s5608 + $0xb98] sm:$0xff]
    %v5981 = vld [vmem:[%s5608 + $0xba0] sm:$0xff]
    %v5982 = vld [vmem:[%s5608 + $0xba8] sm:$0xff]
    %v5983 = vld [vmem:[%s5608 + $0xbb0] sm:$0xff]
    %v5984 = vld [vmem:[%s5608 + $0xbb8] sm:$0xff]
    %v5985 = vld [vmem:[%s5608 + $0xbc0] sm:$0xff]
    %v5986 = vld [vmem:[%s5608 + $0xbc8] sm:$0xff]
    %v5987 = vld [vmem:[%s5608 + $0xbd0] sm:$0xff]
    %v5988 = vld [vmem:[%s5608 + $0xbd8] sm:$0xff]
    %v5989 = vld [vmem:[%s5608 + $0xbe0] sm:$0xff]
    %v5990 = vld [vmem:[%s5608 + $0xbe8] sm:$0xff]
    %v5991 = vld [vmem:[%s5608 + $0xbf0] sm:$0xff]
    %v5992 = vld [vmem:[%s5608 + $0xbf8] sm:$0xff]
    %v5993 = vld [vmem:[%s5608 + $0xc00] sm:$0xff]
    %v5994 = vld [vmem:[%s5608 + $0xc08] sm:$0xff]
    %v5995 = vld [vmem:[%s5608 + $0xc10] sm:$0xff]
    %v5996 = vld [vmem:[%s5608 + $0xc18] sm:$0xff]
    %v5997 = vld [vmem:[%s5608 + $0xc20] sm:$0xff]
    %v5998 = vld [vmem:[%s5608 + $0xc28] sm:$0xff]
    %v5999 = vld [vmem:[%s5608 + $0xc30] sm:$0xff]
    %v6000 = vld [vmem:[%s5608 + $0xc38] sm:$0xff]
    %v6001 = vld [vmem:[%s5608 + $0xc40] sm:$0xff]
    %v6002 = vld [vmem:[%s5608 + $0xc48] sm:$0xff]
    %v6003 = vld [vmem:[%s5608 + $0xc50] sm:$0xff]
    %v6004 = vld [vmem:[%s5608 + $0xc58] sm:$0xff]
    %v6005 = vld [vmem:[%s5608 + $0xc60] sm:$0xff]
    %v6006 = vld [vmem:[%s5608 + $0xc68] sm:$0xff]
    %v6007 = vld [vmem:[%s5608 + $0xc70] sm:$0xff]
    %v6008 = vld [vmem:[%s5608 + $0xc78] sm:$0xff]
    %v6009 = vld [vmem:[%s5608 + $0xc80] sm:$0xff]
    %v6010 = vld [vmem:[%s5608 + $0xc88] sm:$0xff]
    %v6011 = vld [vmem:[%s5608 + $0xc90] sm:$0xff]
    %v6012 = vld [vmem:[%s5608 + $0xc98] sm:$0xff]
    %v6013 = vld [vmem:[%s5608 + $0xca0] sm:$0xff]
    %v6014 = vld [vmem:[%s5608 + $0xca8] sm:$0xff]
    %v6015 = vld [vmem:[%s5608 + $0xcb0] sm:$0xff]
    %v6016 = vld [vmem:[%s5608 + $0xcb8] sm:$0xff]
    %v6017 = vld [vmem:[%s5608 + $0xcc0] sm:$0xff]
    %v6018 = vld [vmem:[%s5608 + $0xcc8] sm:$0xff]
    %v6019 = vld [vmem:[%s5608 + $0xcd0] sm:$0xff]
    %v6020 = vld [vmem:[%s5608 + $0xcd8] sm:$0xff]
    %v6021 = vld [vmem:[%s5608 + $0xce0] sm:$0xff]
    %v6022 = vld [vmem:[%s5608 + $0xce8] sm:$0xff]
    %v6023 = vld [vmem:[%s5608 + $0xcf0] sm:$0xff]
    %v6024 = vld [vmem:[%s5608 + $0xcf8] sm:$0xff]
    %v6025 = vld [vmem:[%s5608 + $0xd00] sm:$0xff]
    %v6026 = vld [vmem:[%s5608 + $0xd08] sm:$0xff]
    %v6027 = vld [vmem:[%s5608 + $0xd10] sm:$0xff]
    %v6028 = vld [vmem:[%s5608 + $0xd18] sm:$0xff]
    %v6029 = vld [vmem:[%s5608 + $0xd20] sm:$0xff]
    %v6030 = vld [vmem:[%s5608 + $0xd28] sm:$0xff]
    %v6031 = vld [vmem:[%s5608 + $0xd30] sm:$0xff]
    %v6032 = vld [vmem:[%s5608 + $0xd38] sm:$0xff]
    %v6033 = vld [vmem:[%s5608 + $0xd40] sm:$0xff]
    %v6034 = vld [vmem:[%s5608 + $0xd48] sm:$0xff]
    %v6035 = vld [vmem:[%s5608 + $0xd50] sm:$0xff]
    %v6036 = vld [vmem:[%s5608 + $0xd58] sm:$0xff]
    %v6037 = vld [vmem:[%s5608 + $0xd60] sm:$0xff]
    %v6038 = vld [vmem:[%s5608 + $0xd68] sm:$0xff]
    %v6039 = vld [vmem:[%s5608 + $0xd70] sm:$0xff]
    %v6040 = vld [vmem:[%s5608 + $0xd78] sm:$0xff]
    %v6041 = vld [vmem:[%s5608 + $0xd80] sm:$0xff]
    %v6042 = vld [vmem:[%s5608 + $0xd88] sm:$0xff]
    %v6043 = vld [vmem:[%s5608 + $0xd90] sm:$0xff]
    %v6044 = vld [vmem:[%s5608 + $0xd98] sm:$0xff]
    %v6045 = vld [vmem:[%s5608 + $0xda0] sm:$0xff]
    %v6046 = vld [vmem:[%s5608 + $0xda8] sm:$0xff]
    %v6047 = vld [vmem:[%s5608 + $0xdb0] sm:$0xff]
    %v6048 = vld [vmem:[%s5608 + $0xdb8] sm:$0xff]
    %v6049 = vld [vmem:[%s5608 + $0xdc0] sm:$0xff]
    %v6050 = vld [vmem:[%s5608 + $0xdc8] sm:$0xff]
    %v6051 = vld [vmem:[%s5608 + $0xdd0] sm:$0xff]
    %v6052 = vld [vmem:[%s5608 + $0xdd8] sm:$0xff]
    %v6053 = vld [vmem:[%s5608 + $0xde0] sm:$0xff]
    %v6054 = vld [vmem:[%s5608 + $0xde8] sm:$0xff]
    %v6055 = vld [vmem:[%s5608 + $0xdf0] sm:$0xff]
    %v6056 = vld [vmem:[%s5608 + $0xdf8] sm:$0xff]
    %v6057 = vld [vmem:[%s5608 + $0xe00] sm:$0xff]
    %v6058 = vld [vmem:[%s5608 + $0xe08] sm:$0xff]
    %v6059 = vld [vmem:[%s5608 + $0xe10] sm:$0xff]
    %v6060 = vld [vmem:[%s5608 + $0xe18] sm:$0xff]
    %v6061 = vld [vmem:[%s5608 + $0xe20] sm:$0xff]
    %v6062 = vld [vmem:[%s5608 + $0xe28] sm:$0xff]
    %v6063 = vld [vmem:[%s5608 + $0xe30] sm:$0xff]
    %v6064 = vld [vmem:[%s5608 + $0xe38] sm:$0xff]
    %v6065 = vld [vmem:[%s5608 + $0xe40] sm:$0xff]
    %v6066 = vld [vmem:[%s5608 + $0xe48] sm:$0xff]
    %v6067 = vld [vmem:[%s5608 + $0xe50] sm:$0xff]
    %v6068 = vld [vmem:[%s5608 + $0xe58] sm:$0xff]
    %v6069 = vld [vmem:[%s5608 + $0xe60] sm:$0xff]
    %v6070 = vld [vmem:[%s5608 + $0xe68] sm:$0xff]
    %v6071 = vld [vmem:[%s5608 + $0xe70] sm:$0xff]
    %v6072 = vld [vmem:[%s5608 + $0xe78] sm:$0xff]
    %v6073 = vld [vmem:[%s5608 + $0xe80] sm:$0xff]
    %v6074 = vld [vmem:[%s5608 + $0xe88] sm:$0xff]
    %v6075 = vld [vmem:[%s5608 + $0xe90] sm:$0xff]
    %v6076 = vld [vmem:[%s5608 + $0xe98] sm:$0xff]
    %v6077 = vld [vmem:[%s5608 + $0xea0] sm:$0xff]
    %v6078 = vld [vmem:[%s5608 + $0xea8] sm:$0xff]
    %v6079 = vld [vmem:[%s5608 + $0xeb0] sm:$0xff]
    %v6080 = vld [vmem:[%s5608 + $0xeb8] sm:$0xff]
    %v6081 = vld [vmem:[%s5608 + $0xec0] sm:$0xff]
    %v6082 = vld [vmem:[%s5608 + $0xec8] sm:$0xff]
    %v6083 = vld [vmem:[%s5608 + $0xed0] sm:$0xff]
    %v6084 = vld [vmem:[%s5608 + $0xed8] sm:$0xff]
    %v6085 = vld [vmem:[%s5608 + $0xee0] sm:$0xff]
    %v6086 = vld [vmem:[%s5608 + $0xee8] sm:$0xff]
    %v6087 = vld [vmem:[%s5608 + $0xef0] sm:$0xff]
    %v6088 = vld [vmem:[%s5608 + $0xef8] sm:$0xff]
    %v6089 = vld [vmem:[%s5608 + $0xf00] sm:$0xff]
    %v6090 = vld [vmem:[%s5608 + $0xf08] sm:$0xff]
    %v6091 = vld [vmem:[%s5608 + $0xf10] sm:$0xff]
    %v6092 = vld [vmem:[%s5608 + $0xf18] sm:$0xff]
    %v6093 = vld [vmem:[%s5608 + $0xf20] sm:$0xff]
    %v6094 = vld [vmem:[%s5608 + $0xf28] sm:$0xff]
    %v6095 = vld [vmem:[%s5608 + $0xf30] sm:$0xff]
    %v6096 = vld [vmem:[%s5608 + $0xf38] sm:$0xff]
    %v6097 = vld [vmem:[%s5608 + $0xf40] sm:$0xff]
    %v6098 = vld [vmem:[%s5608 + $0xf48] sm:$0xff]
    %v6099 = vld [vmem:[%s5608 + $0xf50] sm:$0xff]
    %v6100 = vld [vmem:[%s5608 + $0xf58] sm:$0xff]
    %v6101 = vld [vmem:[%s5608 + $0xf60] sm:$0xff]
    %v6102 = vld [vmem:[%s5608 + $0xf68] sm:$0xff]
    %v6103 = vld [vmem:[%s5608 + $0xf70] sm:$0xff]
    %v6104 = vld [vmem:[%s5608 + $0xf78] sm:$0xff]
    %v6105 = vld [vmem:[%s5608 + $0xf80] sm:$0xff]
    %v6106 = vld [vmem:[%s5608 + $0xf88] sm:$0xff]
    %v6107 = vld [vmem:[%s5608 + $0xf90] sm:$0xff]
    %v6108 = vld [vmem:[%s5608 + $0xf98] sm:$0xff]
    %v6109 = vld [vmem:[%s5608 + $0xfa0] sm:$0xff]
    %v6110 = vld [vmem:[%s5608 + $0xfa8] sm:$0xff]
    %v6111 = vld [vmem:[%s5608 + $0xfb0] sm:$0xff]
    %v6112 = vld [vmem:[%s5608 + $0xfb8] sm:$0xff]
    %v6113 = vld [vmem:[%s5608 + $0xfc0] sm:$0xff]
    %v6114 = vld [vmem:[%s5608 + $0xfc8] sm:$0xff]
    %v6115 = vld [vmem:[%s5608 + $0xfd0] sm:$0xff]
    %v6116 = vld [vmem:[%s5608 + $0xfd8] sm:$0xff]
    %v6117 = vld [vmem:[%s5608 + $0xfe0] sm:$0xff]
    %v6118 = vld [vmem:[%s5608 + $0xfe8] sm:$0xff]
    %v6119 = vld [vmem:[%s5608 + $0xff0] sm:$0xff]
    %v6120 = vld [vmem:[%s5608 + $0xff8] sm:$0xff]
    %s6121 = scalar_lea.vmem [#allocation4], 5
    %v6122 = vld [vmem:[%s6121] ss:$8 sm:$0xf]
    %v6124 = vlaneseq
    %v6125 = vshrl.u32 %v6124, 7
    %v6126 = vsub.s32 0, %v6125
    %v6127 = vrot.slane %v6122, %v6126
    %v6128 = vlaneseq
    %v6129 = vshrl.u32 %v6128, 7
    %v6130 = vsub.s32 1, %v6129
    %v6131 = vrot.slane %v6122, %v6130
    %v6132 = vlaneseq
    %v6133 = vshrl.u32 %v6132, 7
    %v6134 = vsub.s32 2, %v6133
    %v6135 = vrot.slane %v6122, %v6134
    %v6136 = vlaneseq
    %v6137 = vshrl.u32 %v6136, 7
    %v6138 = vsub.s32 3, %v6137
    %v6139 = vrot.slane %v6122, %v6138
    %6144 = vmatprep.subr.mxu0 %v5610
    %6145 = vmatpush1.msra.mxu0 %v5609
    %6146 = vmatprep.subr.mxu0 %v5614
    %6147 = vmatpush1.msra.mxu0 %v5613
    %6148 = vmatprep.subr.mxu0 %v5618
    %6149 = vmatpush1.msra.mxu0 %v5617
    %6150 = vmatprep.subr.mxu0 %v5622
    %6151 = vmatpush1.msra.mxu0 %v5621
    %6152 = vmatprep.subr.mxu0 %v5626
    %6153 = vmatpush1.msra.mxu0 %v5625
    %6154 = vmatprep.subr.mxu0 %v5630
    %6155 = vmatpush1.msra.mxu0 %v5629
    %6156 = vmatprep.subr.mxu0 %v5634
    %6157 = vmatpush1.msra.mxu0 %v5633
    %6158 = vmatprep.subr.mxu0 %v5638
    %6159 = vmatpush1.msra.mxu0 %v5637
    %6160 = vmatprep.subr.mxu0 %v5642
    %6161 = vmatpush1.msra.mxu0 %v5641
    %6162 = vmatprep.subr.mxu0 %v5646
    %6163 = vmatpush1.msra.mxu0 %v5645
    %6164 = vmatprep.subr.mxu0 %v5650
    %6165 = vmatpush1.msra.mxu0 %v5649
    %6166 = vmatprep.subr.mxu0 %v5654
    %6167 = vmatpush1.msra.mxu0 %v5653
    %6168 = vmatprep.subr.mxu0 %v5658
    %6169 = vmatpush1.msra.mxu0 %v5657
    %6170 = vmatprep.subr.mxu0 %v5662
    %6171 = vmatpush1.msra.mxu0 %v5661
    %6172 = vmatprep.subr.mxu0 %v5666
    %6173 = vmatpush1.msra.mxu0 %v5665
    %6174 = vmatprep.subr.mxu0 %v5670
    %6175 = vmatpush1.msra.mxu0 %v5669
    %6176 = vmatprep.subr.mxu0 %v5674
    %6177 = vmatpush1.msra.mxu0 %v5673
    %6178 = vmatprep.subr.mxu0 %v5678
    %6179 = vmatpush1.msra.mxu0 %v5677
    %6180 = vmatprep.subr.mxu0 %v5682
    %6181 = vmatpush1.msra.mxu0 %v5681
    %6182 = vmatprep.subr.mxu0 %v5686
    %6183 = vmatpush1.msra.mxu0 %v5685
    %6184 = vmatprep.subr.mxu0 %v5690
    %6185 = vmatpush1.msra.mxu0 %v5689
    %6186 = vmatprep.subr.mxu0 %v5694
    %6187 = vmatpush1.msra.mxu0 %v5693
    %6188 = vmatprep.subr.mxu0 %v5698
    %6189 = vmatpush1.msra.mxu0 %v5697
    %6190 = vmatprep.subr.mxu0 %v5702
    %6191 = vmatpush1.msra.mxu0 %v5701
    %6192 = vmatprep.subr.mxu0 %v5706
    %6193 = vmatpush1.msra.mxu0 %v5705
    %6194 = vmatprep.subr.mxu0 %v5710
    %6195 = vmatpush1.msra.mxu0 %v5709
    %6196 = vmatprep.subr.mxu0 %v5714
    %6197 = vmatpush1.msra.mxu0 %v5713
    %6198 = vmatprep.subr.mxu0 %v5718
    %6199 = vmatpush1.msra.mxu0 %v5717
    %6200 = vmatprep.subr.mxu0 %v5722
    %6201 = vmatpush1.msra.mxu0 %v5721
    %6202 = vmatprep.subr.mxu0 %v5726
    %6203 = vmatpush1.msra.mxu0 %v5725
    %6204 = vmatprep.subr.mxu0 %v5730
    %6205 = vmatpush1.msra.mxu0 %v5729
    %6206 = vmatprep.subr.mxu0 %v5734
    %6207 = vmatpush1.msra.mxu0 %v5733
    %6208 = vmatprep.mubr.f32.mxu0 %v3703
    %6209 = vmatmul.mubr.f32.gmra.mrb[0].mxu0 %v3701
    %v6210 = vpop.f32.mrb[0].mxu0
    %v6211 = vadd.f32 %v6127, %v6210
    %v6212 = vpop.f32.mrb[0].mxu0
    %v6213 = vadd.f32 %v6131, %v6212
    %6214 = vdwg.mxu0
    %6215 = vmatprep.subr.mxu0 %v5738
    %6216 = vmatpush1.msra.mxu0 %v5737
    %6217 = vmatprep.subr.mxu0 %v5742
    %6218 = vmatpush1.msra.mxu0 %v5741
    %6219 = vmatprep.subr.mxu0 %v5746
    %6220 = vmatpush1.msra.mxu0 %v5745
    %6221 = vmatprep.subr.mxu0 %v5750
    %6222 = vmatpush1.msra.mxu0 %v5749
    %6223 = vmatprep.subr.mxu0 %v5754
    %6224 = vmatpush1.msra.mxu0 %v5753
    %6225 = vmatprep.subr.mxu0 %v5758
    %6226 = vmatpush1.msra.mxu0 %v5757
    %6227 = vmatprep.subr.mxu0 %v5762
    %6228 = vmatpush1.msra.mxu0 %v5761
    %6229 = vmatprep.subr.mxu0 %v5766
    %6230 = vmatpush1.msra.mxu0 %v5765
    %6231 = vmatprep.subr.mxu0 %v5770
    %6232 = vmatpush1.msra.mxu0 %v5769
    %6233 = vmatprep.subr.mxu0 %v5774
    %6234 = vmatpush1.msra.mxu0 %v5773
    %6235 = vmatprep.subr.mxu0 %v5778
    %6236 = vmatpush1.msra.mxu0 %v5777
    %6237 = vmatprep.subr.mxu0 %v5782
    %6238 = vmatpush1.msra.mxu0 %v5781
    %6239 = vmatprep.subr.mxu0 %v5786
    %6240 = vmatpush1.msra.mxu0 %v5785
    %6241 = vmatprep.subr.mxu0 %v5790
    %6242 = vmatpush1.msra.mxu0 %v5789
    %6243 = vmatprep.subr.mxu0 %v5794
    %6244 = vmatpush1.msra.mxu0 %v5793
    %6245 = vmatprep.subr.mxu0 %v5798
    %6246 = vmatpush1.msra.mxu0 %v5797
    %6247 = vmatprep.subr.mxu0 %v5802
    %6248 = vmatpush1.msra.mxu0 %v5801
    %6249 = vmatprep.subr.mxu0 %v5806
    %6250 = vmatpush1.msra.mxu0 %v5805
    %6251 = vmatprep.subr.mxu0 %v5810
    %6252 = vmatpush1.msra.mxu0 %v5809
    %6253 = vmatprep.subr.mxu0 %v5814
    %6254 = vmatpush1.msra.mxu0 %v5813
    %6255 = vmatprep.subr.mxu0 %v5818
    %6256 = vmatpush1.msra.mxu0 %v5817
    %6257 = vmatprep.subr.mxu0 %v5822
    %6258 = vmatpush1.msra.mxu0 %v5821
    %6259 = vmatprep.subr.mxu0 %v5826
    %6260 = vmatpush1.msra.mxu0 %v5825
    %6261 = vmatprep.subr.mxu0 %v5830
    %6262 = vmatpush1.msra.mxu0 %v5829
    %6263 = vmatprep.subr.mxu0 %v5834
    %6264 = vmatpush1.msra.mxu0 %v5833
    %6265 = vmatprep.subr.mxu0 %v5838
    %6266 = vmatpush1.msra.mxu0 %v5837
    %6267 = vmatprep.subr.mxu0 %v5842
    %6268 = vmatpush1.msra.mxu0 %v5841
    %6269 = vmatprep.subr.mxu0 %v5846
    %6270 = vmatpush1.msra.mxu0 %v5845
    %6271 = vmatprep.subr.mxu0 %v5850
    %6272 = vmatpush1.msra.mxu0 %v5849
    %6273 = vmatprep.subr.mxu0 %v5854
    %6274 = vmatpush1.msra.mxu0 %v5853
    %6275 = vmatprep.subr.mxu0 %v5858
    %6276 = vmatpush1.msra.mxu0 %v5857
    %6277 = vmatprep.subr.mxu0 %v5862
    %6278 = vmatpush1.msra.mxu0 %v5861
    %6279 = vmatprep.mubr.f32.mxu0 %v3845
    %6280 = vmatmul.mubr.f32.gmra.mrb[0].mxu0 %v3843
    %v6281 = vpop.f32.mrb[0].mxu0
    %v6282 = vadd.f32 %v6211, %v6281
    %v6283 = vpop.f32.mrb[0].mxu0
    %v6284 = vadd.f32 %v6213, %v6283
    %6285 = vdwg.mxu0
    %6286 = vmatprep.subr.mxu0 %v5866
    %6287 = vmatpush1.msra.mxu0 %v5865
    %6288 = vmatprep.subr.mxu0 %v5870
    %6289 = vmatpush1.msra.mxu0 %v5869
    %6290 = vmatprep.subr.mxu0 %v5874
    %6291 = vmatpush1.msra.mxu0 %v5873
    %6292 = vmatprep.subr.mxu0 %v5878
    %6293 = vmatpush1.msra.mxu0 %v5877
    %6294 = vmatprep.subr.mxu0 %v5882
    %6295 = vmatpush1.msra.mxu0 %v5881
    %6296 = vmatprep.subr.mxu0 %v5886
    %6297 = vmatpush1.msra.mxu0 %v5885
    %6298 = vmatprep.subr.mxu0 %v5890
    %6299 = vmatpush1.msra.mxu0 %v5889
    %6300 = vmatprep.subr.mxu0 %v5894
    %6301 = vmatpush1.msra.mxu0 %v5893
    %6302 = vmatprep.subr.mxu0 %v5898
    %6303 = vmatpush1.msra.mxu0 %v5897
    %6304 = vmatprep.subr.mxu0 %v5902
    %6305 = vmatpush1.msra.mxu0 %v5901
    %6306 = vmatprep.subr.mxu0 %v5906
    %6307 = vmatpush1.msra.mxu0 %v5905
    %6308 = vmatprep.subr.mxu0 %v5910
    %6309 = vmatpush1.msra.mxu0 %v5909
    %6310 = vmatprep.subr.mxu0 %v5914
    %6311 = vmatpush1.msra.mxu0 %v5913
    %6312 = vmatprep.subr.mxu0 %v5918
    %6313 = vmatpush1.msra.mxu0 %v5917
    %6314 = vmatprep.subr.mxu0 %v5922
    %6315 = vmatpush1.msra.mxu0 %v5921
    %6316 = vmatprep.subr.mxu0 %v5926
    %6317 = vmatpush1.msra.mxu0 %v5925
    %6318 = vmatprep.subr.mxu0 %v5930
    %6319 = vmatpush1.msra.mxu0 %v5929
    %6320 = vmatprep.subr.mxu0 %v5934
    %6321 = vmatpush1.msra.mxu0 %v5933
    %6322 = vmatprep.subr.mxu0 %v5938
    %6323 = vmatpush1.msra.mxu0 %v5937
    %6324 = vmatprep.subr.mxu0 %v5942
    %6325 = vmatpush1.msra.mxu0 %v5941
    %6326 = vmatprep.subr.mxu0 %v5946
    %6327 = vmatpush1.msra.mxu0 %v5945
    %6328 = vmatprep.subr.mxu0 %v5950
    %6329 = vmatpush1.msra.mxu0 %v5949
    %6330 = vmatprep.subr.mxu0 %v5954
    %6331 = vmatpush1.msra.mxu0 %v5953
    %6332 = vmatprep.subr.mxu0 %v5958
    %6333 = vmatpush1.msra.mxu0 %v5957
    %6334 = vmatprep.subr.mxu0 %v5962
    %6335 = vmatpush1.msra.mxu0 %v5961
    %6336 = vmatprep.subr.mxu0 %v5966
    %6337 = vmatpush1.msra.mxu0 %v5965
    %6338 = vmatprep.subr.mxu0 %v5970
    %6339 = vmatpush1.msra.mxu0 %v5969
    %6340 = vmatprep.subr.mxu0 %v5974
    %6341 = vmatpush1.msra.mxu0 %v5973
    %6342 = vmatprep.subr.mxu0 %v5978
    %6343 = vmatpush1.msra.mxu0 %v5977
    %6344 = vmatprep.subr.mxu0 %v5982
    %6345 = vmatpush1.msra.mxu0 %v5981
    %6346 = vmatprep.subr.mxu0 %v5986
    %6347 = vmatpush1.msra.mxu0 %v5985
    %6348 = vmatprep.subr.mxu0 %v5990
    %6349 = vmatpush1.msra.mxu0 %v5989
    %6350 = vmatprep.mubr.f32.mxu0 %v3987
    %6351 = vmatmul.mubr.f32.gmra.mrb[0].mxu0 %v3985
    %v6352 = vpop.f32.mrb[0].mxu0
    %v6353 = vadd.f32 %v6282, %v6352
    %v6354 = vpop.f32.mrb[0].mxu0
    %v6355 = vadd.f32 %v6284, %v6354
    %6356 = vdwg.mxu0
    %6357 = vmatprep.subr.mxu0 %v5994
    %6358 = vmatpush1.msra.mxu0 %v5993
    %6359 = vmatprep.subr.mxu0 %v5998
    %6360 = vmatpush1.msra.mxu0 %v5997
    %6361 = vmatprep.subr.mxu0 %v6002
    %6362 = vmatpush1.msra.mxu0 %v6001
    %6363 = vmatprep.subr.mxu0 %v6006
    %6364 = vmatpush1.msra.mxu0 %v6005
    %6365 = vmatprep.subr.mxu0 %v6010
    %6366 = vmatpush1.msra.mxu0 %v6009
    %6367 = vmatprep.subr.mxu0 %v6014
    %6368 = vmatpush1.msra.mxu0 %v6013
    %6369 = vmatprep.subr.mxu0 %v6018
    %6370 = vmatpush1.msra.mxu0 %v6017
    %6371 = vmatprep.subr.mxu0 %v6022
    %6372 = vmatpush1.msra.mxu0 %v6021
    %6373 = vmatprep.subr.mxu0 %v6026
    %6374 = vmatpush1.msra.mxu0 %v6025
    %6375 = vmatprep.subr.mxu0 %v6030
    %6376 = vmatpush1.msra.mxu0 %v6029
    %6377 = vmatprep.subr.mxu0 %v6034
    %6378 = vmatpush1.msra.mxu0 %v6033
    %6379 = vmatprep.subr.mxu0 %v6038
    %6380 = vmatpush1.msra.mxu0 %v6037
    %6381 = vmatprep.subr.mxu0 %v6042
    %6382 = vmatpush1.msra.mxu0 %v6041
    %6383 = vmatprep.subr.mxu0 %v6046
    %6384 = vmatpush1.msra.mxu0 %v6045
    %6385 = vmatprep.subr.mxu0 %v6050
    %6386 = vmatpush1.msra.mxu0 %v6049
    %6387 = vmatprep.subr.mxu0 %v6054
    %6388 = vmatpush1.msra.mxu0 %v6053
    %6389 = vmatprep.subr.mxu0 %v6058
    %6390 = vmatpush1.msra.mxu0 %v6057
    %6391 = vmatprep.subr.mxu0 %v6062
    %6392 = vmatpush1.msra.mxu0 %v6061
    %6393 = vmatprep.subr.mxu0 %v6066
    %6394 = vmatpush1.msra.mxu0 %v6065
    %6395 = vmatprep.subr.mxu0 %v6070
    %6396 = vmatpush1.msra.mxu0 %v6069
    %6397 = vmatprep.subr.mxu0 %v6074
    %6398 = vmatpush1.msra.mxu0 %v6073
    %6399 = vmatprep.subr.mxu0 %v6078
    %6400 = vmatpush1.msra.mxu0 %v6077
    %6401 = vmatprep.subr.mxu0 %v6082
    %6402 = vmatpush1.msra.mxu0 %v6081
    %6403 = vmatprep.subr.mxu0 %v6086
    %6404 = vmatpush1.msra.mxu0 %v6085
    %6405 = vmatprep.subr.mxu0 %v6090
    %6406 = vmatpush1.msra.mxu0 %v6089
    %6407 = vmatprep.subr.mxu0 %v6094
    %6408 = vmatpush1.msra.mxu0 %v6093
    %6409 = vmatprep.subr.mxu0 %v6098
    %6410 = vmatpush1.msra.mxu0 %v6097
    %6411 = vmatprep.subr.mxu0 %v6102
    %6412 = vmatpush1.msra.mxu0 %v6101
    %6413 = vmatprep.subr.mxu0 %v6106
    %6414 = vmatpush1.msra.mxu0 %v6105
    %6415 = vmatprep.subr.mxu0 %v6110
    %6416 = vmatpush1.msra.mxu0 %v6109
    %6417 = vmatprep.subr.mxu0 %v6114
    %6418 = vmatpush1.msra.mxu0 %v6113
    %6419 = vmatprep.subr.mxu0 %v6118
    %6420 = vmatpush1.msra.mxu0 %v6117
    %6421 = vmatprep.mubr.f32.mxu0 %v4129
    %6422 = vmatmul.mubr.f32.gmra.mrb[0].mxu0 %v4127
    %v6423 = vpop.f32.mrb[0].mxu0
    %v6424 = vadd.f32 %v6353, %v6423
    %v6425 = vpop.f32.mrb[0].mxu0
    %v6426 = vadd.f32 %v6355, %v6425
    %6427 = vdwg.mxu0
    %6428 = vmatprep.subr.mxu0 %v5612
    %6429 = vmatpush1.msra.mxu0 %v5611
    %6430 = vmatprep.subr.mxu0 %v5616
    %6431 = vmatpush1.msra.mxu0 %v5615
    %6432 = vmatprep.subr.mxu0 %v5620
    %6433 = vmatpush1.msra.mxu0 %v5619
    %6434 = vmatprep.subr.mxu0 %v5624
    %6435 = vmatpush1.msra.mxu0 %v5623
    %6436 = vmatprep.subr.mxu0 %v5628
    %6437 = vmatpush1.msra.mxu0 %v5627
    %6438 = vmatprep.subr.mxu0 %v5632
    %6439 = vmatpush1.msra.mxu0 %v5631
    %6440 = vmatprep.subr.mxu0 %v5636
    %6441 = vmatpush1.msra.mxu0 %v5635
    %6442 = vmatprep.subr.mxu0 %v5640
    %6443 = vmatpush1.msra.mxu0 %v5639
    %6444 = vmatprep.subr.mxu0 %v5644
    %6445 = vmatpush1.msra.mxu0 %v5643
    %6446 = vmatprep.subr.mxu0 %v5648
    %6447 = vmatpush1.msra.mxu0 %v5647
    %6448 = vmatprep.subr.mxu0 %v5652
    %6449 = vmatpush1.msra.mxu0 %v5651
    %6450 = vmatprep.subr.mxu0 %v5656
    %6451 = vmatpush1.msra.mxu0 %v5655
    %6452 = vmatprep.subr.mxu0 %v5660
    %6453 = vmatpush1.msra.mxu0 %v5659
    %6454 = vmatprep.subr.mxu0 %v5664
    %6455 = vmatpush1.msra.mxu0 %v5663
    %6456 = vmatprep.subr.mxu0 %v5668
    %6457 = vmatpush1.msra.mxu0 %v5667
    %6458 = vmatprep.subr.mxu0 %v5672
    %6459 = vmatpush1.msra.mxu0 %v5671
    %6460 = vmatprep.subr.mxu0 %v5676
    %6461 = vmatpush1.msra.mxu0 %v5675
    %6462 = vmatprep.subr.mxu0 %v5680
    %6463 = vmatpush1.msra.mxu0 %v5679
    %6464 = vmatprep.subr.mxu0 %v5684
    %6465 = vmatpush1.msra.mxu0 %v5683
    %6466 = vmatprep.subr.mxu0 %v5688
    %6467 = vmatpush1.msra.mxu0 %v5687
    %6468 = vmatprep.subr.mxu0 %v5692
    %6469 = vmatpush1.msra.mxu0 %v5691
    %6470 = vmatprep.subr.mxu0 %v5696
    %6471 = vmatpush1.msra.mxu0 %v5695
    %6472 = vmatprep.subr.mxu0 %v5700
    %6473 = vmatpush1.msra.mxu0 %v5699
    %6474 = vmatprep.subr.mxu0 %v5704
    %6475 = vmatpush1.msra.mxu0 %v5703
    %6476 = vmatprep.subr.mxu0 %v5708
    %6477 = vmatpush1.msra.mxu0 %v5707
    %6478 = vmatprep.subr.mxu0 %v5712
    %6479 = vmatpush1.msra.mxu0 %v5711
    %6480 = vmatprep.subr.mxu0 %v5716
    %6481 = vmatpush1.msra.mxu0 %v5715
    %6482 = vmatprep.subr.mxu0 %v5720
    %6483 = vmatpush1.msra.mxu0 %v5719
    %6484 = vmatprep.subr.mxu0 %v5724
    %6485 = vmatpush1.msra.mxu0 %v5723
    %6486 = vmatprep.subr.mxu0 %v5728
    %6487 = vmatpush1.msra.mxu0 %v5727
    %6488 = vmatprep.subr.mxu0 %v5732
    %6489 = vmatpush1.msra.mxu0 %v5731
    %6490 = vmatprep.subr.mxu0 %v5736
    %6491 = vmatpush1.msra.mxu0 %v5735
    %6492 = vmatprep.mubr.f32.mxu0 %v3703
    %6493 = vmatmul.mubr.f32.gmra.mrb[0].mxu0 %v3701
    %v6494 = vpop.f32.mrb[0].mxu0
    %v6495 = vadd.f32 %v6135, %v6494
    %v6496 = vpop.f32.mrb[0].mxu0
    %v6497 = vadd.f32 %v6139, %v6496
    %6498 = vdwg.mxu0
    %6499 = vmatprep.subr.mxu0 %v5740
    %6500 = vmatpush1.msra.mxu0 %v5739
    %6501 = vmatprep.subr.mxu0 %v5744
    %6502 = vmatpush1.msra.mxu0 %v5743
    %6503 = vmatprep.subr.mxu0 %v5748
    %6504 = vmatpush1.msra.mxu0 %v5747
    %6505 = vmatprep.subr.mxu0 %v5752
    %6506 = vmatpush1.msra.mxu0 %v5751
    %6507 = vmatprep.subr.mxu0 %v5756
    %6508 = vmatpush1.msra.mxu0 %v5755
    %6509 = vmatprep.subr.mxu0 %v5760
    %6510 = vmatpush1.msra.mxu0 %v5759
    %6511 = vmatprep.subr.mxu0 %v5764
    %6512 = vmatpush1.msra.mxu0 %v5763
    %6513 = vmatprep.subr.mxu0 %v5768
    %6514 = vmatpush1.msra.mxu0 %v5767
    %6515 = vmatprep.subr.mxu0 %v5772
    %6516 = vmatpush1.msra.mxu0 %v5771
    %6517 = vmatprep.subr.mxu0 %v5776
    %6518 = vmatpush1.msra.mxu0 %v5775
    %6519 = vmatprep.subr.mxu0 %v5780
    %6520 = vmatpush1.msra.mxu0 %v5779
    %6521 = vmatprep.subr.mxu0 %v5784
    %6522 = vmatpush1.msra.mxu0 %v5783
    %6523 = vmatprep.subr.mxu0 %v5788
    %6524 = vmatpush1.msra.mxu0 %v5787
    %6525 = vmatprep.subr.mxu0 %v5792
    %6526 = vmatpush1.msra.mxu0 %v5791
    %6527 = vmatprep.subr.mxu0 %v5796
    %6528 = vmatpush1.msra.mxu0 %v5795
    %6529 = vmatprep.subr.mxu0 %v5800
    %6530 = vmatpush1.msra.mxu0 %v5799
    %6531 = vmatprep.subr.mxu0 %v5804
    %6532 = vmatpush1.msra.mxu0 %v5803
    %6533 = vmatprep.subr.mxu0 %v5808
    %6534 = vmatpush1.msra.mxu0 %v5807
    %6535 = vmatprep.subr.mxu0 %v5812
    %6536 = vmatpush1.msra.mxu0 %v5811
    %6537 = vmatprep.subr.mxu0 %v5816
    %6538 = vmatpush1.msra.mxu0 %v5815
    %6539 = vmatprep.subr.mxu0 %v5820
    %6540 = vmatpush1.msra.mxu0 %v5819
    %6541 = vmatprep.subr.mxu0 %v5824
    %6542 = vmatpush1.msra.mxu0 %v5823
    %6543 = vmatprep.subr.mxu0 %v5828
    %6544 = vmatpush1.msra.mxu0 %v5827
    %6545 = vmatprep.subr.mxu0 %v5832
    %6546 = vmatpush1.msra.mxu0 %v5831
    %6547 = vmatprep.subr.mxu0 %v5836
    %6548 = vmatpush1.msra.mxu0 %v5835
    %6549 = vmatprep.subr.mxu0 %v5840
    %6550 = vmatpush1.msra.mxu0 %v5839
    %6551 = vmatprep.subr.mxu0 %v5844
    %6552 = vmatpush1.msra.mxu0 %v5843
    %6553 = vmatprep.subr.mxu0 %v5848
    %6554 = vmatpush1.msra.mxu0 %v5847
    %6555 = vmatprep.subr.mxu0 %v5852
    %6556 = vmatpush1.msra.mxu0 %v5851
    %6557 = vmatprep.subr.mxu0 %v5856
    %6558 = vmatpush1.msra.mxu0 %v5855
    %6559 = vmatprep.subr.mxu0 %v5860
    %6560 = vmatpush1.msra.mxu0 %v5859
    %6561 = vmatprep.subr.mxu0 %v5864
    %6562 = vmatpush1.msra.mxu0 %v5863
    %6563 = vmatprep.mubr.f32.mxu0 %v3845
    %6564 = vmatmul.mubr.f32.gmra.mrb[0].mxu0 %v3843
    %v6565 = vpop.f32.mrb[0].mxu0
    %v6566 = vadd.f32 %v6495, %v6565
    %v6567 = vpop.f32.mrb[0].mxu0
    %v6568 = vadd.f32 %v6497, %v6567
    %6569 = vdwg.mxu0
    %6570 = vmatprep.subr.mxu0 %v5868
    %6571 = vmatpush1.msra.mxu0 %v5867
    %6572 = vmatprep.subr.mxu0 %v5872
    %6573 = vmatpush1.msra.mxu0 %v5871
    %6574 = vmatprep.subr.mxu0 %v5876
    %6575 = vmatpush1.msra.mxu0 %v5875
    %6576 = vmatprep.subr.mxu0 %v5880
    %6577 = vmatpush1.msra.mxu0 %v5879
    %6578 = vmatprep.subr.mxu0 %v5884
    %6579 = vmatpush1.msra.mxu0 %v5883
    %6580 = vmatprep.subr.mxu0 %v5888
    %6581 = vmatpush1.msra.mxu0 %v5887
    %6582 = vmatprep.subr.mxu0 %v5892
    %6583 = vmatpush1.msra.mxu0 %v5891
    %6584 = vmatprep.subr.mxu0 %v5896
    %6585 = vmatpush1.msra.mxu0 %v5895
    %6586 = vmatprep.subr.mxu0 %v5900
    %6587 = vmatpush1.msra.mxu0 %v5899
    %6588 = vmatprep.subr.mxu0 %v5904
    %6589 = vmatpush1.msra.mxu0 %v5903
    %6590 = vmatprep.subr.mxu0 %v5908
    %6591 = vmatpush1.msra.mxu0 %v5907
    %6592 = vmatprep.subr.mxu0 %v5912
    %6593 = vmatpush1.msra.mxu0 %v5911
    %6594 = vmatprep.subr.mxu0 %v5916
    %6595 = vmatpush1.msra.mxu0 %v5915
    %6596 = vmatprep.subr.mxu0 %v5920
    %6597 = vmatpush1.msra.mxu0 %v5919
    %6598 = vmatprep.subr.mxu0 %v5924
    %6599 = vmatpush1.msra.mxu0 %v5923
    %6600 = vmatprep.subr.mxu0 %v5928
    %6601 = vmatpush1.msra.mxu0 %v5927
    %6602 = vmatprep.subr.mxu0 %v5932
    %6603 = vmatpush1.msra.mxu0 %v5931
    %6604 = vmatprep.subr.mxu0 %v5936
    %6605 = vmatpush1.msra.mxu0 %v5935
    %6606 = vmatprep.subr.mxu0 %v5940
    %6607 = vmatpush1.msra.mxu0 %v5939
    %6608 = vmatprep.subr.mxu0 %v5944
    %6609 = vmatpush1.msra.mxu0 %v5943
    %6610 = vmatprep.subr.mxu0 %v5948
    %6611 = vmatpush1.msra.mxu0 %v5947
    %6612 = vmatprep.subr.mxu0 %v5952
    %6613 = vmatpush1.msra.mxu0 %v5951
    %6614 = vmatprep.subr.mxu0 %v5956
    %6615 = vmatpush1.msra.mxu0 %v5955
    %6616 = vmatprep.subr.mxu0 %v5960
    %6617 = vmatpush1.msra.mxu0 %v5959
    %6618 = vmatprep.subr.mxu0 %v5964
    %6619 = vmatpush1.msra.mxu0 %v5963
    %6620 = vmatprep.subr.mxu0 %v5968
    %6621 = vmatpush1.msra.mxu0 %v5967
    %6622 = vmatprep.subr.mxu0 %v5972
    %6623 = vmatpush1.msra.mxu0 %v5971
    %6624 = vmatprep.subr.mxu0 %v5976
    %6625 = vmatpush1.msra.mxu0 %v5975
    %6626 = vmatprep.subr.mxu0 %v5980
    %6627 = vmatpush1.msra.mxu0 %v5979
    %6628 = vmatprep.subr.mxu0 %v5984
    %6629 = vmatpush1.msra.mxu0 %v5983
    %6630 = vmatprep.subr.mxu0 %v5988
    %6631 = vmatpush1.msra.mxu0 %v5987
    %6632 = vmatprep.subr.mxu0 %v5992
    %6633 = vmatpush1.msra.mxu0 %v5991
    %6634 = vmatprep.mubr.f32.mxu0 %v3987
    %6635 = vmatmul.mubr.f32.gmra.mrb[0].mxu0 %v3985
    %v6636 = vpop.f32.mrb[0].mxu0
    %v6637 = vadd.f32 %v6566, %v6636
    %v6638 = vpop.f32.mrb[0].mxu0
    %v6639 = vadd.f32 %v6568, %v6638
    %6640 = vdwg.mxu0
    %6641 = vmatprep.subr.mxu0 %v5996
    %6642 = vmatpush1.msra.mxu0 %v5995
    %6643 = vmatprep.subr.mxu0 %v6000
    %6644 = vmatpush1.msra.mxu0 %v5999
    %6645 = vmatprep.subr.mxu0 %v6004
    %6646 = vmatpush1.msra.mxu0 %v6003
    %6647 = vmatprep.subr.mxu0 %v6008
    %6648 = vmatpush1.msra.mxu0 %v6007
    %6649 = vmatprep.subr.mxu0 %v6012
    %6650 = vmatpush1.msra.mxu0 %v6011
    %6651 = vmatprep.subr.mxu0 %v6016
    %6652 = vmatpush1.msra.mxu0 %v6015
    %6653 = vmatprep.subr.mxu0 %v6020
    %6654 = vmatpush1.msra.mxu0 %v6019
    %6655 = vmatprep.subr.mxu0 %v6024
    %6656 = vmatpush1.msra.mxu0 %v6023
    %6657 = vmatprep.subr.mxu0 %v6028
    %6658 = vmatpush1.msra.mxu0 %v6027
    %6659 = vmatprep.subr.mxu0 %v6032
    %6660 = vmatpush1.msra.mxu0 %v6031
    %6661 = vmatprep.subr.mxu0 %v6036
    %6662 = vmatpush1.msra.mxu0 %v6035
    %6663 = vmatprep.subr.mxu0 %v6040
    %6664 = vmatpush1.msra.mxu0 %v6039
    %6665 = vmatprep.subr.mxu0 %v6044
    %6666 = vmatpush1.msra.mxu0 %v6043
    %6667 = vmatprep.subr.mxu0 %v6048
    %6668 = vmatpush1.msra.mxu0 %v6047
    %6669 = vmatprep.subr.mxu0 %v6052
    %6670 = vmatpush1.msra.mxu0 %v6051
    %6671 = vmatprep.subr.mxu0 %v6056
    %6672 = vmatpush1.msra.mxu0 %v6055
    %6673 = vmatprep.subr.mxu0 %v6060
    %6674 = vmatpush1.msra.mxu0 %v6059
    %6675 = vmatprep.subr.mxu0 %v6064
    %6676 = vmatpush1.msra.mxu0 %v6063
    %6677 = vmatprep.subr.mxu0 %v6068
    %6678 = vmatpush1.msra.mxu0 %v6067
    %6679 = vmatprep.subr.mxu0 %v6072
    %6680 = vmatpush1.msra.mxu0 %v6071
    %6681 = vmatprep.subr.mxu0 %v6076
    %6682 = vmatpush1.msra.mxu0 %v6075
    %6683 = vmatprep.subr.mxu0 %v6080
    %6684 = vmatpush1.msra.mxu0 %v6079
    %6685 = vmatprep.subr.mxu0 %v6084
    %6686 = vmatpush1.msra.mxu0 %v6083
    %6687 = vmatprep.subr.mxu0 %v6088
    %6688 = vmatpush1.msra.mxu0 %v6087
    %6689 = vmatprep.subr.mxu0 %v6092
    %6690 = vmatpush1.msra.mxu0 %v6091
    %6691 = vmatprep.subr.mxu0 %v6096
    %6692 = vmatpush1.msra.mxu0 %v6095
    %6693 = vmatprep.subr.mxu0 %v6100
    %6694 = vmatpush1.msra.mxu0 %v6099
    %6695 = vmatprep.subr.mxu0 %v6104
    %6696 = vmatpush1.msra.mxu0 %v6103
    %6697 = vmatprep.subr.mxu0 %v6108
    %6698 = vmatpush1.msra.mxu0 %v6107
    %6699 = vmatprep.subr.mxu0 %v6112
    %6700 = vmatpush1.msra.mxu0 %v6111
    %6701 = vmatprep.subr.mxu0 %v6116
    %6702 = vmatpush1.msra.mxu0 %v6115
    %6703 = vmatprep.subr.mxu0 %v6120
    %6704 = vmatpush1.msra.mxu0 %v6119
    %6705 = vmatprep.mubr.f32.mxu0 %v4129
    %6706 = vmatmul.mubr.f32.gmra.mrb[0].mxu0 %v4127
    %v6707 = vpop.f32.mrb[0].mxu0
    %v6708 = vadd.f32 %v6637, %v6707
    %v6709 = vpop.f32.mrb[0].mxu0
    %v6710 = vadd.f32 %v6639, %v6709
    %6711 = vdwg.mxu0
    %6712 = vmatprep.subr.mxu0 %v5353
    %6713 = vmatpush1.msra.mxu0 %v5352
    %6714 = vmatprep.subr.mxu0 %v5357
    %6715 = vmatpush1.msra.mxu0 %v5356
    %6716 = vmatprep.subr.mxu0 %v5361
    %6717 = vmatpush1.msra.mxu0 %v5360
    %6718 = vmatprep.subr.mxu0 %v5365
    %6719 = vmatpush1.msra.mxu0 %v5364
    %6720 = vmatprep.subr.mxu0 %v5369
    %6721 = vmatpush1.msra.mxu0 %v5368
    %6722 = vmatprep.subr.mxu0 %v5373
    %6723 = vmatpush1.msra.mxu0 %v5372
    %6724 = vmatprep.subr.mxu0 %v5377
    %6725 = vmatpush1.msra.mxu0 %v5376
    %6726 = vmatprep.subr.mxu0 %v5381
    %6727 = vmatpush1.msra.mxu0 %v5380
    %6728 = vmatprep.subr.mxu0 %v5385
    %6729 = vmatpush1.msra.mxu0 %v5384
    %6730 = vmatprep.subr.mxu0 %v5389
    %6731 = vmatpush1.msra.mxu0 %v5388
    %6732 = vmatprep.subr.mxu0 %v5393
    %6733 = vmatpush1.msra.mxu0 %v5392
    %6734 = vmatprep.subr.mxu0 %v5397
    %6735 = vmatpush1.msra.mxu0 %v5396
    %6736 = vmatprep.subr.mxu0 %v5401
    %6737 = vmatpush1.msra.mxu0 %v5400
    %6738 = vmatprep.subr.mxu0 %v5405
    %6739 = vmatpush1.msra.mxu0 %v5404
    %6740 = vmatprep.subr.mxu0 %v5409
    %6741 = vmatpush1.msra.mxu0 %v5408
    %6742 = vmatprep.subr.mxu0 %v5413
    %6743 = vmatpush1.msra.mxu0 %v5412
    %6744 = vmatprep.subr.mxu0 %v5417
    %6745 = vmatpush1.msra.mxu0 %v5416
    %6746 = vmatprep.subr.mxu0 %v5421
    %6747 = vmatpush1.msra.mxu0 %v5420
    %6748 = vmatprep.subr.mxu0 %v5425
    %6749 = vmatpush1.msra.mxu0 %v5424
    %6750 = vmatprep.subr.mxu0 %v5429
    %6751 = vmatpush1.msra.mxu0 %v5428
    %6752 = vmatprep.subr.mxu0 %v5433
    %6753 = vmatpush1.msra.mxu0 %v5432
    %6754 = vmatprep.subr.mxu0 %v5437
    %6755 = vmatpush1.msra.mxu0 %v5436
    %6756 = vmatprep.subr.mxu0 %v5441
    %6757 = vmatpush1.msra.mxu0 %v5440
    %6758 = vmatprep.subr.mxu0 %v5445
    %6759 = vmatpush1.msra.mxu0 %v5444
    %6760 = vmatprep.subr.mxu0 %v5449
    %6761 = vmatpush1.msra.mxu0 %v5448
    %6762 = vmatprep.subr.mxu0 %v5453
    %6763 = vmatpush1.msra.mxu0 %v5452
    %6764 = vmatprep.subr.mxu0 %v5457
    %6765 = vmatpush1.msra.mxu0 %v5456
    %6766 = vmatprep.subr.mxu0 %v5461
    %6767 = vmatpush1.msra.mxu0 %v5460
    %6768 = vmatprep.subr.mxu0 %v5465
    %6769 = vmatpush1.msra.mxu0 %v5464
    %6770 = vmatprep.subr.mxu0 %v5469
    %6771 = vmatpush1.msra.mxu0 %v5468
    %6772 = vmatprep.subr.mxu0 %v5473
    %6773 = vmatpush1.msra.mxu0 %v5472
    %6774 = vmatprep.subr.mxu0 %v5477
    %6775 = vmatpush1.msra.mxu0 %v5476
    %6776 = vmatprep.mubr.f32.mxu0 %v5349
    %6777 = vmatmul.mubr.f32.gmra.mrb[0].mxu0 %v5348
    %v6778 = vpop.f32.mrb[0].mxu0
    %v6779 = vadd.f32 %v6424, %v6778
    %v6780 = vpop.f32.mrb[0].mxu0
    %v6781 = vadd.f32 %v6426, %v6780
    %6782 = vdwg.mxu0
    %6783 = vmatprep.subr.mxu0 %v5481
    %6784 = vmatpush1.msra.mxu0 %v5480
    %6785 = vmatprep.subr.mxu0 %v5485
    %6786 = vmatpush1.msra.mxu0 %v5484
    %6787 = vmatprep.subr.mxu0 %v5489
    %6788 = vmatpush1.msra.mxu0 %v5488
    %6789 = vmatprep.subr.mxu0 %v5493
    %6790 = vmatpush1.msra.mxu0 %v5492
    %6791 = vmatprep.subr.mxu0 %v5497
    %6792 = vmatpush1.msra.mxu0 %v5496
    %6793 = vmatprep.subr.mxu0 %v5501
    %6794 = vmatpush1.msra.mxu0 %v5500
    %6795 = vmatprep.subr.mxu0 %v5505
    %6796 = vmatpush1.msra.mxu0 %v5504
    %6797 = vmatprep.subr.mxu0 %v5509
    %6798 = vmatpush1.msra.mxu0 %v5508
    %6799 = vmatprep.subr.mxu0 %v5513
    %6800 = vmatpush1.msra.mxu0 %v5512
    %6801 = vmatprep.subr.mxu0 %v5517
    %6802 = vmatpush1.msra.mxu0 %v5516
    %6803 = vmatprep.subr.mxu0 %v5521
    %6804 = vmatpush1.msra.mxu0 %v5520
    %6805 = vmatprep.subr.mxu0 %v5525
    %6806 = vmatpush1.msra.mxu0 %v5524
    %6807 = vmatprep.subr.mxu0 %v5529
    %6808 = vmatpush1.msra.mxu0 %v5528
    %6809 = vmatprep.subr.mxu0 %v5533
    %6810 = vmatpush1.msra.mxu0 %v5532
    %6811 = vmatprep.subr.mxu0 %v5537
    %6812 = vmatpush1.msra.mxu0 %v5536
    %6813 = vmatprep.subr.mxu0 %v5541
    %6814 = vmatpush1.msra.mxu0 %v5540
    %6815 = vmatprep.subr.mxu0 %v5545
    %6816 = vmatpush1.msra.mxu0 %v5544
    %6817 = vmatprep.subr.mxu0 %v5549
    %6818 = vmatpush1.msra.mxu0 %v5548
    %6819 = vmatprep.subr.mxu0 %v5553
    %6820 = vmatpush1.msra.mxu0 %v5552
    %6821 = vmatprep.subr.mxu0 %v5557
    %6822 = vmatpush1.msra.mxu0 %v5556
    %6823 = vmatprep.subr.mxu0 %v5561
    %6824 = vmatpush1.msra.mxu0 %v5560
    %6825 = vmatprep.subr.mxu0 %v5565
    %6826 = vmatpush1.msra.mxu0 %v5564
    %6827 = vmatprep.subr.mxu0 %v5569
    %6828 = vmatpush1.msra.mxu0 %v5568
    %6829 = vmatprep.subr.mxu0 %v5573
    %6830 = vmatpush1.msra.mxu0 %v5572
    %6831 = vmatprep.subr.mxu0 %v5577
    %6832 = vmatpush1.msra.mxu0 %v5576
    %6833 = vmatprep.subr.mxu0 %v5581
    %6834 = vmatpush1.msra.mxu0 %v5580
    %6835 = vmatprep.subr.mxu0 %v5585
    %6836 = vmatpush1.msra.mxu0 %v5584
    %6837 = vmatprep.subr.mxu0 %v5589
    %6838 = vmatpush1.msra.mxu0 %v5588
    %6839 = vmatprep.subr.mxu0 %v5593
    %6840 = vmatpush1.msra.mxu0 %v5592
    %6841 = vmatprep.subr.mxu0 %v5597
    %6842 = vmatpush1.msra.mxu0 %v5596
    %6843 = vmatprep.subr.mxu0 %v5601
    %6844 = vmatpush1.msra.mxu0 %v5600
    %6845 = vmatprep.subr.mxu0 %v5605
    %6846 = vmatpush1.msra.mxu0 %v5604
    %6847 = vmatprep.mubr.f32.mxu0 %v5351
    %6848 = vmatmul.mubr.f32.gmra.mrb[0].mxu0 %v5350
    %v6849 = vpop.f32.mrb[0].mxu0
    %v6850 = vadd.f32 %v6779, %v6849
    %v6851 = vpop.f32.mrb[0].mxu0
    %v6852 = vadd.f32 %v6781, %v6851
    %6853 = vdwg.mxu0
    %6854 = vmatprep.subr.mxu0 %v5355
    %6855 = vmatpush1.msra.mxu0 %v5354
    %6856 = vmatprep.subr.mxu0 %v5359
    %6857 = vmatpush1.msra.mxu0 %v5358
    %6858 = vmatprep.subr.mxu0 %v5363
    %6859 = vmatpush1.msra.mxu0 %v5362
    %6860 = vmatprep.subr.mxu0 %v5367
    %6861 = vmatpush1.msra.mxu0 %v5366
    %6862 = vmatprep.subr.mxu0 %v5371
    %6863 = vmatpush1.msra.mxu0 %v5370
    %6864 = vmatprep.subr.mxu0 %v5375
    %6865 = vmatpush1.msra.mxu0 %v5374
    %6866 = vmatprep.subr.mxu0 %v5379
    %6867 = vmatpush1.msra.mxu0 %v5378
    %6868 = vmatprep.subr.mxu0 %v5383
    %6869 = vmatpush1.msra.mxu0 %v5382
    %6870 = vmatprep.subr.mxu0 %v5387
    %6871 = vmatpush1.msra.mxu0 %v5386
    %6872 = vmatprep.subr.mxu0 %v5391
    %6873 = vmatpush1.msra.mxu0 %v5390
    %6874 = vmatprep.subr.mxu0 %v5395
    %6875 = vmatpush1.msra.mxu0 %v5394
    %6876 = vmatprep.subr.mxu0 %v5399
    %6877 = vmatpush1.msra.mxu0 %v5398
    %6878 = vmatprep.subr.mxu0 %v5403
    %6879 = vmatpush1.msra.mxu0 %v5402
    %6880 = vmatprep.subr.mxu0 %v5407
    %6881 = vmatpush1.msra.mxu0 %v5406
    %6882 = vmatprep.subr.mxu0 %v5411
    %6883 = vmatpush1.msra.mxu0 %v5410
    %6884 = vmatprep.subr.mxu0 %v5415
    %6885 = vmatpush1.msra.mxu0 %v5414
    %6886 = vmatprep.subr.mxu0 %v5419
    %6887 = vmatpush1.msra.mxu0 %v5418
    %6888 = vmatprep.subr.mxu0 %v5423
    %6889 = vmatpush1.msra.mxu0 %v5422
    %6890 = vmatprep.subr.mxu0 %v5427
    %6891 = vmatpush1.msra.mxu0 %v5426
    %6892 = vmatprep.subr.mxu0 %v5431
    %6893 = vmatpush1.msra.mxu0 %v5430
    %6894 = vmatprep.subr.mxu0 %v5435
    %6895 = vmatpush1.msra.mxu0 %v5434
    %6896 = vmatprep.subr.mxu0 %v5439
    %6897 = vmatpush1.msra.mxu0 %v5438
    %6898 = vmatprep.subr.mxu0 %v5443
    %6899 = vmatpush1.msra.mxu0 %v5442
    %6900 = vmatprep.subr.mxu0 %v5447
    %6901 = vmatpush1.msra.mxu0 %v5446
    %6902 = vmatprep.subr.mxu0 %v5451
    %6903 = vmatpush1.msra.mxu0 %v5450
    %6904 = vmatprep.subr.mxu0 %v5455
    %6905 = vmatpush1.msra.mxu0 %v5454
    %6906 = vmatprep.subr.mxu0 %v5459
    %6907 = vmatpush1.msra.mxu0 %v5458
    %6908 = vmatprep.subr.mxu0 %v5463
    %6909 = vmatpush1.msra.mxu0 %v5462
    %6910 = vmatprep.subr.mxu0 %v5467
    %6911 = vmatpush1.msra.mxu0 %v5466
    %6912 = vmatprep.subr.mxu0 %v5471
    %6913 = vmatpush1.msra.mxu0 %v5470
    %6914 = vmatprep.subr.mxu0 %v5475
    %6915 = vmatpush1.msra.mxu0 %v5474
    %6916 = vmatprep.subr.mxu0 %v5479
    %6917 = vmatpush1.msra.mxu0 %v5478
    %6918 = vmatprep.mubr.f32.mxu0 %v5349
    %6919 = vmatmul.mubr.f32.gmra.mrb[0].mxu0 %v5348
    %v6920 = vpop.f32.mrb[0].mxu0
    %v6921 = vadd.f32 %v6708, %v6920
    %v6922 = vpop.f32.mrb[0].mxu0
    %v6923 = vadd.f32 %v6710, %v6922
    %6924 = vdwg.mxu0
    %6925 = vmatprep.subr.mxu0 %v5483
    %6926 = vmatpush1.msra.mxu0 %v5482
    %6927 = vmatprep.subr.mxu0 %v5487
    %6928 = vmatpush1.msra.mxu0 %v5486
    %6929 = vmatprep.subr.mxu0 %v5491
    %6930 = vmatpush1.msra.mxu0 %v5490
    %6931 = vmatprep.subr.mxu0 %v5495
    %6932 = vmatpush1.msra.mxu0 %v5494
    %6933 = vmatprep.subr.mxu0 %v5499
    %6934 = vmatpush1.msra.mxu0 %v5498
    %6935 = vmatprep.subr.mxu0 %v5503
    %6936 = vmatpush1.msra.mxu0 %v5502
    %6937 = vmatprep.subr.mxu0 %v5507
    %6938 = vmatpush1.msra.mxu0 %v5506
    %6939 = vmatprep.subr.mxu0 %v5511
    %6940 = vmatpush1.msra.mxu0 %v5510
    %6941 = vmatprep.subr.mxu0 %v5515
    %6942 = vmatpush1.msra.mxu0 %v5514
    %6943 = vmatprep.subr.mxu0 %v5519
    %6944 = vmatpush1.msra.mxu0 %v5518
    %6945 = vmatprep.subr.mxu0 %v5523
    %6946 = vmatpush1.msra.mxu0 %v5522
    %6947 = vmatprep.subr.mxu0 %v5527
    %6948 = vmatpush1.msra.mxu0 %v5526
    %6949 = vmatprep.subr.mxu0 %v5531
    %6950 = vmatpush1.msra.mxu0 %v5530
    %6951 = vmatprep.subr.mxu0 %v5535
    %6952 = vmatpush1.msra.mxu0 %v5534
    %6953 = vmatprep.subr.mxu0 %v5539
    %6954 = vmatpush1.msra.mxu0 %v5538
    %6955 = vmatprep.subr.mxu0 %v5543
    %6956 = vmatpush1.msra.mxu0 %v5542
    %6957 = vmatprep.subr.mxu0 %v5547
    %6958 = vmatpush1.msra.mxu0 %v5546
    %6959 = vmatprep.subr.mxu0 %v5551
    %6960 = vmatpush1.msra.mxu0 %v5550
    %6961 = vmatprep.subr.mxu0 %v5555
    %6962 = vmatpush1.msra.mxu0 %v5554
    %6963 = vmatprep.subr.mxu0 %v5559
    %6964 = vmatpush1.msra.mxu0 %v5558
    %6965 = vmatprep.subr.mxu0 %v5563
    %6966 = vmatpush1.msra.mxu0 %v5562
    %6967 = vmatprep.subr.mxu0 %v5567
    %6968 = vmatpush1.msra.mxu0 %v5566
    %6969 = vmatprep.subr.mxu0 %v5571
    %6970 = vmatpush1.msra.mxu0 %v5570
    %6971 = vmatprep.subr.mxu0 %v5575
    %6972 = vmatpush1.msra.mxu0 %v5574
    %6973 = vmatprep.subr.mxu0 %v5579
    %6974 = vmatpush1.msra.mxu0 %v5578
    %6975 = vmatprep.subr.mxu0 %v5583
    %6976 = vmatpush1.msra.mxu0 %v5582
    %6977 = vmatprep.subr.mxu0 %v5587
    %6978 = vmatpush1.msra.mxu0 %v5586
    %6979 = vmatprep.subr.mxu0 %v5591
    %6980 = vmatpush1.msra.mxu0 %v5590
    %6981 = vmatprep.subr.mxu0 %v5595
    %6982 = vmatpush1.msra.mxu0 %v5594
    %6983 = vmatprep.subr.mxu0 %v5599
    %6984 = vmatpush1.msra.mxu0 %v5598
    %6985 = vmatprep.subr.mxu0 %v5603
    %6986 = vmatpush1.msra.mxu0 %v5602
    %6987 = vmatprep.subr.mxu0 %v5607
    %6988 = vmatpush1.msra.mxu0 %v5606
    %6989 = vmatprep.mubr.f32.mxu0 %v5351
    %6990 = vmatmul.mubr.f32.gmra.mrb[0].mxu0 %v5350
    %v6991 = vpop.f32.mrb[0].mxu0
    %v6992 = vadd.f32 %v6921, %v6991
    %v6993 = vpop.f32.mrb[0].mxu0
    %v6994 = vadd.f32 %v6923, %v6993
    %6995 = vdwg.mxu0
    %s6996 = scalar_lea.vmem [#allocation4], 6
    %v6997 = vld [vmem:[%s6996] ss:$8 sm:$0xf]
    %v6999 = vlaneseq
    %v7000 = vshrl.u32 %v6999, 7
    %v7001 = vsub.s32 0, %v7000
    %v7002 = vrot.slane %v6997, %v7001
    %v7003 = vlaneseq
    %v7004 = vshrl.u32 %v7003, 7
    %v7005 = vsub.s32 1, %v7004
    %v7006 = vrot.slane %v6997, %v7005
    %v7007 = vlaneseq
    %v7008 = vshrl.u32 %v7007, 7
    %v7009 = vsub.s32 2, %v7008
    %v7010 = vrot.slane %v6997, %v7009
    %v7011 = vlaneseq
    %v7012 = vshrl.u32 %v7011, 7
    %v7013 = vsub.s32 3, %v7012
    %v7014 = vrot.slane %v6997, %v7013
    %v7019 = vmul.f32 %v6850, %v7002
    %v7020 = vmul.f32 %v6852, %v7006
    %v7021 = vmul.f32 %v6992, %v7010
    %v7022 = vmul.f32 %v6994, %v7014
    %s7023 = scalar_lea.vmem [#allocation4], 7
    %v7024 = vld [vmem:[%s7023] ss:$8 sm:$0xf]
    %v7026 = vlaneseq
    %v7027 = vshrl.u32 %v7026, 7
    %v7028 = vsub.s32 0, %v7027
    %v7029 = vrot.slane %v7024, %v7028
    %v7030 = vlaneseq
    %v7031 = vshrl.u32 %v7030, 7
    %v7032 = vsub.s32 1, %v7031
    %v7033 = vrot.slane %v7024, %v7032
    %v7034 = vlaneseq
    %v7035 = vshrl.u32 %v7034, 7
    %v7036 = vsub.s32 2, %v7035
    %v7037 = vrot.slane %v7024, %v7036
    %v7038 = vlaneseq
    %v7039 = vshrl.u32 %v7038, 7
    %v7040 = vsub.s32 3, %v7039
    %v7041 = vrot.slane %v7024, %v7040
    %v7046 = vadd.f32 %v7019, %v7029
    %v7047 = vadd.f32 %v7020, %v7033
    %v7048 = vadd.f32 %v7021, %v7037
    %v7049 = vadd.f32 %v7022, %v7041
    %v7050 = vmax.f32 %v7046, 0.0
    %v7051 = vmax.f32 %v7047, 0.0
    %v7052 = vmax.f32 %v7048, 0.0
    %v7053 = vmax.f32 %v7049, 0.0
    %s7054 = scalar_lea.vmem [#allocation10], 2048
    %v7055 = vld [vmem:[%s7054] sm:$0xff]
    %v7056 = vld [vmem:[%s7054 + $0x8] sm:$0xff]
    %v7057 = vld [vmem:[%s7054 + $0x10] sm:$0xff]
    %v7058 = vld [vmem:[%s7054 + $0x18] sm:$0xff]
    %v7059 = vld [vmem:[%s7054 + $0x20] sm:$0xff]
    %v7060 = vld [vmem:[%s7054 + $0x28] sm:$0xff]
    %v7061 = vld [vmem:[%s7054 + $0x30] sm:$0xff]
    %v7062 = vld [vmem:[%s7054 + $0x38] sm:$0xff]
    %v7063 = vld [vmem:[%s7054 + $0x40] sm:$0xff]
    %v7064 = vld [vmem:[%s7054 + $0x48] sm:$0xff]
    %v7065 = vld [vmem:[%s7054 + $0x50] sm:$0xff]
    %v7066 = vld [vmem:[%s7054 + $0x58] sm:$0xff]
    %v7067 = vld [vmem:[%s7054 + $0x60] sm:$0xff]
    %v7068 = vld [vmem:[%s7054 + $0x68] sm:$0xff]
    %v7069 = vld [vmem:[%s7054 + $0x70] sm:$0xff]
    %v7070 = vld [vmem:[%s7054 + $0x78] sm:$0xff]
    %v7071 = vld [vmem:[%s7054 + $0x80] sm:$0xff]
    %v7072 = vld [vmem:[%s7054 + $0x88] sm:$0xff]
    %v7073 = vld [vmem:[%s7054 + $0x90] sm:$0xff]
    %v7074 = vld [vmem:[%s7054 + $0x98] sm:$0xff]
    %v7075 = vld [vmem:[%s7054 + $0xa0] sm:$0xff]
    %v7076 = vld [vmem:[%s7054 + $0xa8] sm:$0xff]
    %v7077 = vld [vmem:[%s7054 + $0xb0] sm:$0xff]
    %v7078 = vld [vmem:[%s7054 + $0xb8] sm:$0xff]
    %v7079 = vld [vmem:[%s7054 + $0xc0] sm:$0xff]
    %v7080 = vld [vmem:[%s7054 + $0xc8] sm:$0xff]
    %v7081 = vld [vmem:[%s7054 + $0xd0] sm:$0xff]
    %v7082 = vld [vmem:[%s7054 + $0xd8] sm:$0xff]
    %v7083 = vld [vmem:[%s7054 + $0xe0] sm:$0xff]
    %v7084 = vld [vmem:[%s7054 + $0xe8] sm:$0xff]
    %v7085 = vld [vmem:[%s7054 + $0xf0] sm:$0xff]
    %v7086 = vld [vmem:[%s7054 + $0xf8] sm:$0xff]
    %v7087 = vld [vmem:[%s7054 + $0x100] sm:$0xff]
    %v7088 = vld [vmem:[%s7054 + $0x108] sm:$0xff]
    %v7089 = vld [vmem:[%s7054 + $0x110] sm:$0xff]
    %v7090 = vld [vmem:[%s7054 + $0x118] sm:$0xff]
    %v7091 = vld [vmem:[%s7054 + $0x120] sm:$0xff]
    %v7092 = vld [vmem:[%s7054 + $0x128] sm:$0xff]
    %v7093 = vld [vmem:[%s7054 + $0x130] sm:$0xff]
    %v7094 = vld [vmem:[%s7054 + $0x138] sm:$0xff]
    %v7095 = vld [vmem:[%s7054 + $0x140] sm:$0xff]
    %v7096 = vld [vmem:[%s7054 + $0x148] sm:$0xff]
    %v7097 = vld [vmem:[%s7054 + $0x150] sm:$0xff]
    %v7098 = vld [vmem:[%s7054 + $0x158] sm:$0xff]
    %v7099 = vld [vmem:[%s7054 + $0x160] sm:$0xff]
    %v7100 = vld [vmem:[%s7054 + $0x168] sm:$0xff]
    %v7101 = vld [vmem:[%s7054 + $0x170] sm:$0xff]
    %v7102 = vld [vmem:[%s7054 + $0x178] sm:$0xff]
    %v7103 = vld [vmem:[%s7054 + $0x180] sm:$0xff]
    %v7104 = vld [vmem:[%s7054 + $0x188] sm:$0xff]
    %v7105 = vld [vmem:[%s7054 + $0x190] sm:$0xff]
    %v7106 = vld [vmem:[%s7054 + $0x198] sm:$0xff]
    %v7107 = vld [vmem:[%s7054 + $0x1a0] sm:$0xff]
    %v7108 = vld [vmem:[%s7054 + $0x1a8] sm:$0xff]
    %v7109 = vld [vmem:[%s7054 + $0x1b0] sm:$0xff]
    %v7110 = vld [vmem:[%s7054 + $0x1b8] sm:$0xff]
    %v7111 = vld [vmem:[%s7054 + $0x1c0] sm:$0xff]
    %v7112 = vld [vmem:[%s7054 + $0x1c8] sm:$0xff]
    %v7113 = vld [vmem:[%s7054 + $0x1d0] sm:$0xff]
    %v7114 = vld [vmem:[%s7054 + $0x1d8] sm:$0xff]
    %v7115 = vld [vmem:[%s7054 + $0x1e0] sm:$0xff]
    %v7116 = vld [vmem:[%s7054 + $0x1e8] sm:$0xff]
    %v7117 = vld [vmem:[%s7054 + $0x1f0] sm:$0xff]
    %v7118 = vld [vmem:[%s7054 + $0x1f8] sm:$0xff]
    %v7119 = vld [vmem:[%s7054 + $0x200] sm:$0xff]
    %v7120 = vld [vmem:[%s7054 + $0x208] sm:$0xff]
    %v7121 = vld [vmem:[%s7054 + $0x210] sm:$0xff]
    %v7122 = vld [vmem:[%s7054 + $0x218] sm:$0xff]
    %v7123 = vld [vmem:[%s7054 + $0x220] sm:$0xff]
    %v7124 = vld [vmem:[%s7054 + $0x228] sm:$0xff]
    %v7125 = vld [vmem:[%s7054 + $0x230] sm:$0xff]
    %v7126 = vld [vmem:[%s7054 + $0x238] sm:$0xff]
    %v7127 = vld [vmem:[%s7054 + $0x240] sm:$0xff]
    %v7128 = vld [vmem:[%s7054 + $0x248] sm:$0xff]
    %v7129 = vld [vmem:[%s7054 + $0x250] sm:$0xff]
    %v7130 = vld [vmem:[%s7054 + $0x258] sm:$0xff]
    %v7131 = vld [vmem:[%s7054 + $0x260] sm:$0xff]
    %v7132 = vld [vmem:[%s7054 + $0x268] sm:$0xff]
    %v7133 = vld [vmem:[%s7054 + $0x270] sm:$0xff]
    %v7134 = vld [vmem:[%s7054 + $0x278] sm:$0xff]
    %v7135 = vld [vmem:[%s7054 + $0x280] sm:$0xff]
    %v7136 = vld [vmem:[%s7054 + $0x288] sm:$0xff]
    %v7137 = vld [vmem:[%s7054 + $0x290] sm:$0xff]
    %v7138 = vld [vmem:[%s7054 + $0x298] sm:$0xff]
    %v7139 = vld [vmem:[%s7054 + $0x2a0] sm:$0xff]
    %v7140 = vld [vmem:[%s7054 + $0x2a8] sm:$0xff]
    %v7141 = vld [vmem:[%s7054 + $0x2b0] sm:$0xff]
    %v7142 = vld [vmem:[%s7054 + $0x2b8] sm:$0xff]
    %v7143 = vld [vmem:[%s7054 + $0x2c0] sm:$0xff]
    %v7144 = vld [vmem:[%s7054 + $0x2c8] sm:$0xff]
    %v7145 = vld [vmem:[%s7054 + $0x2d0] sm:$0xff]
    %v7146 = vld [vmem:[%s7054 + $0x2d8] sm:$0xff]
    %v7147 = vld [vmem:[%s7054 + $0x2e0] sm:$0xff]
    %v7148 = vld [vmem:[%s7054 + $0x2e8] sm:$0xff]
    %v7149 = vld [vmem:[%s7054 + $0x2f0] sm:$0xff]
    %v7150 = vld [vmem:[%s7054 + $0x2f8] sm:$0xff]
    %v7151 = vld [vmem:[%s7054 + $0x300] sm:$0xff]
    %v7152 = vld [vmem:[%s7054 + $0x308] sm:$0xff]
    %v7153 = vld [vmem:[%s7054 + $0x310] sm:$0xff]
    %v7154 = vld [vmem:[%s7054 + $0x318] sm:$0xff]
    %v7155 = vld [vmem:[%s7054 + $0x320] sm:$0xff]
    %v7156 = vld [vmem:[%s7054 + $0x328] sm:$0xff]
    %v7157 = vld [vmem:[%s7054 + $0x330] sm:$0xff]
    %v7158 = vld [vmem:[%s7054 + $0x338] sm:$0xff]
    %v7159 = vld [vmem:[%s7054 + $0x340] sm:$0xff]
    %v7160 = vld [vmem:[%s7054 + $0x348] sm:$0xff]
    %v7161 = vld [vmem:[%s7054 + $0x350] sm:$0xff]
    %v7162 = vld [vmem:[%s7054 + $0x358] sm:$0xff]
    %v7163 = vld [vmem:[%s7054 + $0x360] sm:$0xff]
    %v7164 = vld [vmem:[%s7054 + $0x368] sm:$0xff]
    %v7165 = vld [vmem:[%s7054 + $0x370] sm:$0xff]
    %v7166 = vld [vmem:[%s7054 + $0x378] sm:$0xff]
    %v7167 = vld [vmem:[%s7054 + $0x380] sm:$0xff]
    %v7168 = vld [vmem:[%s7054 + $0x388] sm:$0xff]
    %v7169 = vld [vmem:[%s7054 + $0x390] sm:$0xff]
    %v7170 = vld [vmem:[%s7054 + $0x398] sm:$0xff]
    %v7171 = vld [vmem:[%s7054 + $0x3a0] sm:$0xff]
    %v7172 = vld [vmem:[%s7054 + $0x3a8] sm:$0xff]
    %v7173 = vld [vmem:[%s7054 + $0x3b0] sm:$0xff]
    %v7174 = vld [vmem:[%s7054 + $0x3b8] sm:$0xff]
    %v7175 = vld [vmem:[%s7054 + $0x3c0] sm:$0xff]
    %v7176 = vld [vmem:[%s7054 + $0x3c8] sm:$0xff]
    %v7177 = vld [vmem:[%s7054 + $0x3d0] sm:$0xff]
    %v7178 = vld [vmem:[%s7054 + $0x3d8] sm:$0xff]
    %v7179 = vld [vmem:[%s7054 + $0x3e0] sm:$0xff]
    %v7180 = vld [vmem:[%s7054 + $0x3e8] sm:$0xff]
    %v7181 = vld [vmem:[%s7054 + $0x3f0] sm:$0xff]
    %v7182 = vld [vmem:[%s7054 + $0x3f8] sm:$0xff]
    %v7183 = vld [vmem:[%s7054 + $0x400] sm:$0xff]
    %v7184 = vld [vmem:[%s7054 + $0x408] sm:$0xff]
    %v7185 = vld [vmem:[%s7054 + $0x410] sm:$0xff]
    %v7186 = vld [vmem:[%s7054 + $0x418] sm:$0xff]
    %v7187 = vld [vmem:[%s7054 + $0x420] sm:$0xff]
    %v7188 = vld [vmem:[%s7054 + $0x428] sm:$0xff]
    %v7189 = vld [vmem:[%s7054 + $0x430] sm:$0xff]
    %v7190 = vld [vmem:[%s7054 + $0x438] sm:$0xff]
    %v7191 = vld [vmem:[%s7054 + $0x440] sm:$0xff]
    %v7192 = vld [vmem:[%s7054 + $0x448] sm:$0xff]
    %v7193 = vld [vmem:[%s7054 + $0x450] sm:$0xff]
    %v7194 = vld [vmem:[%s7054 + $0x458] sm:$0xff]
    %v7195 = vld [vmem:[%s7054 + $0x460] sm:$0xff]
    %v7196 = vld [vmem:[%s7054 + $0x468] sm:$0xff]
    %v7197 = vld [vmem:[%s7054 + $0x470] sm:$0xff]
    %v7198 = vld [vmem:[%s7054 + $0x478] sm:$0xff]
    %v7199 = vld [vmem:[%s7054 + $0x480] sm:$0xff]
    %v7200 = vld [vmem:[%s7054 + $0x488] sm:$0xff]
    %v7201 = vld [vmem:[%s7054 + $0x490] sm:$0xff]
    %v7202 = vld [vmem:[%s7054 + $0x498] sm:$0xff]
    %v7203 = vld [vmem:[%s7054 + $0x4a0] sm:$0xff]
    %v7204 = vld [vmem:[%s7054 + $0x4a8] sm:$0xff]
    %v7205 = vld [vmem:[%s7054 + $0x4b0] sm:$0xff]
    %v7206 = vld [vmem:[%s7054 + $0x4b8] sm:$0xff]
    %v7207 = vld [vmem:[%s7054 + $0x4c0] sm:$0xff]
    %v7208 = vld [vmem:[%s7054 + $0x4c8] sm:$0xff]
    %v7209 = vld [vmem:[%s7054 + $0x4d0] sm:$0xff]
    %v7210 = vld [vmem:[%s7054 + $0x4d8] sm:$0xff]
    %v7211 = vld [vmem:[%s7054 + $0x4e0] sm:$0xff]
    %v7212 = vld [vmem:[%s7054 + $0x4e8] sm:$0xff]
    %v7213 = vld [vmem:[%s7054 + $0x4f0] sm:$0xff]
    %v7214 = vld [vmem:[%s7054 + $0x4f8] sm:$0xff]
    %v7215 = vld [vmem:[%s7054 + $0x500] sm:$0xff]
    %v7216 = vld [vmem:[%s7054 + $0x508] sm:$0xff]
    %v7217 = vld [vmem:[%s7054 + $0x510] sm:$0xff]
    %v7218 = vld [vmem:[%s7054 + $0x518] sm:$0xff]
    %v7219 = vld [vmem:[%s7054 + $0x520] sm:$0xff]
    %v7220 = vld [vmem:[%s7054 + $0x528] sm:$0xff]
    %v7221 = vld [vmem:[%s7054 + $0x530] sm:$0xff]
    %v7222 = vld [vmem:[%s7054 + $0x538] sm:$0xff]
    %v7223 = vld [vmem:[%s7054 + $0x540] sm:$0xff]
    %v7224 = vld [vmem:[%s7054 + $0x548] sm:$0xff]
    %v7225 = vld [vmem:[%s7054 + $0x550] sm:$0xff]
    %v7226 = vld [vmem:[%s7054 + $0x558] sm:$0xff]
    %v7227 = vld [vmem:[%s7054 + $0x560] sm:$0xff]
    %v7228 = vld [vmem:[%s7054 + $0x568] sm:$0xff]
    %v7229 = vld [vmem:[%s7054 + $0x570] sm:$0xff]
    %v7230 = vld [vmem:[%s7054 + $0x578] sm:$0xff]
    %v7231 = vld [vmem:[%s7054 + $0x580] sm:$0xff]
    %v7232 = vld [vmem:[%s7054 + $0x588] sm:$0xff]
    %v7233 = vld [vmem:[%s7054 + $0x590] sm:$0xff]
    %v7234 = vld [vmem:[%s7054 + $0x598] sm:$0xff]
    %v7235 = vld [vmem:[%s7054 + $0x5a0] sm:$0xff]
    %v7236 = vld [vmem:[%s7054 + $0x5a8] sm:$0xff]
    %v7237 = vld [vmem:[%s7054 + $0x5b0] sm:$0xff]
    %v7238 = vld [vmem:[%s7054 + $0x5b8] sm:$0xff]
    %v7239 = vld [vmem:[%s7054 + $0x5c0] sm:$0xff]
    %v7240 = vld [vmem:[%s7054 + $0x5c8] sm:$0xff]
    %v7241 = vld [vmem:[%s7054 + $0x5d0] sm:$0xff]
    %v7242 = vld [vmem:[%s7054 + $0x5d8] sm:$0xff]
    %v7243 = vld [vmem:[%s7054 + $0x5e0] sm:$0xff]
    %v7244 = vld [vmem:[%s7054 + $0x5e8] sm:$0xff]
    %v7245 = vld [vmem:[%s7054 + $0x5f0] sm:$0xff]
    %v7246 = vld [vmem:[%s7054 + $0x5f8] sm:$0xff]
    %v7247 = vld [vmem:[%s7054 + $0x600] sm:$0xff]
    %v7248 = vld [vmem:[%s7054 + $0x608] sm:$0xff]
    %v7249 = vld [vmem:[%s7054 + $0x610] sm:$0xff]
    %v7250 = vld [vmem:[%s7054 + $0x618] sm:$0xff]
    %v7251 = vld [vmem:[%s7054 + $0x620] sm:$0xff]
    %v7252 = vld [vmem:[%s7054 + $0x628] sm:$0xff]
    %v7253 = vld [vmem:[%s7054 + $0x630] sm:$0xff]
    %v7254 = vld [vmem:[%s7054 + $0x638] sm:$0xff]
    %v7255 = vld [vmem:[%s7054 + $0x640] sm:$0xff]
    %v7256 = vld [vmem:[%s7054 + $0x648] sm:$0xff]
    %v7257 = vld [vmem:[%s7054 + $0x650] sm:$0xff]
    %v7258 = vld [vmem:[%s7054 + $0x658] sm:$0xff]
    %v7259 = vld [vmem:[%s7054 + $0x660] sm:$0xff]
    %v7260 = vld [vmem:[%s7054 + $0x668] sm:$0xff]
    %v7261 = vld [vmem:[%s7054 + $0x670] sm:$0xff]
    %v7262 = vld [vmem:[%s7054 + $0x678] sm:$0xff]
    %v7263 = vld [vmem:[%s7054 + $0x680] sm:$0xff]
    %v7264 = vld [vmem:[%s7054 + $0x688] sm:$0xff]
    %v7265 = vld [vmem:[%s7054 + $0x690] sm:$0xff]
    %v7266 = vld [vmem:[%s7054 + $0x698] sm:$0xff]
    %v7267 = vld [vmem:[%s7054 + $0x6a0] sm:$0xff]
    %v7268 = vld [vmem:[%s7054 + $0x6a8] sm:$0xff]
    %v7269 = vld [vmem:[%s7054 + $0x6b0] sm:$0xff]
    %v7270 = vld [vmem:[%s7054 + $0x6b8] sm:$0xff]
    %v7271 = vld [vmem:[%s7054 + $0x6c0] sm:$0xff]
    %v7272 = vld [vmem:[%s7054 + $0x6c8] sm:$0xff]
    %v7273 = vld [vmem:[%s7054 + $0x6d0] sm:$0xff]
    %v7274 = vld [vmem:[%s7054 + $0x6d8] sm:$0xff]
    %v7275 = vld [vmem:[%s7054 + $0x6e0] sm:$0xff]
    %v7276 = vld [vmem:[%s7054 + $0x6e8] sm:$0xff]
    %v7277 = vld [vmem:[%s7054 + $0x6f0] sm:$0xff]
    %v7278 = vld [vmem:[%s7054 + $0x6f8] sm:$0xff]
    %v7279 = vld [vmem:[%s7054 + $0x700] sm:$0xff]
    %v7280 = vld [vmem:[%s7054 + $0x708] sm:$0xff]
    %v7281 = vld [vmem:[%s7054 + $0x710] sm:$0xff]
    %v7282 = vld [vmem:[%s7054 + $0x718] sm:$0xff]
    %v7283 = vld [vmem:[%s7054 + $0x720] sm:$0xff]
    %v7284 = vld [vmem:[%s7054 + $0x728] sm:$0xff]
    %v7285 = vld [vmem:[%s7054 + $0x730] sm:$0xff]
    %v7286 = vld [vmem:[%s7054 + $0x738] sm:$0xff]
    %v7287 = vld [vmem:[%s7054 + $0x740] sm:$0xff]
    %v7288 = vld [vmem:[%s7054 + $0x748] sm:$0xff]
    %v7289 = vld [vmem:[%s7054 + $0x750] sm:$0xff]
    %v7290 = vld [vmem:[%s7054 + $0x758] sm:$0xff]
    %v7291 = vld [vmem:[%s7054 + $0x760] sm:$0xff]
    %v7292 = vld [vmem:[%s7054 + $0x768] sm:$0xff]
    %v7293 = vld [vmem:[%s7054 + $0x770] sm:$0xff]
    %v7294 = vld [vmem:[%s7054 + $0x778] sm:$0xff]
    %v7295 = vld [vmem:[%s7054 + $0x780] sm:$0xff]
    %v7296 = vld [vmem:[%s7054 + $0x788] sm:$0xff]
    %v7297 = vld [vmem:[%s7054 + $0x790] sm:$0xff]
    %v7298 = vld [vmem:[%s7054 + $0x798] sm:$0xff]
    %v7299 = vld [vmem:[%s7054 + $0x7a0] sm:$0xff]
    %v7300 = vld [vmem:[%s7054 + $0x7a8] sm:$0xff]
    %v7301 = vld [vmem:[%s7054 + $0x7b0] sm:$0xff]
    %v7302 = vld [vmem:[%s7054 + $0x7b8] sm:$0xff]
    %v7303 = vld [vmem:[%s7054 + $0x7c0] sm:$0xff]
    %v7304 = vld [vmem:[%s7054 + $0x7c8] sm:$0xff]
    %v7305 = vld [vmem:[%s7054 + $0x7d0] sm:$0xff]
    %v7306 = vld [vmem:[%s7054 + $0x7d8] sm:$0xff]
    %v7307 = vld [vmem:[%s7054 + $0x7e0] sm:$0xff]
    %v7308 = vld [vmem:[%s7054 + $0x7e8] sm:$0xff]
    %v7309 = vld [vmem:[%s7054 + $0x7f0] sm:$0xff]
    %v7310 = vld [vmem:[%s7054 + $0x7f8] sm:$0xff]
    %s7311 = scalar_lea.vmem [#allocation4], 64
    %v7312 = vld [vmem:[%s7311] ss:$8 sm:$0xf]
    %v7314 = vlaneseq
    %v7315 = vshrl.u32 %v7314, 7
    %v7316 = vsub.s32 0, %v7315
    %v7317 = vrot.slane %v7312, %v7316
    %v7318 = vlaneseq
    %v7319 = vshrl.u32 %v7318, 7
    %v7320 = vsub.s32 1, %v7319
    %v7321 = vrot.slane %v7312, %v7320
    %v7322 = vlaneseq
    %v7323 = vshrl.u32 %v7322, 7
    %v7324 = vsub.s32 2, %v7323
    %v7325 = vrot.slane %v7312, %v7324
    %v7326 = vlaneseq
    %v7327 = vshrl.u32 %v7326, 7
    %v7328 = vsub.s32 3, %v7327
    %v7329 = vrot.slane %v7312, %v7328
    %7334 = vmatprep.subr.mxu0 %v7056
    %7335 = vmatpush1.msra.mxu0 %v7055
    %7336 = vmatprep.subr.mxu0 %v7060
    %7337 = vmatpush1.msra.mxu0 %v7059
    %7338 = vmatprep.subr.mxu0 %v7064
    %7339 = vmatpush1.msra.mxu0 %v7063
    %7340 = vmatprep.subr.mxu0 %v7068
    %7341 = vmatpush1.msra.mxu0 %v7067
    %7342 = vmatprep.subr.mxu0 %v7072
    %7343 = vmatpush1.msra.mxu0 %v7071
    %7344 = vmatprep.subr.mxu0 %v7076
    %7345 = vmatpush1.msra.mxu0 %v7075
    %7346 = vmatprep.subr.mxu0 %v7080
    %7347 = vmatpush1.msra.mxu0 %v7079
    %7348 = vmatprep.subr.mxu0 %v7084
    %7349 = vmatpush1.msra.mxu0 %v7083
    %7350 = vmatprep.subr.mxu0 %v7088
    %7351 = vmatpush1.msra.mxu0 %v7087
    %7352 = vmatprep.subr.mxu0 %v7092
    %7353 = vmatpush1.msra.mxu0 %v7091
    %7354 = vmatprep.subr.mxu0 %v7096
    %7355 = vmatpush1.msra.mxu0 %v7095
    %7356 = vmatprep.subr.mxu0 %v7100
    %7357 = vmatpush1.msra.mxu0 %v7099
    %7358 = vmatprep.subr.mxu0 %v7104
    %7359 = vmatpush1.msra.mxu0 %v7103
    %7360 = vmatprep.subr.mxu0 %v7108
    %7361 = vmatpush1.msra.mxu0 %v7107
    %7362 = vmatprep.subr.mxu0 %v7112
    %7363 = vmatpush1.msra.mxu0 %v7111
    %7364 = vmatprep.subr.mxu0 %v7116
    %7365 = vmatpush1.msra.mxu0 %v7115
    %7366 = vmatprep.subr.mxu0 %v7120
    %7367 = vmatpush1.msra.mxu0 %v7119
    %7368 = vmatprep.subr.mxu0 %v7124
    %7369 = vmatpush1.msra.mxu0 %v7123
    %7370 = vmatprep.subr.mxu0 %v7128
    %7371 = vmatpush1.msra.mxu0 %v7127
    %7372 = vmatprep.subr.mxu0 %v7132
    %7373 = vmatpush1.msra.mxu0 %v7131
    %7374 = vmatprep.subr.mxu0 %v7136
    %7375 = vmatpush1.msra.mxu0 %v7135
    %7376 = vmatprep.subr.mxu0 %v7140
    %7377 = vmatpush1.msra.mxu0 %v7139
    %7378 = vmatprep.subr.mxu0 %v7144
    %7379 = vmatpush1.msra.mxu0 %v7143
    %7380 = vmatprep.subr.mxu0 %v7148
    %7381 = vmatpush1.msra.mxu0 %v7147
    %7382 = vmatprep.subr.mxu0 %v7152
    %7383 = vmatpush1.msra.mxu0 %v7151
    %7384 = vmatprep.subr.mxu0 %v7156
    %7385 = vmatpush1.msra.mxu0 %v7155
    %7386 = vmatprep.subr.mxu0 %v7160
    %7387 = vmatpush1.msra.mxu0 %v7159
    %7388 = vmatprep.subr.mxu0 %v7164
    %7389 = vmatpush1.msra.mxu0 %v7163
    %7390 = vmatprep.subr.mxu0 %v7168
    %7391 = vmatpush1.msra.mxu0 %v7167
    %7392 = vmatprep.subr.mxu0 %v7172
    %7393 = vmatpush1.msra.mxu0 %v7171
    %7394 = vmatprep.subr.mxu0 %v7176
    %7395 = vmatpush1.msra.mxu0 %v7175
    %7396 = vmatprep.subr.mxu0 %v7180
    %7397 = vmatpush1.msra.mxu0 %v7179
    %7398 = vmatprep.mubr.f32.mxu0 %v7051
    %7399 = vmatmul.mubr.f32.gmra.mrb[0].mxu0 %v7050
    %v7400 = vpop.f32.mrb[0].mxu0
    %v7401 = vadd.f32 %v7317, %v7400
    %v7402 = vpop.f32.mrb[0].mxu0
    %v7403 = vadd.f32 %v7321, %v7402
    %7404 = vdwg.mxu0
    %7405 = vmatprep.subr.mxu0 %v7184
    %7406 = vmatpush1.msra.mxu0 %v7183
    %7407 = vmatprep.subr.mxu0 %v7188
    %7408 = vmatpush1.msra.mxu0 %v7187
    %7409 = vmatprep.subr.mxu0 %v7192
    %7410 = vmatpush1.msra.mxu0 %v7191
    %7411 = vmatprep.subr.mxu0 %v7196
    %7412 = vmatpush1.msra.mxu0 %v7195
    %7413 = vmatprep.subr.mxu0 %v7200
    %7414 = vmatpush1.msra.mxu0 %v7199
    %7415 = vmatprep.subr.mxu0 %v7204
    %7416 = vmatpush1.msra.mxu0 %v7203
    %7417 = vmatprep.subr.mxu0 %v7208
    %7418 = vmatpush1.msra.mxu0 %v7207
    %7419 = vmatprep.subr.mxu0 %v7212
    %7420 = vmatpush1.msra.mxu0 %v7211
    %7421 = vmatprep.subr.mxu0 %v7216
    %7422 = vmatpush1.msra.mxu0 %v7215
    %7423 = vmatprep.subr.mxu0 %v7220
    %7424 = vmatpush1.msra.mxu0 %v7219
    %7425 = vmatprep.subr.mxu0 %v7224
    %7426 = vmatpush1.msra.mxu0 %v7223
    %7427 = vmatprep.subr.mxu0 %v7228
    %7428 = vmatpush1.msra.mxu0 %v7227
    %7429 = vmatprep.subr.mxu0 %v7232
    %7430 = vmatpush1.msra.mxu0 %v7231
    %7431 = vmatprep.subr.mxu0 %v7236
    %7432 = vmatpush1.msra.mxu0 %v7235
    %7433 = vmatprep.subr.mxu0 %v7240
    %7434 = vmatpush1.msra.mxu0 %v7239
    %7435 = vmatprep.subr.mxu0 %v7244
    %7436 = vmatpush1.msra.mxu0 %v7243
    %7437 = vmatprep.subr.mxu0 %v7248
    %7438 = vmatpush1.msra.mxu0 %v7247
    %7439 = vmatprep.subr.mxu0 %v7252
    %7440 = vmatpush1.msra.mxu0 %v7251
    %7441 = vmatprep.subr.mxu0 %v7256
    %7442 = vmatpush1.msra.mxu0 %v7255
    %7443 = vmatprep.subr.mxu0 %v7260
    %7444 = vmatpush1.msra.mxu0 %v7259
    %7445 = vmatprep.subr.mxu0 %v7264
    %7446 = vmatpush1.msra.mxu0 %v7263
    %7447 = vmatprep.subr.mxu0 %v7268
    %7448 = vmatpush1.msra.mxu0 %v7267
    %7449 = vmatprep.subr.mxu0 %v7272
    %7450 = vmatpush1.msra.mxu0 %v7271
    %7451 = vmatprep.subr.mxu0 %v7276
    %7452 = vmatpush1.msra.mxu0 %v7275
    %7453 = vmatprep.subr.mxu0 %v7280
    %7454 = vmatpush1.msra.mxu0 %v7279
    %7455 = vmatprep.subr.mxu0 %v7284
    %7456 = vmatpush1.msra.mxu0 %v7283
    %7457 = vmatprep.subr.mxu0 %v7288
    %7458 = vmatpush1.msra.mxu0 %v7287
    %7459 = vmatprep.subr.mxu0 %v7292
    %7460 = vmatpush1.msra.mxu0 %v7291
    %7461 = vmatprep.subr.mxu0 %v7296
    %7462 = vmatpush1.msra.mxu0 %v7295
    %7463 = vmatprep.subr.mxu0 %v7300
    %7464 = vmatpush1.msra.mxu0 %v7299
    %7465 = vmatprep.subr.mxu0 %v7304
    %7466 = vmatpush1.msra.mxu0 %v7303
    %7467 = vmatprep.subr.mxu0 %v7308
    %7468 = vmatpush1.msra.mxu0 %v7307
    %7469 = vmatprep.mubr.f32.mxu0 %v7053
    %7470 = vmatmul.mubr.f32.gmra.mrb[0].mxu0 %v7052
    %v7471 = vpop.f32.mrb[0].mxu0
    %v7472 = vadd.f32 %v7401, %v7471
    %v7473 = vpop.f32.mrb[0].mxu0
    %v7474 = vadd.f32 %v7403, %v7473
    %7475 = vdwg.mxu0
    %7476 = vmatprep.subr.mxu0 %v7058
    %7477 = vmatpush1.msra.mxu0 %v7057
    %7478 = vmatprep.subr.mxu0 %v7062
    %7479 = vmatpush1.msra.mxu0 %v7061
    %7480 = vmatprep.subr.mxu0 %v7066
    %7481 = vmatpush1.msra.mxu0 %v7065
    %7482 = vmatprep.subr.mxu0 %v7070
    %7483 = vmatpush1.msra.mxu0 %v7069
    %7484 = vmatprep.subr.mxu0 %v7074
    %7485 = vmatpush1.msra.mxu0 %v7073
    %7486 = vmatprep.subr.mxu0 %v7078
    %7487 = vmatpush1.msra.mxu0 %v7077
    %7488 = vmatprep.subr.mxu0 %v7082
    %7489 = vmatpush1.msra.mxu0 %v7081
    %7490 = vmatprep.subr.mxu0 %v7086
    %7491 = vmatpush1.msra.mxu0 %v7085
    %7492 = vmatprep.subr.mxu0 %v7090
    %7493 = vmatpush1.msra.mxu0 %v7089
    %7494 = vmatprep.subr.mxu0 %v7094
    %7495 = vmatpush1.msra.mxu0 %v7093
    %7496 = vmatprep.subr.mxu0 %v7098
    %7497 = vmatpush1.msra.mxu0 %v7097
    %7498 = vmatprep.subr.mxu0 %v7102
    %7499 = vmatpush1.msra.mxu0 %v7101
    %7500 = vmatprep.subr.mxu0 %v7106
    %7501 = vmatpush1.msra.mxu0 %v7105
    %7502 = vmatprep.subr.mxu0 %v7110
    %7503 = vmatpush1.msra.mxu0 %v7109
    %7504 = vmatprep.subr.mxu0 %v7114
    %7505 = vmatpush1.msra.mxu0 %v7113
    %7506 = vmatprep.subr.mxu0 %v7118
    %7507 = vmatpush1.msra.mxu0 %v7117
    %7508 = vmatprep.subr.mxu0 %v7122
    %7509 = vmatpush1.msra.mxu0 %v7121
    %7510 = vmatprep.subr.mxu0 %v7126
    %7511 = vmatpush1.msra.mxu0 %v7125
    %7512 = vmatprep.subr.mxu0 %v7130
    %7513 = vmatpush1.msra.mxu0 %v7129
    %7514 = vmatprep.subr.mxu0 %v7134
    %7515 = vmatpush1.msra.mxu0 %v7133
    %7516 = vmatprep.subr.mxu0 %v7138
    %7517 = vmatpush1.msra.mxu0 %v7137
    %7518 = vmatprep.subr.mxu0 %v7142
    %7519 = vmatpush1.msra.mxu0 %v7141
    %7520 = vmatprep.subr.mxu0 %v7146
    %7521 = vmatpush1.msra.mxu0 %v7145
    %7522 = vmatprep.subr.mxu0 %v7150
    %7523 = vmatpush1.msra.mxu0 %v7149
    %7524 = vmatprep.subr.mxu0 %v7154
    %7525 = vmatpush1.msra.mxu0 %v7153
    %7526 = vmatprep.subr.mxu0 %v7158
    %7527 = vmatpush1.msra.mxu0 %v7157
    %7528 = vmatprep.subr.mxu0 %v7162
    %7529 = vmatpush1.msra.mxu0 %v7161
    %7530 = vmatprep.subr.mxu0 %v7166
    %7531 = vmatpush1.msra.mxu0 %v7165
    %7532 = vmatprep.subr.mxu0 %v7170
    %7533 = vmatpush1.msra.mxu0 %v7169
    %7534 = vmatprep.subr.mxu0 %v7174
    %7535 = vmatpush1.msra.mxu0 %v7173
    %7536 = vmatprep.subr.mxu0 %v7178
    %7537 = vmatpush1.msra.mxu0 %v7177
    %7538 = vmatprep.subr.mxu0 %v7182
    %7539 = vmatpush1.msra.mxu0 %v7181
    %7540 = vmatprep.mubr.f32.mxu0 %v7051
    %7541 = vmatmul.mubr.f32.gmra.mrb[0].mxu0 %v7050
    %v7542 = vpop.f32.mrb[0].mxu0
    %v7543 = vadd.f32 %v7325, %v7542
    %v7544 = vpop.f32.mrb[0].mxu0
    %v7545 = vadd.f32 %v7329, %v7544
    %7546 = vdwg.mxu0
    %7547 = vmatprep.subr.mxu0 %v7186
    %7548 = vmatpush1.msra.mxu0 %v7185
    %7549 = vmatprep.subr.mxu0 %v7190
    %7550 = vmatpush1.msra.mxu0 %v7189
    %7551 = vmatprep.subr.mxu0 %v7194
    %7552 = vmatpush1.msra.mxu0 %v7193
    %7553 = vmatprep.subr.mxu0 %v7198
    %7554 = vmatpush1.msra.mxu0 %v7197
    %7555 = vmatprep.subr.mxu0 %v7202
    %7556 = vmatpush1.msra.mxu0 %v7201
    %7557 = vmatprep.subr.mxu0 %v7206
    %7558 = vmatpush1.msra.mxu0 %v7205
    %7559 = vmatprep.subr.mxu0 %v7210
    %7560 = vmatpush1.msra.mxu0 %v7209
    %7561 = vmatprep.subr.mxu0 %v7214
    %7562 = vmatpush1.msra.mxu0 %v7213
    %7563 = vmatprep.subr.mxu0 %v7218
    %7564 = vmatpush1.msra.mxu0 %v7217
    %7565 = vmatprep.subr.mxu0 %v7222
    %7566 = vmatpush1.msra.mxu0 %v7221
    %7567 = vmatprep.subr.mxu0 %v7226
    %7568 = vmatpush1.msra.mxu0 %v7225
    %7569 = vmatprep.subr.mxu0 %v7230
    %7570 = vmatpush1.msra.mxu0 %v7229
    %7571 = vmatprep.subr.mxu0 %v7234
    %7572 = vmatpush1.msra.mxu0 %v7233
    %7573 = vmatprep.subr.mxu0 %v7238
    %7574 = vmatpush1.msra.mxu0 %v7237
    %7575 = vmatprep.subr.mxu0 %v7242
    %7576 = vmatpush1.msra.mxu0 %v7241
    %7577 = vmatprep.subr.mxu0 %v7246
    %7578 = vmatpush1.msra.mxu0 %v7245
    %7579 = vmatprep.subr.mxu0 %v7250
    %7580 = vmatpush1.msra.mxu0 %v7249
    %7581 = vmatprep.subr.mxu0 %v7254
    %7582 = vmatpush1.msra.mxu0 %v7253
    %7583 = vmatprep.subr.mxu0 %v7258
    %7584 = vmatpush1.msra.mxu0 %v7257
    %7585 = vmatprep.subr.mxu0 %v7262
    %7586 = vmatpush1.msra.mxu0 %v7261
    %7587 = vmatprep.subr.mxu0 %v7266
    %7588 = vmatpush1.msra.mxu0 %v7265
    %7589 = vmatprep.subr.mxu0 %v7270
    %7590 = vmatpush1.msra.mxu0 %v7269
    %7591 = vmatprep.subr.mxu0 %v7274
    %7592 = vmatpush1.msra.mxu0 %v7273
    %7593 = vmatprep.subr.mxu0 %v7278
    %7594 = vmatpush1.msra.mxu0 %v7277
    %7595 = vmatprep.subr.mxu0 %v7282
    %7596 = vmatpush1.msra.mxu0 %v7281
    %7597 = vmatprep.subr.mxu0 %v7286
    %7598 = vmatpush1.msra.mxu0 %v7285
    %7599 = vmatprep.subr.mxu0 %v7290
    %7600 = vmatpush1.msra.mxu0 %v7289
    %7601 = vmatprep.subr.mxu0 %v7294
    %7602 = vmatpush1.msra.mxu0 %v7293
    %7603 = vmatprep.subr.mxu0 %v7298
    %7604 = vmatpush1.msra.mxu0 %v7297
    %7605 = vmatprep.subr.mxu0 %v7302
    %7606 = vmatpush1.msra.mxu0 %v7301
    %7607 = vmatprep.subr.mxu0 %v7306
    %7608 = vmatpush1.msra.mxu0 %v7305
    %7609 = vmatprep.subr.mxu0 %v7310
    %7610 = vmatpush1.msra.mxu0 %v7309
    %7611 = vmatprep.mubr.f32.mxu0 %v7053
    %7612 = vmatmul.mubr.f32.gmra.mrb[0].mxu0 %v7052
    %v7613 = vpop.f32.mrb[0].mxu0
    %v7614 = vadd.f32 %v7543, %v7613
    %v7615 = vpop.f32.mrb[0].mxu0
    %v7616 = vadd.f32 %v7545, %v7615
    %7617 = vdwg.mxu0
    %v7618 = vmax.f32 %v7472, 0.0
    %v7619 = vmax.f32 %v7474, 0.0
    %v7620 = vmax.f32 %v7614, 0.0
    %v7621 = vmax.f32 %v7616, 0.0
    %s7622 = scalar_lea.vmem [#allocation10], 4096
    %v7623 = vld [vmem:[%s7622] sm:$0xff]
    %v7624 = vld [vmem:[%s7622 + $0x8] sm:$0xff]
    %v7625 = vld [vmem:[%s7622 + $0x10] sm:$0xff]
    %v7626 = vld [vmem:[%s7622 + $0x18] sm:$0xff]
    %v7627 = vld [vmem:[%s7622 + $0x20] sm:$0xff]
    %v7628 = vld [vmem:[%s7622 + $0x28] sm:$0xff]
    %v7629 = vld [vmem:[%s7622 + $0x30] sm:$0xff]
    %v7630 = vld [vmem:[%s7622 + $0x38] sm:$0xff]
    %v7631 = vld [vmem:[%s7622 + $0x40] sm:$0xff]
    %v7632 = vld [vmem:[%s7622 + $0x48] sm:$0xff]
    %v7633 = vld [vmem:[%s7622 + $0x50] sm:$0xff]
    %v7634 = vld [vmem:[%s7622 + $0x58] sm:$0xff]
    %v7635 = vld [vmem:[%s7622 + $0x60] sm:$0xff]
    %v7636 = vld [vmem:[%s7622 + $0x68] sm:$0xff]
    %v7637 = vld [vmem:[%s7622 + $0x70] sm:$0xff]
    %v7638 = vld [vmem:[%s7622 + $0x78] sm:$0xff]
    %v7639 = vld [vmem:[%s7622 + $0x80] sm:$0xff]
    %v7640 = vld [vmem:[%s7622 + $0x88] sm:$0xff]
    %v7641 = vld [vmem:[%s7622 + $0x90] sm:$0xff]
    %v7642 = vld [vmem:[%s7622 + $0x98] sm:$0xff]
    %v7643 = vld [vmem:[%s7622 + $0xa0] sm:$0xff]
    %v7644 = vld [vmem:[%s7622 + $0xa8] sm:$0xff]
    %v7645 = vld [vmem:[%s7622 + $0xb0] sm:$0xff]
    %v7646 = vld [vmem:[%s7622 + $0xb8] sm:$0xff]
    %v7647 = vld [vmem:[%s7622 + $0xc0] sm:$0xff]
    %v7648 = vld [vmem:[%s7622 + $0xc8] sm:$0xff]
    %v7649 = vld [vmem:[%s7622 + $0xd0] sm:$0xff]
    %v7650 = vld [vmem:[%s7622 + $0xd8] sm:$0xff]
    %v7651 = vld [vmem:[%s7622 + $0xe0] sm:$0xff]
    %v7652 = vld [vmem:[%s7622 + $0xe8] sm:$0xff]
    %v7653 = vld [vmem:[%s7622 + $0xf0] sm:$0xff]
    %v7654 = vld [vmem:[%s7622 + $0xf8] sm:$0xff]
    %v7655 = vld [vmem:[%s7622 + $0x100] sm:$0xff]
    %v7656 = vld [vmem:[%s7622 + $0x108] sm:$0xff]
    %v7657 = vld [vmem:[%s7622 + $0x110] sm:$0xff]
    %v7658 = vld [vmem:[%s7622 + $0x118] sm:$0xff]
    %v7659 = vld [vmem:[%s7622 + $0x120] sm:$0xff]
    %v7660 = vld [vmem:[%s7622 + $0x128] sm:$0xff]
    %v7661 = vld [vmem:[%s7622 + $0x130] sm:$0xff]
    %v7662 = vld [vmem:[%s7622 + $0x138] sm:$0xff]
    %v7663 = vld [vmem:[%s7622 + $0x140] sm:$0xff]
    %v7664 = vld [vmem:[%s7622 + $0x148] sm:$0xff]
    %v7665 = vld [vmem:[%s7622 + $0x150] sm:$0xff]
    %v7666 = vld [vmem:[%s7622 + $0x158] sm:$0xff]
    %v7667 = vld [vmem:[%s7622 + $0x160] sm:$0xff]
    %v7668 = vld [vmem:[%s7622 + $0x168] sm:$0xff]
    %v7669 = vld [vmem:[%s7622 + $0x170] sm:$0xff]
    %v7670 = vld [vmem:[%s7622 + $0x178] sm:$0xff]
    %v7671 = vld [vmem:[%s7622 + $0x180] sm:$0xff]
    %v7672 = vld [vmem:[%s7622 + $0x188] sm:$0xff]
    %v7673 = vld [vmem:[%s7622 + $0x190] sm:$0xff]
    %v7674 = vld [vmem:[%s7622 + $0x198] sm:$0xff]
    %v7675 = vld [vmem:[%s7622 + $0x1a0] sm:$0xff]
    %v7676 = vld [vmem:[%s7622 + $0x1a8] sm:$0xff]
    %v7677 = vld [vmem:[%s7622 + $0x1b0] sm:$0xff]
    %v7678 = vld [vmem:[%s7622 + $0x1b8] sm:$0xff]
    %v7679 = vld [vmem:[%s7622 + $0x1c0] sm:$0xff]
    %v7680 = vld [vmem:[%s7622 + $0x1c8] sm:$0xff]
    %v7681 = vld [vmem:[%s7622 + $0x1d0] sm:$0xff]
    %v7682 = vld [vmem:[%s7622 + $0x1d8] sm:$0xff]
    %v7683 = vld [vmem:[%s7622 + $0x1e0] sm:$0xff]
    %v7684 = vld [vmem:[%s7622 + $0x1e8] sm:$0xff]
    %v7685 = vld [vmem:[%s7622 + $0x1f0] sm:$0xff]
    %v7686 = vld [vmem:[%s7622 + $0x1f8] sm:$0xff]
    %v7687 = vld [vmem:[%s7622 + $0x200] sm:$0xff]
    %v7688 = vld [vmem:[%s7622 + $0x208] sm:$0xff]
    %v7689 = vld [vmem:[%s7622 + $0x210] sm:$0xff]
    %v7690 = vld [vmem:[%s7622 + $0x218] sm:$0xff]
    %v7691 = vld [vmem:[%s7622 + $0x220] sm:$0xff]
    %v7692 = vld [vmem:[%s7622 + $0x228] sm:$0xff]
    %v7693 = vld [vmem:[%s7622 + $0x230] sm:$0xff]
    %v7694 = vld [vmem:[%s7622 + $0x238] sm:$0xff]
    %v7695 = vld [vmem:[%s7622 + $0x240] sm:$0xff]
    %v7696 = vld [vmem:[%s7622 + $0x248] sm:$0xff]
    %v7697 = vld [vmem:[%s7622 + $0x250] sm:$0xff]
    %v7698 = vld [vmem:[%s7622 + $0x258] sm:$0xff]
    %v7699 = vld [vmem:[%s7622 + $0x260] sm:$0xff]
    %v7700 = vld [vmem:[%s7622 + $0x268] sm:$0xff]
    %v7701 = vld [vmem:[%s7622 + $0x270] sm:$0xff]
    %v7702 = vld [vmem:[%s7622 + $0x278] sm:$0xff]
    %v7703 = vld [vmem:[%s7622 + $0x280] sm:$0xff]
    %v7704 = vld [vmem:[%s7622 + $0x288] sm:$0xff]
    %v7705 = vld [vmem:[%s7622 + $0x290] sm:$0xff]
    %v7706 = vld [vmem:[%s7622 + $0x298] sm:$0xff]
    %v7707 = vld [vmem:[%s7622 + $0x2a0] sm:$0xff]
    %v7708 = vld [vmem:[%s7622 + $0x2a8] sm:$0xff]
    %v7709 = vld [vmem:[%s7622 + $0x2b0] sm:$0xff]
    %v7710 = vld [vmem:[%s7622 + $0x2b8] sm:$0xff]
    %v7711 = vld [vmem:[%s7622 + $0x2c0] sm:$0xff]
    %v7712 = vld [vmem:[%s7622 + $0x2c8] sm:$0xff]
    %v7713 = vld [vmem:[%s7622 + $0x2d0] sm:$0xff]
    %v7714 = vld [vmem:[%s7622 + $0x2d8] sm:$0xff]
    %v7715 = vld [vmem:[%s7622 + $0x2e0] sm:$0xff]
    %v7716 = vld [vmem:[%s7622 + $0x2e8] sm:$0xff]
    %v7717 = vld [vmem:[%s7622 + $0x2f0] sm:$0xff]
    %v7718 = vld [vmem:[%s7622 + $0x2f8] sm:$0xff]
    %v7719 = vld [vmem:[%s7622 + $0x300] sm:$0xff]
    %v7720 = vld [vmem:[%s7622 + $0x308] sm:$0xff]
    %v7721 = vld [vmem:[%s7622 + $0x310] sm:$0xff]
    %v7722 = vld [vmem:[%s7622 + $0x318] sm:$0xff]
    %v7723 = vld [vmem:[%s7622 + $0x320] sm:$0xff]
    %v7724 = vld [vmem:[%s7622 + $0x328] sm:$0xff]
    %v7725 = vld [vmem:[%s7622 + $0x330] sm:$0xff]
    %v7726 = vld [vmem:[%s7622 + $0x338] sm:$0xff]
    %v7727 = vld [vmem:[%s7622 + $0x340] sm:$0xff]
    %v7728 = vld [vmem:[%s7622 + $0x348] sm:$0xff]
    %v7729 = vld [vmem:[%s7622 + $0x350] sm:$0xff]
    %v7730 = vld [vmem:[%s7622 + $0x358] sm:$0xff]
    %v7731 = vld [vmem:[%s7622 + $0x360] sm:$0xff]
    %v7732 = vld [vmem:[%s7622 + $0x368] sm:$0xff]
    %v7733 = vld [vmem:[%s7622 + $0x370] sm:$0xff]
    %v7734 = vld [vmem:[%s7622 + $0x378] sm:$0xff]
    %v7735 = vld [vmem:[%s7622 + $0x380] sm:$0xff]
    %v7736 = vld [vmem:[%s7622 + $0x388] sm:$0xff]
    %v7737 = vld [vmem:[%s7622 + $0x390] sm:$0xff]
    %v7738 = vld [vmem:[%s7622 + $0x398] sm:$0xff]
    %v7739 = vld [vmem:[%s7622 + $0x3a0] sm:$0xff]
    %v7740 = vld [vmem:[%s7622 + $0x3a8] sm:$0xff]
    %v7741 = vld [vmem:[%s7622 + $0x3b0] sm:$0xff]
    %v7742 = vld [vmem:[%s7622 + $0x3b8] sm:$0xff]
    %v7743 = vld [vmem:[%s7622 + $0x3c0] sm:$0xff]
    %v7744 = vld [vmem:[%s7622 + $0x3c8] sm:$0xff]
    %v7745 = vld [vmem:[%s7622 + $0x3d0] sm:$0xff]
    %v7746 = vld [vmem:[%s7622 + $0x3d8] sm:$0xff]
    %v7747 = vld [vmem:[%s7622 + $0x3e0] sm:$0xff]
    %v7748 = vld [vmem:[%s7622 + $0x3e8] sm:$0xff]
    %v7749 = vld [vmem:[%s7622 + $0x3f0] sm:$0xff]
    %v7750 = vld [vmem:[%s7622 + $0x3f8] sm:$0xff]
    %v7751 = vld [vmem:[%s7622 + $0x400] sm:$0xff]
    %v7752 = vld [vmem:[%s7622 + $0x408] sm:$0xff]
    %v7753 = vld [vmem:[%s7622 + $0x410] sm:$0xff]
    %v7754 = vld [vmem:[%s7622 + $0x418] sm:$0xff]
    %v7755 = vld [vmem:[%s7622 + $0x420] sm:$0xff]
    %v7756 = vld [vmem:[%s7622 + $0x428] sm:$0xff]
    %v7757 = vld [vmem:[%s7622 + $0x430] sm:$0xff]
    %v7758 = vld [vmem:[%s7622 + $0x438] sm:$0xff]
    %v7759 = vld [vmem:[%s7622 + $0x440] sm:$0xff]
    %v7760 = vld [vmem:[%s7622 + $0x448] sm:$0xff]
    %v7761 = vld [vmem:[%s7622 + $0x450] sm:$0xff]
    %v7762 = vld [vmem:[%s7622 + $0x458] sm:$0xff]
    %v7763 = vld [vmem:[%s7622 + $0x460] sm:$0xff]
    %v7764 = vld [vmem:[%s7622 + $0x468] sm:$0xff]
    %v7765 = vld [vmem:[%s7622 + $0x470] sm:$0xff]
    %v7766 = vld [vmem:[%s7622 + $0x478] sm:$0xff]
    %v7767 = vld [vmem:[%s7622 + $0x480] sm:$0xff]
    %v7768 = vld [vmem:[%s7622 + $0x488] sm:$0xff]
    %v7769 = vld [vmem:[%s7622 + $0x490] sm:$0xff]
    %v7770 = vld [vmem:[%s7622 + $0x498] sm:$0xff]
    %v7771 = vld [vmem:[%s7622 + $0x4a0] sm:$0xff]
    %v7772 = vld [vmem:[%s7622 + $0x4a8] sm:$0xff]
    %v7773 = vld [vmem:[%s7622 + $0x4b0] sm:$0xff]
    %v7774 = vld [vmem:[%s7622 + $0x4b8] sm:$0xff]
    %v7775 = vld [vmem:[%s7622 + $0x4c0] sm:$0xff]
    %v7776 = vld [vmem:[%s7622 + $0x4c8] sm:$0xff]
    %v7777 = vld [vmem:[%s7622 + $0x4d0] sm:$0xff]
    %v7778 = vld [vmem:[%s7622 + $0x4d8] sm:$0xff]
    %v7779 = vld [vmem:[%s7622 + $0x4e0] sm:$0xff]
    %v7780 = vld [vmem:[%s7622 + $0x4e8] sm:$0xff]
    %v7781 = vld [vmem:[%s7622 + $0x4f0] sm:$0xff]
    %v7782 = vld [vmem:[%s7622 + $0x4f8] sm:$0xff]
    %v7783 = vld [vmem:[%s7622 + $0x500] sm:$0xff]
    %v7784 = vld [vmem:[%s7622 + $0x508] sm:$0xff]
    %v7785 = vld [vmem:[%s7622 + $0x510] sm:$0xff]
    %v7786 = vld [vmem:[%s7622 + $0x518] sm:$0xff]
    %v7787 = vld [vmem:[%s7622 + $0x520] sm:$0xff]
    %v7788 = vld [vmem:[%s7622 + $0x528] sm:$0xff]
    %v7789 = vld [vmem:[%s7622 + $0x530] sm:$0xff]
    %v7790 = vld [vmem:[%s7622 + $0x538] sm:$0xff]
    %v7791 = vld [vmem:[%s7622 + $0x540] sm:$0xff]
    %v7792 = vld [vmem:[%s7622 + $0x548] sm:$0xff]
    %v7793 = vld [vmem:[%s7622 + $0x550] sm:$0xff]
    %v7794 = vld [vmem:[%s7622 + $0x558] sm:$0xff]
    %v7795 = vld [vmem:[%s7622 + $0x560] sm:$0xff]
    %v7796 = vld [vmem:[%s7622 + $0x568] sm:$0xff]
    %v7797 = vld [vmem:[%s7622 + $0x570] sm:$0xff]
    %v7798 = vld [vmem:[%s7622 + $0x578] sm:$0xff]
    %v7799 = vld [vmem:[%s7622 + $0x580] sm:$0xff]
    %v7800 = vld [vmem:[%s7622 + $0x588] sm:$0xff]
    %v7801 = vld [vmem:[%s7622 + $0x590] sm:$0xff]
    %v7802 = vld [vmem:[%s7622 + $0x598] sm:$0xff]
    %v7803 = vld [vmem:[%s7622 + $0x5a0] sm:$0xff]
    %v7804 = vld [vmem:[%s7622 + $0x5a8] sm:$0xff]
    %v7805 = vld [vmem:[%s7622 + $0x5b0] sm:$0xff]
    %v7806 = vld [vmem:[%s7622 + $0x5b8] sm:$0xff]
    %v7807 = vld [vmem:[%s7622 + $0x5c0] sm:$0xff]
    %v7808 = vld [vmem:[%s7622 + $0x5c8] sm:$0xff]
    %v7809 = vld [vmem:[%s7622 + $0x5d0] sm:$0xff]
    %v7810 = vld [vmem:[%s7622 + $0x5d8] sm:$0xff]
    %v7811 = vld [vmem:[%s7622 + $0x5e0] sm:$0xff]
    %v7812 = vld [vmem:[%s7622 + $0x5e8] sm:$0xff]
    %v7813 = vld [vmem:[%s7622 + $0x5f0] sm:$0xff]
    %v7814 = vld [vmem:[%s7622 + $0x5f8] sm:$0xff]
    %v7815 = vld [vmem:[%s7622 + $0x600] sm:$0xff]
    %v7816 = vld [vmem:[%s7622 + $0x608] sm:$0xff]
    %v7817 = vld [vmem:[%s7622 + $0x610] sm:$0xff]
    %v7818 = vld [vmem:[%s7622 + $0x618] sm:$0xff]
    %v7819 = vld [vmem:[%s7622 + $0x620] sm:$0xff]
    %v7820 = vld [vmem:[%s7622 + $0x628] sm:$0xff]
    %v7821 = vld [vmem:[%s7622 + $0x630] sm:$0xff]
    %v7822 = vld [vmem:[%s7622 + $0x638] sm:$0xff]
    %v7823 = vld [vmem:[%s7622 + $0x640] sm:$0xff]
    %v7824 = vld [vmem:[%s7622 + $0x648] sm:$0xff]
    %v7825 = vld [vmem:[%s7622 + $0x650] sm:$0xff]
    %v7826 = vld [vmem:[%s7622 + $0x658] sm:$0xff]
    %v7827 = vld [vmem:[%s7622 + $0x660] sm:$0xff]
    %v7828 = vld [vmem:[%s7622 + $0x668] sm:$0xff]
    %v7829 = vld [vmem:[%s7622 + $0x670] sm:$0xff]
    %v7830 = vld [vmem:[%s7622 + $0x678] sm:$0xff]
    %v7831 = vld [vmem:[%s7622 + $0x680] sm:$0xff]
    %v7832 = vld [vmem:[%s7622 + $0x688] sm:$0xff]
    %v7833 = vld [vmem:[%s7622 + $0x690] sm:$0xff]
    %v7834 = vld [vmem:[%s7622 + $0x698] sm:$0xff]
    %v7835 = vld [vmem:[%s7622 + $0x6a0] sm:$0xff]
    %v7836 = vld [vmem:[%s7622 + $0x6a8] sm:$0xff]
    %v7837 = vld [vmem:[%s7622 + $0x6b0] sm:$0xff]
    %v7838 = vld [vmem:[%s7622 + $0x6b8] sm:$0xff]
    %v7839 = vld [vmem:[%s7622 + $0x6c0] sm:$0xff]
    %v7840 = vld [vmem:[%s7622 + $0x6c8] sm:$0xff]
    %v7841 = vld [vmem:[%s7622 + $0x6d0] sm:$0xff]
    %v7842 = vld [vmem:[%s7622 + $0x6d8] sm:$0xff]
    %v7843 = vld [vmem:[%s7622 + $0x6e0] sm:$0xff]
    %v7844 = vld [vmem:[%s7622 + $0x6e8] sm:$0xff]
    %v7845 = vld [vmem:[%s7622 + $0x6f0] sm:$0xff]
    %v7846 = vld [vmem:[%s7622 + $0x6f8] sm:$0xff]
    %v7847 = vld [vmem:[%s7622 + $0x700] sm:$0xff]
    %v7848 = vld [vmem:[%s7622 + $0x708] sm:$0xff]
    %v7849 = vld [vmem:[%s7622 + $0x710] sm:$0xff]
    %v7850 = vld [vmem:[%s7622 + $0x718] sm:$0xff]
    %v7851 = vld [vmem:[%s7622 + $0x720] sm:$0xff]
    %v7852 = vld [vmem:[%s7622 + $0x728] sm:$0xff]
    %v7853 = vld [vmem:[%s7622 + $0x730] sm:$0xff]
    %v7854 = vld [vmem:[%s7622 + $0x738] sm:$0xff]
    %v7855 = vld [vmem:[%s7622 + $0x740] sm:$0xff]
    %v7856 = vld [vmem:[%s7622 + $0x748] sm:$0xff]
    %v7857 = vld [vmem:[%s7622 + $0x750] sm:$0xff]
    %v7858 = vld [vmem:[%s7622 + $0x758] sm:$0xff]
    %v7859 = vld [vmem:[%s7622 + $0x760] sm:$0xff]
    %v7860 = vld [vmem:[%s7622 + $0x768] sm:$0xff]
    %v7861 = vld [vmem:[%s7622 + $0x770] sm:$0xff]
    %v7862 = vld [vmem:[%s7622 + $0x778] sm:$0xff]
    %v7863 = vld [vmem:[%s7622 + $0x780] sm:$0xff]
    %v7864 = vld [vmem:[%s7622 + $0x788] sm:$0xff]
    %v7865 = vld [vmem:[%s7622 + $0x790] sm:$0xff]
    %v7866 = vld [vmem:[%s7622 + $0x798] sm:$0xff]
    %v7867 = vld [vmem:[%s7622 + $0x7a0] sm:$0xff]
    %v7868 = vld [vmem:[%s7622 + $0x7a8] sm:$0xff]
    %v7869 = vld [vmem:[%s7622 + $0x7b0] sm:$0xff]
    %v7870 = vld [vmem:[%s7622 + $0x7b8] sm:$0xff]
    %v7871 = vld [vmem:[%s7622 + $0x7c0] sm:$0xff]
    %v7872 = vld [vmem:[%s7622 + $0x7c8] sm:$0xff]
    %v7873 = vld [vmem:[%s7622 + $0x7d0] sm:$0xff]
    %v7874 = vld [vmem:[%s7622 + $0x7d8] sm:$0xff]
    %v7875 = vld [vmem:[%s7622 + $0x7e0] sm:$0xff]
    %v7876 = vld [vmem:[%s7622 + $0x7e8] sm:$0xff]
    %v7877 = vld [vmem:[%s7622 + $0x7f0] sm:$0xff]
    %v7878 = vld [vmem:[%s7622 + $0x7f8] sm:$0xff]
    %7879 = vmatprep.subr.mxu0 %v7624
    %7880 = vmatpush1.msra.mxu0 %v7623
    %7881 = vmatprep.subr.mxu0 %v7628
    %7882 = vmatpush1.msra.mxu0 %v7627
    %7883 = vmatprep.subr.mxu0 %v7632
    %7884 = vmatpush1.msra.mxu0 %v7631
    %7885 = vmatprep.subr.mxu0 %v7636
    %7886 = vmatpush1.msra.mxu0 %v7635
    %7887 = vmatprep.subr.mxu0 %v7640
    %7888 = vmatpush1.msra.mxu0 %v7639
    %7889 = vmatprep.subr.mxu0 %v7644
    %7890 = vmatpush1.msra.mxu0 %v7643
    %7891 = vmatprep.subr.mxu0 %v7648
    %7892 = vmatpush1.msra.mxu0 %v7647
    %7893 = vmatprep.subr.mxu0 %v7652
    %7894 = vmatpush1.msra.mxu0 %v7651
    %7895 = vmatprep.subr.mxu0 %v7656
    %7896 = vmatpush1.msra.mxu0 %v7655
    %7897 = vmatprep.subr.mxu0 %v7660
    %7898 = vmatpush1.msra.mxu0 %v7659
    %7899 = vmatprep.subr.mxu0 %v7664
    %7900 = vmatpush1.msra.mxu0 %v7663
    %7901 = vmatprep.subr.mxu0 %v7668
    %7902 = vmatpush1.msra.mxu0 %v7667
    %7903 = vmatprep.subr.mxu0 %v7672
    %7904 = vmatpush1.msra.mxu0 %v7671
    %7905 = vmatprep.subr.mxu0 %v7676
    %7906 = vmatpush1.msra.mxu0 %v7675
    %7907 = vmatprep.subr.mxu0 %v7680
    %7908 = vmatpush1.msra.mxu0 %v7679
    %7909 = vmatprep.subr.mxu0 %v7684
    %7910 = vmatpush1.msra.mxu0 %v7683
    %7911 = vmatprep.subr.mxu0 %v7688
    %7912 = vmatpush1.msra.mxu0 %v7687
    %7913 = vmatprep.subr.mxu0 %v7692
    %7914 = vmatpush1.msra.mxu0 %v7691
    %7915 = vmatprep.subr.mxu0 %v7696
    %7916 = vmatpush1.msra.mxu0 %v7695
    %7917 = vmatprep.subr.mxu0 %v7700
    %7918 = vmatpush1.msra.mxu0 %v7699
    %7919 = vmatprep.subr.mxu0 %v7704
    %7920 = vmatpush1.msra.mxu0 %v7703
    %7921 = vmatprep.subr.mxu0 %v7708
    %7922 = vmatpush1.msra.mxu0 %v7707
    %7923 = vmatprep.subr.mxu0 %v7712
    %7924 = vmatpush1.msra.mxu0 %v7711
    %7925 = vmatprep.subr.mxu0 %v7716
    %7926 = vmatpush1.msra.mxu0 %v7715
    %7927 = vmatprep.subr.mxu0 %v7720
    %7928 = vmatpush1.msra.mxu0 %v7719
    %7929 = vmatprep.subr.mxu0 %v7724
    %7930 = vmatpush1.msra.mxu0 %v7723
    %7931 = vmatprep.subr.mxu0 %v7728
    %7932 = vmatpush1.msra.mxu0 %v7727
    %7933 = vmatprep.subr.mxu0 %v7732
    %7934 = vmatpush1.msra.mxu0 %v7731
    %7935 = vmatprep.subr.mxu0 %v7736
    %7936 = vmatpush1.msra.mxu0 %v7735
    %7937 = vmatprep.subr.mxu0 %v7740
    %7938 = vmatpush1.msra.mxu0 %v7739
    %7939 = vmatprep.subr.mxu0 %v7744
    %7940 = vmatpush1.msra.mxu0 %v7743
    %7941 = vmatprep.subr.mxu0 %v7748
    %7942 = vmatpush1.msra.mxu0 %v7747
    %7943 = vmatprep.mubr.f32.mxu0 %v7619
    %7944 = vmatmul.mubr.f32.gmra.mrb[0].mxu0 %v7618
    %v7945 = vpop.f32.mrb[0].mxu0
    %v7946 = vadd.f32 %v6850, %v7945
    %v7947 = vpop.f32.mrb[0].mxu0
    %v7948 = vadd.f32 %v6852, %v7947
    %7949 = vdwg.mxu0
    %7950 = vmatprep.subr.mxu0 %v7752
    %7951 = vmatpush1.msra.mxu0 %v7751
    %7952 = vmatprep.subr.mxu0 %v7756
    %7953 = vmatpush1.msra.mxu0 %v7755
    %7954 = vmatprep.subr.mxu0 %v7760
    %7955 = vmatpush1.msra.mxu0 %v7759
    %7956 = vmatprep.subr.mxu0 %v7764
    %7957 = vmatpush1.msra.mxu0 %v7763
    %7958 = vmatprep.subr.mxu0 %v7768
    %7959 = vmatpush1.msra.mxu0 %v7767
    %7960 = vmatprep.subr.mxu0 %v7772
    %7961 = vmatpush1.msra.mxu0 %v7771
    %7962 = vmatprep.subr.mxu0 %v7776
    %7963 = vmatpush1.msra.mxu0 %v7775
    %7964 = vmatprep.subr.mxu0 %v7780
    %7965 = vmatpush1.msra.mxu0 %v7779
    %7966 = vmatprep.subr.mxu0 %v7784
    %7967 = vmatpush1.msra.mxu0 %v7783
    %7968 = vmatprep.subr.mxu0 %v7788
    %7969 = vmatpush1.msra.mxu0 %v7787
    %7970 = vmatprep.subr.mxu0 %v7792
    %7971 = vmatpush1.msra.mxu0 %v7791
    %7972 = vmatprep.subr.mxu0 %v7796
    %7973 = vmatpush1.msra.mxu0 %v7795
    %7974 = vmatprep.subr.mxu0 %v7800
    %7975 = vmatpush1.msra.mxu0 %v7799
    %7976 = vmatprep.subr.mxu0 %v7804
    %7977 = vmatpush1.msra.mxu0 %v7803
    %7978 = vmatprep.subr.mxu0 %v7808
    %7979 = vmatpush1.msra.mxu0 %v7807
    %7980 = vmatprep.subr.mxu0 %v7812
    %7981 = vmatpush1.msra.mxu0 %v7811
    %7982 = vmatprep.subr.mxu0 %v7816
    %7983 = vmatpush1.msra.mxu0 %v7815
    %7984 = vmatprep.subr.mxu0 %v7820
    %7985 = vmatpush1.msra.mxu0 %v7819
    %7986 = vmatprep.subr.mxu0 %v7824
    %7987 = vmatpush1.msra.mxu0 %v7823
    %7988 = vmatprep.subr.mxu0 %v7828
    %7989 = vmatpush1.msra.mxu0 %v7827
    %7990 = vmatprep.subr.mxu0 %v7832
    %7991 = vmatpush1.msra.mxu0 %v7831
    %7992 = vmatprep.subr.mxu0 %v7836
    %7993 = vmatpush1.msra.mxu0 %v7835
    %7994 = vmatprep.subr.mxu0 %v7840
    %7995 = vmatpush1.msra.mxu0 %v7839
    %7996 = vmatprep.subr.mxu0 %v7844
    %7997 = vmatpush1.msra.mxu0 %v7843
    %7998 = vmatprep.subr.mxu0 %v7848
    %7999 = vmatpush1.msra.mxu0 %v7847
    %8000 = vmatprep.subr.mxu0 %v7852
    %8001 = vmatpush1.msra.mxu0 %v7851
    %8002 = vmatprep.subr.mxu0 %v7856
    %8003 = vmatpush1.msra.mxu0 %v7855
    %8004 = vmatprep.subr.mxu0 %v7860
    %8005 = vmatpush1.msra.mxu0 %v7859
    %8006 = vmatprep.subr.mxu0 %v7864
    %8007 = vmatpush1.msra.mxu0 %v7863
    %8008 = vmatprep.subr.mxu0 %v7868
    %8009 = vmatpush1.msra.mxu0 %v7867
    %8010 = vmatprep.subr.mxu0 %v7872
    %8011 = vmatpush1.msra.mxu0 %v7871
    %8012 = vmatprep.subr.mxu0 %v7876
    %8013 = vmatpush1.msra.mxu0 %v7875
    %8014 = vmatprep.mubr.f32.mxu0 %v7621
    %8015 = vmatmul.mubr.f32.gmra.mrb[0].mxu0 %v7620
    %v8016 = vpop.f32.mrb[0].mxu0
    %v8017 = vadd.f32 %v7946, %v8016
    %v8018 = vpop.f32.mrb[0].mxu0
    %v8019 = vadd.f32 %v7948, %v8018
    %8020 = vdwg.mxu0
    %8021 = vmatprep.subr.mxu0 %v7626
    %8022 = vmatpush1.msra.mxu0 %v7625
    %8023 = vmatprep.subr.mxu0 %v7630
    %8024 = vmatpush1.msra.mxu0 %v7629
    %8025 = vmatprep.subr.mxu0 %v7634
    %8026 = vmatpush1.msra.mxu0 %v7633
    %8027 = vmatprep.subr.mxu0 %v7638
    %8028 = vmatpush1.msra.mxu0 %v7637
    %8029 = vmatprep.subr.mxu0 %v7642
    %8030 = vmatpush1.msra.mxu0 %v7641
    %8031 = vmatprep.subr.mxu0 %v7646
    %8032 = vmatpush1.msra.mxu0 %v7645
    %8033 = vmatprep.subr.mxu0 %v7650
    %8034 = vmatpush1.msra.mxu0 %v7649
    %8035 = vmatprep.subr.mxu0 %v7654
    %8036 = vmatpush1.msra.mxu0 %v7653
    %8037 = vmatprep.subr.mxu0 %v7658
    %8038 = vmatpush1.msra.mxu0 %v7657
    %8039 = vmatprep.subr.mxu0 %v7662
    %8040 = vmatpush1.msra.mxu0 %v7661
    %8041 = vmatprep.subr.mxu0 %v7666
    %8042 = vmatpush1.msra.mxu0 %v7665
    %8043 = vmatprep.subr.mxu0 %v7670
    %8044 = vmatpush1.msra.mxu0 %v7669
    %8045 = vmatprep.subr.mxu0 %v7674
    %8046 = vmatpush1.msra.mxu0 %v7673
    %8047 = vmatprep.subr.mxu0 %v7678
    %8048 = vmatpush1.msra.mxu0 %v7677
    %8049 = vmatprep.subr.mxu0 %v7682
    %8050 = vmatpush1.msra.mxu0 %v7681
    %8051 = vmatprep.subr.mxu0 %v7686
    %8052 = vmatpush1.msra.mxu0 %v7685
    %8053 = vmatprep.subr.mxu0 %v7690
    %8054 = vmatpush1.msra.mxu0 %v7689
    %8055 = vmatprep.subr.mxu0 %v7694
    %8056 = vmatpush1.msra.mxu0 %v7693
    %8057 = vmatprep.subr.mxu0 %v7698
    %8058 = vmatpush1.msra.mxu0 %v7697
    %8059 = vmatprep.subr.mxu0 %v7702
    %8060 = vmatpush1.msra.mxu0 %v7701
    %8061 = vmatprep.subr.mxu0 %v7706
    %8062 = vmatpush1.msra.mxu0 %v7705
    %8063 = vmatprep.subr.mxu0 %v7710
    %8064 = vmatpush1.msra.mxu0 %v7709
    %8065 = vmatprep.subr.mxu0 %v7714
    %8066 = vmatpush1.msra.mxu0 %v7713
    %8067 = vmatprep.subr.mxu0 %v7718
    %8068 = vmatpush1.msra.mxu0 %v7717
    %8069 = vmatprep.subr.mxu0 %v7722
    %8070 = vmatpush1.msra.mxu0 %v7721
    %8071 = vmatprep.subr.mxu0 %v7726
    %8072 = vmatpush1.msra.mxu0 %v7725
    %8073 = vmatprep.subr.mxu0 %v7730
    %8074 = vmatpush1.msra.mxu0 %v7729
    %8075 = vmatprep.subr.mxu0 %v7734
    %8076 = vmatpush1.msra.mxu0 %v7733
    %8077 = vmatprep.subr.mxu0 %v7738
    %8078 = vmatpush1.msra.mxu0 %v7737
    %8079 = vmatprep.subr.mxu0 %v7742
    %8080 = vmatpush1.msra.mxu0 %v7741
    %8081 = vmatprep.subr.mxu0 %v7746
    %8082 = vmatpush1.msra.mxu0 %v7745
    %8083 = vmatprep.subr.mxu0 %v7750
    %8084 = vmatpush1.msra.mxu0 %v7749
    %8085 = vmatprep.mubr.f32.mxu0 %v7619
    %8086 = vmatmul.mubr.f32.gmra.mrb[0].mxu0 %v7618
    %v8087 = vpop.f32.mrb[0].mxu0
    %v8088 = vadd.f32 %v6992, %v8087
    %v8089 = vpop.f32.mrb[0].mxu0
    %v8090 = vadd.f32 %v6994, %v8089
    %8091 = vdwg.mxu0
    %8092 = vmatprep.subr.mxu0 %v7754
    %8093 = vmatpush1.msra.mxu0 %v7753
    %8094 = vmatprep.subr.mxu0 %v7758
    %8095 = vmatpush1.msra.mxu0 %v7757
    %8096 = vmatprep.subr.mxu0 %v7762
    %8097 = vmatpush1.msra.mxu0 %v7761
    %8098 = vmatprep.subr.mxu0 %v7766
    %8099 = vmatpush1.msra.mxu0 %v7765
    %8100 = vmatprep.subr.mxu0 %v7770
    %8101 = vmatpush1.msra.mxu0 %v7769
    %8102 = vmatprep.subr.mxu0 %v7774
    %8103 = vmatpush1.msra.mxu0 %v7773
    %8104 = vmatprep.subr.mxu0 %v7778
    %8105 = vmatpush1.msra.mxu0 %v7777
    %8106 = vmatprep.subr.mxu0 %v7782
    %8107 = vmatpush1.msra.mxu0 %v7781
    %8108 = vmatprep.subr.mxu0 %v7786
    %8109 = vmatpush1.msra.mxu0 %v7785
    %8110 = vmatprep.subr.mxu0 %v7790
    %8111 = vmatpush1.msra.mxu0 %v7789
    %8112 = vmatprep.subr.mxu0 %v7794
    %8113 = vmatpush1.msra.mxu0 %v7793
    %8114 = vmatprep.subr.mxu0 %v7798
    %8115 = vmatpush1.msra.mxu0 %v7797
    %8116 = vmatprep.subr.mxu0 %v7802
    %8117 = vmatpush1.msra.mxu0 %v7801
    %8118 = vmatprep.subr.mxu0 %v7806
    %8119 = vmatpush1.msra.mxu0 %v7805
    %8120 = vmatprep.subr.mxu0 %v7810
    %8121 = vmatpush1.msra.mxu0 %v7809
    %8122 = vmatprep.subr.mxu0 %v7814
    %8123 = vmatpush1.msra.mxu0 %v7813
    %8124 = vmatprep.subr.mxu0 %v7818
    %8125 = vmatpush1.msra.mxu0 %v7817
    %8126 = vmatprep.subr.mxu0 %v7822
    %8127 = vmatpush1.msra.mxu0 %v7821
    %8128 = vmatprep.subr.mxu0 %v7826
    %8129 = vmatpush1.msra.mxu0 %v7825
    %8130 = vmatprep.subr.mxu0 %v7830
    %8131 = vmatpush1.msra.mxu0 %v7829
    %8132 = vmatprep.subr.mxu0 %v7834
    %8133 = vmatpush1.msra.mxu0 %v7833
    %8134 = vmatprep.subr.mxu0 %v7838
    %8135 = vmatpush1.msra.mxu0 %v7837
    %8136 = vmatprep.subr.mxu0 %v7842
    %8137 = vmatpush1.msra.mxu0 %v7841
    %8138 = vmatprep.subr.mxu0 %v7846
    %8139 = vmatpush1.msra.mxu0 %v7845
    %8140 = vmatprep.subr.mxu0 %v7850
    %8141 = vmatpush1.msra.mxu0 %v7849
    %8142 = vmatprep.subr.mxu0 %v7854
    %8143 = vmatpush1.msra.mxu0 %v7853
    %8144 = vmatprep.subr.mxu0 %v7858
    %8145 = vmatpush1.msra.mxu0 %v7857
    %8146 = vmatprep.subr.mxu0 %v7862
    %8147 = vmatpush1.msra.mxu0 %v7861
    %8148 = vmatprep.subr.mxu0 %v7866
    %8149 = vmatpush1.msra.mxu0 %v7865
    %8150 = vmatprep.subr.mxu0 %v7870
    %8151 = vmatpush1.msra.mxu0 %v7869
    %8152 = vmatprep.subr.mxu0 %v7874
    %8153 = vmatpush1.msra.mxu0 %v7873
    %8154 = vmatprep.subr.mxu0 %v7878
    %8155 = vmatpush1.msra.mxu0 %v7877
    %8156 = vmatprep.mubr.f32.mxu0 %v7621
    %8157 = vmatmul.mubr.f32.gmra.mrb[0].mxu0 %v7620
    %v8158 = vpop.f32.mrb[0].mxu0
    %v8159 = vadd.f32 %v8088, %v8158
    %v8160 = vpop.f32.mrb[0].mxu0
    %v8161 = vadd.f32 %v8090, %v8160
    %8162 = vdwg.mxu0
    %s8163 = scalar_lea.vmem [#allocation4], 65
    %v8164 = vld [vmem:[%s8163] ss:$8 sm:$0xf]
    %v8166 = vlaneseq
    %v8167 = vshrl.u32 %v8166, 7
    %v8168 = vsub.s32 0, %v8167
    %v8169 = vrot.slane %v8164, %v8168
    %v8170 = vlaneseq
    %v8171 = vshrl.u32 %v8170, 7
    %v8172 = vsub.s32 1, %v8171
    %v8173 = vrot.slane %v8164, %v8172
    %v8174 = vlaneseq
    %v8175 = vshrl.u32 %v8174, 7
    %v8176 = vsub.s32 2, %v8175
    %v8177 = vrot.slane %v8164, %v8176
    %v8178 = vlaneseq
    %v8179 = vshrl.u32 %v8178, 7
    %v8180 = vsub.s32 3, %v8179
    %v8181 = vrot.slane %v8164, %v8180
    %v8186 = vmul.f32 %v8017, %v8169
    %v8187 = vmul.f32 %v8019, %v8173
    %v8188 = vmul.f32 %v8159, %v8177
    %v8189 = vmul.f32 %v8161, %v8181
    %s8190 = scalar_lea.vmem [#allocation4], 66
    %v8191 = vld [vmem:[%s8190] ss:$8 sm:$0xf]
    %v8193 = vlaneseq
    %v8194 = vshrl.u32 %v8193, 7
    %v8195 = vsub.s32 0, %v8194
    %v8196 = vrot.slane %v8191, %v8195
    %v8197 = vlaneseq
    %v8198 = vshrl.u32 %v8197, 7
    %v8199 = vsub.s32 1, %v8198
    %v8200 = vrot.slane %v8191, %v8199
    %v8201 = vlaneseq
    %v8202 = vshrl.u32 %v8201, 7
    %v8203 = vsub.s32 2, %v8202
    %v8204 = vrot.slane %v8191, %v8203
    %v8205 = vlaneseq
    %v8206 = vshrl.u32 %v8205, 7
    %v8207 = vsub.s32 3, %v8206
    %v8208 = vrot.slane %v8191, %v8207
    %v8213 = vadd.f32 %v8186, %v8196
    %v8214 = vadd.f32 %v8187, %v8200
    %v8215 = vadd.f32 %v8188, %v8204
    %v8216 = vadd.f32 %v8189, %v8208
    %v8217 = vmax.f32 %v8213, 0.0
    %v8218 = vmax.f32 %v8214, 0.0
    %v8219 = vmax.f32 %v8215, 0.0
    %v8220 = vmax.f32 %v8216, 0.0
    %v8221 = vld [vmem:[#allocation12] sm:$0xff]
    %v8222 = vld [vmem:[#allocation12 + $0x8] sm:$0xff]
    %v8223 = vld [vmem:[#allocation12 + $0x10] sm:$0xff]
    %v8224 = vld [vmem:[#allocation12 + $0x18] sm:$0xff]
    %v8225 = vld [vmem:[#allocation12 + $0x20] sm:$0xff]
    %v8226 = vld [vmem:[#allocation12 + $0x28] sm:$0xff]
    %v8227 = vld [vmem:[#allocation12 + $0x30] sm:$0xff]
    %v8228 = vld [vmem:[#allocation12 + $0x38] sm:$0xff]
    %v8229 = vld [vmem:[#allocation12 + $0x40] sm:$0xff]
    %v8230 = vld [vmem:[#allocation12 + $0x48] sm:$0xff]
    %v8231 = vld [vmem:[#allocation12 + $0x50] sm:$0xff]
    %v8232 = vld [vmem:[#allocation12 + $0x58] sm:$0xff]
    %v8233 = vld [vmem:[#allocation12 + $0x60] sm:$0xff]
    %v8234 = vld [vmem:[#allocation12 + $0x68] sm:$0xff]
    %v8235 = vld [vmem:[#allocation12 + $0x70] sm:$0xff]
    %v8236 = vld [vmem:[#allocation12 + $0x78] sm:$0xff]
    %v8237 = vld [vmem:[#allocation12 + $0x80] sm:$0xff]
    %v8238 = vld [vmem:[#allocation12 + $0x88] sm:$0xff]
    %v8239 = vld [vmem:[#allocation12 + $0x90] sm:$0xff]
    %v8240 = vld [vmem:[#allocation12 + $0x98] sm:$0xff]
    %v8241 = vld [vmem:[#allocation12 + $0xa0] sm:$0xff]
    %v8242 = vld [vmem:[#allocation12 + $0xa8] sm:$0xff]
    %v8243 = vld [vmem:[#allocation12 + $0xb0] sm:$0xff]
    %v8244 = vld [vmem:[#allocation12 + $0xb8] sm:$0xff]
    %v8245 = vld [vmem:[#allocation12 + $0xc0] sm:$0xff]
    %v8246 = vld [vmem:[#allocation12 + $0xc8] sm:$0xff]
    %v8247 = vld [vmem:[#allocation12 + $0xd0] sm:$0xff]
    %v8248 = vld [vmem:[#allocation12 + $0xd8] sm:$0xff]
    %v8249 = vld [vmem:[#allocation12 + $0xe0] sm:$0xff]
    %v8250 = vld [vmem:[#allocation12 + $0xe8] sm:$0xff]
    %v8251 = vld [vmem:[#allocation12 + $0xf0] sm:$0xff]
    %v8252 = vld [vmem:[#allocation12 + $0xf8] sm:$0xff]
    %v8253 = vld [vmem:[#allocation12 + $0x100] sm:$0xff]
    %v8254 = vld [vmem:[#allocation12 + $0x108] sm:$0xff]
    %v8255 = vld [vmem:[#allocation12 + $0x110] sm:$0xff]
    %v8256 = vld [vmem:[#allocation12 + $0x118] sm:$0xff]
    %v8257 = vld [vmem:[#allocation12 + $0x120] sm:$0xff]
    %v8258 = vld [vmem:[#allocation12 + $0x128] sm:$0xff]
    %v8259 = vld [vmem:[#allocation12 + $0x130] sm:$0xff]
    %v8260 = vld [vmem:[#allocation12 + $0x138] sm:$0xff]
    %v8261 = vld [vmem:[#allocation12 + $0x140] sm:$0xff]
    %v8262 = vld [vmem:[#allocation12 + $0x148] sm:$0xff]
    %v8263 = vld [vmem:[#allocation12 + $0x150] sm:$0xff]
    %v8264 = vld [vmem:[#allocation12 + $0x158] sm:$0xff]
    %v8265 = vld [vmem:[#allocation12 + $0x160] sm:$0xff]
    %v8266 = vld [vmem:[#allocation12 + $0x168] sm:$0xff]
    %v8267 = vld [vmem:[#allocation12 + $0x170] sm:$0xff]
    %v8268 = vld [vmem:[#allocation12 + $0x178] sm:$0xff]
    %v8269 = vld [vmem:[#allocation12 + $0x180] sm:$0xff]
    %v8270 = vld [vmem:[#allocation12 + $0x188] sm:$0xff]
    %v8271 = vld [vmem:[#allocation12 + $0x190] sm:$0xff]
    %v8272 = vld [vmem:[#allocation12 + $0x198] sm:$0xff]
    %v8273 = vld [vmem:[#allocation12 + $0x1a0] sm:$0xff]
    %v8274 = vld [vmem:[#allocation12 + $0x1a8] sm:$0xff]
    %v8275 = vld [vmem:[#allocation12 + $0x1b0] sm:$0xff]
    %v8276 = vld [vmem:[#allocation12 + $0x1b8] sm:$0xff]
    %v8277 = vld [vmem:[#allocation12 + $0x1c0] sm:$0xff]
    %v8278 = vld [vmem:[#allocation12 + $0x1c8] sm:$0xff]
    %v8279 = vld [vmem:[#allocation12 + $0x1d0] sm:$0xff]
    %v8280 = vld [vmem:[#allocation12 + $0x1d8] sm:$0xff]
    %v8281 = vld [vmem:[#allocation12 + $0x1e0] sm:$0xff]
    %v8282 = vld [vmem:[#allocation12 + $0x1e8] sm:$0xff]
    %v8283 = vld [vmem:[#allocation12 + $0x1f0] sm:$0xff]
    %v8284 = vld [vmem:[#allocation12 + $0x1f8] sm:$0xff]
    %v8285 = vld [vmem:[#allocation12 + $0x200] sm:$0xff]
    %v8286 = vld [vmem:[#allocation12 + $0x208] sm:$0xff]
    %v8287 = vld [vmem:[#allocation12 + $0x210] sm:$0xff]
    %v8288 = vld [vmem:[#allocation12 + $0x218] sm:$0xff]
    %v8289 = vld [vmem:[#allocation12 + $0x220] sm:$0xff]
    %v8290 = vld [vmem:[#allocation12 + $0x228] sm:$0xff]
    %v8291 = vld [vmem:[#allocation12 + $0x230] sm:$0xff]
    %v8292 = vld [vmem:[#allocation12 + $0x238] sm:$0xff]
    %v8293 = vld [vmem:[#allocation12 + $0x240] sm:$0xff]
    %v8294 = vld [vmem:[#allocation12 + $0x248] sm:$0xff]
    %v8295 = vld [vmem:[#allocation12 + $0x250] sm:$0xff]
    %v8296 = vld [vmem:[#allocation12 + $0x258] sm:$0xff]
    %v8297 = vld [vmem:[#allocation12 + $0x260] sm:$0xff]
    %v8298 = vld [vmem:[#allocation12 + $0x268] sm:$0xff]
    %v8299 = vld [vmem:[#allocation12 + $0x270] sm:$0xff]
    %v8300 = vld [vmem:[#allocation12 + $0x278] sm:$0xff]
    %v8301 = vld [vmem:[#allocation12 + $0x280] sm:$0xff]
    %v8302 = vld [vmem:[#allocation12 + $0x288] sm:$0xff]
    %v8303 = vld [vmem:[#allocation12 + $0x290] sm:$0xff]
    %v8304 = vld [vmem:[#allocation12 + $0x298] sm:$0xff]
    %v8305 = vld [vmem:[#allocation12 + $0x2a0] sm:$0xff]
    %v8306 = vld [vmem:[#allocation12 + $0x2a8] sm:$0xff]
    %v8307 = vld [vmem:[#allocation12 + $0x2b0] sm:$0xff]
    %v8308 = vld [vmem:[#allocation12 + $0x2b8] sm:$0xff]
    %v8309 = vld [vmem:[#allocation12 + $0x2c0] sm:$0xff]
    %v8310 = vld [vmem:[#allocation12 + $0x2c8] sm:$0xff]
    %v8311 = vld [vmem:[#allocation12 + $0x2d0] sm:$0xff]
    %v8312 = vld [vmem:[#allocation12 + $0x2d8] sm:$0xff]
    %v8313 = vld [vmem:[#allocation12 + $0x2e0] sm:$0xff]
    %v8314 = vld [vmem:[#allocation12 + $0x2e8] sm:$0xff]
    %v8315 = vld [vmem:[#allocation12 + $0x2f0] sm:$0xff]
    %v8316 = vld [vmem:[#allocation12 + $0x2f8] sm:$0xff]
    %v8317 = vld [vmem:[#allocation12 + $0x300] sm:$0xff]
    %v8318 = vld [vmem:[#allocation12 + $0x308] sm:$0xff]
    %v8319 = vld [vmem:[#allocation12 + $0x310] sm:$0xff]
    %v8320 = vld [vmem:[#allocation12 + $0x318] sm:$0xff]
    %v8321 = vld [vmem:[#allocation12 + $0x320] sm:$0xff]
    %v8322 = vld [vmem:[#allocation12 + $0x328] sm:$0xff]
    %v8323 = vld [vmem:[#allocation12 + $0x330] sm:$0xff]
    %v8324 = vld [vmem:[#allocation12 + $0x338] sm:$0xff]
    %v8325 = vld [vmem:[#allocation12 + $0x340] sm:$0xff]
    %v8326 = vld [vmem:[#allocation12 + $0x348] sm:$0xff]
    %v8327 = vld [vmem:[#allocation12 + $0x350] sm:$0xff]
    %v8328 = vld [vmem:[#allocation12 + $0x358] sm:$0xff]
    %v8329 = vld [vmem:[#allocation12 + $0x360] sm:$0xff]
    %v8330 = vld [vmem:[#allocation12 + $0x368] sm:$0xff]
    %v8331 = vld [vmem:[#allocation12 + $0x370] sm:$0xff]
    %v8332 = vld [vmem:[#allocation12 + $0x378] sm:$0xff]
    %v8333 = vld [vmem:[#allocation12 + $0x380] sm:$0xff]
    %v8334 = vld [vmem:[#allocation12 + $0x388] sm:$0xff]
    %v8335 = vld [vmem:[#allocation12 + $0x390] sm:$0xff]
    %v8336 = vld [vmem:[#allocation12 + $0x398] sm:$0xff]
    %v8337 = vld [vmem:[#allocation12 + $0x3a0] sm:$0xff]
    %v8338 = vld [vmem:[#allocation12 + $0x3a8] sm:$0xff]
    %v8339 = vld [vmem:[#allocation12 + $0x3b0] sm:$0xff]
    %v8340 = vld [vmem:[#allocation12 + $0x3b8] sm:$0xff]
    %v8341 = vld [vmem:[#allocation12 + $0x3c0] sm:$0xff]
    %v8342 = vld [vmem:[#allocation12 + $0x3c8] sm:$0xff]
    %v8343 = vld [vmem:[#allocation12 + $0x3d0] sm:$0xff]
    %v8344 = vld [vmem:[#allocation12 + $0x3d8] sm:$0xff]
    %v8345 = vld [vmem:[#allocation12 + $0x3e0] sm:$0xff]
    %v8346 = vld [vmem:[#allocation12 + $0x3e8] sm:$0xff]
    %v8347 = vld [vmem:[#allocation12 + $0x3f0] sm:$0xff]
    %v8348 = vld [vmem:[#allocation12 + $0x3f8] sm:$0xff]
    %s8349 = scalar_lea.vmem [#allocation4], 67
    %v8350 = vld [vmem:[%s8349] ss:$8 sm:$0x3]
    %v8352 = vlaneseq
    %v8353 = vshrl.u32 %v8352, 7
    %v8354 = vsub.s32 0, %v8353
    %v8355 = vrot.slane %v8350, %v8354
    %v8356 = vlaneseq
    %v8357 = vshrl.u32 %v8356, 7
    %v8358 = vsub.s32 1, %v8357
    %v8359 = vrot.slane %v8350, %v8358
    %8362 = vmatprep.subr.mxu0 %v8222
    %8363 = vmatpush1.msra.mxu0 %v8221
    %8364 = vmatprep.subr.mxu0 %v8224
    %8365 = vmatpush1.msra.mxu0 %v8223
    %8366 = vmatprep.subr.mxu0 %v8226
    %8367 = vmatpush1.msra.mxu0 %v8225
    %8368 = vmatprep.subr.mxu0 %v8228
    %8369 = vmatpush1.msra.mxu0 %v8227
    %8370 = vmatprep.subr.mxu0 %v8230
    %8371 = vmatpush1.msra.mxu0 %v8229
    %8372 = vmatprep.subr.mxu0 %v8232
    %8373 = vmatpush1.msra.mxu0 %v8231
    %8374 = vmatprep.subr.mxu0 %v8234
    %8375 = vmatpush1.msra.mxu0 %v8233
    %8376 = vmatprep.subr.mxu0 %v8236
    %8377 = vmatpush1.msra.mxu0 %v8235
    %8378 = vmatprep.subr.mxu0 %v8238
    %8379 = vmatpush1.msra.mxu0 %v8237
    %8380 = vmatprep.subr.mxu0 %v8240
    %8381 = vmatpush1.msra.mxu0 %v8239
    %8382 = vmatprep.subr.mxu0 %v8242
    %8383 = vmatpush1.msra.mxu0 %v8241
    %8384 = vmatprep.subr.mxu0 %v8244
    %8385 = vmatpush1.msra.mxu0 %v8243
    %8386 = vmatprep.subr.mxu0 %v8246
    %8387 = vmatpush1.msra.mxu0 %v8245
    %8388 = vmatprep.subr.mxu0 %v8248
    %8389 = vmatpush1.msra.mxu0 %v8247
    %8390 = vmatprep.subr.mxu0 %v8250
    %8391 = vmatpush1.msra.mxu0 %v8249
    %8392 = vmatprep.subr.mxu0 %v8252
    %8393 = vmatpush1.msra.mxu0 %v8251
    %8394 = vmatprep.subr.mxu0 %v8254
    %8395 = vmatpush1.msra.mxu0 %v8253
    %8396 = vmatprep.subr.mxu0 %v8256
    %8397 = vmatpush1.msra.mxu0 %v8255
    %8398 = vmatprep.subr.mxu0 %v8258
    %8399 = vmatpush1.msra.mxu0 %v8257
    %8400 = vmatprep.subr.mxu0 %v8260
    %8401 = vmatpush1.msra.mxu0 %v8259
    %8402 = vmatprep.subr.mxu0 %v8262
    %8403 = vmatpush1.msra.mxu0 %v8261
    %8404 = vmatprep.subr.mxu0 %v8264
    %8405 = vmatpush1.msra.mxu0 %v8263
    %8406 = vmatprep.subr.mxu0 %v8266
    %8407 = vmatpush1.msra.mxu0 %v8265
    %8408 = vmatprep.subr.mxu0 %v8268
    %8409 = vmatpush1.msra.mxu0 %v8267
    %8410 = vmatprep.subr.mxu0 %v8270
    %8411 = vmatpush1.msra.mxu0 %v8269
    %8412 = vmatprep.subr.mxu0 %v8272
    %8413 = vmatpush1.msra.mxu0 %v8271
    %8414 = vmatprep.subr.mxu0 %v8274
    %8415 = vmatpush1.msra.mxu0 %v8273
    %8416 = vmatprep.subr.mxu0 %v8276
    %8417 = vmatpush1.msra.mxu0 %v8275
    %8418 = vmatprep.subr.mxu0 %v8278
    %8419 = vmatpush1.msra.mxu0 %v8277
    %8420 = vmatprep.subr.mxu0 %v8280
    %8421 = vmatpush1.msra.mxu0 %v8279
    %8422 = vmatprep.subr.mxu0 %v8282
    %8423 = vmatpush1.msra.mxu0 %v8281
    %8424 = vmatprep.subr.mxu0 %v8284
    %8425 = vmatpush1.msra.mxu0 %v8283
    %8426 = vmatprep.mubr.f32.mxu0 %v8218
    %8427 = vmatmul.mubr.f32.gmra.mrb[0].mxu0 %v8217
    %v8428 = vpop.f32.mrb[0].mxu0
    %v8429 = vadd.f32 %v8355, %v8428
    %v8430 = vpop.f32.mrb[0].mxu0
    %v8431 = vadd.f32 %v8359, %v8430
    %8432 = vdwg.mxu0
    %8433 = vmatprep.subr.mxu0 %v8286
    %8434 = vmatpush1.msra.mxu0 %v8285
    %8435 = vmatprep.subr.mxu0 %v8288
    %8436 = vmatpush1.msra.mxu0 %v8287
    %8437 = vmatprep.subr.mxu0 %v8290
    %8438 = vmatpush1.msra.mxu0 %v8289
    %8439 = vmatprep.subr.mxu0 %v8292
    %8440 = vmatpush1.msra.mxu0 %v8291
    %8441 = vmatprep.subr.mxu0 %v8294
    %8442 = vmatpush1.msra.mxu0 %v8293
    %8443 = vmatprep.subr.mxu0 %v8296
    %8444 = vmatpush1.msra.mxu0 %v8295
    %8445 = vmatprep.subr.mxu0 %v8298
    %8446 = vmatpush1.msra.mxu0 %v8297
    %8447 = vmatprep.subr.mxu0 %v8300
    %8448 = vmatpush1.msra.mxu0 %v8299
    %8449 = vmatprep.subr.mxu0 %v8302
    %8450 = vmatpush1.msra.mxu0 %v8301
    %8451 = vmatprep.subr.mxu0 %v8304
    %8452 = vmatpush1.msra.mxu0 %v8303
    %8453 = vmatprep.subr.mxu0 %v8306
    %8454 = vmatpush1.msra.mxu0 %v8305
    %8455 = vmatprep.subr.mxu0 %v8308
    %8456 = vmatpush1.msra.mxu0 %v8307
    %8457 = vmatprep.subr.mxu0 %v8310
    %8458 = vmatpush1.msra.mxu0 %v8309
    %8459 = vmatprep.subr.mxu0 %v8312
    %8460 = vmatpush1.msra.mxu0 %v8311
    %8461 = vmatprep.subr.mxu0 %v8314
    %8462 = vmatpush1.msra.mxu0 %v8313
    %8463 = vmatprep.subr.mxu0 %v8316
    %8464 = vmatpush1.msra.mxu0 %v8315
    %8465 = vmatprep.subr.mxu0 %v8318
    %8466 = vmatpush1.msra.mxu0 %v8317
    %8467 = vmatprep.subr.mxu0 %v8320
    %8468 = vmatpush1.msra.mxu0 %v8319
    %8469 = vmatprep.subr.mxu0 %v8322
    %8470 = vmatpush1.msra.mxu0 %v8321
    %8471 = vmatprep.subr.mxu0 %v8324
    %8472 = vmatpush1.msra.mxu0 %v8323
    %8473 = vmatprep.subr.mxu0 %v8326
    %8474 = vmatpush1.msra.mxu0 %v8325
    %8475 = vmatprep.subr.mxu0 %v8328
    %8476 = vmatpush1.msra.mxu0 %v8327
    %8477 = vmatprep.subr.mxu0 %v8330
    %8478 = vmatpush1.msra.mxu0 %v8329
    %8479 = vmatprep.subr.mxu0 %v8332
    %8480 = vmatpush1.msra.mxu0 %v8331
    %8481 = vmatprep.subr.mxu0 %v8334
    %8482 = vmatpush1.msra.mxu0 %v8333
    %8483 = vmatprep.subr.mxu0 %v8336
    %8484 = vmatpush1.msra.mxu0 %v8335
    %8485 = vmatprep.subr.mxu0 %v8338
    %8486 = vmatpush1.msra.mxu0 %v8337
    %8487 = vmatprep.subr.mxu0 %v8340
    %8488 = vmatpush1.msra.mxu0 %v8339
    %8489 = vmatprep.subr.mxu0 %v8342
    %8490 = vmatpush1.msra.mxu0 %v8341
    %8491 = vmatprep.subr.mxu0 %v8344
    %8492 = vmatpush1.msra.mxu0 %v8343
    %8493 = vmatprep.subr.mxu0 %v8346
    %8494 = vmatpush1.msra.mxu0 %v8345
    %8495 = vmatprep.subr.mxu0 %v8348
    %8496 = vmatpush1.msra.mxu0 %v8347
    %8497 = vmatprep.mubr.f32.mxu0 %v8220
    %8498 = vmatmul.mubr.f32.gmra.mrb[0].mxu0 %v8219
    %v8499 = vpop.f32.mrb[0].mxu0
    %v8500 = vadd.f32 %v8429, %v8499
    %v8501 = vpop.f32.mrb[0].mxu0
    %v8502 = vadd.f32 %v8431, %v8501
    %8503 = vdwg.mxu0
    %v8504 = vmax.f32 %v8500, 0.0
    %v8505 = vmax.f32 %v8502, 0.0
    %v8506 = vld [vmem:[#allocation13] sm:$0xff]
    %v8507 = vld [vmem:[#allocation13 + $0x8] sm:$0xff]
    %v8508 = vld [vmem:[#allocation13 + $0x10] sm:$0xff]
    %v8509 = vld [vmem:[#allocation13 + $0x18] sm:$0xff]
    %v8510 = vld [vmem:[#allocation13 + $0x20] sm:$0xff]
    %v8511 = vld [vmem:[#allocation13 + $0x28] sm:$0xff]
    %v8512 = vld [vmem:[#allocation13 + $0x30] sm:$0xff]
    %v8513 = vld [vmem:[#allocation13 + $0x38] sm:$0xff]
    %v8514 = vld [vmem:[#allocation13 + $0x40] sm:$0xff]
    %v8515 = vld [vmem:[#allocation13 + $0x48] sm:$0xff]
    %v8516 = vld [vmem:[#allocation13 + $0x50] sm:$0xff]
    %v8517 = vld [vmem:[#allocation13 + $0x58] sm:$0xff]
    %v8518 = vld [vmem:[#allocation13 + $0x60] sm:$0xff]
    %v8519 = vld [vmem:[#allocation13 + $0x68] sm:$0xff]
    %v8520 = vld [vmem:[#allocation13 + $0x70] sm:$0xff]
    %v8521 = vld [vmem:[#allocation13 + $0x78] sm:$0xff]
    %v8522 = vld [vmem:[#allocation13 + $0x80] sm:$0xff]
    %v8523 = vld [vmem:[#allocation13 + $0x88] sm:$0xff]
    %v8524 = vld [vmem:[#allocation13 + $0x90] sm:$0xff]
    %v8525 = vld [vmem:[#allocation13 + $0x98] sm:$0xff]
    %v8526 = vld [vmem:[#allocation13 + $0xa0] sm:$0xff]
    %v8527 = vld [vmem:[#allocation13 + $0xa8] sm:$0xff]
    %v8528 = vld [vmem:[#allocation13 + $0xb0] sm:$0xff]
    %v8529 = vld [vmem:[#allocation13 + $0xb8] sm:$0xff]
    %v8530 = vld [vmem:[#allocation13 + $0xc0] sm:$0xff]
    %v8531 = vld [vmem:[#allocation13 + $0xc8] sm:$0xff]
    %v8532 = vld [vmem:[#allocation13 + $0xd0] sm:$0xff]
    %v8533 = vld [vmem:[#allocation13 + $0xd8] sm:$0xff]
    %v8534 = vld [vmem:[#allocation13 + $0xe0] sm:$0xff]
    %v8535 = vld [vmem:[#allocation13 + $0xe8] sm:$0xff]
    %v8536 = vld [vmem:[#allocation13 + $0xf0] sm:$0xff]
    %v8537 = vld [vmem:[#allocation13 + $0xf8] sm:$0xff]
    %v8538 = vld [vmem:[#allocation13 + $0x100] sm:$0xff]
    %v8539 = vld [vmem:[#allocation13 + $0x108] sm:$0xff]
    %v8540 = vld [vmem:[#allocation13 + $0x110] sm:$0xff]
    %v8541 = vld [vmem:[#allocation13 + $0x118] sm:$0xff]
    %v8542 = vld [vmem:[#allocation13 + $0x120] sm:$0xff]
    %v8543 = vld [vmem:[#allocation13 + $0x128] sm:$0xff]
    %v8544 = vld [vmem:[#allocation13 + $0x130] sm:$0xff]
    %v8545 = vld [vmem:[#allocation13 + $0x138] sm:$0xff]
    %v8546 = vld [vmem:[#allocation13 + $0x140] sm:$0xff]
    %v8547 = vld [vmem:[#allocation13 + $0x148] sm:$0xff]
    %v8548 = vld [vmem:[#allocation13 + $0x150] sm:$0xff]
    %v8549 = vld [vmem:[#allocation13 + $0x158] sm:$0xff]
    %v8550 = vld [vmem:[#allocation13 + $0x160] sm:$0xff]
    %v8551 = vld [vmem:[#allocation13 + $0x168] sm:$0xff]
    %v8552 = vld [vmem:[#allocation13 + $0x170] sm:$0xff]
    %v8553 = vld [vmem:[#allocation13 + $0x178] sm:$0xff]
    %v8554 = vld [vmem:[#allocation13 + $0x180] sm:$0xff]
    %v8555 = vld [vmem:[#allocation13 + $0x188] sm:$0xff]
    %v8556 = vld [vmem:[#allocation13 + $0x190] sm:$0xff]
    %v8557 = vld [vmem:[#allocation13 + $0x198] sm:$0xff]
    %v8558 = vld [vmem:[#allocation13 + $0x1a0] sm:$0xff]
    %v8559 = vld [vmem:[#allocation13 + $0x1a8] sm:$0xff]
    %v8560 = vld [vmem:[#allocation13 + $0x1b0] sm:$0xff]
    %v8561 = vld [vmem:[#allocation13 + $0x1b8] sm:$0xff]
    %v8562 = vld [vmem:[#allocation13 + $0x1c0] sm:$0xff]
    %v8563 = vld [vmem:[#allocation13 + $0x1c8] sm:$0xff]
    %v8564 = vld [vmem:[#allocation13 + $0x1d0] sm:$0xff]
    %v8565 = vld [vmem:[#allocation13 + $0x1d8] sm:$0xff]
    %v8566 = vld [vmem:[#allocation13 + $0x1e0] sm:$0xff]
    %v8567 = vld [vmem:[#allocation13 + $0x1e8] sm:$0xff]
    %v8568 = vld [vmem:[#allocation13 + $0x1f0] sm:$0xff]
    %v8569 = vld [vmem:[#allocation13 + $0x1f8] sm:$0xff]
    %s8570 = scalar_lea.vmem [#allocation12], 1024
    %v8571 = vld [vmem:[%s8570] sm:$0xff]
    %v8572 = vld [vmem:[%s8570 + $0x8] sm:$0xff]
    %v8573 = vld [vmem:[%s8570 + $0x10] sm:$0xff]
    %v8574 = vld [vmem:[%s8570 + $0x18] sm:$0xff]
    %v8575 = vld [vmem:[%s8570 + $0x20] sm:$0xff]
    %v8576 = vld [vmem:[%s8570 + $0x28] sm:$0xff]
    %v8577 = vld [vmem:[%s8570 + $0x30] sm:$0xff]
    %v8578 = vld [vmem:[%s8570 + $0x38] sm:$0xff]
    %v8579 = vld [vmem:[%s8570 + $0x40] sm:$0xff]
    %v8580 = vld [vmem:[%s8570 + $0x48] sm:$0xff]
    %v8581 = vld [vmem:[%s8570 + $0x50] sm:$0xff]
    %v8582 = vld [vmem:[%s8570 + $0x58] sm:$0xff]
    %v8583 = vld [vmem:[%s8570 + $0x60] sm:$0xff]
    %v8584 = vld [vmem:[%s8570 + $0x68] sm:$0xff]
    %v8585 = vld [vmem:[%s8570 + $0x70] sm:$0xff]
    %v8586 = vld [vmem:[%s8570 + $0x78] sm:$0xff]
    %v8587 = vld [vmem:[%s8570 + $0x80] sm:$0xff]
    %v8588 = vld [vmem:[%s8570 + $0x88] sm:$0xff]
    %v8589 = vld [vmem:[%s8570 + $0x90] sm:$0xff]
    %v8590 = vld [vmem:[%s8570 + $0x98] sm:$0xff]
    %v8591 = vld [vmem:[%s8570 + $0xa0] sm:$0xff]
    %v8592 = vld [vmem:[%s8570 + $0xa8] sm:$0xff]
    %v8593 = vld [vmem:[%s8570 + $0xb0] sm:$0xff]
    %v8594 = vld [vmem:[%s8570 + $0xb8] sm:$0xff]
    %v8595 = vld [vmem:[%s8570 + $0xc0] sm:$0xff]
    %v8596 = vld [vmem:[%s8570 + $0xc8] sm:$0xff]
    %v8597 = vld [vmem:[%s8570 + $0xd0] sm:$0xff]
    %v8598 = vld [vmem:[%s8570 + $0xd8] sm:$0xff]
    %v8599 = vld [vmem:[%s8570 + $0xe0] sm:$0xff]
    %v8600 = vld [vmem:[%s8570 + $0xe8] sm:$0xff]
    %v8601 = vld [vmem:[%s8570 + $0xf0] sm:$0xff]
    %v8602 = vld [vmem:[%s8570 + $0xf8] sm:$0xff]
    %v8603 = vld [vmem:[%s8570 + $0x100] sm:$0xff]
    %v8604 = vld [vmem:[%s8570 + $0x108] sm:$0xff]
    %v8605 = vld [vmem:[%s8570 + $0x110] sm:$0xff]
    %v8606 = vld [vmem:[%s8570 + $0x118] sm:$0xff]
    %v8607 = vld [vmem:[%s8570 + $0x120] sm:$0xff]
    %v8608 = vld [vmem:[%s8570 + $0x128] sm:$0xff]
    %v8609 = vld [vmem:[%s8570 + $0x130] sm:$0xff]
    %v8610 = vld [vmem:[%s8570 + $0x138] sm:$0xff]
    %v8611 = vld [vmem:[%s8570 + $0x140] sm:$0xff]
    %v8612 = vld [vmem:[%s8570 + $0x148] sm:$0xff]
    %v8613 = vld [vmem:[%s8570 + $0x150] sm:$0xff]
    %v8614 = vld [vmem:[%s8570 + $0x158] sm:$0xff]
    %v8615 = vld [vmem:[%s8570 + $0x160] sm:$0xff]
    %v8616 = vld [vmem:[%s8570 + $0x168] sm:$0xff]
    %v8617 = vld [vmem:[%s8570 + $0x170] sm:$0xff]
    %v8618 = vld [vmem:[%s8570 + $0x178] sm:$0xff]
    %v8619 = vld [vmem:[%s8570 + $0x180] sm:$0xff]
    %v8620 = vld [vmem:[%s8570 + $0x188] sm:$0xff]
    %v8621 = vld [vmem:[%s8570 + $0x190] sm:$0xff]
    %v8622 = vld [vmem:[%s8570 + $0x198] sm:$0xff]
    %v8623 = vld [vmem:[%s8570 + $0x1a0] sm:$0xff]
    %v8624 = vld [vmem:[%s8570 + $0x1a8] sm:$0xff]
    %v8625 = vld [vmem:[%s8570 + $0x1b0] sm:$0xff]
    %v8626 = vld [vmem:[%s8570 + $0x1b8] sm:$0xff]
    %v8627 = vld [vmem:[%s8570 + $0x1c0] sm:$0xff]
    %v8628 = vld [vmem:[%s8570 + $0x1c8] sm:$0xff]
    %v8629 = vld [vmem:[%s8570 + $0x1d0] sm:$0xff]
    %v8630 = vld [vmem:[%s8570 + $0x1d8] sm:$0xff]
    %v8631 = vld [vmem:[%s8570 + $0x1e0] sm:$0xff]
    %v8632 = vld [vmem:[%s8570 + $0x1e8] sm:$0xff]
    %v8633 = vld [vmem:[%s8570 + $0x1f0] sm:$0xff]
    %v8634 = vld [vmem:[%s8570 + $0x1f8] sm:$0xff]
    %v8635 = vld [vmem:[%s8570 + $0x200] sm:$0xff]
    %v8636 = vld [vmem:[%s8570 + $0x208] sm:$0xff]
    %v8637 = vld [vmem:[%s8570 + $0x210] sm:$0xff]
    %v8638 = vld [vmem:[%s8570 + $0x218] sm:$0xff]
    %v8639 = vld [vmem:[%s8570 + $0x220] sm:$0xff]
    %v8640 = vld [vmem:[%s8570 + $0x228] sm:$0xff]
    %v8641 = vld [vmem:[%s8570 + $0x230] sm:$0xff]
    %v8642 = vld [vmem:[%s8570 + $0x238] sm:$0xff]
    %v8643 = vld [vmem:[%s8570 + $0x240] sm:$0xff]
    %v8644 = vld [vmem:[%s8570 + $0x248] sm:$0xff]
    %v8645 = vld [vmem:[%s8570 + $0x250] sm:$0xff]
    %v8646 = vld [vmem:[%s8570 + $0x258] sm:$0xff]
    %v8647 = vld [vmem:[%s8570 + $0x260] sm:$0xff]
    %v8648 = vld [vmem:[%s8570 + $0x268] sm:$0xff]
    %v8649 = vld [vmem:[%s8570 + $0x270] sm:$0xff]
    %v8650 = vld [vmem:[%s8570 + $0x278] sm:$0xff]
    %v8651 = vld [vmem:[%s8570 + $0x280] sm:$0xff]
    %v8652 = vld [vmem:[%s8570 + $0x288] sm:$0xff]
    %v8653 = vld [vmem:[%s8570 + $0x290] sm:$0xff]
    %v8654 = vld [vmem:[%s8570 + $0x298] sm:$0xff]
    %v8655 = vld [vmem:[%s8570 + $0x2a0] sm:$0xff]
    %v8656 = vld [vmem:[%s8570 + $0x2a8] sm:$0xff]
    %v8657 = vld [vmem:[%s8570 + $0x2b0] sm:$0xff]
    %v8658 = vld [vmem:[%s8570 + $0x2b8] sm:$0xff]
    %v8659 = vld [vmem:[%s8570 + $0x2c0] sm:$0xff]
    %v8660 = vld [vmem:[%s8570 + $0x2c8] sm:$0xff]
    %v8661 = vld [vmem:[%s8570 + $0x2d0] sm:$0xff]
    %v8662 = vld [vmem:[%s8570 + $0x2d8] sm:$0xff]
    %v8663 = vld [vmem:[%s8570 + $0x2e0] sm:$0xff]
    %v8664 = vld [vmem:[%s8570 + $0x2e8] sm:$0xff]
    %v8665 = vld [vmem:[%s8570 + $0x2f0] sm:$0xff]
    %v8666 = vld [vmem:[%s8570 + $0x2f8] sm:$0xff]
    %v8667 = vld [vmem:[%s8570 + $0x300] sm:$0xff]
    %v8668 = vld [vmem:[%s8570 + $0x308] sm:$0xff]
    %v8669 = vld [vmem:[%s8570 + $0x310] sm:$0xff]
    %v8670 = vld [vmem:[%s8570 + $0x318] sm:$0xff]
    %v8671 = vld [vmem:[%s8570 + $0x320] sm:$0xff]
    %v8672 = vld [vmem:[%s8570 + $0x328] sm:$0xff]
    %v8673 = vld [vmem:[%s8570 + $0x330] sm:$0xff]
    %v8674 = vld [vmem:[%s8570 + $0x338] sm:$0xff]
    %v8675 = vld [vmem:[%s8570 + $0x340] sm:$0xff]
    %v8676 = vld [vmem:[%s8570 + $0x348] sm:$0xff]
    %v8677 = vld [vmem:[%s8570 + $0x350] sm:$0xff]
    %v8678 = vld [vmem:[%s8570 + $0x358] sm:$0xff]
    %v8679 = vld [vmem:[%s8570 + $0x360] sm:$0xff]
    %v8680 = vld [vmem:[%s8570 + $0x368] sm:$0xff]
    %v8681 = vld [vmem:[%s8570 + $0x370] sm:$0xff]
    %v8682 = vld [vmem:[%s8570 + $0x378] sm:$0xff]
    %v8683 = vld [vmem:[%s8570 + $0x380] sm:$0xff]
    %v8684 = vld [vmem:[%s8570 + $0x388] sm:$0xff]
    %v8685 = vld [vmem:[%s8570 + $0x390] sm:$0xff]
    %v8686 = vld [vmem:[%s8570 + $0x398] sm:$0xff]
    %v8687 = vld [vmem:[%s8570 + $0x3a0] sm:$0xff]
    %v8688 = vld [vmem:[%s8570 + $0x3a8] sm:$0xff]
    %v8689 = vld [vmem:[%s8570 + $0x3b0] sm:$0xff]
    %v8690 = vld [vmem:[%s8570 + $0x3b8] sm:$0xff]
    %v8691 = vld [vmem:[%s8570 + $0x3c0] sm:$0xff]
    %v8692 = vld [vmem:[%s8570 + $0x3c8] sm:$0xff]
    %v8693 = vld [vmem:[%s8570 + $0x3d0] sm:$0xff]
    %v8694 = vld [vmem:[%s8570 + $0x3d8] sm:$0xff]
    %v8695 = vld [vmem:[%s8570 + $0x3e0] sm:$0xff]
    %v8696 = vld [vmem:[%s8570 + $0x3e8] sm:$0xff]
    %v8697 = vld [vmem:[%s8570 + $0x3f0] sm:$0xff]
    %v8698 = vld [vmem:[%s8570 + $0x3f8] sm:$0xff]
    %s8699 = scalar_lea.vmem [#allocation4], 68
    %v8700 = vld [vmem:[%s8699] ss:$8 sm:$0x3]
    %v8702 = vlaneseq
    %v8703 = vshrl.u32 %v8702, 7
    %v8704 = vsub.s32 0, %v8703
    %v8705 = vrot.slane %v8700, %v8704
    %v8706 = vlaneseq
    %v8707 = vshrl.u32 %v8706, 7
    %v8708 = vsub.s32 1, %v8707
    %v8709 = vrot.slane %v8700, %v8708
    %8712 = vmatprep.subr.mxu0 %v8572
    %8713 = vmatpush1.msra.mxu0 %v8571
    %8714 = vmatprep.subr.mxu0 %v8574
    %8715 = vmatpush1.msra.mxu0 %v8573
    %8716 = vmatprep.subr.mxu0 %v8576
    %8717 = vmatpush1.msra.mxu0 %v8575
    %8718 = vmatprep.subr.mxu0 %v8578
    %8719 = vmatpush1.msra.mxu0 %v8577
    %8720 = vmatprep.subr.mxu0 %v8580
    %8721 = vmatpush1.msra.mxu0 %v8579
    %8722 = vmatprep.subr.mxu0 %v8582
    %8723 = vmatpush1.msra.mxu0 %v8581
    %8724 = vmatprep.subr.mxu0 %v8584
    %8725 = vmatpush1.msra.mxu0 %v8583
    %8726 = vmatprep.subr.mxu0 %v8586
    %8727 = vmatpush1.msra.mxu0 %v8585
    %8728 = vmatprep.subr.mxu0 %v8588
    %8729 = vmatpush1.msra.mxu0 %v8587
    %8730 = vmatprep.subr.mxu0 %v8590
    %8731 = vmatpush1.msra.mxu0 %v8589
    %8732 = vmatprep.subr.mxu0 %v8592
    %8733 = vmatpush1.msra.mxu0 %v8591
    %8734 = vmatprep.subr.mxu0 %v8594
    %8735 = vmatpush1.msra.mxu0 %v8593
    %8736 = vmatprep.subr.mxu0 %v8596
    %8737 = vmatpush1.msra.mxu0 %v8595
    %8738 = vmatprep.subr.mxu0 %v8598
    %8739 = vmatpush1.msra.mxu0 %v8597
    %8740 = vmatprep.subr.mxu0 %v8600
    %8741 = vmatpush1.msra.mxu0 %v8599
    %8742 = vmatprep.subr.mxu0 %v8602
    %8743 = vmatpush1.msra.mxu0 %v8601
    %8744 = vmatprep.subr.mxu0 %v8604
    %8745 = vmatpush1.msra.mxu0 %v8603
    %8746 = vmatprep.subr.mxu0 %v8606
    %8747 = vmatpush1.msra.mxu0 %v8605
    %8748 = vmatprep.subr.mxu0 %v8608
    %8749 = vmatpush1.msra.mxu0 %v8607
    %8750 = vmatprep.subr.mxu0 %v8610
    %8751 = vmatpush1.msra.mxu0 %v8609
    %8752 = vmatprep.subr.mxu0 %v8612
    %8753 = vmatpush1.msra.mxu0 %v8611
    %8754 = vmatprep.subr.mxu0 %v8614
    %8755 = vmatpush1.msra.mxu0 %v8613
    %8756 = vmatprep.subr.mxu0 %v8616
    %8757 = vmatpush1.msra.mxu0 %v8615
    %8758 = vmatprep.subr.mxu0 %v8618
    %8759 = vmatpush1.msra.mxu0 %v8617
    %8760 = vmatprep.subr.mxu0 %v8620
    %8761 = vmatpush1.msra.mxu0 %v8619
    %8762 = vmatprep.subr.mxu0 %v8622
    %8763 = vmatpush1.msra.mxu0 %v8621
    %8764 = vmatprep.subr.mxu0 %v8624
    %8765 = vmatpush1.msra.mxu0 %v8623
    %8766 = vmatprep.subr.mxu0 %v8626
    %8767 = vmatpush1.msra.mxu0 %v8625
    %8768 = vmatprep.subr.mxu0 %v8628
    %8769 = vmatpush1.msra.mxu0 %v8627
    %8770 = vmatprep.subr.mxu0 %v8630
    %8771 = vmatpush1.msra.mxu0 %v8629
    %8772 = vmatprep.subr.mxu0 %v8632
    %8773 = vmatpush1.msra.mxu0 %v8631
    %8774 = vmatprep.subr.mxu0 %v8634
    %8775 = vmatpush1.msra.mxu0 %v8633
    %8776 = vmatprep.mubr.f32.mxu0 %v8019
    %8777 = vmatmul.mubr.f32.gmra.mrb[0].mxu0 %v8017
    %v8778 = vpop.f32.mrb[0].mxu0
    %v8779 = vadd.f32 %v8705, %v8778
    %v8780 = vpop.f32.mrb[0].mxu0
    %v8781 = vadd.f32 %v8709, %v8780
    %8782 = vdwg.mxu0
    %8783 = vmatprep.subr.mxu0 %v8636
    %8784 = vmatpush1.msra.mxu0 %v8635
    %8785 = vmatprep.subr.mxu0 %v8638
    %8786 = vmatpush1.msra.mxu0 %v8637
    %8787 = vmatprep.subr.mxu0 %v8640
    %8788 = vmatpush1.msra.mxu0 %v8639
    %8789 = vmatprep.subr.mxu0 %v8642
    %8790 = vmatpush1.msra.mxu0 %v8641
    %8791 = vmatprep.subr.mxu0 %v8644
    %8792 = vmatpush1.msra.mxu0 %v8643
    %8793 = vmatprep.subr.mxu0 %v8646
    %8794 = vmatpush1.msra.mxu0 %v8645
    %8795 = vmatprep.subr.mxu0 %v8648
    %8796 = vmatpush1.msra.mxu0 %v8647
    %8797 = vmatprep.subr.mxu0 %v8650
    %8798 = vmatpush1.msra.mxu0 %v8649
    %8799 = vmatprep.subr.mxu0 %v8652
    %8800 = vmatpush1.msra.mxu0 %v8651
    %8801 = vmatprep.subr.mxu0 %v8654
    %8802 = vmatpush1.msra.mxu0 %v8653
    %8803 = vmatprep.subr.mxu0 %v8656
    %8804 = vmatpush1.msra.mxu0 %v8655
    %8805 = vmatprep.subr.mxu0 %v8658
    %8806 = vmatpush1.msra.mxu0 %v8657
    %8807 = vmatprep.subr.mxu0 %v8660
    %8808 = vmatpush1.msra.mxu0 %v8659
    %8809 = vmatprep.subr.mxu0 %v8662
    %8810 = vmatpush1.msra.mxu0 %v8661
    %8811 = vmatprep.subr.mxu0 %v8664
    %8812 = vmatpush1.msra.mxu0 %v8663
    %8813 = vmatprep.subr.mxu0 %v8666
    %8814 = vmatpush1.msra.mxu0 %v8665
    %8815 = vmatprep.subr.mxu0 %v8668
    %8816 = vmatpush1.msra.mxu0 %v8667
    %8817 = vmatprep.subr.mxu0 %v8670
    %8818 = vmatpush1.msra.mxu0 %v8669
    %8819 = vmatprep.subr.mxu0 %v8672
    %8820 = vmatpush1.msra.mxu0 %v8671
    %8821 = vmatprep.subr.mxu0 %v8674
    %8822 = vmatpush1.msra.mxu0 %v8673
    %8823 = vmatprep.subr.mxu0 %v8676
    %8824 = vmatpush1.msra.mxu0 %v8675
    %8825 = vmatprep.subr.mxu0 %v8678
    %8826 = vmatpush1.msra.mxu0 %v8677
    %8827 = vmatprep.subr.mxu0 %v8680
    %8828 = vmatpush1.msra.mxu0 %v8679
    %8829 = vmatprep.subr.mxu0 %v8682
    %8830 = vmatpush1.msra.mxu0 %v8681
    %8831 = vmatprep.subr.mxu0 %v8684
    %8832 = vmatpush1.msra.mxu0 %v8683
    %8833 = vmatprep.subr.mxu0 %v8686
    %8834 = vmatpush1.msra.mxu0 %v8685
    %8835 = vmatprep.subr.mxu0 %v8688
    %8836 = vmatpush1.msra.mxu0 %v8687
    %8837 = vmatprep.subr.mxu0 %v8690
    %8838 = vmatpush1.msra.mxu0 %v8689
    %8839 = vmatprep.subr.mxu0 %v8692
    %8840 = vmatpush1.msra.mxu0 %v8691
    %8841 = vmatprep.subr.mxu0 %v8694
    %8842 = vmatpush1.msra.mxu0 %v8693
    %8843 = vmatprep.subr.mxu0 %v8696
    %8844 = vmatpush1.msra.mxu0 %v8695
    %8845 = vmatprep.subr.mxu0 %v8698
    %8846 = vmatpush1.msra.mxu0 %v8697
    %8847 = vmatprep.mubr.f32.mxu0 %v8161
    %8848 = vmatmul.mubr.f32.gmra.mrb[0].mxu0 %v8159
    %v8849 = vpop.f32.mrb[0].mxu0
    %v8850 = vadd.f32 %v8779, %v8849
    %v8851 = vpop.f32.mrb[0].mxu0
    %v8852 = vadd.f32 %v8781, %v8851
    %8853 = vdwg.mxu0
    %8854 = vmatprep.subr.mxu0 %v8507
    %8855 = vmatpush1.msra.mxu0 %v8506
    %8856 = vmatprep.subr.mxu0 %v8509
    %8857 = vmatpush1.msra.mxu0 %v8508
    %8858 = vmatprep.subr.mxu0 %v8511
    %8859 = vmatpush1.msra.mxu0 %v8510
    %8860 = vmatprep.subr.mxu0 %v8513
    %8861 = vmatpush1.msra.mxu0 %v8512
    %8862 = vmatprep.subr.mxu0 %v8515
    %8863 = vmatpush1.msra.mxu0 %v8514
    %8864 = vmatprep.subr.mxu0 %v8517
    %8865 = vmatpush1.msra.mxu0 %v8516
    %8866 = vmatprep.subr.mxu0 %v8519
    %8867 = vmatpush1.msra.mxu0 %v8518
    %8868 = vmatprep.subr.mxu0 %v8521
    %8869 = vmatpush1.msra.mxu0 %v8520
    %8870 = vmatprep.subr.mxu0 %v8523
    %8871 = vmatpush1.msra.mxu0 %v8522
    %8872 = vmatprep.subr.mxu0 %v8525
    %8873 = vmatpush1.msra.mxu0 %v8524
    %8874 = vmatprep.subr.mxu0 %v8527
    %8875 = vmatpush1.msra.mxu0 %v8526
    %8876 = vmatprep.subr.mxu0 %v8529
    %8877 = vmatpush1.msra.mxu0 %v8528
    %8878 = vmatprep.subr.mxu0 %v8531
    %8879 = vmatpush1.msra.mxu0 %v8530
    %8880 = vmatprep.subr.mxu0 %v8533
    %8881 = vmatpush1.msra.mxu0 %v8532
    %8882 = vmatprep.subr.mxu0 %v8535
    %8883 = vmatpush1.msra.mxu0 %v8534
    %8884 = vmatprep.subr.mxu0 %v8537
    %8885 = vmatpush1.msra.mxu0 %v8536
    %8886 = vmatprep.subr.mxu0 %v8539
    %8887 = vmatpush1.msra.mxu0 %v8538
    %8888 = vmatprep.subr.mxu0 %v8541
    %8889 = vmatpush1.msra.mxu0 %v8540
    %8890 = vmatprep.subr.mxu0 %v8543
    %8891 = vmatpush1.msra.mxu0 %v8542
    %8892 = vmatprep.subr.mxu0 %v8545
    %8893 = vmatpush1.msra.mxu0 %v8544
    %8894 = vmatprep.subr.mxu0 %v8547
    %8895 = vmatpush1.msra.mxu0 %v8546
    %8896 = vmatprep.subr.mxu0 %v8549
    %8897 = vmatpush1.msra.mxu0 %v8548
    %8898 = vmatprep.subr.mxu0 %v8551
    %8899 = vmatpush1.msra.mxu0 %v8550
    %8900 = vmatprep.subr.mxu0 %v8553
    %8901 = vmatpush1.msra.mxu0 %v8552
    %8902 = vmatprep.subr.mxu0 %v8555
    %8903 = vmatpush1.msra.mxu0 %v8554
    %8904 = vmatprep.subr.mxu0 %v8557
    %8905 = vmatpush1.msra.mxu0 %v8556
    %8906 = vmatprep.subr.mxu0 %v8559
    %8907 = vmatpush1.msra.mxu0 %v8558
    %8908 = vmatprep.subr.mxu0 %v8561
    %8909 = vmatpush1.msra.mxu0 %v8560
    %8910 = vmatprep.subr.mxu0 %v8563
    %8911 = vmatpush1.msra.mxu0 %v8562
    %8912 = vmatprep.subr.mxu0 %v8565
    %8913 = vmatpush1.msra.mxu0 %v8564
    %8914 = vmatprep.subr.mxu0 %v8567
    %8915 = vmatpush1.msra.mxu0 %v8566
    %8916 = vmatprep.subr.mxu0 %v8569
    %8917 = vmatpush1.msra.mxu0 %v8568
    %8918 = vmatprep.mubr.f32.mxu0 %v8505
    %8919 = vmatmul.mubr.f32.gmra.mrb[0].mxu0 %v8504
    %v8920 = vpop.f32.mrb[0].mxu0
    %v8921 = vadd.f32 %v8850, %v8920
    %v8922 = vpop.f32.mrb[0].mxu0
    %v8923 = vadd.f32 %v8852, %v8922
    %8924 = vdwg.mxu0
    %s8925 = scalar_lea.vmem [#allocation4], 69
    %v8926 = vld [vmem:[%s8925] ss:$8 sm:$0x3]
    %v8928 = vlaneseq
    %v8929 = vshrl.u32 %v8928, 7
    %v8930 = vsub.s32 0, %v8929
    %v8931 = vrot.slane %v8926, %v8930
    %v8932 = vlaneseq
    %v8933 = vshrl.u32 %v8932, 7
    %v8934 = vsub.s32 1, %v8933
    %v8935 = vrot.slane %v8926, %v8934
    %v8938 = vmul.f32 %v8921, %v8931
    %v8939 = vmul.f32 %v8923, %v8935
    %s8940 = scalar_lea.vmem [#allocation4], 70
    %v8941 = vld [vmem:[%s8940] ss:$8 sm:$0x3]
    %v8943 = vlaneseq
    %v8944 = vshrl.u32 %v8943, 7
    %v8945 = vsub.s32 0, %v8944
    %v8946 = vrot.slane %v8941, %v8945
    %v8947 = vlaneseq
    %v8948 = vshrl.u32 %v8947, 7
    %v8949 = vsub.s32 1, %v8948
    %v8950 = vrot.slane %v8941, %v8949
    %v8953 = vadd.f32 %v8938, %v8946
    %v8954 = vadd.f32 %v8939, %v8950
    %v8955 = vmax.f32 %v8953, 0.0
    %v8956 = vmax.f32 %v8954, 0.0
    %s8957 = scalar_lea.vmem [#allocation13], 512
    %v8958 = vld [vmem:[%s8957] sm:$0xff]
    %v8959 = vld [vmem:[%s8957 + $0x8] sm:$0xff]
    %v8960 = vld [vmem:[%s8957 + $0x10] sm:$0xff]
    %v8961 = vld [vmem:[%s8957 + $0x18] sm:$0xff]
    %v8962 = vld [vmem:[%s8957 + $0x20] sm:$0xff]
    %v8963 = vld [vmem:[%s8957 + $0x28] sm:$0xff]
    %v8964 = vld [vmem:[%s8957 + $0x30] sm:$0xff]
    %v8965 = vld [vmem:[%s8957 + $0x38] sm:$0xff]
    %v8966 = vld [vmem:[%s8957 + $0x40] sm:$0xff]
    %v8967 = vld [vmem:[%s8957 + $0x48] sm:$0xff]
    %v8968 = vld [vmem:[%s8957 + $0x50] sm:$0xff]
    %v8969 = vld [vmem:[%s8957 + $0x58] sm:$0xff]
    %v8970 = vld [vmem:[%s8957 + $0x60] sm:$0xff]
    %v8971 = vld [vmem:[%s8957 + $0x68] sm:$0xff]
    %v8972 = vld [vmem:[%s8957 + $0x70] sm:$0xff]
    %v8973 = vld [vmem:[%s8957 + $0x78] sm:$0xff]
    %v8974 = vld [vmem:[%s8957 + $0x80] sm:$0xff]
    %v8975 = vld [vmem:[%s8957 + $0x88] sm:$0xff]
    %v8976 = vld [vmem:[%s8957 + $0x90] sm:$0xff]
    %v8977 = vld [vmem:[%s8957 + $0x98] sm:$0xff]
    %v8978 = vld [vmem:[%s8957 + $0xa0] sm:$0xff]
    %v8979 = vld [vmem:[%s8957 + $0xa8] sm:$0xff]
    %v8980 = vld [vmem:[%s8957 + $0xb0] sm:$0xff]
    %v8981 = vld [vmem:[%s8957 + $0xb8] sm:$0xff]
    %v8982 = vld [vmem:[%s8957 + $0xc0] sm:$0xff]
    %v8983 = vld [vmem:[%s8957 + $0xc8] sm:$0xff]
    %v8984 = vld [vmem:[%s8957 + $0xd0] sm:$0xff]
    %v8985 = vld [vmem:[%s8957 + $0xd8] sm:$0xff]
    %v8986 = vld [vmem:[%s8957 + $0xe0] sm:$0xff]
    %v8987 = vld [vmem:[%s8957 + $0xe8] sm:$0xff]
    %v8988 = vld [vmem:[%s8957 + $0xf0] sm:$0xff]
    %v8989 = vld [vmem:[%s8957 + $0xf8] sm:$0xff]
    %v8990 = vld [vmem:[%s8957 + $0x100] sm:$0xff]
    %v8991 = vld [vmem:[%s8957 + $0x108] sm:$0xff]
    %v8992 = vld [vmem:[%s8957 + $0x110] sm:$0xff]
    %v8993 = vld [vmem:[%s8957 + $0x118] sm:$0xff]
    %v8994 = vld [vmem:[%s8957 + $0x120] sm:$0xff]
    %v8995 = vld [vmem:[%s8957 + $0x128] sm:$0xff]
    %v8996 = vld [vmem:[%s8957 + $0x130] sm:$0xff]
    %v8997 = vld [vmem:[%s8957 + $0x138] sm:$0xff]
    %v8998 = vld [vmem:[%s8957 + $0x140] sm:$0xff]
    %v8999 = vld [vmem:[%s8957 + $0x148] sm:$0xff]
    %v9000 = vld [vmem:[%s8957 + $0x150] sm:$0xff]
    %v9001 = vld [vmem:[%s8957 + $0x158] sm:$0xff]
    %v9002 = vld [vmem:[%s8957 + $0x160] sm:$0xff]
    %v9003 = vld [vmem:[%s8957 + $0x168] sm:$0xff]
    %v9004 = vld [vmem:[%s8957 + $0x170] sm:$0xff]
    %v9005 = vld [vmem:[%s8957 + $0x178] sm:$0xff]
    %v9006 = vld [vmem:[%s8957 + $0x180] sm:$0xff]
    %v9007 = vld [vmem:[%s8957 + $0x188] sm:$0xff]
    %v9008 = vld [vmem:[%s8957 + $0x190] sm:$0xff]
    %v9009 = vld [vmem:[%s8957 + $0x198] sm:$0xff]
    %v9010 = vld [vmem:[%s8957 + $0x1a0] sm:$0xff]
    %v9011 = vld [vmem:[%s8957 + $0x1a8] sm:$0xff]
    %v9012 = vld [vmem:[%s8957 + $0x1b0] sm:$0xff]
    %v9013 = vld [vmem:[%s8957 + $0x1b8] sm:$0xff]
    %v9014 = vld [vmem:[%s8957 + $0x1c0] sm:$0xff]
    %v9015 = vld [vmem:[%s8957 + $0x1c8] sm:$0xff]
    %v9016 = vld [vmem:[%s8957 + $0x1d0] sm:$0xff]
    %v9017 = vld [vmem:[%s8957 + $0x1d8] sm:$0xff]
    %v9018 = vld [vmem:[%s8957 + $0x1e0] sm:$0xff]
    %v9019 = vld [vmem:[%s8957 + $0x1e8] sm:$0xff]
    %v9020 = vld [vmem:[%s8957 + $0x1f0] sm:$0xff]
    %v9021 = vld [vmem:[%s8957 + $0x1f8] sm:$0xff]
    %s9022 = scalar_lea.vmem [#allocation4], 71
    %v9023 = vld [vmem:[%s9022] ss:$8 sm:$0x3]
    %v9025 = vlaneseq
    %v9026 = vshrl.u32 %v9025, 7
    %v9027 = vsub.s32 0, %v9026
    %v9028 = vrot.slane %v9023, %v9027
    %v9029 = vlaneseq
    %v9030 = vshrl.u32 %v9029, 7
    %v9031 = vsub.s32 1, %v9030
    %v9032 = vrot.slane %v9023, %v9031
    %9035 = vmatprep.subr.mxu0 %v8959
    %9036 = vmatpush1.msra.mxu0 %v8958
    %9037 = vmatprep.subr.mxu0 %v8961
    %9038 = vmatpush1.msra.mxu0 %v8960
    %9039 = vmatprep.subr.mxu0 %v8963
    %9040 = vmatpush1.msra.mxu0 %v8962
    %9041 = vmatprep.subr.mxu0 %v8965
    %9042 = vmatpush1.msra.mxu0 %v8964
    %9043 = vmatprep.subr.mxu0 %v8967
    %9044 = vmatpush1.msra.mxu0 %v8966
    %9045 = vmatprep.subr.mxu0 %v8969
    %9046 = vmatpush1.msra.mxu0 %v8968
    %9047 = vmatprep.subr.mxu0 %v8971
    %9048 = vmatpush1.msra.mxu0 %v8970
    %9049 = vmatprep.subr.mxu0 %v8973
    %9050 = vmatpush1.msra.mxu0 %v8972
    %9051 = vmatprep.subr.mxu0 %v8975
    %9052 = vmatpush1.msra.mxu0 %v8974
    %9053 = vmatprep.subr.mxu0 %v8977
    %9054 = vmatpush1.msra.mxu0 %v8976
    %9055 = vmatprep.subr.mxu0 %v8979
    %9056 = vmatpush1.msra.mxu0 %v8978
    %9057 = vmatprep.subr.mxu0 %v8981
    %9058 = vmatpush1.msra.mxu0 %v8980
    %9059 = vmatprep.subr.mxu0 %v8983
    %9060 = vmatpush1.msra.mxu0 %v8982
    %9061 = vmatprep.subr.mxu0 %v8985
    %9062 = vmatpush1.msra.mxu0 %v8984
    %9063 = vmatprep.subr.mxu0 %v8987
    %9064 = vmatpush1.msra.mxu0 %v8986
    %9065 = vmatprep.subr.mxu0 %v8989
    %9066 = vmatpush1.msra.mxu0 %v8988
    %9067 = vmatprep.subr.mxu0 %v8991
    %9068 = vmatpush1.msra.mxu0 %v8990
    %9069 = vmatprep.subr.mxu0 %v8993
    %9070 = vmatpush1.msra.mxu0 %v8992
    %9071 = vmatprep.subr.mxu0 %v8995
    %9072 = vmatpush1.msra.mxu0 %v8994
    %9073 = vmatprep.subr.mxu0 %v8997
    %9074 = vmatpush1.msra.mxu0 %v8996
    %9075 = vmatprep.subr.mxu0 %v8999
    %9076 = vmatpush1.msra.mxu0 %v8998
    %9077 = vmatprep.subr.mxu0 %v9001
    %9078 = vmatpush1.msra.mxu0 %v9000
    %9079 = vmatprep.subr.mxu0 %v9003
    %9080 = vmatpush1.msra.mxu0 %v9002
    %9081 = vmatprep.subr.mxu0 %v9005
    %9082 = vmatpush1.msra.mxu0 %v9004
    %9083 = vmatprep.subr.mxu0 %v9007
    %9084 = vmatpush1.msra.mxu0 %v9006
    %9085 = vmatprep.subr.mxu0 %v9009
    %9086 = vmatpush1.msra.mxu0 %v9008
    %9087 = vmatprep.subr.mxu0 %v9011
    %9088 = vmatpush1.msra.mxu0 %v9010
    %9089 = vmatprep.subr.mxu0 %v9013
    %9090 = vmatpush1.msra.mxu0 %v9012
    %9091 = vmatprep.subr.mxu0 %v9015
    %9092 = vmatpush1.msra.mxu0 %v9014
    %9093 = vmatprep.subr.mxu0 %v9017
    %9094 = vmatpush1.msra.mxu0 %v9016
    %9095 = vmatprep.subr.mxu0 %v9019
    %9096 = vmatpush1.msra.mxu0 %v9018
    %9097 = vmatprep.subr.mxu0 %v9021
    %9098 = vmatpush1.msra.mxu0 %v9020
    %9099 = vmatprep.mubr.f32.mxu0 %v8956
    %9100 = vmatmul.mubr.f32.gmra.mrb[0].mxu0 %v8955
    %v9101 = vpop.f32.mrb[0].mxu0
    %v9102 = vadd.f32 %v9028, %v9101
    %v9103 = vpop.f32.mrb[0].mxu0
    %v9104 = vadd.f32 %v9032, %v9103
    %9105 = vdwg.mxu0
    %v9106 = vmax.f32 %v9102, 0.0
    %v9107 = vmax.f32 %v9104, 0.0
    %s9108 = scalar_lea.vmem [#allocation13], 1024
    %v9109 = vld [vmem:[%s9108] sm:$0xff]
    %v9110 = vld [vmem:[%s9108 + $0x8] sm:$0xff]
    %v9111 = vld [vmem:[%s9108 + $0x10] sm:$0xff]
    %v9112 = vld [vmem:[%s9108 + $0x18] sm:$0xff]
    %v9113 = vld [vmem:[%s9108 + $0x20] sm:$0xff]
    %v9114 = vld [vmem:[%s9108 + $0x28] sm:$0xff]
    %v9115 = vld [vmem:[%s9108 + $0x30] sm:$0xff]
    %v9116 = vld [vmem:[%s9108 + $0x38] sm:$0xff]
    %v9117 = vld [vmem:[%s9108 + $0x40] sm:$0xff]
    %v9118 = vld [vmem:[%s9108 + $0x48] sm:$0xff]
    %v9119 = vld [vmem:[%s9108 + $0x50] sm:$0xff]
    %v9120 = vld [vmem:[%s9108 + $0x58] sm:$0xff]
    %v9121 = vld [vmem:[%s9108 + $0x60] sm:$0xff]
    %v9122 = vld [vmem:[%s9108 + $0x68] sm:$0xff]
    %v9123 = vld [vmem:[%s9108 + $0x70] sm:$0xff]
    %v9124 = vld [vmem:[%s9108 + $0x78] sm:$0xff]
    %v9125 = vld [vmem:[%s9108 + $0x80] sm:$0xff]
    %v9126 = vld [vmem:[%s9108 + $0x88] sm:$0xff]
    %v9127 = vld [vmem:[%s9108 + $0x90] sm:$0xff]
    %v9128 = vld [vmem:[%s9108 + $0x98] sm:$0xff]
    %v9129 = vld [vmem:[%s9108 + $0xa0] sm:$0xff]
    %v9130 = vld [vmem:[%s9108 + $0xa8] sm:$0xff]
    %v9131 = vld [vmem:[%s9108 + $0xb0] sm:$0xff]
    %v9132 = vld [vmem:[%s9108 + $0xb8] sm:$0xff]
    %v9133 = vld [vmem:[%s9108 + $0xc0] sm:$0xff]
    %v9134 = vld [vmem:[%s9108 + $0xc8] sm:$0xff]
    %v9135 = vld [vmem:[%s9108 + $0xd0] sm:$0xff]
    %v9136 = vld [vmem:[%s9108 + $0xd8] sm:$0xff]
    %v9137 = vld [vmem:[%s9108 + $0xe0] sm:$0xff]
    %v9138 = vld [vmem:[%s9108 + $0xe8] sm:$0xff]
    %v9139 = vld [vmem:[%s9108 + $0xf0] sm:$0xff]
    %v9140 = vld [vmem:[%s9108 + $0xf8] sm:$0xff]
    %v9141 = vld [vmem:[%s9108 + $0x100] sm:$0xff]
    %v9142 = vld [vmem:[%s9108 + $0x108] sm:$0xff]
    %v9143 = vld [vmem:[%s9108 + $0x110] sm:$0xff]
    %v9144 = vld [vmem:[%s9108 + $0x118] sm:$0xff]
    %v9145 = vld [vmem:[%s9108 + $0x120] sm:$0xff]
    %v9146 = vld [vmem:[%s9108 + $0x128] sm:$0xff]
    %v9147 = vld [vmem:[%s9108 + $0x130] sm:$0xff]
    %v9148 = vld [vmem:[%s9108 + $0x138] sm:$0xff]
    %v9149 = vld [vmem:[%s9108 + $0x140] sm:$0xff]
    %v9150 = vld [vmem:[%s9108 + $0x148] sm:$0xff]
    %v9151 = vld [vmem:[%s9108 + $0x150] sm:$0xff]
    %v9152 = vld [vmem:[%s9108 + $0x158] sm:$0xff]
    %v9153 = vld [vmem:[%s9108 + $0x160] sm:$0xff]
    %v9154 = vld [vmem:[%s9108 + $0x168] sm:$0xff]
    %v9155 = vld [vmem:[%s9108 + $0x170] sm:$0xff]
    %v9156 = vld [vmem:[%s9108 + $0x178] sm:$0xff]
    %v9157 = vld [vmem:[%s9108 + $0x180] sm:$0xff]
    %v9158 = vld [vmem:[%s9108 + $0x188] sm:$0xff]
    %v9159 = vld [vmem:[%s9108 + $0x190] sm:$0xff]
    %v9160 = vld [vmem:[%s9108 + $0x198] sm:$0xff]
    %v9161 = vld [vmem:[%s9108 + $0x1a0] sm:$0xff]
    %v9162 = vld [vmem:[%s9108 + $0x1a8] sm:$0xff]
    %v9163 = vld [vmem:[%s9108 + $0x1b0] sm:$0xff]
    %v9164 = vld [vmem:[%s9108 + $0x1b8] sm:$0xff]
    %v9165 = vld [vmem:[%s9108 + $0x1c0] sm:$0xff]
    %v9166 = vld [vmem:[%s9108 + $0x1c8] sm:$0xff]
    %v9167 = vld [vmem:[%s9108 + $0x1d0] sm:$0xff]
    %v9168 = vld [vmem:[%s9108 + $0x1d8] sm:$0xff]
    %v9169 = vld [vmem:[%s9108 + $0x1e0] sm:$0xff]
    %v9170 = vld [vmem:[%s9108 + $0x1e8] sm:$0xff]
    %v9171 = vld [vmem:[%s9108 + $0x1f0] sm:$0xff]
    %v9172 = vld [vmem:[%s9108 + $0x1f8] sm:$0xff]
    %9173 = vmatprep.subr.mxu0 %v9110
    %9174 = vmatpush1.msra.mxu0 %v9109
    %9175 = vmatprep.subr.mxu0 %v9112
    %9176 = vmatpush1.msra.mxu0 %v9111
    %9177 = vmatprep.subr.mxu0 %v9114
    %9178 = vmatpush1.msra.mxu0 %v9113
    %9179 = vmatprep.subr.mxu0 %v9116
    %9180 = vmatpush1.msra.mxu0 %v9115
    %9181 = vmatprep.subr.mxu0 %v9118
    %9182 = vmatpush1.msra.mxu0 %v9117
    %9183 = vmatprep.subr.mxu0 %v9120
    %9184 = vmatpush1.msra.mxu0 %v9119
    %9185 = vmatprep.subr.mxu0 %v9122
    %9186 = vmatpush1.msra.mxu0 %v9121
    %9187 = vmatprep.subr.mxu0 %v9124
    %9188 = vmatpush1.msra.mxu0 %v9123
    %9189 = vmatprep.subr.mxu0 %v9126
    %9190 = vmatpush1.msra.mxu0 %v9125
    %9191 = vmatprep.subr.mxu0 %v9128
    %9192 = vmatpush1.msra.mxu0 %v9127
    %9193 = vmatprep.subr.mxu0 %v9130
    %9194 = vmatpush1.msra.mxu0 %v9129
    %9195 = vmatprep.subr.mxu0 %v9132
    %9196 = vmatpush1.msra.mxu0 %v9131
    %9197 = vmatprep.subr.mxu0 %v9134
    %9198 = vmatpush1.msra.mxu0 %v9133
    %9199 = vmatprep.subr.mxu0 %v9136
    %9200 = vmatpush1.msra.mxu0 %v9135
    %9201 = vmatprep.subr.mxu0 %v9138
    %9202 = vmatpush1.msra.mxu0 %v9137
    %9203 = vmatprep.subr.mxu0 %v9140
    %9204 = vmatpush1.msra.mxu0 %v9139
    %9205 = vmatprep.subr.mxu0 %v9142
    %9206 = vmatpush1.msra.mxu0 %v9141
    %9207 = vmatprep.subr.mxu0 %v9144
    %9208 = vmatpush1.msra.mxu0 %v9143
    %9209 = vmatprep.subr.mxu0 %v9146
    %9210 = vmatpush1.msra.mxu0 %v9145
    %9211 = vmatprep.subr.mxu0 %v9148
    %9212 = vmatpush1.msra.mxu0 %v9147
    %9213 = vmatprep.subr.mxu0 %v9150
    %9214 = vmatpush1.msra.mxu0 %v9149
    %9215 = vmatprep.subr.mxu0 %v9152
    %9216 = vmatpush1.msra.mxu0 %v9151
    %9217 = vmatprep.subr.mxu0 %v9154
    %9218 = vmatpush1.msra.mxu0 %v9153
    %9219 = vmatprep.subr.mxu0 %v9156
    %9220 = vmatpush1.msra.mxu0 %v9155
    %9221 = vmatprep.subr.mxu0 %v9158
    %9222 = vmatpush1.msra.mxu0 %v9157
    %9223 = vmatprep.subr.mxu0 %v9160
    %9224 = vmatpush1.msra.mxu0 %v9159
    %9225 = vmatprep.subr.mxu0 %v9162
    %9226 = vmatpush1.msra.mxu0 %v9161
    %9227 = vmatprep.subr.mxu0 %v9164
    %9228 = vmatpush1.msra.mxu0 %v9163
    %9229 = vmatprep.subr.mxu0 %v9166
    %9230 = vmatpush1.msra.mxu0 %v9165
    %9231 = vmatprep.subr.mxu0 %v9168
    %9232 = vmatpush1.msra.mxu0 %v9167
    %9233 = vmatprep.subr.mxu0 %v9170
    %9234 = vmatpush1.msra.mxu0 %v9169
    %9235 = vmatprep.subr.mxu0 %v9172
    %9236 = vmatpush1.msra.mxu0 %v9171
    %9237 = vmatprep.mubr.f32.mxu0 %v9107
    %9238 = vmatmul.mubr.f32.gmra.mrb[0].mxu0 %v9106
    %v9239 = vpop.f32.mrb[0].mxu0
    %v9240 = vadd.f32 %v8921, %v9239
    %v9241 = vpop.f32.mrb[0].mxu0
    %v9242 = vadd.f32 %v8923, %v9241
    %9243 = vdwg.mxu0
    %s9244 = scalar_lea.vmem [#allocation4], 128
    %v9245 = vld [vmem:[%s9244] ss:$8 sm:$0x3]
    %v9247 = vlaneseq
    %v9248 = vshrl.u32 %v9247, 7
    %v9249 = vsub.s32 0, %v9248
    %v9250 = vrot.slane %v9245, %v9249
    %v9251 = vlaneseq
    %v9252 = vshrl.u32 %v9251, 7
    %v9253 = vsub.s32 1, %v9252
    %v9254 = vrot.slane %v9245, %v9253
    %v9257 = vmul.f32 %v9240, %v9250
    %v9258 = vmul.f32 %v9242, %v9254
    %s9259 = scalar_lea.vmem [#allocation4], 129
    %v9260 = vld [vmem:[%s9259] ss:$8 sm:$0x3]
    %v9262 = vlaneseq
    %v9263 = vshrl.u32 %v9262, 7
    %v9264 = vsub.s32 0, %v9263
    %v9265 = vrot.slane %v9260, %v9264
    %v9266 = vlaneseq
    %v9267 = vshrl.u32 %v9266, 7
    %v9268 = vsub.s32 1, %v9267
    %v9269 = vrot.slane %v9260, %v9268
    %v9272 = vadd.f32 %v9257, %v9265
    %v9273 = vadd.f32 %v9258, %v9269
    %v9274 = vmax.f32 %v9272, 0.0
    %v9275 = vmax.f32 %v9273, 0.0
    %v9276 = vld [vmem:[#allocation15] sm:$0xff]
    %v9277 = vld [vmem:[#allocation15 + $0x8] sm:$0xff]
    %v9278 = vld [vmem:[#allocation15 + $0x10] sm:$0xff]
    %v9279 = vld [vmem:[#allocation15 + $0x18] sm:$0xff]
    %v9280 = vld [vmem:[#allocation15 + $0x20] sm:$0xff]
    %v9281 = vld [vmem:[#allocation15 + $0x28] sm:$0xff]
    %v9282 = vld [vmem:[#allocation15 + $0x30] sm:$0xff]
    %v9283 = vld [vmem:[#allocation15 + $0x38] sm:$0xff]
    %v9284 = vld [vmem:[#allocation15 + $0x40] sm:$0xff]
    %v9285 = vld [vmem:[#allocation15 + $0x48] sm:$0xff]
    %v9286 = vld [vmem:[#allocation15 + $0x50] sm:$0xff]
    %v9287 = vld [vmem:[#allocation15 + $0x58] sm:$0xff]
    %v9288 = vld [vmem:[#allocation15 + $0x60] sm:$0xff]
    %v9289 = vld [vmem:[#allocation15 + $0x68] sm:$0xff]
    %v9290 = vld [vmem:[#allocation15 + $0x70] sm:$0xff]
    %v9291 = vld [vmem:[#allocation15 + $0x78] sm:$0xff]
    %v9292 = vld [vmem:[#allocation15 + $0x80] sm:$0xff]
    %v9293 = vld [vmem:[#allocation15 + $0x88] sm:$0xff]
    %v9294 = vld [vmem:[#allocation15 + $0x90] sm:$0xff]
    %v9295 = vld [vmem:[#allocation15 + $0x98] sm:$0xff]
    %v9296 = vld [vmem:[#allocation15 + $0xa0] sm:$0xff]
    %v9297 = vld [vmem:[#allocation15 + $0xa8] sm:$0xff]
    %v9298 = vld [vmem:[#allocation15 + $0xb0] sm:$0xff]
    %v9299 = vld [vmem:[#allocation15 + $0xb8] sm:$0xff]
    %v9300 = vld [vmem:[#allocation15 + $0xc0] sm:$0xff]
    %v9301 = vld [vmem:[#allocation15 + $0xc8] sm:$0xff]
    %v9302 = vld [vmem:[#allocation15 + $0xd0] sm:$0xff]
    %v9303 = vld [vmem:[#allocation15 + $0xd8] sm:$0xff]
    %v9304 = vld [vmem:[#allocation15 + $0xe0] sm:$0xff]
    %v9305 = vld [vmem:[#allocation15 + $0xe8] sm:$0xff]
    %v9306 = vld [vmem:[#allocation15 + $0xf0] sm:$0xff]
    %v9307 = vld [vmem:[#allocation15 + $0xf8] sm:$0xff]
    %v9308 = vld [vmem:[#allocation4 + $0x82] ss:$0 sm:$0xff]
    %9309 = vmatprep.subr.mxu0 0.0
    %9310 = vmatpush1.msra.mxu0 %v9276
    %9311 = vmatprep.subr.mxu0 0.0
    %9312 = vmatpush1.msra.mxu0 %v9277
    %9313 = vmatprep.subr.mxu0 0.0
    %9314 = vmatpush1.msra.mxu0 %v9278
    %9315 = vmatprep.subr.mxu0 0.0
    %9316 = vmatpush1.msra.mxu0 %v9279
    %9317 = vmatprep.subr.mxu0 0.0
    %9318 = vmatpush1.msra.mxu0 %v9280
    %9319 = vmatprep.subr.mxu0 0.0
    %9320 = vmatpush1.msra.mxu0 %v9281
    %9321 = vmatprep.subr.mxu0 0.0
    %9322 = vmatpush1.msra.mxu0 %v9282
    %9323 = vmatprep.subr.mxu0 0.0
    %9324 = vmatpush1.msra.mxu0 %v9283
    %9325 = vmatprep.subr.mxu0 0.0
    %9326 = vmatpush1.msra.mxu0 %v9284
    %9327 = vmatprep.subr.mxu0 0.0
    %9328 = vmatpush1.msra.mxu0 %v9285
    %9329 = vmatprep.subr.mxu0 0.0
    %9330 = vmatpush1.msra.mxu0 %v9286
    %9331 = vmatprep.subr.mxu0 0.0
    %9332 = vmatpush1.msra.mxu0 %v9287
    %9333 = vmatprep.subr.mxu0 0.0
    %9334 = vmatpush1.msra.mxu0 %v9288
    %9335 = vmatprep.subr.mxu0 0.0
    %9336 = vmatpush1.msra.mxu0 %v9289
    %9337 = vmatprep.subr.mxu0 0.0
    %9338 = vmatpush1.msra.mxu0 %v9290
    %9339 = vmatprep.subr.mxu0 0.0
    %9340 = vmatpush1.msra.mxu0 %v9291
    %9341 = vmatprep.subr.mxu0 0.0
    %9342 = vmatpush1.msra.mxu0 %v9292
    %9343 = vmatprep.subr.mxu0 0.0
    %9344 = vmatpush1.msra.mxu0 %v9293
    %9345 = vmatprep.subr.mxu0 0.0
    %9346 = vmatpush1.msra.mxu0 %v9294
    %9347 = vmatprep.subr.mxu0 0.0
    %9348 = vmatpush1.msra.mxu0 %v9295
    %9349 = vmatprep.subr.mxu0 0.0
    %9350 = vmatpush1.msra.mxu0 %v9296
    %9351 = vmatprep.subr.mxu0 0.0
    %9352 = vmatpush1.msra.mxu0 %v9297
    %9353 = vmatprep.subr.mxu0 0.0
    %9354 = vmatpush1.msra.mxu0 %v9298
    %9355 = vmatprep.subr.mxu0 0.0
    %9356 = vmatpush1.msra.mxu0 %v9299
    %9357 = vmatprep.subr.mxu0 0.0
    %9358 = vmatpush1.msra.mxu0 %v9300
    %9359 = vmatprep.subr.mxu0 0.0
    %9360 = vmatpush1.msra.mxu0 %v9301
    %9361 = vmatprep.subr.mxu0 0.0
    %9362 = vmatpush1.msra.mxu0 %v9302
    %9363 = vmatprep.subr.mxu0 0.0
    %9364 = vmatpush1.msra.mxu0 %v9303
    %9365 = vmatprep.subr.mxu0 0.0
    %9366 = vmatpush1.msra.mxu0 %v9304
    %9367 = vmatprep.subr.mxu0 0.0
    %9368 = vmatpush1.msra.mxu0 %v9305
    %9369 = vmatprep.subr.mxu0 0.0
    %9370 = vmatpush1.msra.mxu0 %v9306
    %9371 = vmatprep.subr.mxu0 0.0
    %9372 = vmatpush1.msra.mxu0 %v9307
    %9373 = vmatprep.mubr.f32.mxu0 %v9275
    %9374 = vmatmul.mubr.f32.gmra.mrb[0].mxu0 %v9274
    %v9375 = vpop.f32.mrb[0].mxu0
    %v9376 = vadd.f32 %v9308, %v9375
    %v9377 = vpop.f32.mrb[0].mxu0
    %9378 = vdwg.mxu0
    %v9379 = vmax.f32 %v9376, 0.0
    %v9380 = vld [vmem:[#allocation16] sm:$0xff]
    %v9381 = vld [vmem:[#allocation16 + $0x8] sm:$0xff]
    %v9382 = vld [vmem:[#allocation16 + $0x10] sm:$0xff]
    %v9383 = vld [vmem:[#allocation16 + $0x18] sm:$0xff]
    %v9384 = vld [vmem:[#allocation16 + $0x20] sm:$0xff]
    %v9385 = vld [vmem:[#allocation16 + $0x28] sm:$0xff]
    %v9386 = vld [vmem:[#allocation16 + $0x30] sm:$0xff]
    %v9387 = vld [vmem:[#allocation16 + $0x38] sm:$0xff]
    %v9388 = vld [vmem:[#allocation16 + $0x40] sm:$0xff]
    %v9389 = vld [vmem:[#allocation16 + $0x48] sm:$0xff]
    %v9390 = vld [vmem:[#allocation16 + $0x50] sm:$0xff]
    %v9391 = vld [vmem:[#allocation16 + $0x58] sm:$0xff]
    %v9392 = vld [vmem:[#allocation16 + $0x60] sm:$0xff]
    %v9393 = vld [vmem:[#allocation16 + $0x68] sm:$0xff]
    %v9394 = vld [vmem:[#allocation16 + $0x70] sm:$0xff]
    %v9395 = vld [vmem:[#allocation16 + $0x78] sm:$0xff]
    %s9396 = scalar_lea.vmem [#allocation15], 256
    %v9397 = vld [vmem:[%s9396] sm:$0xff]
    %v9398 = vld [vmem:[%s9396 + $0x8] sm:$0xff]
    %v9399 = vld [vmem:[%s9396 + $0x10] sm:$0xff]
    %v9400 = vld [vmem:[%s9396 + $0x18] sm:$0xff]
    %v9401 = vld [vmem:[%s9396 + $0x20] sm:$0xff]
    %v9402 = vld [vmem:[%s9396 + $0x28] sm:$0xff]
    %v9403 = vld [vmem:[%s9396 + $0x30] sm:$0xff]
    %v9404 = vld [vmem:[%s9396 + $0x38] sm:$0xff]
    %v9405 = vld [vmem:[%s9396 + $0x40] sm:$0xff]
    %v9406 = vld [vmem:[%s9396 + $0x48] sm:$0xff]
    %v9407 = vld [vmem:[%s9396 + $0x50] sm:$0xff]
    %v9408 = vld [vmem:[%s9396 + $0x58] sm:$0xff]
    %v9409 = vld [vmem:[%s9396 + $0x60] sm:$0xff]
    %v9410 = vld [vmem:[%s9396 + $0x68] sm:$0xff]
    %v9411 = vld [vmem:[%s9396 + $0x70] sm:$0xff]
    %v9412 = vld [vmem:[%s9396 + $0x78] sm:$0xff]
    %v9413 = vld [vmem:[%s9396 + $0x80] sm:$0xff]
    %v9414 = vld [vmem:[%s9396 + $0x88] sm:$0xff]
    %v9415 = vld [vmem:[%s9396 + $0x90] sm:$0xff]
    %v9416 = vld [vmem:[%s9396 + $0x98] sm:$0xff]
    %v9417 = vld [vmem:[%s9396 + $0xa0] sm:$0xff]
    %v9418 = vld [vmem:[%s9396 + $0xa8] sm:$0xff]
    %v9419 = vld [vmem:[%s9396 + $0xb0] sm:$0xff]
    %v9420 = vld [vmem:[%s9396 + $0xb8] sm:$0xff]
    %v9421 = vld [vmem:[%s9396 + $0xc0] sm:$0xff]
    %v9422 = vld [vmem:[%s9396 + $0xc8] sm:$0xff]
    %v9423 = vld [vmem:[%s9396 + $0xd0] sm:$0xff]
    %v9424 = vld [vmem:[%s9396 + $0xd8] sm:$0xff]
    %v9425 = vld [vmem:[%s9396 + $0xe0] sm:$0xff]
    %v9426 = vld [vmem:[%s9396 + $0xe8] sm:$0xff]
    %v9427 = vld [vmem:[%s9396 + $0xf0] sm:$0xff]
    %v9428 = vld [vmem:[%s9396 + $0xf8] sm:$0xff]
    %v9429 = vld [vmem:[#allocation4 + $0x83] ss:$0 sm:$0xff]
    %9430 = vmatprep.subr.mxu0 0.0
    %9431 = vmatpush1.msra.mxu0 %v9397
    %9432 = vmatprep.subr.mxu0 0.0
    %9433 = vmatpush1.msra.mxu0 %v9398
    %9434 = vmatprep.subr.mxu0 0.0
    %9435 = vmatpush1.msra.mxu0 %v9399
    %9436 = vmatprep.subr.mxu0 0.0
    %9437 = vmatpush1.msra.mxu0 %v9400
    %9438 = vmatprep.subr.mxu0 0.0
    %9439 = vmatpush1.msra.mxu0 %v9401
    %9440 = vmatprep.subr.mxu0 0.0
    %9441 = vmatpush1.msra.mxu0 %v9402
    %9442 = vmatprep.subr.mxu0 0.0
    %9443 = vmatpush1.msra.mxu0 %v9403
    %9444 = vmatprep.subr.mxu0 0.0
    %9445 = vmatpush1.msra.mxu0 %v9404
    %9446 = vmatprep.subr.mxu0 0.0
    %9447 = vmatpush1.msra.mxu0 %v9405
    %9448 = vmatprep.subr.mxu0 0.0
    %9449 = vmatpush1.msra.mxu0 %v9406
    %9450 = vmatprep.subr.mxu0 0.0
    %9451 = vmatpush1.msra.mxu0 %v9407
    %9452 = vmatprep.subr.mxu0 0.0
    %9453 = vmatpush1.msra.mxu0 %v9408
    %9454 = vmatprep.subr.mxu0 0.0
    %9455 = vmatpush1.msra.mxu0 %v9409
    %9456 = vmatprep.subr.mxu0 0.0
    %9457 = vmatpush1.msra.mxu0 %v9410
    %9458 = vmatprep.subr.mxu0 0.0
    %9459 = vmatpush1.msra.mxu0 %v9411
    %9460 = vmatprep.subr.mxu0 0.0
    %9461 = vmatpush1.msra.mxu0 %v9412
    %9462 = vmatprep.subr.mxu0 0.0
    %9463 = vmatpush1.msra.mxu0 %v9413
    %9464 = vmatprep.subr.mxu0 0.0
    %9465 = vmatpush1.msra.mxu0 %v9414
    %9466 = vmatprep.subr.mxu0 0.0
    %9467 = vmatpush1.msra.mxu0 %v9415
    %9468 = vmatprep.subr.mxu0 0.0
    %9469 = vmatpush1.msra.mxu0 %v9416
    %9470 = vmatprep.subr.mxu0 0.0
    %9471 = vmatpush1.msra.mxu0 %v9417
    %9472 = vmatprep.subr.mxu0 0.0
    %9473 = vmatpush1.msra.mxu0 %v9418
    %9474 = vmatprep.subr.mxu0 0.0
    %9475 = vmatpush1.msra.mxu0 %v9419
    %9476 = vmatprep.subr.mxu0 0.0
    %9477 = vmatpush1.msra.mxu0 %v9420
    %9478 = vmatprep.subr.mxu0 0.0
    %9479 = vmatpush1.msra.mxu0 %v9421
    %9480 = vmatprep.subr.mxu0 0.0
    %9481 = vmatpush1.msra.mxu0 %v9422
    %9482 = vmatprep.subr.mxu0 0.0
    %9483 = vmatpush1.msra.mxu0 %v9423
    %9484 = vmatprep.subr.mxu0 0.0
    %9485 = vmatpush1.msra.mxu0 %v9424
    %9486 = vmatprep.subr.mxu0 0.0
    %9487 = vmatpush1.msra.mxu0 %v9425
    %9488 = vmatprep.subr.mxu0 0.0
    %9489 = vmatpush1.msra.mxu0 %v9426
    %9490 = vmatprep.subr.mxu0 0.0
    %9491 = vmatpush1.msra.mxu0 %v9427
    %9492 = vmatprep.subr.mxu0 0.0
    %9493 = vmatpush1.msra.mxu0 %v9428
    %9494 = vmatprep.mubr.f32.mxu0 %v9242
    %9495 = vmatmul.mubr.f32.gmra.mrb[0].mxu0 %v9240
    %v9496 = vpop.f32.mrb[0].mxu0
    %v9497 = vadd.f32 %v9429, %v9496
    %v9498 = vpop.f32.mrb[0].mxu0
    %9499 = vdwg.mxu0
    %9500 = vmatprep.subr.mxu0 0.0
    %9501 = vmatpush1.msra.mxu0 %v9380
    %9502 = vmatprep.subr.mxu0 0.0
    %9503 = vmatpush1.msra.mxu0 %v9381
    %9504 = vmatprep.subr.mxu0 0.0
    %9505 = vmatpush1.msra.mxu0 %v9382
    %9506 = vmatprep.subr.mxu0 0.0
    %9507 = vmatpush1.msra.mxu0 %v9383
    %9508 = vmatprep.subr.mxu0 0.0
    %9509 = vmatpush1.msra.mxu0 %v9384
    %9510 = vmatprep.subr.mxu0 0.0
    %9511 = vmatpush1.msra.mxu0 %v9385
    %9512 = vmatprep.subr.mxu0 0.0
    %9513 = vmatpush1.msra.mxu0 %v9386
    %9514 = vmatprep.subr.mxu0 0.0
    %9515 = vmatpush1.msra.mxu0 %v9387
    %9516 = vmatprep.subr.mxu0 0.0
    %9517 = vmatpush1.msra.mxu0 %v9388
    %9518 = vmatprep.subr.mxu0 0.0
    %9519 = vmatpush1.msra.mxu0 %v9389
    %9520 = vmatprep.subr.mxu0 0.0
    %9521 = vmatpush1.msra.mxu0 %v9390
    %9522 = vmatprep.subr.mxu0 0.0
    %9523 = vmatpush1.msra.mxu0 %v9391
    %9524 = vmatprep.subr.mxu0 0.0
    %9525 = vmatpush1.msra.mxu0 %v9392
    %9526 = vmatprep.subr.mxu0 0.0
    %9527 = vmatpush1.msra.mxu0 %v9393
    %9528 = vmatprep.subr.mxu0 0.0
    %9529 = vmatpush1.msra.mxu0 %v9394
    %9530 = vmatprep.subr.mxu0 0.0
    %9531 = vmatpush1.msra.mxu0 %v9395
    %9532 = vmatprep.subr.mxu0 0.0
    %9533 = vmatpush1.msra.mxu0 0.0
    %9534 = vmatprep.subr.mxu0 0.0
    %9535 = vmatpush1.msra.mxu0 0.0
    %9536 = vmatprep.subr.mxu0 0.0
    %9537 = vmatpush1.msra.mxu0 0.0
    %9538 = vmatprep.subr.mxu0 0.0
    %9539 = vmatpush1.msra.mxu0 0.0
    %9540 = vmatprep.subr.mxu0 0.0
    %9541 = vmatpush1.msra.mxu0 0.0
    %9542 = vmatprep.subr.mxu0 0.0
    %9543 = vmatpush1.msra.mxu0 0.0
    %9544 = vmatprep.subr.mxu0 0.0
    %9545 = vmatpush1.msra.mxu0 0.0
    %9546 = vmatprep.subr.mxu0 0.0
    %9547 = vmatpush1.msra.mxu0 0.0
    %9548 = vmatprep.subr.mxu0 0.0
    %9549 = vmatpush1.msra.mxu0 0.0
    %9550 = vmatprep.subr.mxu0 0.0
    %9551 = vmatpush1.msra.mxu0 0.0
    %9552 = vmatprep.subr.mxu0 0.0
    %9553 = vmatpush1.msra.mxu0 0.0
    %9554 = vmatprep.subr.mxu0 0.0
    %9555 = vmatpush1.msra.mxu0 0.0
    %9556 = vmatprep.subr.mxu0 0.0
    %9557 = vmatpush1.msra.mxu0 0.0
    %9558 = vmatprep.subr.mxu0 0.0
    %9559 = vmatpush1.msra.mxu0 0.0
    %9560 = vmatprep.subr.mxu0 0.0
    %9561 = vmatpush1.msra.mxu0 0.0
    %9562 = vmatprep.subr.mxu0 0.0
    %9563 = vmatpush1.msra.mxu0 0.0
    %9564 = vmatprep.mubr.f32.mxu0 0.0
    %9565 = vmatmul.mubr.f32.gmra.mrb[0].mxu0 %v9379
    %v9566 = vpop.f32.mrb[0].mxu0
    %v9567 = vadd.f32 %v9497, %v9566
    %v9568 = vpop.f32.mrb[0].mxu0
    %9569 = vdwg.mxu0
    %v9570 = vld [vmem:[#allocation4 + $0x84] ss:$0 sm:$0xff]
    %v9571 = vmul.f32 %v9567, %v9570
    %v9572 = vld [vmem:[#allocation4 + $0x85] ss:$0 sm:$0xff]
    %v9573 = vadd.f32 %v9571, %v9572
    %v9574 = vmax.f32 %v9573, 0.0
    %s9575 = scalar_lea.vmem [#allocation16], 128
    %v9576 = vld [vmem:[%s9575] sm:$0xff]
    %v9577 = vld [vmem:[%s9575 + $0x8] sm:$0xff]
    %v9578 = vld [vmem:[%s9575 + $0x10] sm:$0xff]
    %v9579 = vld [vmem:[%s9575 + $0x18] sm:$0xff]
    %v9580 = vld [vmem:[%s9575 + $0x20] sm:$0xff]
    %v9581 = vld [vmem:[%s9575 + $0x28] sm:$0xff]
    %v9582 = vld [vmem:[%s9575 + $0x30] sm:$0xff]
    %v9583 = vld [vmem:[%s9575 + $0x38] sm:$0xff]
    %v9584 = vld [vmem:[%s9575 + $0x40] sm:$0xff]
    %v9585 = vld [vmem:[%s9575 + $0x48] sm:$0xff]
    %v9586 = vld [vmem:[%s9575 + $0x50] sm:$0xff]
    %v9587 = vld [vmem:[%s9575 + $0x58] sm:$0xff]
    %v9588 = vld [vmem:[%s9575 + $0x60] sm:$0xff]
    %v9589 = vld [vmem:[%s9575 + $0x68] sm:$0xff]
    %v9590 = vld [vmem:[%s9575 + $0x70] sm:$0xff]
    %v9591 = vld [vmem:[%s9575 + $0x78] sm:$0xff]
    %v9592 = vld [vmem:[#allocation4 + $0x86] ss:$0 sm:$0xff]
    %9593 = vmatprep.subr.mxu0 0.0
    %9594 = vmatpush1.msra.mxu0 %v9576
    %9595 = vmatprep.subr.mxu0 0.0
    %9596 = vmatpush1.msra.mxu0 %v9577
    %9597 = vmatprep.subr.mxu0 0.0
    %9598 = vmatpush1.msra.mxu0 %v9578
    %9599 = vmatprep.subr.mxu0 0.0
    %9600 = vmatpush1.msra.mxu0 %v9579
    %9601 = vmatprep.subr.mxu0 0.0
    %9602 = vmatpush1.msra.mxu0 %v9580
    %9603 = vmatprep.subr.mxu0 0.0
    %9604 = vmatpush1.msra.mxu0 %v9581
    %9605 = vmatprep.subr.mxu0 0.0
    %9606 = vmatpush1.msra.mxu0 %v9582
    %9607 = vmatprep.subr.mxu0 0.0
    %9608 = vmatpush1.msra.mxu0 %v9583
    %9609 = vmatprep.subr.mxu0 0.0
    %9610 = vmatpush1.msra.mxu0 %v9584
    %9611 = vmatprep.subr.mxu0 0.0
    %9612 = vmatpush1.msra.mxu0 %v9585
    %9613 = vmatprep.subr.mxu0 0.0
    %9614 = vmatpush1.msra.mxu0 %v9586
    %9615 = vmatprep.subr.mxu0 0.0
    %9616 = vmatpush1.msra.mxu0 %v9587
    %9617 = vmatprep.subr.mxu0 0.0
    %9618 = vmatpush1.msra.mxu0 %v9588
    %9619 = vmatprep.subr.mxu0 0.0
    %9620 = vmatpush1.msra.mxu0 %v9589
    %9621 = vmatprep.subr.mxu0 0.0
    %9622 = vmatpush1.msra.mxu0 %v9590
    %9623 = vmatprep.subr.mxu0 0.0
    %9624 = vmatpush1.msra.mxu0 %v9591
    %9625 = vmatprep.subr.mxu0 0.0
    %9626 = vmatpush1.msra.mxu0 0.0
    %9627 = vmatprep.subr.mxu0 0.0
    %9628 = vmatpush1.msra.mxu0 0.0
    %9629 = vmatprep.subr.mxu0 0.0
    %9630 = vmatpush1.msra.mxu0 0.0
    %9631 = vmatprep.subr.mxu0 0.0
    %9632 = vmatpush1.msra.mxu0 0.0
    %9633 = vmatprep.subr.mxu0 0.0
    %9634 = vmatpush1.msra.mxu0 0.0
    %9635 = vmatprep.subr.mxu0 0.0
    %9636 = vmatpush1.msra.mxu0 0.0
    %9637 = vmatprep.subr.mxu0 0.0
    %9638 = vmatpush1.msra.mxu0 0.0
    %9639 = vmatprep.subr.mxu0 0.0
    %9640 = vmatpush1.msra.mxu0 0.0
    %9641 = vmatprep.subr.mxu0 0.0
    %9642 = vmatpush1.msra.mxu0 0.0
    %9643 = vmatprep.subr.mxu0 0.0
    %9644 = vmatpush1.msra.mxu0 0.0
    %9645 = vmatprep.subr.mxu0 0.0
    %9646 = vmatpush1.msra.mxu0 0.0
    %9647 = vmatprep.subr.mxu0 0.0
    %9648 = vmatpush1.msra.mxu0 0.0
    %9649 = vmatprep.subr.mxu0 0.0
    %9650 = vmatpush1.msra.mxu0 0.0
    %9651 = vmatprep.subr.mxu0 0.0
    %9652 = vmatpush1.msra.mxu0 0.0
    %9653 = vmatprep.subr.mxu0 0.0
    %9654 = vmatpush1.msra.mxu0 0.0
    %9655 = vmatprep.subr.mxu0 0.0
    %9656 = vmatpush1.msra.mxu0 0.0
    %9657 = vmatprep.mubr.f32.mxu0 0.0
    %9658 = vmatmul.mubr.f32.gmra.mrb[0].mxu0 %v9574
    %v9659 = vpop.f32.mrb[0].mxu0
    %v9660 = vadd.f32 %v9592, %v9659
    %v9661 = vpop.f32.mrb[0].mxu0
    %9662 = vdwg.mxu0
    %v9663 = vmax.f32 %v9660, 0.0
    %s9664 = scalar_lea.vmem [#allocation16], 256
    %v9665 = vld [vmem:[%s9664] sm:$0xff]
    %v9666 = vld [vmem:[%s9664 + $0x8] sm:$0xff]
    %v9667 = vld [vmem:[%s9664 + $0x10] sm:$0xff]
    %v9668 = vld [vmem:[%s9664 + $0x18] sm:$0xff]
    %v9669 = vld [vmem:[%s9664 + $0x20] sm:$0xff]
    %v9670 = vld [vmem:[%s9664 + $0x28] sm:$0xff]
    %v9671 = vld [vmem:[%s9664 + $0x30] sm:$0xff]
    %v9672 = vld [vmem:[%s9664 + $0x38] sm:$0xff]
    %v9673 = vld [vmem:[%s9664 + $0x40] sm:$0xff]
    %v9674 = vld [vmem:[%s9664 + $0x48] sm:$0xff]
    %v9675 = vld [vmem:[%s9664 + $0x50] sm:$0xff]
    %v9676 = vld [vmem:[%s9664 + $0x58] sm:$0xff]
    %v9677 = vld [vmem:[%s9664 + $0x60] sm:$0xff]
    %v9678 = vld [vmem:[%s9664 + $0x68] sm:$0xff]
    %v9679 = vld [vmem:[%s9664 + $0x70] sm:$0xff]
    %v9680 = vld [vmem:[%s9664 + $0x78] sm:$0xff]
    %9681 = vmatprep.subr.mxu0 0.0
    %9682 = vmatpush1.msra.mxu0 %v9665
    %9683 = vmatprep.subr.mxu0 0.0
    %9684 = vmatpush1.msra.mxu0 %v9666
    %9685 = vmatprep.subr.mxu0 0.0
    %9686 = vmatpush1.msra.mxu0 %v9667
    %9687 = vmatprep.subr.mxu0 0.0
    %9688 = vmatpush1.msra.mxu0 %v9668
    %9689 = vmatprep.subr.mxu0 0.0
    %9690 = vmatpush1.msra.mxu0 %v9669
    %9691 = vmatprep.subr.mxu0 0.0
    %9692 = vmatpush1.msra.mxu0 %v9670
    %9693 = vmatprep.subr.mxu0 0.0
    %9694 = vmatpush1.msra.mxu0 %v9671
    %9695 = vmatprep.subr.mxu0 0.0
    %9696 = vmatpush1.msra.mxu0 %v9672
    %9697 = vmatprep.subr.mxu0 0.0
    %9698 = vmatpush1.msra.mxu0 %v9673
    %9699 = vmatprep.subr.mxu0 0.0
    %9700 = vmatpush1.msra.mxu0 %v9674
    %9701 = vmatprep.subr.mxu0 0.0
    %9702 = vmatpush1.msra.mxu0 %v9675
    %9703 = vmatprep.subr.mxu0 0.0
    %9704 = vmatpush1.msra.mxu0 %v9676
    %9705 = vmatprep.subr.mxu0 0.0
    %9706 = vmatpush1.msra.mxu0 %v9677
    %9707 = vmatprep.subr.mxu0 0.0
    %9708 = vmatpush1.msra.mxu0 %v9678
    %9709 = vmatprep.subr.mxu0 0.0
    %9710 = vmatpush1.msra.mxu0 %v9679
    %9711 = vmatprep.subr.mxu0 0.0
    %9712 = vmatpush1.msra.mxu0 %v9680
    %9713 = vmatprep.subr.mxu0 0.0
    %9714 = vmatpush1.msra.mxu0 0.0
    %9715 = vmatprep.subr.mxu0 0.0
    %9716 = vmatpush1.msra.mxu0 0.0
    %9717 = vmatprep.subr.mxu0 0.0
    %9718 = vmatpush1.msra.mxu0 0.0
    %9719 = vmatprep.subr.mxu0 0.0
    %9720 = vmatpush1.msra.mxu0 0.0
    %9721 = vmatprep.subr.mxu0 0.0
    %9722 = vmatpush1.msra.mxu0 0.0
    %9723 = vmatprep.subr.mxu0 0.0
    %9724 = vmatpush1.msra.mxu0 0.0
    %9725 = vmatprep.subr.mxu0 0.0
    %9726 = vmatpush1.msra.mxu0 0.0
    %9727 = vmatprep.subr.mxu0 0.0
    %9728 = vmatpush1.msra.mxu0 0.0
    %9729 = vmatprep.subr.mxu0 0.0
    %9730 = vmatpush1.msra.mxu0 0.0
    %9731 = vmatprep.subr.mxu0 0.0
    %9732 = vmatpush1.msra.mxu0 0.0
    %9733 = vmatprep.subr.mxu0 0.0
    %9734 = vmatpush1.msra.mxu0 0.0
    %9735 = vmatprep.subr.mxu0 0.0
    %9736 = vmatpush1.msra.mxu0 0.0
    %9737 = vmatprep.subr.mxu0 0.0
    %9738 = vmatpush1.msra.mxu0 0.0
    %9739 = vmatprep.subr.mxu0 0.0
    %9740 = vmatpush1.msra.mxu0 0.0
    %9741 = vmatprep.subr.mxu0 0.0
    %9742 = vmatpush1.msra.mxu0 0.0
    %9743 = vmatprep.subr.mxu0 0.0
    %9744 = vmatpush1.msra.mxu0 0.0
    %9745 = vmatprep.mubr.f32.mxu0 0.0
    %9746 = vmatmul.mubr.f32.gmra.mrb[0].mxu0 %v9663
    %v9747 = vpop.f32.mrb[0].mxu0
    %v9748 = vadd.f32 %v9567, %v9747
    %v9749 = vpop.f32.mrb[0].mxu0
    %9750 = vdwg.mxu0
    %v9751 = vld [vmem:[#allocation4 + $0x87] ss:$0 sm:$0xff]
    %v9752 = vmul.f32 %v9748, %v9751
    %vm9753 = vcmask 1041408
    %v9754 = vsel %vm9753, %v9752, 0.0
    %9755 = vadd.xlane.f32.xlu0 %v9754
    %v9756 = vpop.xlane.xlu0 %9755
    %v9757 = vld [vmem:[#allocation4 + $0xc0] ss:$0 sm:$0xff]
    %v9758 = vadd.f32 %v9756, %v9757
    %vm9759 = vcmask 1024
    %9760 = vst.msk [vmem:[%s10] sm:$0x3] %vm9759, %v9758
    // Predicated region
    $region82: #{tpu_custom_call.1} parent=1 // pred_check
      _
    $region83: #{tpu_custom_call.1} parent=1 // pred_check_branch
      %9762 = sbr.rel (0) target = $region85
    $region84: #{tpu_custom_call.1} parent=1 // pred_region
      _
    $region85: #{tpu_custom_call.1} parent=1 // pred_fallthru
      _
    // Predicated region
    $region86: #{tpu_custom_call.1} parent=1 // pred_check
      _
    $region87: #{tpu_custom_call.1} parent=1 // pred_check_branch
      %9764 = sbr.rel (0) target = $region89
    $region88: #{tpu_custom_call.1} parent=1 // pred_region
      _
    $region89: #{tpu_custom_call.1} parent=1 // pred_fallthru
      _
    %9765 = vsyncpa [#allocation3], 1
    %9766 = vsyncpa [#allocation5], 1
    %9767 = vsyncpa [#allocation8], 1
    %9768 = vsyncpa [#allocation11], 1
    %9769 = vsyncpa [#allocation14], 1
    %9770 = vsyncpa [#allocation17], 1

</llo_original>
